<compile_context>
chip_gen: v5e
topology: v5e:2x2
jax: 0.10.0
libtpu: 0.0.40
codegen_flags: <defaults>
</compile_context>

<pallas_src>
import numpy as np

import jax
import jax.numpy as jnp
from jax import lax
from jax.experimental import pallas as pl
from jax.experimental.pallas import tpu as pltpu


# ----------------------------------------------------------------------------
# Fused forward kernel: 5 MXU matmuls + lane-block pooling + VPU head reduce
# ----------------------------------------------------------------------------
def _fused_forward_kernel(
    x_ref, tab_ref,                                  # batch-blocked activations
    t1_ref, b1_ref, t2_ref, b2_ref,                  # lowered conv weights/biases
    m1w_ref, m1b_ref, m2w_ref, m2b_ref,              # tabular MLP params
    h1wc_ref, h1wt_ref, h1b_ref, h2w_ref, h2b_ref,   # head params
    out_ref,                                         # (tb, 1) output
):
    f32 = jnp.float32
    bf16 = jnp.bfloat16

    # ---- conv1 (3x3 same, 13->32) + bias + ReLU: one dot, K=1024, N=2048 ----
    x = x_ref[...]                                                 # (tb, 1024) bf16
    y1 = jnp.dot(x, t1_ref[...], preferred_element_type=f32)      # (tb, 2048) f32
    y1 = jnp.maximum(y1 + b1_ref[...], 0.0)

    # ---- maxpool1 2x2: aligned lane-block maxima (h-parity, then w-parity) --
    q1 = jnp.maximum(y1[:, :1024], y1[:, 1024:])                   # (tb, 1024)
    p1 = jnp.maximum(q1[:, :512], q1[:, 512:])                     # (tb, 512) = 4x4x32

    # ---- conv2 (3x3 same, 32->64) + bias + ReLU: one dot, K=512, N=1024 -----
    y2 = jnp.dot(p1.astype(bf16), t2_ref[...], preferred_element_type=f32)
    y2 = jnp.maximum(y2 + b2_ref[...], 0.0)                        # (tb, 1024)

    # ---- maxpool2 2x2 (pooled lanes already in head-weight order) -----------
    q2 = jnp.maximum(y2[:, :512], y2[:, 512:])                     # (tb, 512)
    p2 = jnp.maximum(q2[:, :256], q2[:, 256:])                     # (tb, 256) = 2x2x64

    # ---- tabular MLP ---------------------------------------------------------
    t = jnp.dot(tab_ref[...].astype(bf16), m1w_ref[...], preferred_element_type=f32)
    t = jnp.maximum(t + m1b_ref[...], 0.0)                         # (tb, 16)
    t = jnp.dot(t.astype(bf16), m2w_ref[...], preferred_element_type=f32)
    t = jnp.maximum(t + m2b_ref[...], 0.0)                         # (tb, 8)

    # ---- head: Linear(264->64)+ReLU (flatten/concat folded into weights),
    # ---- then Linear(64->1) as a VPU multiply + 64-lane reduction ------------
    h = jnp.dot(p2.astype(bf16), h1wc_ref[...], preferred_element_type=f32)
    h = h + jnp.dot(t.astype(bf16), h1wt_ref[...], preferred_element_type=f32)
    h = jnp.maximum(h + h1b_ref[...], 0.0)                         # (tb, 64)
    out = jnp.sum(h * h2w_ref[...], axis=-1, keepdims=True) + h2b_ref[...]
    out_ref[...] = out.astype(out_ref.dtype)


# ----------------------------------------------------------------------------
# Wrapper
# ----------------------------------------------------------------------------
def _choose_batch_tile(batch, max_tile=128):
    """Tile is a multiple of 8, capped, and sized so medium batches get at
    least two grid steps (lets the 'parallel' axis shard across v7x's 2 TCs)."""
    half = -(-batch // 2)                 # cdiv(batch, 2)
    tb = ((half + 7) // 8) * 8            # round up to the sublane multiple
    return max(8, min(tb, max_tile))


def chess_puzzle_cnn_forward(prepped, board_nchw, tabular):
    """board_nchw: (B, 13, 8, 8), tabular: (B, T) -> (B, 1) float32."""
    batch = board_nchw.shape[0]

    # Cheap fused XLA layout glue (no spatial padding here - it is folded into
    # the lowered conv weights): NCHW -> (h, w, c) lane order, 13->16 channel
    # pad, flatten to 1024 lanes, bf16 MXU-operand cast.
    x = jnp.transpose(board_nchw.astype(jnp.float32), (0, 2, 3, 1))   # (B,8,8,13)
    x = jnp.pad(x, ((0, 0), (0, 0), (0, 0), (0, 3)))                  # (B,8,8,16)
    x = x.reshape(batch, 8 * 8 * 16).astype(jnp.bfloat16)             # (B,1024)
    tab = tabular.astype(jnp.float32)

    tb = _choose_batch_tile(batch)
    padded = ((batch + tb - 1) // tb) * tb
    if padded != batch:
        x = jnp.pad(x, ((0, padded - batch), (0, 0)))
        tab = jnp.pad(tab, ((0, padded - batch), (0, 0)))
    grid = (padded // tb,)

    weights = (prepped["t1"], prepped["b1"], prepped["t2"], prepped["b2"],
               prepped["m1w"], prepped["m1b"], prepped["m2w"], prepped["m2b"],
               prepped["h1wc"], prepped["h1wt"], prepped["h1b"],
               prepped["h2w"], prepped["h2b"])

    def batched(arr):
        shape = arr.shape
        return pl.BlockSpec((tb,) + tuple(shape[1:]),
                            lambda i: (i,) + (0,) * (len(shape) - 1))

    def replicated(arr):
        shape = arr.shape
        return pl.BlockSpec(tuple(shape), lambda i: (0,) * len(shape))

    in_specs = [batched(x), batched(tab)] + [replicated(w) for w in weights]
    out_specs = pl.BlockSpec((tb, 1), lambda i: (i, 0))

    out = pl.pallas_call(
        _fused_forward_kernel,
        out_shape=jax.ShapeDtypeStruct((padded, 1), jnp.float32),
        grid=grid,
        in_specs=in_specs,
        out_specs=out_specs,
        compiler_params=pltpu.CompilerParams(
            dimension_semantics=("parallel",),
            vmem_limit_bytes=32 * 1024 * 1024),
    )(x, tab, *weights)
    return out[:batch]


# ----------------------------------------------------------------------------
# Parameters: torch layouts -> one-time conversion to the fused-kernel layout
# ----------------------------------------------------------------------------
def init_params(num_tabular_features, key):
    ks = jax.random.split(key, 12)
    scale = 0.05

    def nrm(k, shape):
        return scale * jax.random.normal(k, shape, dtype=jnp.float32)

    return {
        "conv1_w": nrm(ks[0], (32, 13, 3, 3)),     # torch Conv2d: (Cout, Cin, kh, kw)
        "conv1_b": nrm(ks[1], (32,)),
        "conv2_w": nrm(ks[2], (64, 32, 3, 3)),
        "conv2_b": nrm(ks[3], (64,)),
        "mlp1_w": nrm(ks[4], (16, num_tabular_features)),   # torch Linear: (out, in)
        "mlp1_b": nrm(ks[5], (16,)),
        "mlp2_w": nrm(ks[6], (8, 16)),
        "mlp2_b": nrm(ks[7], (8,)),
        "head1_w": nrm(ks[8], (64, 64 * 2 * 2 + 8)),
        "head1_b": nrm(ks[9], (64,)),
        "head2_w": nrm(ks[10], (1, 64)),
        "head2_b": nrm(ks[11], (1,)),
    }


def _lowered_conv3x3_weight(w_oihw, cin_pad, size):
    """Lower a 3x3 stride-1 'same' conv on a (size x size) image to one dense
    matmul weight of shape (size*size*cin_pad, size*size*cout).

    Input lane order : (h_in*size + w_in)*cin_pad + c_in
    Output lane order: ((h%2)*2*hh*hh + (w%2)*hh*hh + (h//2)*hh + (w//2))*cout + c
      (hh = size//2) so that 2x2 max-pool partners sit exactly N/2 lanes apart
      and the pooled result comes out in natural (h2, w2, c) lane order.
    Spatial zero-padding is folded in: out-of-range taps are simply absent.
    """
    cout, cin = int(w_oihw.shape[0]), int(w_oihw.shape[1])
    w = np.asarray(w_oihw, np.float32)
    hh = size // 2
    t = np.zeros((size * size * cin_pad, size * size * cout), np.float32)
    for ho in range(size):
        for wo in range(size):
            ob = (((ho % 2) * 2 * hh * hh) + ((wo % 2) * hh * hh)
                  + (ho // 2) * hh + (wo // 2)) * cout
            for kh in range(3):
                hi = ho + kh - 1
                if not 0 <= hi < size:
                    continue
                for kw in range(3):
                    wi = wo + kw - 1
                    if not 0 <= wi < size:
                        continue
                    rb = (hi * size + wi) * cin_pad
                    t[rb:rb + cin, ob:ob + cout] = w[:, :, kh, kw].T
    return t


def prepare_params(params):
    """One-time conversion of torch-layout params to the fused-kernel layout.
    MXU matmul operands are stored in bf16; biases stay f32."""
    f32 = np.float32
    bf16 = jnp.bfloat16

    t1 = _lowered_conv3x3_weight(params["conv1_w"], cin_pad=16, size=8)   # (1024, 2048)
    t2 = _lowered_conv3x3_weight(params["conv2_w"], cin_pad=32, size=4)   # (512, 1024)

    # Output lane index mod Cout == channel, so a plain tile gives the bias row.
    b1 = np.tile(np.asarray(params["conv1_b"], f32), 8 * 8)[None, :]      # (1, 2048)
    b2 = np.tile(np.asarray(params["conv2_b"], f32), 4 * 4)[None, :]      # (1, 1024)

    # head1 input order in torch: [flatten(C=64,H=2,W=2) of cnn, tabular(8)];
    # fold the (c,h,w)->(h,w,c) pooled lane order into the weight rows.
    h1w = np.asarray(params["head1_w"], f32).T                            # (264, 64)
    h1wc = h1w[:256].reshape(64, 2, 2, 64)                                # (c,h,w,o)
    h1wc = np.transpose(h1wc, (1, 2, 0, 3)).reshape(256, 64)              # row=h*128+w*64+c
    h1wt = h1w[256:]                                                      # (8, 64)

    return {
        "t1": jnp.asarray(t1, bf16),
        "b1": jnp.asarray(b1, jnp.float32),
        "t2": jnp.asarray(t2, bf16),
        "b2": jnp.asarray(b2, jnp.float32),
        "m1w": jnp.asarray(np.asarray(params["mlp1_w"], f32).T, bf16),    # (T, 16)
        "m1b": jnp.asarray(np.asarray(params["mlp1_b"], f32)[None, :], jnp.float32),
        "m2w": jnp.asarray(np.asarray(params["mlp2_w"], f32).T, bf16),    # (16, 8)
        "m2b": jnp.asarray(np.asarray(params["mlp2_b"], f32)[None, :], jnp.float32),
        "h1wc": jnp.asarray(h1wc, bf16),                                  # (256, 64)
        "h1wt": jnp.asarray(h1wt, bf16),                                  # (8, 64)
        "h1b": jnp.asarray(np.asarray(params["head1_b"], f32)[None, :], jnp.float32),
        "h2w": jnp.asarray(np.asarray(params["head2_w"], f32).reshape(1, 64), jnp.float32),
        "h2b": jnp.asarray(np.asarray(params["head2_b"], f32).reshape(1, 1), jnp.float32),
    }


# ----------------------------------------------------------------------------
# Pure-JAX fp32 reference (mirrors the PyTorch module) for a sanity check
# ----------------------------------------------------------------------------
def reference_forward(params, board, tabular):
    dn = ("NCHW", "OIHW", "NCHW")
    x = board.astype(jnp.float32)
    x = lax.conv_general_dilated(x, params["conv1_w"], (1, 1), "SAME",
                                 dimension_numbers=dn)
    x = jnp.maximum(x + params["conv1_b"][None, :, None, None], 0.0)
    x = lax.reduce_window(x, -jnp.inf, lax.max, (1, 1, 2, 2), (1, 1, 2, 2), "VALID")
    x = lax.conv_general_dilated(x, params["conv2_w"], (1, 1), "SAME",
                                 dimension_numbers=dn)
    x = jnp.maximum(x + params["conv2_b"][None, :, None, None], 0.0)
    x = lax.reduce_window(x, -jnp.inf, lax.max, (1, 1, 2, 2), (1, 1, 2, 2), "VALID")
    x = x.reshape(x.shape[0], -1)
    t = jnp.maximum(tabular @ params["mlp1_w"].T + params["mlp1_b"], 0.0)
    t = jnp.maximum(t @ params["mlp2_w"].T + params["mlp2_b"], 0.0)
    o = jnp.concatenate([x, t], axis=1)
    o = jnp.maximum(o @ params["head1_w"].T + params["head1_b"], 0.0)
    return o @ params["head2_w"].T + params["head2_b"]


# ----------------------------------------------------------------------------
# Main
# ----------------------------------------------------------------------------
if __name__ == "__main__":
    key = jax.random.PRNGKey(0)
    k_board, k_tab, k_params = jax.random.split(key, 3)

    batch = 2
    num_tabular_features = 5

    board = jax.random.normal(k_board, (batch, 13, 8, 8), dtype=jnp.float32)
    tabular = jax.random.normal(k_tab, (batch, num_tabular_features),
                                dtype=jnp.float32)

    params = init_params(num_tabular_features, k_params)
    prepped = prepare_params(params)

    fwd = jax.jit(chess_puzzle_cnn_forward)
    out = jax.block_until_ready(fwd(prepped, board, tabular))
    assert out.shape == (batch, 1), out.shape

    # fp32 reference check (kernel uses bf16 MXU operands, fp32 accumulation).
    ref = jax.block_until_ready(reference_forward(params, board, tabular))
    np.testing.assert_allclose(np.asarray(out), np.asarray(ref),
                               rtol=5e-2, atol=5e-2)

    print("KERNEL_OK")
</pallas_src>

<mosaic_0001>
module attributes {stable_mosaic.version = 11 : i64} {
  func.func @_fused_forward_kernel(%arg0: i32, %arg1: memref<8x1024xbf16, #tpu.memory_space<vmem>>, %arg2: memref<8x5xf32, #tpu.memory_space<vmem>>, %arg3: memref<1024x2048xbf16, #tpu.memory_space<vmem>>, %arg4: memref<1x2048xf32, #tpu.memory_space<vmem>>, %arg5: memref<512x1024xbf16, #tpu.memory_space<vmem>>, %arg6: memref<1x1024xf32, #tpu.memory_space<vmem>>, %arg7: memref<5x16xbf16, #tpu.memory_space<vmem>>, %arg8: memref<1x16xf32, #tpu.memory_space<vmem>>, %arg9: memref<16x8xbf16, #tpu.memory_space<vmem>>, %arg10: memref<1x8xf32, #tpu.memory_space<vmem>>, %arg11: memref<256x64xbf16, #tpu.memory_space<vmem>>, %arg12: memref<8x64xbf16, #tpu.memory_space<vmem>>, %arg13: memref<1x64xf32, #tpu.memory_space<vmem>>, %arg14: memref<1x64xf32, #tpu.memory_space<vmem>>, %arg15: memref<1x1xf32, #tpu.memory_space<vmem>>, %arg16: memref<8x1xf32, #tpu.memory_space<vmem>>) attributes {dimension_semantics = [#tpu.dimension_semantics<parallel>], iteration_bounds = array<i64: 1>, scalar_prefetch = 0 : i64, scratch_operands = 0 : i64, tpu.core_type = #tpu.core_type<tc>, window_params = [{transform_indices = @transform_0, window_bounds = array<i64: 8, 1024>}, {transform_indices = @transform_1, window_bounds = array<i64: 8, 5>}, {pipeline_mode = #tpu.pipeline_mode<synchronous>, transform_indices = @transform_2, window_bounds = array<i64: 1024, 2048>}, {pipeline_mode = #tpu.pipeline_mode<synchronous>, transform_indices = @transform_3, window_bounds = array<i64: 1, 2048>}, {pipeline_mode = #tpu.pipeline_mode<synchronous>, transform_indices = @transform_4, window_bounds = array<i64: 512, 1024>}, {pipeline_mode = #tpu.pipeline_mode<synchronous>, transform_indices = @transform_5, window_bounds = array<i64: 1, 1024>}, {pipeline_mode = #tpu.pipeline_mode<synchronous>, transform_indices = @transform_6, window_bounds = array<i64: 5, 16>}, {pipeline_mode = #tpu.pipeline_mode<synchronous>, transform_indices = @transform_7, window_bounds = array<i64: 1, 16>}, {pipeline_mode = #tpu.pipeline_mode<synchronous>, transform_indices = @transform_8, window_bounds = array<i64: 16, 8>}, {pipeline_mode = #tpu.pipeline_mode<synchronous>, transform_indices = @transform_9, window_bounds = array<i64: 1, 8>}, {pipeline_mode = #tpu.pipeline_mode<synchronous>, transform_indices = @transform_10, window_bounds = array<i64: 256, 64>}, {pipeline_mode = #tpu.pipeline_mode<synchronous>, transform_indices = @transform_11, window_bounds = array<i64: 8, 64>}, {pipeline_mode = #tpu.pipeline_mode<synchronous>, transform_indices = @transform_12, window_bounds = array<i64: 1, 64>}, {pipeline_mode = #tpu.pipeline_mode<synchronous>, transform_indices = @transform_13, window_bounds = array<i64: 1, 64>}, {pipeline_mode = #tpu.pipeline_mode<synchronous>, transform_indices = @transform_14, window_bounds = array<i64: 1, 1>}, {transform_indices = @transform_15, window_bounds = array<i64: 8, 1>}]} {
    %c0 = arith.constant 0 : index
    %c0_0 = arith.constant 0 : index
    %0 = vector.load %arg1[%c0, %c0_0] : memref<8x1024xbf16, #tpu.memory_space<vmem>>, vector<8x1024xbf16>
    %c0_1 = arith.constant 0 : index
    %c0_2 = arith.constant 0 : index
    %1 = vector.load %arg3[%c0_1, %c0_2] : memref<1024x2048xbf16, #tpu.memory_space<vmem>>, vector<1024x2048xbf16>
    %cst = arith.constant dense<0.000000e+00> : vector<8x2048xf32>
    %2 = tpu.matmul %0, %1, %cst {dimension_numbers = #tpu.dot_dimension_numbers<[1], [0], [0], [1], [0, 0, 1, 1], [], []>} : vector<8x1024xbf16>, vector<1024x2048xbf16>, vector<8x2048xf32> -> vector<8x2048xf32>
    %c0_3 = arith.constant 0 : index
    %c0_4 = arith.constant 0 : index
    %3 = vector.load %arg4[%c0_3, %c0_4] : memref<1x2048xf32, #tpu.memory_space<vmem>>, vector<1x2048xf32>
    %4 = vector.broadcast %3 : vector<1x2048xf32> to vector<8x2048xf32>
    %5 = arith.addf %2, %4 : vector<8x2048xf32>
    %cst_5 = arith.constant 0.000000e+00 : f32
    %6 = vector.broadcast %cst_5 : f32 to vector<8x2048xf32>
    %7 = arith.maximumf %5, %6 : vector<8x2048xf32>
    %8 = vector.extract_strided_slice %7 {offsets = [0, 0], sizes = [8, 1024], strides = [1, 1]} : vector<8x2048xf32> to vector<8x1024xf32>
    %9 = vector.extract_strided_slice %7 {offsets = [0, 1024], sizes = [8, 1024], strides = [1, 1]} : vector<8x2048xf32> to vector<8x1024xf32>
    %10 = arith.maximumf %8, %9 : vector<8x1024xf32>
    %11 = vector.extract_strided_slice %10 {offsets = [0, 0], sizes = [8, 512], strides = [1, 1]} : vector<8x1024xf32> to vector<8x512xf32>
    %12 = vector.extract_strided_slice %10 {offsets = [0, 512], sizes = [8, 512], strides = [1, 1]} : vector<8x1024xf32> to vector<8x512xf32>
    %13 = arith.maximumf %11, %12 : vector<8x512xf32>
    %14 = arith.truncf %13 : vector<8x512xf32> to vector<8x512xbf16>
    %c0_6 = arith.constant 0 : index
    %c0_7 = arith.constant 0 : index
    %15 = vector.load %arg5[%c0_6, %c0_7] : memref<512x1024xbf16, #tpu.memory_space<vmem>>, vector<512x1024xbf16>
    %cst_8 = arith.constant dense<0.000000e+00> : vector<8x1024xf32>
    %16 = tpu.matmul %14, %15, %cst_8 {dimension_numbers = #tpu.dot_dimension_numbers<[1], [0], [0], [1], [0, 0, 1, 1], [], []>} : vector<8x512xbf16>, vector<512x1024xbf16>, vector<8x1024xf32> -> vector<8x1024xf32>
    %c0_9 = arith.constant 0 : index
    %c0_10 = arith.constant 0 : index
    %17 = vector.load %arg6[%c0_9, %c0_10] : memref<1x1024xf32, #tpu.memory_space<vmem>>, vector<1x1024xf32>
    %18 = vector.broadcast %17 : vector<1x1024xf32> to vector<8x1024xf32>
    %19 = arith.addf %16, %18 : vector<8x1024xf32>
    %cst_11 = arith.constant 0.000000e+00 : f32
    %20 = vector.broadcast %cst_11 : f32 to vector<8x1024xf32>
    %21 = arith.maximumf %19, %20 : vector<8x1024xf32>
    %22 = vector.extract_strided_slice %21 {offsets = [0, 0], sizes = [8, 512], strides = [1, 1]} : vector<8x1024xf32> to vector<8x512xf32>
    %23 = vector.extract_strided_slice %21 {offsets = [0, 512], sizes = [8, 512], strides = [1, 1]} : vector<8x1024xf32> to vector<8x512xf32>
    %24 = arith.maximumf %22, %23 : vector<8x512xf32>
    %25 = vector.extract_strided_slice %24 {offsets = [0, 0], sizes = [8, 256], strides = [1, 1]} : vector<8x512xf32> to vector<8x256xf32>
    %26 = vector.extract_strided_slice %24 {offsets = [0, 256], sizes = [8, 256], strides = [1, 1]} : vector<8x512xf32> to vector<8x256xf32>
    %27 = arith.maximumf %25, %26 : vector<8x256xf32>
    %c0_12 = arith.constant 0 : index
    %c0_13 = arith.constant 0 : index
    %28 = vector.load %arg2[%c0_12, %c0_13] : memref<8x5xf32, #tpu.memory_space<vmem>>, vector<8x5xf32>
    %29 = arith.truncf %28 : vector<8x5xf32> to vector<8x5xbf16>
    %c0_14 = arith.constant 0 : index
    %c0_15 = arith.constant 0 : index
    %30 = vector.load %arg7[%c0_14, %c0_15] : memref<5x16xbf16, #tpu.memory_space<vmem>>, vector<5x16xbf16>
    %cst_16 = arith.constant dense<0.000000e+00> : vector<8x16xf32>
    %31 = tpu.matmul %29, %30, %cst_16 {dimension_numbers = #tpu.dot_dimension_numbers<[1], [0], [0], [1], [0, 0, 1, 1], [], []>} : vector<8x5xbf16>, vector<5x16xbf16>, vector<8x16xf32> -> vector<8x16xf32>
    %c0_17 = arith.constant 0 : index
    %c0_18 = arith.constant 0 : index
    %32 = vector.load %arg8[%c0_17, %c0_18] : memref<1x16xf32, #tpu.memory_space<vmem>>, vector<1x16xf32>
    %33 = vector.broadcast %32 : vector<1x16xf32> to vector<8x16xf32>
    %34 = arith.addf %31, %33 : vector<8x16xf32>
    %cst_19 = arith.constant 0.000000e+00 : f32
    %35 = vector.broadcast %cst_19 : f32 to vector<8x16xf32>
    %36 = arith.maximumf %34, %35 : vector<8x16xf32>
    %37 = arith.truncf %36 : vector<8x16xf32> to vector<8x16xbf16>
    %c0_20 = arith.constant 0 : index
    %c0_21 = arith.constant 0 : index
    %38 = vector.load %arg9[%c0_20, %c0_21] : memref<16x8xbf16, #tpu.memory_space<vmem>>, vector<16x8xbf16>
    %cst_22 = arith.constant dense<0.000000e+00> : vector<8x8xf32>
    %39 = tpu.matmul %37, %38, %cst_22 {dimension_numbers = #tpu.dot_dimension_numbers<[1], [0], [0], [1], [0, 0, 1, 1], [], []>} : vector<8x16xbf16>, vector<16x8xbf16>, vector<8x8xf32> -> vector<8x8xf32>
    %c0_23 = arith.constant 0 : index
    %c0_24 = arith.constant 0 : index
    %40 = vector.load %arg10[%c0_23, %c0_24] : memref<1x8xf32, #tpu.memory_space<vmem>>, vector<1x8xf32>
    %41 = vector.broadcast %40 : vector<1x8xf32> to vector<8x8xf32>
    %42 = arith.addf %39, %41 : vector<8x8xf32>
    %cst_25 = arith.constant 0.000000e+00 : f32
    %43 = vector.broadcast %cst_25 : f32 to vector<8x8xf32>
    %44 = arith.maximumf %42, %43 : vector<8x8xf32>
    %45 = arith.truncf %27 : vector<8x256xf32> to vector<8x256xbf16>
    %c0_26 = arith.constant 0 : index
    %c0_27 = arith.constant 0 : index
    %46 = vector.load %arg11[%c0_26, %c0_27] : memref<256x64xbf16, #tpu.memory_space<vmem>>, vector<256x64xbf16>
    %cst_28 = arith.constant dense<0.000000e+00> : vector<8x64xf32>
    %47 = tpu.matmul %45, %46, %cst_28 {dimension_numbers = #tpu.dot_dimension_numbers<[1], [0], [0], [1], [0, 0, 1, 1], [], []>} : vector<8x256xbf16>, vector<256x64xbf16>, vector<8x64xf32> -> vector<8x64xf32>
    %48 = arith.truncf %44 : vector<8x8xf32> to vector<8x8xbf16>
    %c0_29 = arith.constant 0 : index
    %c0_30 = arith.constant 0 : index
    %49 = vector.load %arg12[%c0_29, %c0_30] : memref<8x64xbf16, #tpu.memory_space<vmem>>, vector<8x64xbf16>
    %cst_31 = arith.constant dense<0.000000e+00> : vector<8x64xf32>
    %50 = tpu.matmul %48, %49, %cst_31 {dimension_numbers = #tpu.dot_dimension_numbers<[1], [0], [0], [1], [0, 0, 1, 1], [], []>} : vector<8x8xbf16>, vector<8x64xbf16>, vector<8x64xf32> -> vector<8x64xf32>
    %51 = arith.addf %47, %50 : vector<8x64xf32>
    %c0_32 = arith.constant 0 : index
    %c0_33 = arith.constant 0 : index
    %52 = vector.load %arg13[%c0_32, %c0_33] : memref<1x64xf32, #tpu.memory_space<vmem>>, vector<1x64xf32>
    %53 = vector.broadcast %52 : vector<1x64xf32> to vector<8x64xf32>
    %54 = arith.addf %51, %53 : vector<8x64xf32>
    %cst_34 = arith.constant 0.000000e+00 : f32
    %55 = vector.broadcast %cst_34 : f32 to vector<8x64xf32>
    %56 = arith.maximumf %54, %55 : vector<8x64xf32>
    %c0_35 = arith.constant 0 : index
    %c0_36 = arith.constant 0 : index
    %57 = vector.load %arg14[%c0_35, %c0_36] : memref<1x64xf32, #tpu.memory_space<vmem>>, vector<1x64xf32>
    %58 = vector.broadcast %57 : vector<1x64xf32> to vector<8x64xf32>
    %59 = arith.mulf %56, %58 : vector<8x64xf32>
    %cst_37 = arith.constant dense<0.000000e+00> : vector<8xf32>
    %60 = vector.multi_reduction <add>, %59, %cst_37 [1] : vector<8x64xf32> to vector<8xf32>
    %61 = vector.shape_cast %60 : vector<8xf32> to vector<8x1xf32>
    %c0_38 = arith.constant 0 : index
    %c0_39 = arith.constant 0 : index
    %62 = vector.load %arg15[%c0_38, %c0_39] : memref<1x1xf32, #tpu.memory_space<vmem>>, vector<1x1xf32>
    %63 = vector.broadcast %62 : vector<1x1xf32> to vector<8x1xf32>
    %64 = arith.addf %61, %63 : vector<8x1xf32>
    %c0_40 = arith.constant 0 : index
    %c0_41 = arith.constant 0 : index
    %65 = vector.load %arg16[%c0_40, %c0_41] : memref<8x1xf32, #tpu.memory_space<vmem>>, vector<8x1xf32>
    tpu.vector_store %arg16[%c0_40, %c0_41], %64 {strides = array<i32>} : memref<8x1xf32, #tpu.memory_space<vmem>>, vector<8x1xf32>,
    return
  }
  func.func @transform_0(%arg0: i32) -> (i32, i32) {
    %c0_i32 = arith.constant 0 : i32
    %c0_i32_0 = arith.constant 0 : i32
    return %arg0, %c0_i32 : i32, i32
  }
  func.func @transform_1(%arg0: i32) -> (i32, i32) {
    %c0_i32 = arith.constant 0 : i32
    %c0_i32_0 = arith.constant 0 : i32
    return %arg0, %c0_i32 : i32, i32
  }
  func.func @transform_2(%arg0: i32) -> (i32, i32) {
    %c0_i32 = arith.constant 0 : i32
    %c0_i32_0 = arith.constant 0 : i32
    %c0_i32_1 = arith.constant 0 : i32
    return %c0_i32, %c0_i32_0 : i32, i32
  }
  func.func @transform_3(%arg0: i32) -> (i32, i32) {
    %c0_i32 = arith.constant 0 : i32
    %c0_i32_0 = arith.constant 0 : i32
    %c0_i32_1 = arith.constant 0 : i32
    return %c0_i32, %c0_i32_0 : i32, i32
  }
  func.func @transform_4(%arg0: i32) -> (i32, i32) {
    %c0_i32 = arith.constant 0 : i32
    %c0_i32_0 = arith.constant 0 : i32
    %c0_i32_1 = arith.constant 0 : i32
    return %c0_i32, %c0_i32_0 : i32, i32
  }
  func.func @transform_5(%arg0: i32) -> (i32, i32) {
    %c0_i32 = arith.constant 0 : i32
    %c0_i32_0 = arith.constant 0 : i32
    %c0_i32_1 = arith.constant 0 : i32
    return %c0_i32, %c0_i32_0 : i32, i32
  }
  func.func @transform_6(%arg0: i32) -> (i32, i32) {
    %c0_i32 = arith.constant 0 : i32
    %c0_i32_0 = arith.constant 0 : i32
    %c0_i32_1 = arith.constant 0 : i32
    return %c0_i32, %c0_i32_0 : i32, i32
  }
  func.func @transform_7(%arg0: i32) -> (i32, i32) {
    %c0_i32 = arith.constant 0 : i32
    %c0_i32_0 = arith.constant 0 : i32
    %c0_i32_1 = arith.constant 0 : i32
    return %c0_i32, %c0_i32_0 : i32, i32
  }
  func.func @transform_8(%arg0: i32) -> (i32, i32) {
    %c0_i32 = arith.constant 0 : i32
    %c0_i32_0 = arith.constant 0 : i32
    %c0_i32_1 = arith.constant 0 : i32
    return %c0_i32, %c0_i32_0 : i32, i32
  }
  func.func @transform_9(%arg0: i32) -> (i32, i32) {
    %c0_i32 = arith.constant 0 : i32
    %c0_i32_0 = arith.constant 0 : i32
    %c0_i32_1 = arith.constant 0 : i32
    return %c0_i32, %c0_i32_0 : i32, i32
  }
  func.func @transform_10(%arg0: i32) -> (i32, i32) {
    %c0_i32 = arith.constant 0 : i32
    %c0_i32_0 = arith.constant 0 : i32
    %c0_i32_1 = arith.constant 0 : i32
    return %c0_i32, %c0_i32_0 : i32, i32
  }
  func.func @transform_11(%arg0: i32) -> (i32, i32) {
    %c0_i32 = arith.constant 0 : i32
    %c0_i32_0 = arith.constant 0 : i32
    %c0_i32_1 = arith.constant 0 : i32
    return %c0_i32, %c0_i32_0 : i32, i32
  }
  func.func @transform_12(%arg0: i32) -> (i32, i32) {
    %c0_i32 = arith.constant 0 : i32
    %c0_i32_0 = arith.constant 0 : i32
    %c0_i32_1 = arith.constant 0 : i32
    return %c0_i32, %c0_i32_0 : i32, i32
  }
  func.func @transform_13(%arg0: i32) -> (i32, i32) {
    %c0_i32 = arith.constant 0 : i32
    %c0_i32_0 = arith.constant 0 : i32
    %c0_i32_1 = arith.constant 0 : i32
    return %c0_i32, %c0_i32_0 : i32, i32
  }
  func.func @transform_14(%arg0: i32) -> (i32, i32) {
    %c0_i32 = arith.constant 0 : i32
    %c0_i32_0 = arith.constant 0 : i32
    %c0_i32_1 = arith.constant 0 : i32
    return %c0_i32, %c0_i32_0 : i32, i32
  }
  func.func @transform_15(%arg0: i32) -> (i32, i32) {
    %c0_i32 = arith.constant 0 : i32
    %c0_i32_0 = arith.constant 0 : i32
    return %arg0, %c0_i32 : i32, i32
  }
}

</mosaic_0001>

<llo_original>
// kernel: chess_puzzle_cnn_forward.1
$region0: #{chess_puzzle_cnn_forward.1}
  #allocation0 [shape = 'u32[]', space=smem, size = 0x4, offset = 0x4, fixed_abs, tag = 'smem constant byte address 0x4 - core index']
  #allocation1 [shape = 'u32[72,128]{1,0:T(1,128)}', space=vmem, size = 0x9000, scoped, tag = 'internal scratch']
  #allocation2 [shape = 'f32[1,1]{1,0:T(1,128)S(1)}', space=vmem, size = 0x200, scoped, tag = 'scoped memory for chess_puzzle_cnn_forward.1']
  %s0 = inlined_call_operand.vmem [shape: bf16[8,1024], index: 0, kind: input, shape index: {}]
  %s1 = inlined_call_operand.vmem [shape: f32[8,5], index: 1, kind: input, shape index: {}]
  %s2 = inlined_call_operand.hbm [shape: bf16[1024,2048], index: 2, kind: input, shape index: {}]
  %s3 = inlined_call_operand.hbm [shape: f32[1,2048], index: 3, kind: input, shape index: {}]
  %s4 = inlined_call_operand.hbm [shape: bf16[512,1024], index: 4, kind: input, shape index: {}]
  %s5 = inlined_call_operand.hbm [shape: f32[1,1024], index: 5, kind: input, shape index: {}]
  %s6 = inlined_call_operand.hbm [shape: bf16[5,16], index: 6, kind: input, shape index: {}]
  %s7 = inlined_call_operand.hbm [shape: f32[1,16], index: 7, kind: input, shape index: {}]
  %s8 = inlined_call_operand.vmem [shape: bf16[16,8], index: 8, kind: input, shape index: {}]
  %s9 = inlined_call_operand.hbm [shape: f32[1,8], index: 9, kind: input, shape index: {}]
  %s10 = inlined_call_operand.vmem [shape: bf16[256,64], index: 10, kind: input, shape index: {}]
  %s11 = inlined_call_operand.hbm [shape: bf16[8,64], index: 11, kind: input, shape index: {}]
  %s12 = inlined_call_operand.hbm [shape: f32[1,64], index: 12, kind: input, shape index: {}]
  %s13 = inlined_call_operand.hbm [shape: f32[1,64], index: 13, kind: input, shape index: {}]
  %s14 = inlined_call_operand.<no memory space> [shape: f32[1,1], index: 14, kind: input, shape index: {}]
  %s15 = inlined_call_operand.vmem [shape: f32[8,1], index: 15, kind: output, shape index: {}]
  %s16 = sld [smem:[#allocation0]]
  $region110: #{chess_puzzle_cnn_forward.1} parent=0
    _
  %s18 = ssub.s32 1, %s16
  %s19 = scalar_select 0, %s18, %s16
  %v20 = vstv %s14
  %21 = vst [vmem:[#allocation2] sm:$0x1] %v20
  $region1: #{chess_puzzle_cnn_forward.1} parent=0
    #allocation3 [shape = 'u8[4194304]{0}', space=vmem, size = 0x400000, scoped, tag = 'input window, operand 2, single buffered']
    #allocation4 [shape = 's32[1]{0}', space=sflag, size = 0x4, scoped, tag = 'scoped memory for chess_puzzle_cnn_forward.1']
    #allocation5 [shape = 'u8[8192]{0}', space=vmem, size = 0x2000, scoped, tag = 'input window, operand 3, single buffered']
    #allocation6 [shape = 's32[1]{0}', space=sflag, size = 0x4, scoped, tag = 'scoped memory for chess_puzzle_cnn_forward.1']
    #allocation7 [shape = 'u8[1048576]{0}', space=vmem, size = 0x100000, scoped, tag = 'input window, operand 4, single buffered']
    #allocation8 [shape = 'u8[4096]{0}', space=vmem, size = 0x1000, scoped, tag = 'input window, operand 5, single buffered']
    #allocation9 [shape = 's32[1]{0}', space=sflag, size = 0x4, scoped, tag = 'scoped memory for chess_puzzle_cnn_forward.1']
    #allocation10 [shape = 'u8[2048]{0}', space=vmem, size = 0x800, scoped, tag = 'input window, operand 6, single buffered']
    #allocation11 [shape = 'u8[512]{0}', space=vmem, size = 0x400, scoped, tag = 'input window, operand 7, single buffered']
    #allocation12 [shape = 's32[1]{0}', space=sflag, size = 0x4, scoped, tag = 'scoped memory for chess_puzzle_cnn_forward.1']
    #allocation13 [shape = 'u8[512]{0}', space=vmem, size = 0x400, scoped, tag = 'input window, operand 9, single buffered']
    #allocation14 [shape = 'u8[2048]{0}', space=vmem, size = 0x800, scoped, tag = 'input window, operand 11, single buffered']
    #allocation15 [shape = 's32[1]{0}', space=sflag, size = 0x4, scoped, tag = 'scoped memory for chess_puzzle_cnn_forward.1']
    #allocation16 [shape = 'u8[512]{0}', space=vmem, size = 0x400, scoped, tag = 'input window, operand 12, single buffered']
    #allocation17 [shape = 'u8[512]{0}', space=vmem, size = 0x400, scoped, tag = 'input window, operand 13, single buffered']
    #allocation18 [shape = 's32[1]{0}', space=sflag, size = 0x4, scoped, tag = 'scoped memory for chess_puzzle_cnn_forward.1']
    %22 = vsyncpa [#allocation4], 0
    %23 = vsyncpa [#allocation6], 0
    %24 = vsyncpa [#allocation9], 0
    %25 = vsyncpa [#allocation12], 0
    %26 = vsyncpa [#allocation15], 0
    %27 = vsyncpa [#allocation18], 0
    // Predicated region
    $region2: #{chess_puzzle_cnn_forward.1} parent=1 // pred_check
      _
    $region3: #{chess_puzzle_cnn_forward.1} parent=1 // pred_check_branch
      %29 = sbr.rel (0) target = $region5
    $region4: #{chess_puzzle_cnn_forward.1} parent=1 // pred_region
      _
    $region5: #{chess_puzzle_cnn_forward.1} parent=1 // pred_fallthru
      _
    // Predicated region
    $region6: #{chess_puzzle_cnn_forward.1} parent=1 // pred_check
      _
    $region7: #{chess_puzzle_cnn_forward.1} parent=1 // pred_check_branch
      %31 = sbr.rel (0) target = $region9
    $region8: #{chess_puzzle_cnn_forward.1} parent=1 // pred_region
      _
    $region9: #{chess_puzzle_cnn_forward.1} parent=1 // pred_fallthru
      _
    // Predicated region
    $region10: #{chess_puzzle_cnn_forward.1} parent=1 // pred_check
      _
    $region11: #{chess_puzzle_cnn_forward.1} parent=1 // pred_check_branch
      %33 = sbr.rel (0) target = $region13
    $region12: #{chess_puzzle_cnn_forward.1} parent=1 // pred_region
      %35 = vsyncadd [#allocation4], 0
      %s36 = sshll.u32 %s2, 4
      %s37 = int_to_ptr.hbm [resolvable:$true] %s36
      %s38 = sshll.u32 [#allocation3], 4
      %s39 = int_to_ptr.vmem [resolvable:$true] %s38
      %44 = dma.hbm_to_vmem [thread:$0]  %s37, 131072, %s39, [#allocation4], 1024, 1024, 64
    $region13: #{chess_puzzle_cnn_forward.1} parent=1 // pred_fallthru
      _
    // Predicated region
    $region14: #{chess_puzzle_cnn_forward.1} parent=1 // pred_check
      _
    $region15: #{chess_puzzle_cnn_forward.1} parent=1 // pred_check_branch
      %46 = sbr.rel (0) target = $region17
    $region16: #{chess_puzzle_cnn_forward.1} parent=1 // pred_region
      %48 = vsyncadd [#allocation6], 0
      %s50 = sshll.u32 %s3, 4
      %s51 = int_to_ptr.hbm [resolvable:$true] %s50
      %s52 = sshll.u32 [#allocation5], 4
      %s53 = int_to_ptr.vmem [resolvable:$true] %s52
      %55 = dma.hbm_to_vmem [thread:$0]  %s51, 256, %s53, [#allocation6]
    $region17: #{chess_puzzle_cnn_forward.1} parent=1 // pred_fallthru
      _
    // Predicated region
    $region18: #{chess_puzzle_cnn_forward.1} parent=1 // pred_check
      _
    $region19: #{chess_puzzle_cnn_forward.1} parent=1 // pred_check_branch
      %57 = sbr.rel (0) target = $region21
    $region20: #{chess_puzzle_cnn_forward.1} parent=1 // pred_region
      %59 = vsyncadd [#allocation6], 0
      %s60 = sshll.u32 %s4, 4
      %s61 = int_to_ptr.hbm [resolvable:$true] %s60
      %s62 = sshll.u32 [#allocation7], 4
      %s63 = int_to_ptr.vmem [resolvable:$true] %s62
      %68 = dma.hbm_to_vmem [thread:$0]  %s61, 32768, %s63, [#allocation6], 512, 512, 32
    $region21: #{chess_puzzle_cnn_forward.1} parent=1 // pred_fallthru
      _
    // Predicated region
    $region22: #{chess_puzzle_cnn_forward.1} parent=1 // pred_check
      _
    $region23: #{chess_puzzle_cnn_forward.1} parent=1 // pred_check_branch
      %70 = sbr.rel (0) target = $region25
    $region24: #{chess_puzzle_cnn_forward.1} parent=1 // pred_region
      %72 = vsyncadd [#allocation9], 0
      %s74 = sshll.u32 %s5, 4
      %s75 = int_to_ptr.hbm [resolvable:$true] %s74
      %s76 = sshll.u32 [#allocation8], 4
      %s77 = int_to_ptr.vmem [resolvable:$true] %s76
      %79 = dma.hbm_to_vmem [thread:$0]  %s75, 128, %s77, [#allocation9]
    $region25: #{chess_puzzle_cnn_forward.1} parent=1 // pred_fallthru
      _
    // Predicated region
    $region26: #{chess_puzzle_cnn_forward.1} parent=1 // pred_check
      _
    $region27: #{chess_puzzle_cnn_forward.1} parent=1 // pred_check_branch
      %81 = sbr.rel (0) target = $region29
    $region28: #{chess_puzzle_cnn_forward.1} parent=1 // pred_region
      %83 = vsyncadd [#allocation9], 0
      %s85 = sshll.u32 %s6, 4
      %s86 = int_to_ptr.hbm [resolvable:$true] %s85
      %s87 = sshll.u32 [#allocation10], 4
      %s88 = int_to_ptr.vmem [resolvable:$true] %s87
      %90 = dma.hbm_to_vmem [thread:$0]  %s86, 64, %s88, [#allocation9]
    $region29: #{chess_puzzle_cnn_forward.1} parent=1 // pred_fallthru
      _
    // Predicated region
    $region30: #{chess_puzzle_cnn_forward.1} parent=1 // pred_check
      _
    $region31: #{chess_puzzle_cnn_forward.1} parent=1 // pred_check_branch
      %92 = sbr.rel (0) target = $region33
    $region32: #{chess_puzzle_cnn_forward.1} parent=1 // pred_region
      %94 = vsyncadd [#allocation12], 0
      %s96 = sshll.u32 %s7, 4
      %s97 = int_to_ptr.hbm [resolvable:$true] %s96
      %s98 = sshll.u32 [#allocation11], 4
      %s99 = int_to_ptr.vmem [resolvable:$true] %s98
      %101 = dma.hbm_to_vmem [thread:$0]  %s97, 16, %s99, [#allocation12]
    $region33: #{chess_puzzle_cnn_forward.1} parent=1 // pred_fallthru
      _
    // Predicated region
    $region34: #{chess_puzzle_cnn_forward.1} parent=1 // pred_check
      _
    $region35: #{chess_puzzle_cnn_forward.1} parent=1 // pred_check_branch
      %103 = sbr.rel (0) target = $region37
    $region36: #{chess_puzzle_cnn_forward.1} parent=1 // pred_region
      _
    $region37: #{chess_puzzle_cnn_forward.1} parent=1 // pred_fallthru
      _
    // Predicated region
    $region38: #{chess_puzzle_cnn_forward.1} parent=1 // pred_check
      _
    $region39: #{chess_puzzle_cnn_forward.1} parent=1 // pred_check_branch
      %105 = sbr.rel (0) target = $region41
    $region40: #{chess_puzzle_cnn_forward.1} parent=1 // pred_region
      %107 = vsyncadd [#allocation12], 0
      %s109 = sshll.u32 %s9, 4
      %s110 = int_to_ptr.hbm [resolvable:$true] %s109
      %s111 = sshll.u32 [#allocation13], 4
      %s112 = int_to_ptr.vmem [resolvable:$true] %s111
      %114 = dma.hbm_to_vmem [thread:$0]  %s110, 16, %s112, [#allocation12]
    $region41: #{chess_puzzle_cnn_forward.1} parent=1 // pred_fallthru
      _
    // Predicated region
    $region42: #{chess_puzzle_cnn_forward.1} parent=1 // pred_check
      _
    $region43: #{chess_puzzle_cnn_forward.1} parent=1 // pred_check_branch
      %116 = sbr.rel (0) target = $region45
    $region44: #{chess_puzzle_cnn_forward.1} parent=1 // pred_region
      _
    $region45: #{chess_puzzle_cnn_forward.1} parent=1 // pred_fallthru
      _
    // Predicated region
    $region46: #{chess_puzzle_cnn_forward.1} parent=1 // pred_check
      _
    $region47: #{chess_puzzle_cnn_forward.1} parent=1 // pred_check_branch
      %118 = sbr.rel (0) target = $region49
    $region48: #{chess_puzzle_cnn_forward.1} parent=1 // pred_region
      %120 = vsyncadd [#allocation15], 0
      %s122 = sshll.u32 %s11, 4
      %s123 = int_to_ptr.hbm [resolvable:$true] %s122
      %s124 = sshll.u32 [#allocation14], 4
      %s125 = int_to_ptr.vmem [resolvable:$true] %s124
      %127 = dma.hbm_to_vmem [thread:$0]  %s123, 64, %s125, [#allocation15]
    $region49: #{chess_puzzle_cnn_forward.1} parent=1 // pred_fallthru
      _
    // Predicated region
    $region50: #{chess_puzzle_cnn_forward.1} parent=1 // pred_check
      _
    $region51: #{chess_puzzle_cnn_forward.1} parent=1 // pred_check_branch
      %129 = sbr.rel (0) target = $region53
    $region52: #{chess_puzzle_cnn_forward.1} parent=1 // pred_region
      %131 = vsyncadd [#allocation15], 0
      %s133 = sshll.u32 %s12, 4
      %s134 = int_to_ptr.hbm [resolvable:$true] %s133
      %s135 = sshll.u32 [#allocation16], 4
      %s136 = int_to_ptr.vmem [resolvable:$true] %s135
      %138 = dma.hbm_to_vmem [thread:$0]  %s134, 16, %s136, [#allocation15]
    $region53: #{chess_puzzle_cnn_forward.1} parent=1 // pred_fallthru
      _
    // Predicated region
    $region54: #{chess_puzzle_cnn_forward.1} parent=1 // pred_check
      _
    $region55: #{chess_puzzle_cnn_forward.1} parent=1 // pred_check_branch
      %140 = sbr.rel (0) target = $region57
    $region56: #{chess_puzzle_cnn_forward.1} parent=1 // pred_region
      %142 = vsyncadd [#allocation18], 0
      %s144 = sshll.u32 %s13, 4
      %s145 = int_to_ptr.hbm [resolvable:$true] %s144
      %s146 = sshll.u32 [#allocation17], 4
      %s147 = int_to_ptr.vmem [resolvable:$true] %s146
      %149 = dma.hbm_to_vmem [thread:$0]  %s145, 16, %s147, [#allocation18]
    $region57: #{chess_puzzle_cnn_forward.1} parent=1 // pred_fallthru
      _
    // Predicated region
    $region58: #{chess_puzzle_cnn_forward.1} parent=1 // pred_check
      _
    $region59: #{chess_puzzle_cnn_forward.1} parent=1 // pred_check_branch
      %151 = sbr.rel (0) target = $region61
    $region60: #{chess_puzzle_cnn_forward.1} parent=1 // pred_region
      _
    $region61: #{chess_puzzle_cnn_forward.1} parent=1 // pred_fallthru
      _
    // Predicated region
    $region62: #{chess_puzzle_cnn_forward.1} parent=1 // pred_check
      _
    $region63: #{chess_puzzle_cnn_forward.1} parent=1 // pred_check_branch
      %153 = sbr.rel (0) target = $region65
    $region64: #{chess_puzzle_cnn_forward.1} parent=1 // pred_region
      %155 = dma.done [#allocation4], 131072
    $region65: #{chess_puzzle_cnn_forward.1} parent=1 // pred_fallthru
      _
    // Predicated region
    $region66: #{chess_puzzle_cnn_forward.1} parent=1 // pred_check
      _
    $region67: #{chess_puzzle_cnn_forward.1} parent=1 // pred_check_branch
      %157 = sbr.rel (0) target = $region69
    $region68: #{chess_puzzle_cnn_forward.1} parent=1 // pred_region
      %159 = dma.done [#allocation6], 256
    $region69: #{chess_puzzle_cnn_forward.1} parent=1 // pred_fallthru
      _
    // Predicated region
    $region70: #{chess_puzzle_cnn_forward.1} parent=1 // pred_check
      _
    $region71: #{chess_puzzle_cnn_forward.1} parent=1 // pred_check_branch
      %161 = sbr.rel (0) target = $region73
    $region72: #{chess_puzzle_cnn_forward.1} parent=1 // pred_region
      %163 = dma.done [#allocation6], 32768
    $region73: #{chess_puzzle_cnn_forward.1} parent=1 // pred_fallthru
      _
    // Predicated region
    $region74: #{chess_puzzle_cnn_forward.1} parent=1 // pred_check
      _
    $region75: #{chess_puzzle_cnn_forward.1} parent=1 // pred_check_branch
      %165 = sbr.rel (0) target = $region77
    $region76: #{chess_puzzle_cnn_forward.1} parent=1 // pred_region
      %167 = dma.done [#allocation9], 128
    $region77: #{chess_puzzle_cnn_forward.1} parent=1 // pred_fallthru
      _
    // Predicated region
    $region78: #{chess_puzzle_cnn_forward.1} parent=1 // pred_check
      _
    $region79: #{chess_puzzle_cnn_forward.1} parent=1 // pred_check_branch
      %169 = sbr.rel (0) target = $region81
    $region80: #{chess_puzzle_cnn_forward.1} parent=1 // pred_region
      %171 = dma.done [#allocation9], 64
    $region81: #{chess_puzzle_cnn_forward.1} parent=1 // pred_fallthru
      _
    // Predicated region
    $region82: #{chess_puzzle_cnn_forward.1} parent=1 // pred_check
      _
    $region83: #{chess_puzzle_cnn_forward.1} parent=1 // pred_check_branch
      %173 = sbr.rel (0) target = $region85
    $region84: #{chess_puzzle_cnn_forward.1} parent=1 // pred_region
      %175 = dma.done [#allocation12], 16
    $region85: #{chess_puzzle_cnn_forward.1} parent=1 // pred_fallthru
      _
    // Predicated region
    $region86: #{chess_puzzle_cnn_forward.1} parent=1 // pred_check
      _
    $region87: #{chess_puzzle_cnn_forward.1} parent=1 // pred_check_branch
      %177 = sbr.rel (0) target = $region89
    $region88: #{chess_puzzle_cnn_forward.1} parent=1 // pred_region
      %179 = dma.done [#allocation12], 16
    $region89: #{chess_puzzle_cnn_forward.1} parent=1 // pred_fallthru
      _
    // Predicated region
    $region90: #{chess_puzzle_cnn_forward.1} parent=1 // pred_check
      _
    $region91: #{chess_puzzle_cnn_forward.1} parent=1 // pred_check_branch
      %181 = sbr.rel (0) target = $region93
    $region92: #{chess_puzzle_cnn_forward.1} parent=1 // pred_region
      %183 = dma.done [#allocation15], 64
    $region93: #{chess_puzzle_cnn_forward.1} parent=1 // pred_fallthru
      _
    // Predicated region
    $region94: #{chess_puzzle_cnn_forward.1} parent=1 // pred_check
      _
    $region95: #{chess_puzzle_cnn_forward.1} parent=1 // pred_check_branch
      %185 = sbr.rel (0) target = $region97
    $region96: #{chess_puzzle_cnn_forward.1} parent=1 // pred_region
      %187 = dma.done [#allocation15], 16
    $region97: #{chess_puzzle_cnn_forward.1} parent=1 // pred_fallthru
      _
    // Predicated region
    $region98: #{chess_puzzle_cnn_forward.1} parent=1 // pred_check
      _
    $region99: #{chess_puzzle_cnn_forward.1} parent=1 // pred_check_branch
      %189 = sbr.rel (0) target = $region101
    $region100: #{chess_puzzle_cnn_forward.1} parent=1 // pred_region
      %191 = dma.done [#allocation18], 16
    $region101: #{chess_puzzle_cnn_forward.1} parent=1 // pred_fallthru
      _
    %v193 = vld [vmem:[%s0] sm:$0xff]
    %v194 = vld [vmem:[%s0 + $0x8] sm:$0xff]
    %v195 = vld [vmem:[%s0 + $0x10] sm:$0xff]
    %v196 = vld [vmem:[%s0 + $0x18] sm:$0xff]
    %v197 = vld [vmem:[#allocation3] sm:$0xff]
    %v198 = vld [vmem:[#allocation3 + $0x8] sm:$0xff]
    %v199 = vld [vmem:[#allocation3 + $0x10] sm:$0xff]
    %v200 = vld [vmem:[#allocation3 + $0x18] sm:$0xff]
    %v201 = vld [vmem:[#allocation3 + $0x20] sm:$0xff]
    %v202 = vld [vmem:[#allocation3 + $0x28] sm:$0xff]
    %v203 = vld [vmem:[#allocation3 + $0x30] sm:$0xff]
    %v204 = vld [vmem:[#allocation3 + $0x38] sm:$0xff]
    %v205 = vld [vmem:[#allocation3 + $0x40] sm:$0xff]
    %v206 = vld [vmem:[#allocation3 + $0x48] sm:$0xff]
    %v207 = vld [vmem:[#allocation3 + $0x50] sm:$0xff]
    %v208 = vld [vmem:[#allocation3 + $0x58] sm:$0xff]
    %v209 = vld [vmem:[#allocation3 + $0x60] sm:$0xff]
    %v210 = vld [vmem:[#allocation3 + $0x68] sm:$0xff]
    %v211 = vld [vmem:[#allocation3 + $0x70] sm:$0xff]
    %v212 = vld [vmem:[#allocation3 + $0x78] sm:$0xff]
    %v213 = vld [vmem:[#allocation3 + $0x80] sm:$0xff]
    %v214 = vld [vmem:[#allocation3 + $0x88] sm:$0xff]
    %v215 = vld [vmem:[#allocation3 + $0x90] sm:$0xff]
    %v216 = vld [vmem:[#allocation3 + $0x98] sm:$0xff]
    %v217 = vld [vmem:[#allocation3 + $0xa0] sm:$0xff]
    %v218 = vld [vmem:[#allocation3 + $0xa8] sm:$0xff]
    %v219 = vld [vmem:[#allocation3 + $0xb0] sm:$0xff]
    %v220 = vld [vmem:[#allocation3 + $0xb8] sm:$0xff]
    %v221 = vld [vmem:[#allocation3 + $0xc0] sm:$0xff]
    %v222 = vld [vmem:[#allocation3 + $0xc8] sm:$0xff]
    %v223 = vld [vmem:[#allocation3 + $0xd0] sm:$0xff]
    %v224 = vld [vmem:[#allocation3 + $0xd8] sm:$0xff]
    %v225 = vld [vmem:[#allocation3 + $0xe0] sm:$0xff]
    %v226 = vld [vmem:[#allocation3 + $0xe8] sm:$0xff]
    %v227 = vld [vmem:[#allocation3 + $0xf0] sm:$0xff]
    %v228 = vld [vmem:[#allocation3 + $0xf8] sm:$0xff]
    %v229 = vld [vmem:[#allocation3 + $0x100] sm:$0xff]
    %v230 = vld [vmem:[#allocation3 + $0x108] sm:$0xff]
    %v231 = vld [vmem:[#allocation3 + $0x110] sm:$0xff]
    %v232 = vld [vmem:[#allocation3 + $0x118] sm:$0xff]
    %v233 = vld [vmem:[#allocation3 + $0x120] sm:$0xff]
    %v234 = vld [vmem:[#allocation3 + $0x128] sm:$0xff]
    %v235 = vld [vmem:[#allocation3 + $0x130] sm:$0xff]
    %v236 = vld [vmem:[#allocation3 + $0x138] sm:$0xff]
    %v237 = vld [vmem:[#allocation3 + $0x140] sm:$0xff]
    %v238 = vld [vmem:[#allocation3 + $0x148] sm:$0xff]
    %v239 = vld [vmem:[#allocation3 + $0x150] sm:$0xff]
    %v240 = vld [vmem:[#allocation3 + $0x158] sm:$0xff]
    %v241 = vld [vmem:[#allocation3 + $0x160] sm:$0xff]
    %v242 = vld [vmem:[#allocation3 + $0x168] sm:$0xff]
    %v243 = vld [vmem:[#allocation3 + $0x170] sm:$0xff]
    %v244 = vld [vmem:[#allocation3 + $0x178] sm:$0xff]
    %v245 = vld [vmem:[#allocation3 + $0x180] sm:$0xff]
    %v246 = vld [vmem:[#allocation3 + $0x188] sm:$0xff]
    %v247 = vld [vmem:[#allocation3 + $0x190] sm:$0xff]
    %v248 = vld [vmem:[#allocation3 + $0x198] sm:$0xff]
    %v249 = vld [vmem:[#allocation3 + $0x1a0] sm:$0xff]
    %v250 = vld [vmem:[#allocation3 + $0x1a8] sm:$0xff]
    %v251 = vld [vmem:[#allocation3 + $0x1b0] sm:$0xff]
    %v252 = vld [vmem:[#allocation3 + $0x1b8] sm:$0xff]
    %v253 = vld [vmem:[#allocation3 + $0x1c0] sm:$0xff]
    %v254 = vld [vmem:[#allocation3 + $0x1c8] sm:$0xff]
    %v255 = vld [vmem:[#allocation3 + $0x1d0] sm:$0xff]
    %v256 = vld [vmem:[#allocation3 + $0x1d8] sm:$0xff]
    %v257 = vld [vmem:[#allocation3 + $0x1e0] sm:$0xff]
    %v258 = vld [vmem:[#allocation3 + $0x1e8] sm:$0xff]
    %v259 = vld [vmem:[#allocation3 + $0x1f0] sm:$0xff]
    %v260 = vld [vmem:[#allocation3 + $0x1f8] sm:$0xff]
    %v261 = vld [vmem:[#allocation3 + $0x200] sm:$0xff]
    %v262 = vld [vmem:[#allocation3 + $0x208] sm:$0xff]
    %v263 = vld [vmem:[#allocation3 + $0x210] sm:$0xff]
    %v264 = vld [vmem:[#allocation3 + $0x218] sm:$0xff]
    %v265 = vld [vmem:[#allocation3 + $0x220] sm:$0xff]
    %v266 = vld [vmem:[#allocation3 + $0x228] sm:$0xff]
    %v267 = vld [vmem:[#allocation3 + $0x230] sm:$0xff]
    %v268 = vld [vmem:[#allocation3 + $0x238] sm:$0xff]
    %v269 = vld [vmem:[#allocation3 + $0x240] sm:$0xff]
    %v270 = vld [vmem:[#allocation3 + $0x248] sm:$0xff]
    %v271 = vld [vmem:[#allocation3 + $0x250] sm:$0xff]
    %v272 = vld [vmem:[#allocation3 + $0x258] sm:$0xff]
    %v273 = vld [vmem:[#allocation3 + $0x260] sm:$0xff]
    %v274 = vld [vmem:[#allocation3 + $0x268] sm:$0xff]
    %v275 = vld [vmem:[#allocation3 + $0x270] sm:$0xff]
    %v276 = vld [vmem:[#allocation3 + $0x278] sm:$0xff]
    %v277 = vld [vmem:[#allocation3 + $0x280] sm:$0xff]
    %v278 = vld [vmem:[#allocation3 + $0x288] sm:$0xff]
    %v279 = vld [vmem:[#allocation3 + $0x290] sm:$0xff]
    %v280 = vld [vmem:[#allocation3 + $0x298] sm:$0xff]
    %v281 = vld [vmem:[#allocation3 + $0x2a0] sm:$0xff]
    %v282 = vld [vmem:[#allocation3 + $0x2a8] sm:$0xff]
    %v283 = vld [vmem:[#allocation3 + $0x2b0] sm:$0xff]
    %v284 = vld [vmem:[#allocation3 + $0x2b8] sm:$0xff]
    %v285 = vld [vmem:[#allocation3 + $0x2c0] sm:$0xff]
    %v286 = vld [vmem:[#allocation3 + $0x2c8] sm:$0xff]
    %v287 = vld [vmem:[#allocation3 + $0x2d0] sm:$0xff]
    %v288 = vld [vmem:[#allocation3 + $0x2d8] sm:$0xff]
    %v289 = vld [vmem:[#allocation3 + $0x2e0] sm:$0xff]
    %v290 = vld [vmem:[#allocation3 + $0x2e8] sm:$0xff]
    %v291 = vld [vmem:[#allocation3 + $0x2f0] sm:$0xff]
    %v292 = vld [vmem:[#allocation3 + $0x2f8] sm:$0xff]
    %v293 = vld [vmem:[#allocation3 + $0x300] sm:$0xff]
    %v294 = vld [vmem:[#allocation3 + $0x308] sm:$0xff]
    %v295 = vld [vmem:[#allocation3 + $0x310] sm:$0xff]
    %v296 = vld [vmem:[#allocation3 + $0x318] sm:$0xff]
    %v297 = vld [vmem:[#allocation3 + $0x320] sm:$0xff]
    %v298 = vld [vmem:[#allocation3 + $0x328] sm:$0xff]
    %v299 = vld [vmem:[#allocation3 + $0x330] sm:$0xff]
    %v300 = vld [vmem:[#allocation3 + $0x338] sm:$0xff]
    %v301 = vld [vmem:[#allocation3 + $0x340] sm:$0xff]
    %v302 = vld [vmem:[#allocation3 + $0x348] sm:$0xff]
    %v303 = vld [vmem:[#allocation3 + $0x350] sm:$0xff]
    %v304 = vld [vmem:[#allocation3 + $0x358] sm:$0xff]
    %v305 = vld [vmem:[#allocation3 + $0x360] sm:$0xff]
    %v306 = vld [vmem:[#allocation3 + $0x368] sm:$0xff]
    %v307 = vld [vmem:[#allocation3 + $0x370] sm:$0xff]
    %v308 = vld [vmem:[#allocation3 + $0x378] sm:$0xff]
    %v309 = vld [vmem:[#allocation3 + $0x380] sm:$0xff]
    %v310 = vld [vmem:[#allocation3 + $0x388] sm:$0xff]
    %v311 = vld [vmem:[#allocation3 + $0x390] sm:$0xff]
    %v312 = vld [vmem:[#allocation3 + $0x398] sm:$0xff]
    %v313 = vld [vmem:[#allocation3 + $0x3a0] sm:$0xff]
    %v314 = vld [vmem:[#allocation3 + $0x3a8] sm:$0xff]
    %v315 = vld [vmem:[#allocation3 + $0x3b0] sm:$0xff]
    %v316 = vld [vmem:[#allocation3 + $0x3b8] sm:$0xff]
    %v317 = vld [vmem:[#allocation3 + $0x3c0] sm:$0xff]
    %v318 = vld [vmem:[#allocation3 + $0x3c8] sm:$0xff]
    %v319 = vld [vmem:[#allocation3 + $0x3d0] sm:$0xff]
    %v320 = vld [vmem:[#allocation3 + $0x3d8] sm:$0xff]
    %v321 = vld [vmem:[#allocation3 + $0x3e0] sm:$0xff]
    %v322 = vld [vmem:[#allocation3 + $0x3e8] sm:$0xff]
    %v323 = vld [vmem:[#allocation3 + $0x3f0] sm:$0xff]
    %v324 = vld [vmem:[#allocation3 + $0x3f8] sm:$0xff]
    %v325 = vld [vmem:[#allocation3 + $0x400] sm:$0xff]
    %v326 = vld [vmem:[#allocation3 + $0x408] sm:$0xff]
    %v327 = vld [vmem:[#allocation3 + $0x410] sm:$0xff]
    %v328 = vld [vmem:[#allocation3 + $0x418] sm:$0xff]
    %v329 = vld [vmem:[#allocation3 + $0x420] sm:$0xff]
    %v330 = vld [vmem:[#allocation3 + $0x428] sm:$0xff]
    %v331 = vld [vmem:[#allocation3 + $0x430] sm:$0xff]
    %v332 = vld [vmem:[#allocation3 + $0x438] sm:$0xff]
    %v333 = vld [vmem:[#allocation3 + $0x440] sm:$0xff]
    %v334 = vld [vmem:[#allocation3 + $0x448] sm:$0xff]
    %v335 = vld [vmem:[#allocation3 + $0x450] sm:$0xff]
    %v336 = vld [vmem:[#allocation3 + $0x458] sm:$0xff]
    %v337 = vld [vmem:[#allocation3 + $0x460] sm:$0xff]
    %v338 = vld [vmem:[#allocation3 + $0x468] sm:$0xff]
    %v339 = vld [vmem:[#allocation3 + $0x470] sm:$0xff]
    %v340 = vld [vmem:[#allocation3 + $0x478] sm:$0xff]
    %v341 = vld [vmem:[#allocation3 + $0x480] sm:$0xff]
    %v342 = vld [vmem:[#allocation3 + $0x488] sm:$0xff]
    %v343 = vld [vmem:[#allocation3 + $0x490] sm:$0xff]
    %v344 = vld [vmem:[#allocation3 + $0x498] sm:$0xff]
    %v345 = vld [vmem:[#allocation3 + $0x4a0] sm:$0xff]
    %v346 = vld [vmem:[#allocation3 + $0x4a8] sm:$0xff]
    %v347 = vld [vmem:[#allocation3 + $0x4b0] sm:$0xff]
    %v348 = vld [vmem:[#allocation3 + $0x4b8] sm:$0xff]
    %v349 = vld [vmem:[#allocation3 + $0x4c0] sm:$0xff]
    %v350 = vld [vmem:[#allocation3 + $0x4c8] sm:$0xff]
    %v351 = vld [vmem:[#allocation3 + $0x4d0] sm:$0xff]
    %v352 = vld [vmem:[#allocation3 + $0x4d8] sm:$0xff]
    %v353 = vld [vmem:[#allocation3 + $0x4e0] sm:$0xff]
    %v354 = vld [vmem:[#allocation3 + $0x4e8] sm:$0xff]
    %v355 = vld [vmem:[#allocation3 + $0x4f0] sm:$0xff]
    %v356 = vld [vmem:[#allocation3 + $0x4f8] sm:$0xff]
    %v357 = vld [vmem:[#allocation3 + $0x500] sm:$0xff]
    %v358 = vld [vmem:[#allocation3 + $0x508] sm:$0xff]
    %v359 = vld [vmem:[#allocation3 + $0x510] sm:$0xff]
    %v360 = vld [vmem:[#allocation3 + $0x518] sm:$0xff]
    %v361 = vld [vmem:[#allocation3 + $0x520] sm:$0xff]
    %v362 = vld [vmem:[#allocation3 + $0x528] sm:$0xff]
    %v363 = vld [vmem:[#allocation3 + $0x530] sm:$0xff]
    %v364 = vld [vmem:[#allocation3 + $0x538] sm:$0xff]
    %v365 = vld [vmem:[#allocation3 + $0x540] sm:$0xff]
    %v366 = vld [vmem:[#allocation3 + $0x548] sm:$0xff]
    %v367 = vld [vmem:[#allocation3 + $0x550] sm:$0xff]
    %v368 = vld [vmem:[#allocation3 + $0x558] sm:$0xff]
    %v369 = vld [vmem:[#allocation3 + $0x560] sm:$0xff]
    %v370 = vld [vmem:[#allocation3 + $0x568] sm:$0xff]
    %v371 = vld [vmem:[#allocation3 + $0x570] sm:$0xff]
    %v372 = vld [vmem:[#allocation3 + $0x578] sm:$0xff]
    %v373 = vld [vmem:[#allocation3 + $0x580] sm:$0xff]
    %v374 = vld [vmem:[#allocation3 + $0x588] sm:$0xff]
    %v375 = vld [vmem:[#allocation3 + $0x590] sm:$0xff]
    %v376 = vld [vmem:[#allocation3 + $0x598] sm:$0xff]
    %v377 = vld [vmem:[#allocation3 + $0x5a0] sm:$0xff]
    %v378 = vld [vmem:[#allocation3 + $0x5a8] sm:$0xff]
    %v379 = vld [vmem:[#allocation3 + $0x5b0] sm:$0xff]
    %v380 = vld [vmem:[#allocation3 + $0x5b8] sm:$0xff]
    %v381 = vld [vmem:[#allocation3 + $0x5c0] sm:$0xff]
    %v382 = vld [vmem:[#allocation3 + $0x5c8] sm:$0xff]
    %v383 = vld [vmem:[#allocation3 + $0x5d0] sm:$0xff]
    %v384 = vld [vmem:[#allocation3 + $0x5d8] sm:$0xff]
    %v385 = vld [vmem:[#allocation3 + $0x5e0] sm:$0xff]
    %v386 = vld [vmem:[#allocation3 + $0x5e8] sm:$0xff]
    %v387 = vld [vmem:[#allocation3 + $0x5f0] sm:$0xff]
    %v388 = vld [vmem:[#allocation3 + $0x5f8] sm:$0xff]
    %v389 = vld [vmem:[#allocation3 + $0x600] sm:$0xff]
    %v390 = vld [vmem:[#allocation3 + $0x608] sm:$0xff]
    %v391 = vld [vmem:[#allocation3 + $0x610] sm:$0xff]
    %v392 = vld [vmem:[#allocation3 + $0x618] sm:$0xff]
    %v393 = vld [vmem:[#allocation3 + $0x620] sm:$0xff]
    %v394 = vld [vmem:[#allocation3 + $0x628] sm:$0xff]
    %v395 = vld [vmem:[#allocation3 + $0x630] sm:$0xff]
    %v396 = vld [vmem:[#allocation3 + $0x638] sm:$0xff]
    %v397 = vld [vmem:[#allocation3 + $0x640] sm:$0xff]
    %v398 = vld [vmem:[#allocation3 + $0x648] sm:$0xff]
    %v399 = vld [vmem:[#allocation3 + $0x650] sm:$0xff]
    %v400 = vld [vmem:[#allocation3 + $0x658] sm:$0xff]
    %v401 = vld [vmem:[#allocation3 + $0x660] sm:$0xff]
    %v402 = vld [vmem:[#allocation3 + $0x668] sm:$0xff]
    %v403 = vld [vmem:[#allocation3 + $0x670] sm:$0xff]
    %v404 = vld [vmem:[#allocation3 + $0x678] sm:$0xff]
    %v405 = vld [vmem:[#allocation3 + $0x680] sm:$0xff]
    %v406 = vld [vmem:[#allocation3 + $0x688] sm:$0xff]
    %v407 = vld [vmem:[#allocation3 + $0x690] sm:$0xff]
    %v408 = vld [vmem:[#allocation3 + $0x698] sm:$0xff]
    %v409 = vld [vmem:[#allocation3 + $0x6a0] sm:$0xff]
    %v410 = vld [vmem:[#allocation3 + $0x6a8] sm:$0xff]
    %v411 = vld [vmem:[#allocation3 + $0x6b0] sm:$0xff]
    %v412 = vld [vmem:[#allocation3 + $0x6b8] sm:$0xff]
    %v413 = vld [vmem:[#allocation3 + $0x6c0] sm:$0xff]
    %v414 = vld [vmem:[#allocation3 + $0x6c8] sm:$0xff]
    %v415 = vld [vmem:[#allocation3 + $0x6d0] sm:$0xff]
    %v416 = vld [vmem:[#allocation3 + $0x6d8] sm:$0xff]
    %v417 = vld [vmem:[#allocation3 + $0x6e0] sm:$0xff]
    %v418 = vld [vmem:[#allocation3 + $0x6e8] sm:$0xff]
    %v419 = vld [vmem:[#allocation3 + $0x6f0] sm:$0xff]
    %v420 = vld [vmem:[#allocation3 + $0x6f8] sm:$0xff]
    %v421 = vld [vmem:[#allocation3 + $0x700] sm:$0xff]
    %v422 = vld [vmem:[#allocation3 + $0x708] sm:$0xff]
    %v423 = vld [vmem:[#allocation3 + $0x710] sm:$0xff]
    %v424 = vld [vmem:[#allocation3 + $0x718] sm:$0xff]
    %v425 = vld [vmem:[#allocation3 + $0x720] sm:$0xff]
    %v426 = vld [vmem:[#allocation3 + $0x728] sm:$0xff]
    %v427 = vld [vmem:[#allocation3 + $0x730] sm:$0xff]
    %v428 = vld [vmem:[#allocation3 + $0x738] sm:$0xff]
    %v429 = vld [vmem:[#allocation3 + $0x740] sm:$0xff]
    %v430 = vld [vmem:[#allocation3 + $0x748] sm:$0xff]
    %v431 = vld [vmem:[#allocation3 + $0x750] sm:$0xff]
    %v432 = vld [vmem:[#allocation3 + $0x758] sm:$0xff]
    %v433 = vld [vmem:[#allocation3 + $0x760] sm:$0xff]
    %v434 = vld [vmem:[#allocation3 + $0x768] sm:$0xff]
    %v435 = vld [vmem:[#allocation3 + $0x770] sm:$0xff]
    %v436 = vld [vmem:[#allocation3 + $0x778] sm:$0xff]
    %v437 = vld [vmem:[#allocation3 + $0x780] sm:$0xff]
    %v438 = vld [vmem:[#allocation3 + $0x788] sm:$0xff]
    %v439 = vld [vmem:[#allocation3 + $0x790] sm:$0xff]
    %v440 = vld [vmem:[#allocation3 + $0x798] sm:$0xff]
    %v441 = vld [vmem:[#allocation3 + $0x7a0] sm:$0xff]
    %v442 = vld [vmem:[#allocation3 + $0x7a8] sm:$0xff]
    %v443 = vld [vmem:[#allocation3 + $0x7b0] sm:$0xff]
    %v444 = vld [vmem:[#allocation3 + $0x7b8] sm:$0xff]
    %v445 = vld [vmem:[#allocation3 + $0x7c0] sm:$0xff]
    %v446 = vld [vmem:[#allocation3 + $0x7c8] sm:$0xff]
    %v447 = vld [vmem:[#allocation3 + $0x7d0] sm:$0xff]
    %v448 = vld [vmem:[#allocation3 + $0x7d8] sm:$0xff]
    %v449 = vld [vmem:[#allocation3 + $0x7e0] sm:$0xff]
    %v450 = vld [vmem:[#allocation3 + $0x7e8] sm:$0xff]
    %v451 = vld [vmem:[#allocation3 + $0x7f0] sm:$0xff]
    %v452 = vld [vmem:[#allocation3 + $0x7f8] sm:$0xff]
    %v453 = vld [vmem:[#allocation3 + $0x800] sm:$0xff]
    %v454 = vld [vmem:[#allocation3 + $0x808] sm:$0xff]
    %v455 = vld [vmem:[#allocation3 + $0x810] sm:$0xff]
    %v456 = vld [vmem:[#allocation3 + $0x818] sm:$0xff]
    %v457 = vld [vmem:[#allocation3 + $0x820] sm:$0xff]
    %v458 = vld [vmem:[#allocation3 + $0x828] sm:$0xff]
    %v459 = vld [vmem:[#allocation3 + $0x830] sm:$0xff]
    %v460 = vld [vmem:[#allocation3 + $0x838] sm:$0xff]
    %v461 = vld [vmem:[#allocation3 + $0x840] sm:$0xff]
    %v462 = vld [vmem:[#allocation3 + $0x848] sm:$0xff]
    %v463 = vld [vmem:[#allocation3 + $0x850] sm:$0xff]
    %v464 = vld [vmem:[#allocation3 + $0x858] sm:$0xff]
    %v465 = vld [vmem:[#allocation3 + $0x860] sm:$0xff]
    %v466 = vld [vmem:[#allocation3 + $0x868] sm:$0xff]
    %v467 = vld [vmem:[#allocation3 + $0x870] sm:$0xff]
    %v468 = vld [vmem:[#allocation3 + $0x878] sm:$0xff]
    %v469 = vld [vmem:[#allocation3 + $0x880] sm:$0xff]
    %v470 = vld [vmem:[#allocation3 + $0x888] sm:$0xff]
    %v471 = vld [vmem:[#allocation3 + $0x890] sm:$0xff]
    %v472 = vld [vmem:[#allocation3 + $0x898] sm:$0xff]
    %v473 = vld [vmem:[#allocation3 + $0x8a0] sm:$0xff]
    %v474 = vld [vmem:[#allocation3 + $0x8a8] sm:$0xff]
    %v475 = vld [vmem:[#allocation3 + $0x8b0] sm:$0xff]
    %v476 = vld [vmem:[#allocation3 + $0x8b8] sm:$0xff]
    %v477 = vld [vmem:[#allocation3 + $0x8c0] sm:$0xff]
    %v478 = vld [vmem:[#allocation3 + $0x8c8] sm:$0xff]
    %v479 = vld [vmem:[#allocation3 + $0x8d0] sm:$0xff]
    %v480 = vld [vmem:[#allocation3 + $0x8d8] sm:$0xff]
    %v481 = vld [vmem:[#allocation3 + $0x8e0] sm:$0xff]
    %v482 = vld [vmem:[#allocation3 + $0x8e8] sm:$0xff]
    %v483 = vld [vmem:[#allocation3 + $0x8f0] sm:$0xff]
    %v484 = vld [vmem:[#allocation3 + $0x8f8] sm:$0xff]
    %v485 = vld [vmem:[#allocation3 + $0x900] sm:$0xff]
    %v486 = vld [vmem:[#allocation3 + $0x908] sm:$0xff]
    %v487 = vld [vmem:[#allocation3 + $0x910] sm:$0xff]
    %v488 = vld [vmem:[#allocation3 + $0x918] sm:$0xff]
    %v489 = vld [vmem:[#allocation3 + $0x920] sm:$0xff]
    %v490 = vld [vmem:[#allocation3 + $0x928] sm:$0xff]
    %v491 = vld [vmem:[#allocation3 + $0x930] sm:$0xff]
    %v492 = vld [vmem:[#allocation3 + $0x938] sm:$0xff]
    %v493 = vld [vmem:[#allocation3 + $0x940] sm:$0xff]
    %v494 = vld [vmem:[#allocation3 + $0x948] sm:$0xff]
    %v495 = vld [vmem:[#allocation3 + $0x950] sm:$0xff]
    %v496 = vld [vmem:[#allocation3 + $0x958] sm:$0xff]
    %v497 = vld [vmem:[#allocation3 + $0x960] sm:$0xff]
    %v498 = vld [vmem:[#allocation3 + $0x968] sm:$0xff]
    %v499 = vld [vmem:[#allocation3 + $0x970] sm:$0xff]
    %v500 = vld [vmem:[#allocation3 + $0x978] sm:$0xff]
    %v501 = vld [vmem:[#allocation3 + $0x980] sm:$0xff]
    %v502 = vld [vmem:[#allocation3 + $0x988] sm:$0xff]
    %v503 = vld [vmem:[#allocation3 + $0x990] sm:$0xff]
    %v504 = vld [vmem:[#allocation3 + $0x998] sm:$0xff]
    %v505 = vld [vmem:[#allocation3 + $0x9a0] sm:$0xff]
    %v506 = vld [vmem:[#allocation3 + $0x9a8] sm:$0xff]
    %v507 = vld [vmem:[#allocation3 + $0x9b0] sm:$0xff]
    %v508 = vld [vmem:[#allocation3 + $0x9b8] sm:$0xff]
    %v509 = vld [vmem:[#allocation3 + $0x9c0] sm:$0xff]
    %v510 = vld [vmem:[#allocation3 + $0x9c8] sm:$0xff]
    %v511 = vld [vmem:[#allocation3 + $0x9d0] sm:$0xff]
    %v512 = vld [vmem:[#allocation3 + $0x9d8] sm:$0xff]
    %v513 = vld [vmem:[#allocation3 + $0x9e0] sm:$0xff]
    %v514 = vld [vmem:[#allocation3 + $0x9e8] sm:$0xff]
    %v515 = vld [vmem:[#allocation3 + $0x9f0] sm:$0xff]
    %v516 = vld [vmem:[#allocation3 + $0x9f8] sm:$0xff]
    %v517 = vld [vmem:[#allocation3 + $0xa00] sm:$0xff]
    %v518 = vld [vmem:[#allocation3 + $0xa08] sm:$0xff]
    %v519 = vld [vmem:[#allocation3 + $0xa10] sm:$0xff]
    %v520 = vld [vmem:[#allocation3 + $0xa18] sm:$0xff]
    %v521 = vld [vmem:[#allocation3 + $0xa20] sm:$0xff]
    %v522 = vld [vmem:[#allocation3 + $0xa28] sm:$0xff]
    %v523 = vld [vmem:[#allocation3 + $0xa30] sm:$0xff]
    %v524 = vld [vmem:[#allocation3 + $0xa38] sm:$0xff]
    %v525 = vld [vmem:[#allocation3 + $0xa40] sm:$0xff]
    %v526 = vld [vmem:[#allocation3 + $0xa48] sm:$0xff]
    %v527 = vld [vmem:[#allocation3 + $0xa50] sm:$0xff]
    %v528 = vld [vmem:[#allocation3 + $0xa58] sm:$0xff]
    %v529 = vld [vmem:[#allocation3 + $0xa60] sm:$0xff]
    %v530 = vld [vmem:[#allocation3 + $0xa68] sm:$0xff]
    %v531 = vld [vmem:[#allocation3 + $0xa70] sm:$0xff]
    %v532 = vld [vmem:[#allocation3 + $0xa78] sm:$0xff]
    %v533 = vld [vmem:[#allocation3 + $0xa80] sm:$0xff]
    %v534 = vld [vmem:[#allocation3 + $0xa88] sm:$0xff]
    %v535 = vld [vmem:[#allocation3 + $0xa90] sm:$0xff]
    %v536 = vld [vmem:[#allocation3 + $0xa98] sm:$0xff]
    %v537 = vld [vmem:[#allocation3 + $0xaa0] sm:$0xff]
    %v538 = vld [vmem:[#allocation3 + $0xaa8] sm:$0xff]
    %v539 = vld [vmem:[#allocation3 + $0xab0] sm:$0xff]
    %v540 = vld [vmem:[#allocation3 + $0xab8] sm:$0xff]
    %v541 = vld [vmem:[#allocation3 + $0xac0] sm:$0xff]
    %v542 = vld [vmem:[#allocation3 + $0xac8] sm:$0xff]
    %v543 = vld [vmem:[#allocation3 + $0xad0] sm:$0xff]
    %v544 = vld [vmem:[#allocation3 + $0xad8] sm:$0xff]
    %v545 = vld [vmem:[#allocation3 + $0xae0] sm:$0xff]
    %v546 = vld [vmem:[#allocation3 + $0xae8] sm:$0xff]
    %v547 = vld [vmem:[#allocation3 + $0xaf0] sm:$0xff]
    %v548 = vld [vmem:[#allocation3 + $0xaf8] sm:$0xff]
    %v549 = vld [vmem:[#allocation3 + $0xb00] sm:$0xff]
    %v550 = vld [vmem:[#allocation3 + $0xb08] sm:$0xff]
    %v551 = vld [vmem:[#allocation3 + $0xb10] sm:$0xff]
    %v552 = vld [vmem:[#allocation3 + $0xb18] sm:$0xff]
    %v553 = vld [vmem:[#allocation3 + $0xb20] sm:$0xff]
    %v554 = vld [vmem:[#allocation3 + $0xb28] sm:$0xff]
    %v555 = vld [vmem:[#allocation3 + $0xb30] sm:$0xff]
    %v556 = vld [vmem:[#allocation3 + $0xb38] sm:$0xff]
    %v557 = vld [vmem:[#allocation3 + $0xb40] sm:$0xff]
    %v558 = vld [vmem:[#allocation3 + $0xb48] sm:$0xff]
    %v559 = vld [vmem:[#allocation3 + $0xb50] sm:$0xff]
    %v560 = vld [vmem:[#allocation3 + $0xb58] sm:$0xff]
    %v561 = vld [vmem:[#allocation3 + $0xb60] sm:$0xff]
    %v562 = vld [vmem:[#allocation3 + $0xb68] sm:$0xff]
    %v563 = vld [vmem:[#allocation3 + $0xb70] sm:$0xff]
    %v564 = vld [vmem:[#allocation3 + $0xb78] sm:$0xff]
    %v565 = vld [vmem:[#allocation3 + $0xb80] sm:$0xff]
    %v566 = vld [vmem:[#allocation3 + $0xb88] sm:$0xff]
    %v567 = vld [vmem:[#allocation3 + $0xb90] sm:$0xff]
    %v568 = vld [vmem:[#allocation3 + $0xb98] sm:$0xff]
    %v569 = vld [vmem:[#allocation3 + $0xba0] sm:$0xff]
    %v570 = vld [vmem:[#allocation3 + $0xba8] sm:$0xff]
    %v571 = vld [vmem:[#allocation3 + $0xbb0] sm:$0xff]
    %v572 = vld [vmem:[#allocation3 + $0xbb8] sm:$0xff]
    %v573 = vld [vmem:[#allocation3 + $0xbc0] sm:$0xff]
    %v574 = vld [vmem:[#allocation3 + $0xbc8] sm:$0xff]
    %v575 = vld [vmem:[#allocation3 + $0xbd0] sm:$0xff]
    %v576 = vld [vmem:[#allocation3 + $0xbd8] sm:$0xff]
    %v577 = vld [vmem:[#allocation3 + $0xbe0] sm:$0xff]
    %v578 = vld [vmem:[#allocation3 + $0xbe8] sm:$0xff]
    %v579 = vld [vmem:[#allocation3 + $0xbf0] sm:$0xff]
    %v580 = vld [vmem:[#allocation3 + $0xbf8] sm:$0xff]
    %v581 = vld [vmem:[#allocation3 + $0xc00] sm:$0xff]
    %v582 = vld [vmem:[#allocation3 + $0xc08] sm:$0xff]
    %v583 = vld [vmem:[#allocation3 + $0xc10] sm:$0xff]
    %v584 = vld [vmem:[#allocation3 + $0xc18] sm:$0xff]
    %v585 = vld [vmem:[#allocation3 + $0xc20] sm:$0xff]
    %v586 = vld [vmem:[#allocation3 + $0xc28] sm:$0xff]
    %v587 = vld [vmem:[#allocation3 + $0xc30] sm:$0xff]
    %v588 = vld [vmem:[#allocation3 + $0xc38] sm:$0xff]
    %v589 = vld [vmem:[#allocation3 + $0xc40] sm:$0xff]
    %v590 = vld [vmem:[#allocation3 + $0xc48] sm:$0xff]
    %v591 = vld [vmem:[#allocation3 + $0xc50] sm:$0xff]
    %v592 = vld [vmem:[#allocation3 + $0xc58] sm:$0xff]
    %v593 = vld [vmem:[#allocation3 + $0xc60] sm:$0xff]
    %v594 = vld [vmem:[#allocation3 + $0xc68] sm:$0xff]
    %v595 = vld [vmem:[#allocation3 + $0xc70] sm:$0xff]
    %v596 = vld [vmem:[#allocation3 + $0xc78] sm:$0xff]
    %v597 = vld [vmem:[#allocation3 + $0xc80] sm:$0xff]
    %v598 = vld [vmem:[#allocation3 + $0xc88] sm:$0xff]
    %v599 = vld [vmem:[#allocation3 + $0xc90] sm:$0xff]
    %v600 = vld [vmem:[#allocation3 + $0xc98] sm:$0xff]
    %v601 = vld [vmem:[#allocation3 + $0xca0] sm:$0xff]
    %v602 = vld [vmem:[#allocation3 + $0xca8] sm:$0xff]
    %v603 = vld [vmem:[#allocation3 + $0xcb0] sm:$0xff]
    %v604 = vld [vmem:[#allocation3 + $0xcb8] sm:$0xff]
    %v605 = vld [vmem:[#allocation3 + $0xcc0] sm:$0xff]
    %v606 = vld [vmem:[#allocation3 + $0xcc8] sm:$0xff]
    %v607 = vld [vmem:[#allocation3 + $0xcd0] sm:$0xff]
    %v608 = vld [vmem:[#allocation3 + $0xcd8] sm:$0xff]
    %v609 = vld [vmem:[#allocation3 + $0xce0] sm:$0xff]
    %v610 = vld [vmem:[#allocation3 + $0xce8] sm:$0xff]
    %v611 = vld [vmem:[#allocation3 + $0xcf0] sm:$0xff]
    %v612 = vld [vmem:[#allocation3 + $0xcf8] sm:$0xff]
    %v613 = vld [vmem:[#allocation3 + $0xd00] sm:$0xff]
    %v614 = vld [vmem:[#allocation3 + $0xd08] sm:$0xff]
    %v615 = vld [vmem:[#allocation3 + $0xd10] sm:$0xff]
    %v616 = vld [vmem:[#allocation3 + $0xd18] sm:$0xff]
    %v617 = vld [vmem:[#allocation3 + $0xd20] sm:$0xff]
    %v618 = vld [vmem:[#allocation3 + $0xd28] sm:$0xff]
    %v619 = vld [vmem:[#allocation3 + $0xd30] sm:$0xff]
    %v620 = vld [vmem:[#allocation3 + $0xd38] sm:$0xff]
    %v621 = vld [vmem:[#allocation3 + $0xd40] sm:$0xff]
    %v622 = vld [vmem:[#allocation3 + $0xd48] sm:$0xff]
    %v623 = vld [vmem:[#allocation3 + $0xd50] sm:$0xff]
    %v624 = vld [vmem:[#allocation3 + $0xd58] sm:$0xff]
    %v625 = vld [vmem:[#allocation3 + $0xd60] sm:$0xff]
    %v626 = vld [vmem:[#allocation3 + $0xd68] sm:$0xff]
    %v627 = vld [vmem:[#allocation3 + $0xd70] sm:$0xff]
    %v628 = vld [vmem:[#allocation3 + $0xd78] sm:$0xff]
    %v629 = vld [vmem:[#allocation3 + $0xd80] sm:$0xff]
    %v630 = vld [vmem:[#allocation3 + $0xd88] sm:$0xff]
    %v631 = vld [vmem:[#allocation3 + $0xd90] sm:$0xff]
    %v632 = vld [vmem:[#allocation3 + $0xd98] sm:$0xff]
    %v633 = vld [vmem:[#allocation3 + $0xda0] sm:$0xff]
    %v634 = vld [vmem:[#allocation3 + $0xda8] sm:$0xff]
    %v635 = vld [vmem:[#allocation3 + $0xdb0] sm:$0xff]
    %v636 = vld [vmem:[#allocation3 + $0xdb8] sm:$0xff]
    %v637 = vld [vmem:[#allocation3 + $0xdc0] sm:$0xff]
    %v638 = vld [vmem:[#allocation3 + $0xdc8] sm:$0xff]
    %v639 = vld [vmem:[#allocation3 + $0xdd0] sm:$0xff]
    %v640 = vld [vmem:[#allocation3 + $0xdd8] sm:$0xff]
    %v641 = vld [vmem:[#allocation3 + $0xde0] sm:$0xff]
    %v642 = vld [vmem:[#allocation3 + $0xde8] sm:$0xff]
    %v643 = vld [vmem:[#allocation3 + $0xdf0] sm:$0xff]
    %v644 = vld [vmem:[#allocation3 + $0xdf8] sm:$0xff]
    %v645 = vld [vmem:[#allocation3 + $0xe00] sm:$0xff]
    %v646 = vld [vmem:[#allocation3 + $0xe08] sm:$0xff]
    %v647 = vld [vmem:[#allocation3 + $0xe10] sm:$0xff]
    %v648 = vld [vmem:[#allocation3 + $0xe18] sm:$0xff]
    %v649 = vld [vmem:[#allocation3 + $0xe20] sm:$0xff]
    %v650 = vld [vmem:[#allocation3 + $0xe28] sm:$0xff]
    %v651 = vld [vmem:[#allocation3 + $0xe30] sm:$0xff]
    %v652 = vld [vmem:[#allocation3 + $0xe38] sm:$0xff]
    %v653 = vld [vmem:[#allocation3 + $0xe40] sm:$0xff]
    %v654 = vld [vmem:[#allocation3 + $0xe48] sm:$0xff]
    %v655 = vld [vmem:[#allocation3 + $0xe50] sm:$0xff]
    %v656 = vld [vmem:[#allocation3 + $0xe58] sm:$0xff]
    %v657 = vld [vmem:[#allocation3 + $0xe60] sm:$0xff]
    %v658 = vld [vmem:[#allocation3 + $0xe68] sm:$0xff]
    %v659 = vld [vmem:[#allocation3 + $0xe70] sm:$0xff]
    %v660 = vld [vmem:[#allocation3 + $0xe78] sm:$0xff]
    %v661 = vld [vmem:[#allocation3 + $0xe80] sm:$0xff]
    %v662 = vld [vmem:[#allocation3 + $0xe88] sm:$0xff]
    %v663 = vld [vmem:[#allocation3 + $0xe90] sm:$0xff]
    %v664 = vld [vmem:[#allocation3 + $0xe98] sm:$0xff]
    %v665 = vld [vmem:[#allocation3 + $0xea0] sm:$0xff]
    %v666 = vld [vmem:[#allocation3 + $0xea8] sm:$0xff]
    %v667 = vld [vmem:[#allocation3 + $0xeb0] sm:$0xff]
    %v668 = vld [vmem:[#allocation3 + $0xeb8] sm:$0xff]
    %v669 = vld [vmem:[#allocation3 + $0xec0] sm:$0xff]
    %v670 = vld [vmem:[#allocation3 + $0xec8] sm:$0xff]
    %v671 = vld [vmem:[#allocation3 + $0xed0] sm:$0xff]
    %v672 = vld [vmem:[#allocation3 + $0xed8] sm:$0xff]
    %v673 = vld [vmem:[#allocation3 + $0xee0] sm:$0xff]
    %v674 = vld [vmem:[#allocation3 + $0xee8] sm:$0xff]
    %v675 = vld [vmem:[#allocation3 + $0xef0] sm:$0xff]
    %v676 = vld [vmem:[#allocation3 + $0xef8] sm:$0xff]
    %v677 = vld [vmem:[#allocation3 + $0xf00] sm:$0xff]
    %v678 = vld [vmem:[#allocation3 + $0xf08] sm:$0xff]
    %v679 = vld [vmem:[#allocation3 + $0xf10] sm:$0xff]
    %v680 = vld [vmem:[#allocation3 + $0xf18] sm:$0xff]
    %v681 = vld [vmem:[#allocation3 + $0xf20] sm:$0xff]
    %v682 = vld [vmem:[#allocation3 + $0xf28] sm:$0xff]
    %v683 = vld [vmem:[#allocation3 + $0xf30] sm:$0xff]
    %v684 = vld [vmem:[#allocation3 + $0xf38] sm:$0xff]
    %v685 = vld [vmem:[#allocation3 + $0xf40] sm:$0xff]
    %v686 = vld [vmem:[#allocation3 + $0xf48] sm:$0xff]
    %v687 = vld [vmem:[#allocation3 + $0xf50] sm:$0xff]
    %v688 = vld [vmem:[#allocation3 + $0xf58] sm:$0xff]
    %v689 = vld [vmem:[#allocation3 + $0xf60] sm:$0xff]
    %v690 = vld [vmem:[#allocation3 + $0xf68] sm:$0xff]
    %v691 = vld [vmem:[#allocation3 + $0xf70] sm:$0xff]
    %v692 = vld [vmem:[#allocation3 + $0xf78] sm:$0xff]
    %v693 = vld [vmem:[#allocation3 + $0xf80] sm:$0xff]
    %v694 = vld [vmem:[#allocation3 + $0xf88] sm:$0xff]
    %v695 = vld [vmem:[#allocation3 + $0xf90] sm:$0xff]
    %v696 = vld [vmem:[#allocation3 + $0xf98] sm:$0xff]
    %v697 = vld [vmem:[#allocation3 + $0xfa0] sm:$0xff]
    %v698 = vld [vmem:[#allocation3 + $0xfa8] sm:$0xff]
    %v699 = vld [vmem:[#allocation3 + $0xfb0] sm:$0xff]
    %v700 = vld [vmem:[#allocation3 + $0xfb8] sm:$0xff]
    %v701 = vld [vmem:[#allocation3 + $0xfc0] sm:$0xff]
    %v702 = vld [vmem:[#allocation3 + $0xfc8] sm:$0xff]
    %v703 = vld [vmem:[#allocation3 + $0xfd0] sm:$0xff]
    %v704 = vld [vmem:[#allocation3 + $0xfd8] sm:$0xff]
    %v705 = vld [vmem:[#allocation3 + $0xfe0] sm:$0xff]
    %v706 = vld [vmem:[#allocation3 + $0xfe8] sm:$0xff]
    %v707 = vld [vmem:[#allocation3 + $0xff0] sm:$0xff]
    %v708 = vld [vmem:[#allocation3 + $0xff8] sm:$0xff]
    %v709 = vld [vmem:[#allocation3 + $0x1000] sm:$0xff]
    %v710 = vld [vmem:[#allocation3 + $0x1008] sm:$0xff]
    %v711 = vld [vmem:[#allocation3 + $0x1010] sm:$0xff]
    %v712 = vld [vmem:[#allocation3 + $0x1018] sm:$0xff]
    %v713 = vld [vmem:[#allocation3 + $0x1020] sm:$0xff]
    %v714 = vld [vmem:[#allocation3 + $0x1028] sm:$0xff]
    %v715 = vld [vmem:[#allocation3 + $0x1030] sm:$0xff]
    %v716 = vld [vmem:[#allocation3 + $0x1038] sm:$0xff]
    %v717 = vld [vmem:[#allocation3 + $0x1040] sm:$0xff]
    %v718 = vld [vmem:[#allocation3 + $0x1048] sm:$0xff]
    %v719 = vld [vmem:[#allocation3 + $0x1050] sm:$0xff]
    %v720 = vld [vmem:[#allocation3 + $0x1058] sm:$0xff]
    %v721 = vld [vmem:[#allocation3 + $0x1060] sm:$0xff]
    %v722 = vld [vmem:[#allocation3 + $0x1068] sm:$0xff]
    %v723 = vld [vmem:[#allocation3 + $0x1070] sm:$0xff]
    %v724 = vld [vmem:[#allocation3 + $0x1078] sm:$0xff]
    %v725 = vld [vmem:[#allocation3 + $0x1080] sm:$0xff]
    %v726 = vld [vmem:[#allocation3 + $0x1088] sm:$0xff]
    %v727 = vld [vmem:[#allocation3 + $0x1090] sm:$0xff]
    %v728 = vld [vmem:[#allocation3 + $0x1098] sm:$0xff]
    %v729 = vld [vmem:[#allocation3 + $0x10a0] sm:$0xff]
    %v730 = vld [vmem:[#allocation3 + $0x10a8] sm:$0xff]
    %v731 = vld [vmem:[#allocation3 + $0x10b0] sm:$0xff]
    %v732 = vld [vmem:[#allocation3 + $0x10b8] sm:$0xff]
    %v733 = vld [vmem:[#allocation3 + $0x10c0] sm:$0xff]
    %v734 = vld [vmem:[#allocation3 + $0x10c8] sm:$0xff]
    %v735 = vld [vmem:[#allocation3 + $0x10d0] sm:$0xff]
    %v736 = vld [vmem:[#allocation3 + $0x10d8] sm:$0xff]
    %v737 = vld [vmem:[#allocation3 + $0x10e0] sm:$0xff]
    %v738 = vld [vmem:[#allocation3 + $0x10e8] sm:$0xff]
    %v739 = vld [vmem:[#allocation3 + $0x10f0] sm:$0xff]
    %v740 = vld [vmem:[#allocation3 + $0x10f8] sm:$0xff]
    %v741 = vld [vmem:[#allocation3 + $0x1100] sm:$0xff]
    %v742 = vld [vmem:[#allocation3 + $0x1108] sm:$0xff]
    %v743 = vld [vmem:[#allocation3 + $0x1110] sm:$0xff]
    %v744 = vld [vmem:[#allocation3 + $0x1118] sm:$0xff]
    %v745 = vld [vmem:[#allocation3 + $0x1120] sm:$0xff]
    %v746 = vld [vmem:[#allocation3 + $0x1128] sm:$0xff]
    %v747 = vld [vmem:[#allocation3 + $0x1130] sm:$0xff]
    %v748 = vld [vmem:[#allocation3 + $0x1138] sm:$0xff]
    %v749 = vld [vmem:[#allocation3 + $0x1140] sm:$0xff]
    %v750 = vld [vmem:[#allocation3 + $0x1148] sm:$0xff]
    %v751 = vld [vmem:[#allocation3 + $0x1150] sm:$0xff]
    %v752 = vld [vmem:[#allocation3 + $0x1158] sm:$0xff]
    %v753 = vld [vmem:[#allocation3 + $0x1160] sm:$0xff]
    %v754 = vld [vmem:[#allocation3 + $0x1168] sm:$0xff]
    %v755 = vld [vmem:[#allocation3 + $0x1170] sm:$0xff]
    %v756 = vld [vmem:[#allocation3 + $0x1178] sm:$0xff]
    %v757 = vld [vmem:[#allocation3 + $0x1180] sm:$0xff]
    %v758 = vld [vmem:[#allocation3 + $0x1188] sm:$0xff]
    %v759 = vld [vmem:[#allocation3 + $0x1190] sm:$0xff]
    %v760 = vld [vmem:[#allocation3 + $0x1198] sm:$0xff]
    %v761 = vld [vmem:[#allocation3 + $0x11a0] sm:$0xff]
    %v762 = vld [vmem:[#allocation3 + $0x11a8] sm:$0xff]
    %v763 = vld [vmem:[#allocation3 + $0x11b0] sm:$0xff]
    %v764 = vld [vmem:[#allocation3 + $0x11b8] sm:$0xff]
    %v765 = vld [vmem:[#allocation3 + $0x11c0] sm:$0xff]
    %v766 = vld [vmem:[#allocation3 + $0x11c8] sm:$0xff]
    %v767 = vld [vmem:[#allocation3 + $0x11d0] sm:$0xff]
    %v768 = vld [vmem:[#allocation3 + $0x11d8] sm:$0xff]
    %v769 = vld [vmem:[#allocation3 + $0x11e0] sm:$0xff]
    %v770 = vld [vmem:[#allocation3 + $0x11e8] sm:$0xff]
    %v771 = vld [vmem:[#allocation3 + $0x11f0] sm:$0xff]
    %v772 = vld [vmem:[#allocation3 + $0x11f8] sm:$0xff]
    %v773 = vld [vmem:[#allocation3 + $0x1200] sm:$0xff]
    %v774 = vld [vmem:[#allocation3 + $0x1208] sm:$0xff]
    %v775 = vld [vmem:[#allocation3 + $0x1210] sm:$0xff]
    %v776 = vld [vmem:[#allocation3 + $0x1218] sm:$0xff]
    %v777 = vld [vmem:[#allocation3 + $0x1220] sm:$0xff]
    %v778 = vld [vmem:[#allocation3 + $0x1228] sm:$0xff]
    %v779 = vld [vmem:[#allocation3 + $0x1230] sm:$0xff]
    %v780 = vld [vmem:[#allocation3 + $0x1238] sm:$0xff]
    %v781 = vld [vmem:[#allocation3 + $0x1240] sm:$0xff]
    %v782 = vld [vmem:[#allocation3 + $0x1248] sm:$0xff]
    %v783 = vld [vmem:[#allocation3 + $0x1250] sm:$0xff]
    %v784 = vld [vmem:[#allocation3 + $0x1258] sm:$0xff]
    %v785 = vld [vmem:[#allocation3 + $0x1260] sm:$0xff]
    %v786 = vld [vmem:[#allocation3 + $0x1268] sm:$0xff]
    %v787 = vld [vmem:[#allocation3 + $0x1270] sm:$0xff]
    %v788 = vld [vmem:[#allocation3 + $0x1278] sm:$0xff]
    %v789 = vld [vmem:[#allocation3 + $0x1280] sm:$0xff]
    %v790 = vld [vmem:[#allocation3 + $0x1288] sm:$0xff]
    %v791 = vld [vmem:[#allocation3 + $0x1290] sm:$0xff]
    %v792 = vld [vmem:[#allocation3 + $0x1298] sm:$0xff]
    %v793 = vld [vmem:[#allocation3 + $0x12a0] sm:$0xff]
    %v794 = vld [vmem:[#allocation3 + $0x12a8] sm:$0xff]
    %v795 = vld [vmem:[#allocation3 + $0x12b0] sm:$0xff]
    %v796 = vld [vmem:[#allocation3 + $0x12b8] sm:$0xff]
    %v797 = vld [vmem:[#allocation3 + $0x12c0] sm:$0xff]
    %v798 = vld [vmem:[#allocation3 + $0x12c8] sm:$0xff]
    %v799 = vld [vmem:[#allocation3 + $0x12d0] sm:$0xff]
    %v800 = vld [vmem:[#allocation3 + $0x12d8] sm:$0xff]
    %v801 = vld [vmem:[#allocation3 + $0x12e0] sm:$0xff]
    %v802 = vld [vmem:[#allocation3 + $0x12e8] sm:$0xff]
    %v803 = vld [vmem:[#allocation3 + $0x12f0] sm:$0xff]
    %v804 = vld [vmem:[#allocation3 + $0x12f8] sm:$0xff]
    %v805 = vld [vmem:[#allocation3 + $0x1300] sm:$0xff]
    %v806 = vld [vmem:[#allocation3 + $0x1308] sm:$0xff]
    %v807 = vld [vmem:[#allocation3 + $0x1310] sm:$0xff]
    %v808 = vld [vmem:[#allocation3 + $0x1318] sm:$0xff]
    %v809 = vld [vmem:[#allocation3 + $0x1320] sm:$0xff]
    %v810 = vld [vmem:[#allocation3 + $0x1328] sm:$0xff]
    %v811 = vld [vmem:[#allocation3 + $0x1330] sm:$0xff]
    %v812 = vld [vmem:[#allocation3 + $0x1338] sm:$0xff]
    %v813 = vld [vmem:[#allocation3 + $0x1340] sm:$0xff]
    %v814 = vld [vmem:[#allocation3 + $0x1348] sm:$0xff]
    %v815 = vld [vmem:[#allocation3 + $0x1350] sm:$0xff]
    %v816 = vld [vmem:[#allocation3 + $0x1358] sm:$0xff]
    %v817 = vld [vmem:[#allocation3 + $0x1360] sm:$0xff]
    %v818 = vld [vmem:[#allocation3 + $0x1368] sm:$0xff]
    %v819 = vld [vmem:[#allocation3 + $0x1370] sm:$0xff]
    %v820 = vld [vmem:[#allocation3 + $0x1378] sm:$0xff]
    %v821 = vld [vmem:[#allocation3 + $0x1380] sm:$0xff]
    %v822 = vld [vmem:[#allocation3 + $0x1388] sm:$0xff]
    %v823 = vld [vmem:[#allocation3 + $0x1390] sm:$0xff]
    %v824 = vld [vmem:[#allocation3 + $0x1398] sm:$0xff]
    %v825 = vld [vmem:[#allocation3 + $0x13a0] sm:$0xff]
    %v826 = vld [vmem:[#allocation3 + $0x13a8] sm:$0xff]
    %v827 = vld [vmem:[#allocation3 + $0x13b0] sm:$0xff]
    %v828 = vld [vmem:[#allocation3 + $0x13b8] sm:$0xff]
    %v829 = vld [vmem:[#allocation3 + $0x13c0] sm:$0xff]
    %v830 = vld [vmem:[#allocation3 + $0x13c8] sm:$0xff]
    %v831 = vld [vmem:[#allocation3 + $0x13d0] sm:$0xff]
    %v832 = vld [vmem:[#allocation3 + $0x13d8] sm:$0xff]
    %v833 = vld [vmem:[#allocation3 + $0x13e0] sm:$0xff]
    %v834 = vld [vmem:[#allocation3 + $0x13e8] sm:$0xff]
    %v835 = vld [vmem:[#allocation3 + $0x13f0] sm:$0xff]
    %v836 = vld [vmem:[#allocation3 + $0x13f8] sm:$0xff]
    %v837 = vld [vmem:[#allocation3 + $0x1400] sm:$0xff]
    %v838 = vld [vmem:[#allocation3 + $0x1408] sm:$0xff]
    %v839 = vld [vmem:[#allocation3 + $0x1410] sm:$0xff]
    %v840 = vld [vmem:[#allocation3 + $0x1418] sm:$0xff]
    %v841 = vld [vmem:[#allocation3 + $0x1420] sm:$0xff]
    %v842 = vld [vmem:[#allocation3 + $0x1428] sm:$0xff]
    %v843 = vld [vmem:[#allocation3 + $0x1430] sm:$0xff]
    %v844 = vld [vmem:[#allocation3 + $0x1438] sm:$0xff]
    %v845 = vld [vmem:[#allocation3 + $0x1440] sm:$0xff]
    %v846 = vld [vmem:[#allocation3 + $0x1448] sm:$0xff]
    %v847 = vld [vmem:[#allocation3 + $0x1450] sm:$0xff]
    %v848 = vld [vmem:[#allocation3 + $0x1458] sm:$0xff]
    %v849 = vld [vmem:[#allocation3 + $0x1460] sm:$0xff]
    %v850 = vld [vmem:[#allocation3 + $0x1468] sm:$0xff]
    %v851 = vld [vmem:[#allocation3 + $0x1470] sm:$0xff]
    %v852 = vld [vmem:[#allocation3 + $0x1478] sm:$0xff]
    %v853 = vld [vmem:[#allocation3 + $0x1480] sm:$0xff]
    %v854 = vld [vmem:[#allocation3 + $0x1488] sm:$0xff]
    %v855 = vld [vmem:[#allocation3 + $0x1490] sm:$0xff]
    %v856 = vld [vmem:[#allocation3 + $0x1498] sm:$0xff]
    %v857 = vld [vmem:[#allocation3 + $0x14a0] sm:$0xff]
    %v858 = vld [vmem:[#allocation3 + $0x14a8] sm:$0xff]
    %v859 = vld [vmem:[#allocation3 + $0x14b0] sm:$0xff]
    %v860 = vld [vmem:[#allocation3 + $0x14b8] sm:$0xff]
    %v861 = vld [vmem:[#allocation3 + $0x14c0] sm:$0xff]
    %v862 = vld [vmem:[#allocation3 + $0x14c8] sm:$0xff]
    %v863 = vld [vmem:[#allocation3 + $0x14d0] sm:$0xff]
    %v864 = vld [vmem:[#allocation3 + $0x14d8] sm:$0xff]
    %v865 = vld [vmem:[#allocation3 + $0x14e0] sm:$0xff]
    %v866 = vld [vmem:[#allocation3 + $0x14e8] sm:$0xff]
    %v867 = vld [vmem:[#allocation3 + $0x14f0] sm:$0xff]
    %v868 = vld [vmem:[#allocation3 + $0x14f8] sm:$0xff]
    %v869 = vld [vmem:[#allocation3 + $0x1500] sm:$0xff]
    %v870 = vld [vmem:[#allocation3 + $0x1508] sm:$0xff]
    %v871 = vld [vmem:[#allocation3 + $0x1510] sm:$0xff]
    %v872 = vld [vmem:[#allocation3 + $0x1518] sm:$0xff]
    %v873 = vld [vmem:[#allocation3 + $0x1520] sm:$0xff]
    %v874 = vld [vmem:[#allocation3 + $0x1528] sm:$0xff]
    %v875 = vld [vmem:[#allocation3 + $0x1530] sm:$0xff]
    %v876 = vld [vmem:[#allocation3 + $0x1538] sm:$0xff]
    %v877 = vld [vmem:[#allocation3 + $0x1540] sm:$0xff]
    %v878 = vld [vmem:[#allocation3 + $0x1548] sm:$0xff]
    %v879 = vld [vmem:[#allocation3 + $0x1550] sm:$0xff]
    %v880 = vld [vmem:[#allocation3 + $0x1558] sm:$0xff]
    %v881 = vld [vmem:[#allocation3 + $0x1560] sm:$0xff]
    %v882 = vld [vmem:[#allocation3 + $0x1568] sm:$0xff]
    %v883 = vld [vmem:[#allocation3 + $0x1570] sm:$0xff]
    %v884 = vld [vmem:[#allocation3 + $0x1578] sm:$0xff]
    %v885 = vld [vmem:[#allocation3 + $0x1580] sm:$0xff]
    %v886 = vld [vmem:[#allocation3 + $0x1588] sm:$0xff]
    %v887 = vld [vmem:[#allocation3 + $0x1590] sm:$0xff]
    %v888 = vld [vmem:[#allocation3 + $0x1598] sm:$0xff]
    %v889 = vld [vmem:[#allocation3 + $0x15a0] sm:$0xff]
    %v890 = vld [vmem:[#allocation3 + $0x15a8] sm:$0xff]
    %v891 = vld [vmem:[#allocation3 + $0x15b0] sm:$0xff]
    %v892 = vld [vmem:[#allocation3 + $0x15b8] sm:$0xff]
    %v893 = vld [vmem:[#allocation3 + $0x15c0] sm:$0xff]
    %v894 = vld [vmem:[#allocation3 + $0x15c8] sm:$0xff]
    %v895 = vld [vmem:[#allocation3 + $0x15d0] sm:$0xff]
    %v896 = vld [vmem:[#allocation3 + $0x15d8] sm:$0xff]
    %v897 = vld [vmem:[#allocation3 + $0x15e0] sm:$0xff]
    %v898 = vld [vmem:[#allocation3 + $0x15e8] sm:$0xff]
    %v899 = vld [vmem:[#allocation3 + $0x15f0] sm:$0xff]
    %v900 = vld [vmem:[#allocation3 + $0x15f8] sm:$0xff]
    %v901 = vld [vmem:[#allocation3 + $0x1600] sm:$0xff]
    %v902 = vld [vmem:[#allocation3 + $0x1608] sm:$0xff]
    %v903 = vld [vmem:[#allocation3 + $0x1610] sm:$0xff]
    %v904 = vld [vmem:[#allocation3 + $0x1618] sm:$0xff]
    %v905 = vld [vmem:[#allocation3 + $0x1620] sm:$0xff]
    %v906 = vld [vmem:[#allocation3 + $0x1628] sm:$0xff]
    %v907 = vld [vmem:[#allocation3 + $0x1630] sm:$0xff]
    %v908 = vld [vmem:[#allocation3 + $0x1638] sm:$0xff]
    %v909 = vld [vmem:[#allocation3 + $0x1640] sm:$0xff]
    %v910 = vld [vmem:[#allocation3 + $0x1648] sm:$0xff]
    %v911 = vld [vmem:[#allocation3 + $0x1650] sm:$0xff]
    %v912 = vld [vmem:[#allocation3 + $0x1658] sm:$0xff]
    %v913 = vld [vmem:[#allocation3 + $0x1660] sm:$0xff]
    %v914 = vld [vmem:[#allocation3 + $0x1668] sm:$0xff]
    %v915 = vld [vmem:[#allocation3 + $0x1670] sm:$0xff]
    %v916 = vld [vmem:[#allocation3 + $0x1678] sm:$0xff]
    %v917 = vld [vmem:[#allocation3 + $0x1680] sm:$0xff]
    %v918 = vld [vmem:[#allocation3 + $0x1688] sm:$0xff]
    %v919 = vld [vmem:[#allocation3 + $0x1690] sm:$0xff]
    %v920 = vld [vmem:[#allocation3 + $0x1698] sm:$0xff]
    %v921 = vld [vmem:[#allocation3 + $0x16a0] sm:$0xff]
    %v922 = vld [vmem:[#allocation3 + $0x16a8] sm:$0xff]
    %v923 = vld [vmem:[#allocation3 + $0x16b0] sm:$0xff]
    %v924 = vld [vmem:[#allocation3 + $0x16b8] sm:$0xff]
    %v925 = vld [vmem:[#allocation3 + $0x16c0] sm:$0xff]
    %v926 = vld [vmem:[#allocation3 + $0x16c8] sm:$0xff]
    %v927 = vld [vmem:[#allocation3 + $0x16d0] sm:$0xff]
    %v928 = vld [vmem:[#allocation3 + $0x16d8] sm:$0xff]
    %v929 = vld [vmem:[#allocation3 + $0x16e0] sm:$0xff]
    %v930 = vld [vmem:[#allocation3 + $0x16e8] sm:$0xff]
    %v931 = vld [vmem:[#allocation3 + $0x16f0] sm:$0xff]
    %v932 = vld [vmem:[#allocation3 + $0x16f8] sm:$0xff]
    %v933 = vld [vmem:[#allocation3 + $0x1700] sm:$0xff]
    %v934 = vld [vmem:[#allocation3 + $0x1708] sm:$0xff]
    %v935 = vld [vmem:[#allocation3 + $0x1710] sm:$0xff]
    %v936 = vld [vmem:[#allocation3 + $0x1718] sm:$0xff]
    %v937 = vld [vmem:[#allocation3 + $0x1720] sm:$0xff]
    %v938 = vld [vmem:[#allocation3 + $0x1728] sm:$0xff]
    %v939 = vld [vmem:[#allocation3 + $0x1730] sm:$0xff]
    %v940 = vld [vmem:[#allocation3 + $0x1738] sm:$0xff]
    %v941 = vld [vmem:[#allocation3 + $0x1740] sm:$0xff]
    %v942 = vld [vmem:[#allocation3 + $0x1748] sm:$0xff]
    %v943 = vld [vmem:[#allocation3 + $0x1750] sm:$0xff]
    %v944 = vld [vmem:[#allocation3 + $0x1758] sm:$0xff]
    %v945 = vld [vmem:[#allocation3 + $0x1760] sm:$0xff]
    %v946 = vld [vmem:[#allocation3 + $0x1768] sm:$0xff]
    %v947 = vld [vmem:[#allocation3 + $0x1770] sm:$0xff]
    %v948 = vld [vmem:[#allocation3 + $0x1778] sm:$0xff]
    %v949 = vld [vmem:[#allocation3 + $0x1780] sm:$0xff]
    %v950 = vld [vmem:[#allocation3 + $0x1788] sm:$0xff]
    %v951 = vld [vmem:[#allocation3 + $0x1790] sm:$0xff]
    %v952 = vld [vmem:[#allocation3 + $0x1798] sm:$0xff]
    %v953 = vld [vmem:[#allocation3 + $0x17a0] sm:$0xff]
    %v954 = vld [vmem:[#allocation3 + $0x17a8] sm:$0xff]
    %v955 = vld [vmem:[#allocation3 + $0x17b0] sm:$0xff]
    %v956 = vld [vmem:[#allocation3 + $0x17b8] sm:$0xff]
    %v957 = vld [vmem:[#allocation3 + $0x17c0] sm:$0xff]
    %v958 = vld [vmem:[#allocation3 + $0x17c8] sm:$0xff]
    %v959 = vld [vmem:[#allocation3 + $0x17d0] sm:$0xff]
    %v960 = vld [vmem:[#allocation3 + $0x17d8] sm:$0xff]
    %v961 = vld [vmem:[#allocation3 + $0x17e0] sm:$0xff]
    %v962 = vld [vmem:[#allocation3 + $0x17e8] sm:$0xff]
    %v963 = vld [vmem:[#allocation3 + $0x17f0] sm:$0xff]
    %v964 = vld [vmem:[#allocation3 + $0x17f8] sm:$0xff]
    %v965 = vld [vmem:[#allocation3 + $0x1800] sm:$0xff]
    %v966 = vld [vmem:[#allocation3 + $0x1808] sm:$0xff]
    %v967 = vld [vmem:[#allocation3 + $0x1810] sm:$0xff]
    %v968 = vld [vmem:[#allocation3 + $0x1818] sm:$0xff]
    %v969 = vld [vmem:[#allocation3 + $0x1820] sm:$0xff]
    %v970 = vld [vmem:[#allocation3 + $0x1828] sm:$0xff]
    %v971 = vld [vmem:[#allocation3 + $0x1830] sm:$0xff]
    %v972 = vld [vmem:[#allocation3 + $0x1838] sm:$0xff]
    %v973 = vld [vmem:[#allocation3 + $0x1840] sm:$0xff]
    %v974 = vld [vmem:[#allocation3 + $0x1848] sm:$0xff]
    %v975 = vld [vmem:[#allocation3 + $0x1850] sm:$0xff]
    %v976 = vld [vmem:[#allocation3 + $0x1858] sm:$0xff]
    %v977 = vld [vmem:[#allocation3 + $0x1860] sm:$0xff]
    %v978 = vld [vmem:[#allocation3 + $0x1868] sm:$0xff]
    %v979 = vld [vmem:[#allocation3 + $0x1870] sm:$0xff]
    %v980 = vld [vmem:[#allocation3 + $0x1878] sm:$0xff]
    %v981 = vld [vmem:[#allocation3 + $0x1880] sm:$0xff]
    %v982 = vld [vmem:[#allocation3 + $0x1888] sm:$0xff]
    %v983 = vld [vmem:[#allocation3 + $0x1890] sm:$0xff]
    %v984 = vld [vmem:[#allocation3 + $0x1898] sm:$0xff]
    %v985 = vld [vmem:[#allocation3 + $0x18a0] sm:$0xff]
    %v986 = vld [vmem:[#allocation3 + $0x18a8] sm:$0xff]
    %v987 = vld [vmem:[#allocation3 + $0x18b0] sm:$0xff]
    %v988 = vld [vmem:[#allocation3 + $0x18b8] sm:$0xff]
    %v989 = vld [vmem:[#allocation3 + $0x18c0] sm:$0xff]
    %v990 = vld [vmem:[#allocation3 + $0x18c8] sm:$0xff]
    %v991 = vld [vmem:[#allocation3 + $0x18d0] sm:$0xff]
    %v992 = vld [vmem:[#allocation3 + $0x18d8] sm:$0xff]
    %v993 = vld [vmem:[#allocation3 + $0x18e0] sm:$0xff]
    %v994 = vld [vmem:[#allocation3 + $0x18e8] sm:$0xff]
    %v995 = vld [vmem:[#allocation3 + $0x18f0] sm:$0xff]
    %v996 = vld [vmem:[#allocation3 + $0x18f8] sm:$0xff]
    %v997 = vld [vmem:[#allocation3 + $0x1900] sm:$0xff]
    %v998 = vld [vmem:[#allocation3 + $0x1908] sm:$0xff]
    %v999 = vld [vmem:[#allocation3 + $0x1910] sm:$0xff]
    %v1000 = vld [vmem:[#allocation3 + $0x1918] sm:$0xff]
    %v1001 = vld [vmem:[#allocation3 + $0x1920] sm:$0xff]
    %v1002 = vld [vmem:[#allocation3 + $0x1928] sm:$0xff]
    %v1003 = vld [vmem:[#allocation3 + $0x1930] sm:$0xff]
    %v1004 = vld [vmem:[#allocation3 + $0x1938] sm:$0xff]
    %v1005 = vld [vmem:[#allocation3 + $0x1940] sm:$0xff]
    %v1006 = vld [vmem:[#allocation3 + $0x1948] sm:$0xff]
    %v1007 = vld [vmem:[#allocation3 + $0x1950] sm:$0xff]
    %v1008 = vld [vmem:[#allocation3 + $0x1958] sm:$0xff]
    %v1009 = vld [vmem:[#allocation3 + $0x1960] sm:$0xff]
    %v1010 = vld [vmem:[#allocation3 + $0x1968] sm:$0xff]
    %v1011 = vld [vmem:[#allocation3 + $0x1970] sm:$0xff]
    %v1012 = vld [vmem:[#allocation3 + $0x1978] sm:$0xff]
    %v1013 = vld [vmem:[#allocation3 + $0x1980] sm:$0xff]
    %v1014 = vld [vmem:[#allocation3 + $0x1988] sm:$0xff]
    %v1015 = vld [vmem:[#allocation3 + $0x1990] sm:$0xff]
    %v1016 = vld [vmem:[#allocation3 + $0x1998] sm:$0xff]
    %v1017 = vld [vmem:[#allocation3 + $0x19a0] sm:$0xff]
    %v1018 = vld [vmem:[#allocation3 + $0x19a8] sm:$0xff]
    %v1019 = vld [vmem:[#allocation3 + $0x19b0] sm:$0xff]
    %v1020 = vld [vmem:[#allocation3 + $0x19b8] sm:$0xff]
    %v1021 = vld [vmem:[#allocation3 + $0x19c0] sm:$0xff]
    %v1022 = vld [vmem:[#allocation3 + $0x19c8] sm:$0xff]
    %v1023 = vld [vmem:[#allocation3 + $0x19d0] sm:$0xff]
    %v1024 = vld [vmem:[#allocation3 + $0x19d8] sm:$0xff]
    %v1025 = vld [vmem:[#allocation3 + $0x19e0] sm:$0xff]
    %v1026 = vld [vmem:[#allocation3 + $0x19e8] sm:$0xff]
    %v1027 = vld [vmem:[#allocation3 + $0x19f0] sm:$0xff]
    %v1028 = vld [vmem:[#allocation3 + $0x19f8] sm:$0xff]
    %v1029 = vld [vmem:[#allocation3 + $0x1a00] sm:$0xff]
    %v1030 = vld [vmem:[#allocation3 + $0x1a08] sm:$0xff]
    %v1031 = vld [vmem:[#allocation3 + $0x1a10] sm:$0xff]
    %v1032 = vld [vmem:[#allocation3 + $0x1a18] sm:$0xff]
    %v1033 = vld [vmem:[#allocation3 + $0x1a20] sm:$0xff]
    %v1034 = vld [vmem:[#allocation3 + $0x1a28] sm:$0xff]
    %v1035 = vld [vmem:[#allocation3 + $0x1a30] sm:$0xff]
    %v1036 = vld [vmem:[#allocation3 + $0x1a38] sm:$0xff]
    %v1037 = vld [vmem:[#allocation3 + $0x1a40] sm:$0xff]
    %v1038 = vld [vmem:[#allocation3 + $0x1a48] sm:$0xff]
    %v1039 = vld [vmem:[#allocation3 + $0x1a50] sm:$0xff]
    %v1040 = vld [vmem:[#allocation3 + $0x1a58] sm:$0xff]
    %v1041 = vld [vmem:[#allocation3 + $0x1a60] sm:$0xff]
    %v1042 = vld [vmem:[#allocation3 + $0x1a68] sm:$0xff]
    %v1043 = vld [vmem:[#allocation3 + $0x1a70] sm:$0xff]
    %v1044 = vld [vmem:[#allocation3 + $0x1a78] sm:$0xff]
    %v1045 = vld [vmem:[#allocation3 + $0x1a80] sm:$0xff]
    %v1046 = vld [vmem:[#allocation3 + $0x1a88] sm:$0xff]
    %v1047 = vld [vmem:[#allocation3 + $0x1a90] sm:$0xff]
    %v1048 = vld [vmem:[#allocation3 + $0x1a98] sm:$0xff]
    %v1049 = vld [vmem:[#allocation3 + $0x1aa0] sm:$0xff]
    %v1050 = vld [vmem:[#allocation3 + $0x1aa8] sm:$0xff]
    %v1051 = vld [vmem:[#allocation3 + $0x1ab0] sm:$0xff]
    %v1052 = vld [vmem:[#allocation3 + $0x1ab8] sm:$0xff]
    %v1053 = vld [vmem:[#allocation3 + $0x1ac0] sm:$0xff]
    %v1054 = vld [vmem:[#allocation3 + $0x1ac8] sm:$0xff]
    %v1055 = vld [vmem:[#allocation3 + $0x1ad0] sm:$0xff]
    %v1056 = vld [vmem:[#allocation3 + $0x1ad8] sm:$0xff]
    %v1057 = vld [vmem:[#allocation3 + $0x1ae0] sm:$0xff]
    %v1058 = vld [vmem:[#allocation3 + $0x1ae8] sm:$0xff]
    %v1059 = vld [vmem:[#allocation3 + $0x1af0] sm:$0xff]
    %v1060 = vld [vmem:[#allocation3 + $0x1af8] sm:$0xff]
    %v1061 = vld [vmem:[#allocation3 + $0x1b00] sm:$0xff]
    %v1062 = vld [vmem:[#allocation3 + $0x1b08] sm:$0xff]
    %v1063 = vld [vmem:[#allocation3 + $0x1b10] sm:$0xff]
    %v1064 = vld [vmem:[#allocation3 + $0x1b18] sm:$0xff]
    %v1065 = vld [vmem:[#allocation3 + $0x1b20] sm:$0xff]
    %v1066 = vld [vmem:[#allocation3 + $0x1b28] sm:$0xff]
    %v1067 = vld [vmem:[#allocation3 + $0x1b30] sm:$0xff]
    %v1068 = vld [vmem:[#allocation3 + $0x1b38] sm:$0xff]
    %v1069 = vld [vmem:[#allocation3 + $0x1b40] sm:$0xff]
    %v1070 = vld [vmem:[#allocation3 + $0x1b48] sm:$0xff]
    %v1071 = vld [vmem:[#allocation3 + $0x1b50] sm:$0xff]
    %v1072 = vld [vmem:[#allocation3 + $0x1b58] sm:$0xff]
    %v1073 = vld [vmem:[#allocation3 + $0x1b60] sm:$0xff]
    %v1074 = vld [vmem:[#allocation3 + $0x1b68] sm:$0xff]
    %v1075 = vld [vmem:[#allocation3 + $0x1b70] sm:$0xff]
    %v1076 = vld [vmem:[#allocation3 + $0x1b78] sm:$0xff]
    %v1077 = vld [vmem:[#allocation3 + $0x1b80] sm:$0xff]
    %v1078 = vld [vmem:[#allocation3 + $0x1b88] sm:$0xff]
    %v1079 = vld [vmem:[#allocation3 + $0x1b90] sm:$0xff]
    %v1080 = vld [vmem:[#allocation3 + $0x1b98] sm:$0xff]
    %v1081 = vld [vmem:[#allocation3 + $0x1ba0] sm:$0xff]
    %v1082 = vld [vmem:[#allocation3 + $0x1ba8] sm:$0xff]
    %v1083 = vld [vmem:[#allocation3 + $0x1bb0] sm:$0xff]
    %v1084 = vld [vmem:[#allocation3 + $0x1bb8] sm:$0xff]
    %v1085 = vld [vmem:[#allocation3 + $0x1bc0] sm:$0xff]
    %v1086 = vld [vmem:[#allocation3 + $0x1bc8] sm:$0xff]
    %v1087 = vld [vmem:[#allocation3 + $0x1bd0] sm:$0xff]
    %v1088 = vld [vmem:[#allocation3 + $0x1bd8] sm:$0xff]
    %v1089 = vld [vmem:[#allocation3 + $0x1be0] sm:$0xff]
    %v1090 = vld [vmem:[#allocation3 + $0x1be8] sm:$0xff]
    %v1091 = vld [vmem:[#allocation3 + $0x1bf0] sm:$0xff]
    %v1092 = vld [vmem:[#allocation3 + $0x1bf8] sm:$0xff]
    %v1093 = vld [vmem:[#allocation3 + $0x1c00] sm:$0xff]
    %v1094 = vld [vmem:[#allocation3 + $0x1c08] sm:$0xff]
    %v1095 = vld [vmem:[#allocation3 + $0x1c10] sm:$0xff]
    %v1096 = vld [vmem:[#allocation3 + $0x1c18] sm:$0xff]
    %v1097 = vld [vmem:[#allocation3 + $0x1c20] sm:$0xff]
    %v1098 = vld [vmem:[#allocation3 + $0x1c28] sm:$0xff]
    %v1099 = vld [vmem:[#allocation3 + $0x1c30] sm:$0xff]
    %v1100 = vld [vmem:[#allocation3 + $0x1c38] sm:$0xff]
    %v1101 = vld [vmem:[#allocation3 + $0x1c40] sm:$0xff]
    %v1102 = vld [vmem:[#allocation3 + $0x1c48] sm:$0xff]
    %v1103 = vld [vmem:[#allocation3 + $0x1c50] sm:$0xff]
    %v1104 = vld [vmem:[#allocation3 + $0x1c58] sm:$0xff]
    %v1105 = vld [vmem:[#allocation3 + $0x1c60] sm:$0xff]
    %v1106 = vld [vmem:[#allocation3 + $0x1c68] sm:$0xff]
    %v1107 = vld [vmem:[#allocation3 + $0x1c70] sm:$0xff]
    %v1108 = vld [vmem:[#allocation3 + $0x1c78] sm:$0xff]
    %v1109 = vld [vmem:[#allocation3 + $0x1c80] sm:$0xff]
    %v1110 = vld [vmem:[#allocation3 + $0x1c88] sm:$0xff]
    %v1111 = vld [vmem:[#allocation3 + $0x1c90] sm:$0xff]
    %v1112 = vld [vmem:[#allocation3 + $0x1c98] sm:$0xff]
    %v1113 = vld [vmem:[#allocation3 + $0x1ca0] sm:$0xff]
    %v1114 = vld [vmem:[#allocation3 + $0x1ca8] sm:$0xff]
    %v1115 = vld [vmem:[#allocation3 + $0x1cb0] sm:$0xff]
    %v1116 = vld [vmem:[#allocation3 + $0x1cb8] sm:$0xff]
    %v1117 = vld [vmem:[#allocation3 + $0x1cc0] sm:$0xff]
    %v1118 = vld [vmem:[#allocation3 + $0x1cc8] sm:$0xff]
    %v1119 = vld [vmem:[#allocation3 + $0x1cd0] sm:$0xff]
    %v1120 = vld [vmem:[#allocation3 + $0x1cd8] sm:$0xff]
    %v1121 = vld [vmem:[#allocation3 + $0x1ce0] sm:$0xff]
    %v1122 = vld [vmem:[#allocation3 + $0x1ce8] sm:$0xff]
    %v1123 = vld [vmem:[#allocation3 + $0x1cf0] sm:$0xff]
    %v1124 = vld [vmem:[#allocation3 + $0x1cf8] sm:$0xff]
    %v1125 = vld [vmem:[#allocation3 + $0x1d00] sm:$0xff]
    %v1126 = vld [vmem:[#allocation3 + $0x1d08] sm:$0xff]
    %v1127 = vld [vmem:[#allocation3 + $0x1d10] sm:$0xff]
    %v1128 = vld [vmem:[#allocation3 + $0x1d18] sm:$0xff]
    %v1129 = vld [vmem:[#allocation3 + $0x1d20] sm:$0xff]
    %v1130 = vld [vmem:[#allocation3 + $0x1d28] sm:$0xff]
    %v1131 = vld [vmem:[#allocation3 + $0x1d30] sm:$0xff]
    %v1132 = vld [vmem:[#allocation3 + $0x1d38] sm:$0xff]
    %v1133 = vld [vmem:[#allocation3 + $0x1d40] sm:$0xff]
    %v1134 = vld [vmem:[#allocation3 + $0x1d48] sm:$0xff]
    %v1135 = vld [vmem:[#allocation3 + $0x1d50] sm:$0xff]
    %v1136 = vld [vmem:[#allocation3 + $0x1d58] sm:$0xff]
    %v1137 = vld [vmem:[#allocation3 + $0x1d60] sm:$0xff]
    %v1138 = vld [vmem:[#allocation3 + $0x1d68] sm:$0xff]
    %v1139 = vld [vmem:[#allocation3 + $0x1d70] sm:$0xff]
    %v1140 = vld [vmem:[#allocation3 + $0x1d78] sm:$0xff]
    %v1141 = vld [vmem:[#allocation3 + $0x1d80] sm:$0xff]
    %v1142 = vld [vmem:[#allocation3 + $0x1d88] sm:$0xff]
    %v1143 = vld [vmem:[#allocation3 + $0x1d90] sm:$0xff]
    %v1144 = vld [vmem:[#allocation3 + $0x1d98] sm:$0xff]
    %v1145 = vld [vmem:[#allocation3 + $0x1da0] sm:$0xff]
    %v1146 = vld [vmem:[#allocation3 + $0x1da8] sm:$0xff]
    %v1147 = vld [vmem:[#allocation3 + $0x1db0] sm:$0xff]
    %v1148 = vld [vmem:[#allocation3 + $0x1db8] sm:$0xff]
    %v1149 = vld [vmem:[#allocation3 + $0x1dc0] sm:$0xff]
    %v1150 = vld [vmem:[#allocation3 + $0x1dc8] sm:$0xff]
    %v1151 = vld [vmem:[#allocation3 + $0x1dd0] sm:$0xff]
    %v1152 = vld [vmem:[#allocation3 + $0x1dd8] sm:$0xff]
    %v1153 = vld [vmem:[#allocation3 + $0x1de0] sm:$0xff]
    %v1154 = vld [vmem:[#allocation3 + $0x1de8] sm:$0xff]
    %v1155 = vld [vmem:[#allocation3 + $0x1df0] sm:$0xff]
    %v1156 = vld [vmem:[#allocation3 + $0x1df8] sm:$0xff]
    %v1157 = vld [vmem:[#allocation3 + $0x1e00] sm:$0xff]
    %v1158 = vld [vmem:[#allocation3 + $0x1e08] sm:$0xff]
    %v1159 = vld [vmem:[#allocation3 + $0x1e10] sm:$0xff]
    %v1160 = vld [vmem:[#allocation3 + $0x1e18] sm:$0xff]
    %v1161 = vld [vmem:[#allocation3 + $0x1e20] sm:$0xff]
    %v1162 = vld [vmem:[#allocation3 + $0x1e28] sm:$0xff]
    %v1163 = vld [vmem:[#allocation3 + $0x1e30] sm:$0xff]
    %v1164 = vld [vmem:[#allocation3 + $0x1e38] sm:$0xff]
    %v1165 = vld [vmem:[#allocation3 + $0x1e40] sm:$0xff]
    %v1166 = vld [vmem:[#allocation3 + $0x1e48] sm:$0xff]
    %v1167 = vld [vmem:[#allocation3 + $0x1e50] sm:$0xff]
    %v1168 = vld [vmem:[#allocation3 + $0x1e58] sm:$0xff]
    %v1169 = vld [vmem:[#allocation3 + $0x1e60] sm:$0xff]
    %v1170 = vld [vmem:[#allocation3 + $0x1e68] sm:$0xff]
    %v1171 = vld [vmem:[#allocation3 + $0x1e70] sm:$0xff]
    %v1172 = vld [vmem:[#allocation3 + $0x1e78] sm:$0xff]
    %v1173 = vld [vmem:[#allocation3 + $0x1e80] sm:$0xff]
    %v1174 = vld [vmem:[#allocation3 + $0x1e88] sm:$0xff]
    %v1175 = vld [vmem:[#allocation3 + $0x1e90] sm:$0xff]
    %v1176 = vld [vmem:[#allocation3 + $0x1e98] sm:$0xff]
    %v1177 = vld [vmem:[#allocation3 + $0x1ea0] sm:$0xff]
    %v1178 = vld [vmem:[#allocation3 + $0x1ea8] sm:$0xff]
    %v1179 = vld [vmem:[#allocation3 + $0x1eb0] sm:$0xff]
    %v1180 = vld [vmem:[#allocation3 + $0x1eb8] sm:$0xff]
    %v1181 = vld [vmem:[#allocation3 + $0x1ec0] sm:$0xff]
    %v1182 = vld [vmem:[#allocation3 + $0x1ec8] sm:$0xff]
    %v1183 = vld [vmem:[#allocation3 + $0x1ed0] sm:$0xff]
    %v1184 = vld [vmem:[#allocation3 + $0x1ed8] sm:$0xff]
    %v1185 = vld [vmem:[#allocation3 + $0x1ee0] sm:$0xff]
    %v1186 = vld [vmem:[#allocation3 + $0x1ee8] sm:$0xff]
    %v1187 = vld [vmem:[#allocation3 + $0x1ef0] sm:$0xff]
    %v1188 = vld [vmem:[#allocation3 + $0x1ef8] sm:$0xff]
    %v1189 = vld [vmem:[#allocation3 + $0x1f00] sm:$0xff]
    %v1190 = vld [vmem:[#allocation3 + $0x1f08] sm:$0xff]
    %v1191 = vld [vmem:[#allocation3 + $0x1f10] sm:$0xff]
    %v1192 = vld [vmem:[#allocation3 + $0x1f18] sm:$0xff]
    %v1193 = vld [vmem:[#allocation3 + $0x1f20] sm:$0xff]
    %v1194 = vld [vmem:[#allocation3 + $0x1f28] sm:$0xff]
    %v1195 = vld [vmem:[#allocation3 + $0x1f30] sm:$0xff]
    %v1196 = vld [vmem:[#allocation3 + $0x1f38] sm:$0xff]
    %v1197 = vld [vmem:[#allocation3 + $0x1f40] sm:$0xff]
    %v1198 = vld [vmem:[#allocation3 + $0x1f48] sm:$0xff]
    %v1199 = vld [vmem:[#allocation3 + $0x1f50] sm:$0xff]
    %v1200 = vld [vmem:[#allocation3 + $0x1f58] sm:$0xff]
    %v1201 = vld [vmem:[#allocation3 + $0x1f60] sm:$0xff]
    %v1202 = vld [vmem:[#allocation3 + $0x1f68] sm:$0xff]
    %v1203 = vld [vmem:[#allocation3 + $0x1f70] sm:$0xff]
    %v1204 = vld [vmem:[#allocation3 + $0x1f78] sm:$0xff]
    %v1205 = vld [vmem:[#allocation3 + $0x1f80] sm:$0xff]
    %v1206 = vld [vmem:[#allocation3 + $0x1f88] sm:$0xff]
    %v1207 = vld [vmem:[#allocation3 + $0x1f90] sm:$0xff]
    %v1208 = vld [vmem:[#allocation3 + $0x1f98] sm:$0xff]
    %v1209 = vld [vmem:[#allocation3 + $0x1fa0] sm:$0xff]
    %v1210 = vld [vmem:[#allocation3 + $0x1fa8] sm:$0xff]
    %v1211 = vld [vmem:[#allocation3 + $0x1fb0] sm:$0xff]
    %v1212 = vld [vmem:[#allocation3 + $0x1fb8] sm:$0xff]
    %v1213 = vld [vmem:[#allocation3 + $0x1fc0] sm:$0xff]
    %v1214 = vld [vmem:[#allocation3 + $0x1fc8] sm:$0xff]
    %v1215 = vld [vmem:[#allocation3 + $0x1fd0] sm:$0xff]
    %v1216 = vld [vmem:[#allocation3 + $0x1fd8] sm:$0xff]
    %v1217 = vld [vmem:[#allocation3 + $0x1fe0] sm:$0xff]
    %v1218 = vld [vmem:[#allocation3 + $0x1fe8] sm:$0xff]
    %v1219 = vld [vmem:[#allocation3 + $0x1ff0] sm:$0xff]
    %v1220 = vld [vmem:[#allocation3 + $0x1ff8] sm:$0xff]
    %v1221 = vld [vmem:[#allocation5] sm:$0xff]
    %v1222 = vld [vmem:[#allocation5 + $0x8] sm:$0xff]
    %v1225 = vperm.slane %v1221, 0
    %v1226 = vperm.slane %v1221, 1
    %v1227 = vperm.slane %v1221, 2
    %v1228 = vperm.slane %v1221, 3
    %v1229 = vperm.slane %v1221, 4
    %v1230 = vperm.slane %v1221, 5
    %v1231 = vperm.slane %v1221, 6
    %v1232 = vperm.slane %v1221, 7
    %v1233 = vperm.slane %v1222, 0
    %v1234 = vperm.slane %v1222, 1
    %v1235 = vperm.slane %v1222, 2
    %v1236 = vperm.slane %v1222, 3
    %v1237 = vperm.slane %v1222, 4
    %v1238 = vperm.slane %v1222, 5
    %v1239 = vperm.slane %v1222, 6
    %v1240 = vperm.slane %v1222, 7
    %v1261 = vunpack.c.l.b16 %v193
    %v1262 = vunpack.c.h.b16 %v193
    %v1263 = vunpack.c.l.b16 %v194
    %v1264 = vunpack.c.h.b16 %v194
    %v1265 = vunpack.c.l.b16 %v195
    %v1266 = vunpack.c.h.b16 %v195
    %v1267 = vunpack.c.l.b16 %v196
    %v1268 = vunpack.c.h.b16 %v196
    %v1269 = vpack.c.b16 %v1261, %v1261
    %v1270 = vpack.c.b16 %v1262, %v1262
    %v1271 = vpack.c.b16 %v1263, %v1263
    %v1272 = vpack.c.b16 %v1264, %v1264
    %v1273 = vpack.c.b16 %v1265, %v1265
    %v1274 = vpack.c.b16 %v1266, %v1266
    %v1275 = vpack.c.b16 %v1267, %v1267
    %v1276 = vpack.c.b16 %v1268, %v1268
    %v2309 = vunpack.c.l.b16 %v197
    %v2310 = vunpack.c.h.b16 %v197
    %v2311 = vunpack.c.l.b16 %v198
    %v2312 = vunpack.c.h.b16 %v198
    %v2313 = vunpack.c.l.b16 %v199
    %v2314 = vunpack.c.h.b16 %v199
    %v2315 = vunpack.c.l.b16 %v200
    %v2316 = vunpack.c.h.b16 %v200
    %v2317 = vunpack.c.l.b16 %v201
    %v2318 = vunpack.c.h.b16 %v201
    %v2319 = vunpack.c.l.b16 %v202
    %v2320 = vunpack.c.h.b16 %v202
    %v2321 = vunpack.c.l.b16 %v203
    %v2322 = vunpack.c.h.b16 %v203
    %v2323 = vunpack.c.l.b16 %v204
    %v2324 = vunpack.c.h.b16 %v204
    %v2325 = vunpack.c.l.b16 %v205
    %v2326 = vunpack.c.h.b16 %v205
    %v2327 = vunpack.c.l.b16 %v206
    %v2328 = vunpack.c.h.b16 %v206
    %v2329 = vunpack.c.l.b16 %v207
    %v2330 = vunpack.c.h.b16 %v207
    %v2331 = vunpack.c.l.b16 %v208
    %v2332 = vunpack.c.h.b16 %v208
    %v2333 = vunpack.c.l.b16 %v209
    %v2334 = vunpack.c.h.b16 %v209
    %v2335 = vunpack.c.l.b16 %v210
    %v2336 = vunpack.c.h.b16 %v210
    %v2337 = vunpack.c.l.b16 %v211
    %v2338 = vunpack.c.h.b16 %v211
    %v2339 = vunpack.c.l.b16 %v212
    %v2340 = vunpack.c.h.b16 %v212
    %v2341 = vunpack.c.l.b16 %v213
    %v2342 = vunpack.c.h.b16 %v213
    %v2343 = vunpack.c.l.b16 %v214
    %v2344 = vunpack.c.h.b16 %v214
    %v2345 = vunpack.c.l.b16 %v215
    %v2346 = vunpack.c.h.b16 %v215
    %v2347 = vunpack.c.l.b16 %v216
    %v2348 = vunpack.c.h.b16 %v216
    %v2349 = vunpack.c.l.b16 %v217
    %v2350 = vunpack.c.h.b16 %v217
    %v2351 = vunpack.c.l.b16 %v218
    %v2352 = vunpack.c.h.b16 %v218
    %v2353 = vunpack.c.l.b16 %v219
    %v2354 = vunpack.c.h.b16 %v219
    %v2355 = vunpack.c.l.b16 %v220
    %v2356 = vunpack.c.h.b16 %v220
    %v2357 = vunpack.c.l.b16 %v221
    %v2358 = vunpack.c.h.b16 %v221
    %v2359 = vunpack.c.l.b16 %v222
    %v2360 = vunpack.c.h.b16 %v222
    %v2361 = vunpack.c.l.b16 %v223
    %v2362 = vunpack.c.h.b16 %v223
    %v2363 = vunpack.c.l.b16 %v224
    %v2364 = vunpack.c.h.b16 %v224
    %v2365 = vunpack.c.l.b16 %v225
    %v2366 = vunpack.c.h.b16 %v225
    %v2367 = vunpack.c.l.b16 %v226
    %v2368 = vunpack.c.h.b16 %v226
    %v2369 = vunpack.c.l.b16 %v227
    %v2370 = vunpack.c.h.b16 %v227
    %v2371 = vunpack.c.l.b16 %v228
    %v2372 = vunpack.c.h.b16 %v228
    %v2373 = vunpack.c.l.b16 %v229
    %v2374 = vunpack.c.h.b16 %v229
    %v2375 = vunpack.c.l.b16 %v230
    %v2376 = vunpack.c.h.b16 %v230
    %v2377 = vunpack.c.l.b16 %v231
    %v2378 = vunpack.c.h.b16 %v231
    %v2379 = vunpack.c.l.b16 %v232
    %v2380 = vunpack.c.h.b16 %v232
    %v2381 = vunpack.c.l.b16 %v233
    %v2382 = vunpack.c.h.b16 %v233
    %v2383 = vunpack.c.l.b16 %v234
    %v2384 = vunpack.c.h.b16 %v234
    %v2385 = vunpack.c.l.b16 %v235
    %v2386 = vunpack.c.h.b16 %v235
    %v2387 = vunpack.c.l.b16 %v236
    %v2388 = vunpack.c.h.b16 %v236
    %v2389 = vunpack.c.l.b16 %v237
    %v2390 = vunpack.c.h.b16 %v237
    %v2391 = vunpack.c.l.b16 %v238
    %v2392 = vunpack.c.h.b16 %v238
    %v2393 = vunpack.c.l.b16 %v239
    %v2394 = vunpack.c.h.b16 %v239
    %v2395 = vunpack.c.l.b16 %v240
    %v2396 = vunpack.c.h.b16 %v240
    %v2397 = vunpack.c.l.b16 %v241
    %v2398 = vunpack.c.h.b16 %v241
    %v2399 = vunpack.c.l.b16 %v242
    %v2400 = vunpack.c.h.b16 %v242
    %v2401 = vunpack.c.l.b16 %v243
    %v2402 = vunpack.c.h.b16 %v243
    %v2403 = vunpack.c.l.b16 %v244
    %v2404 = vunpack.c.h.b16 %v244
    %v2405 = vunpack.c.l.b16 %v245
    %v2406 = vunpack.c.h.b16 %v245
    %v2407 = vunpack.c.l.b16 %v246
    %v2408 = vunpack.c.h.b16 %v246
    %v2409 = vunpack.c.l.b16 %v247
    %v2410 = vunpack.c.h.b16 %v247
    %v2411 = vunpack.c.l.b16 %v248
    %v2412 = vunpack.c.h.b16 %v248
    %v2413 = vunpack.c.l.b16 %v249
    %v2414 = vunpack.c.h.b16 %v249
    %v2415 = vunpack.c.l.b16 %v250
    %v2416 = vunpack.c.h.b16 %v250
    %v2417 = vunpack.c.l.b16 %v251
    %v2418 = vunpack.c.h.b16 %v251
    %v2419 = vunpack.c.l.b16 %v252
    %v2420 = vunpack.c.h.b16 %v252
    %v2421 = vunpack.c.l.b16 %v253
    %v2422 = vunpack.c.h.b16 %v253
    %v2423 = vunpack.c.l.b16 %v254
    %v2424 = vunpack.c.h.b16 %v254
    %v2425 = vunpack.c.l.b16 %v255
    %v2426 = vunpack.c.h.b16 %v255
    %v2427 = vunpack.c.l.b16 %v256
    %v2428 = vunpack.c.h.b16 %v256
    %v2429 = vunpack.c.l.b16 %v257
    %v2430 = vunpack.c.h.b16 %v257
    %v2431 = vunpack.c.l.b16 %v258
    %v2432 = vunpack.c.h.b16 %v258
    %v2433 = vunpack.c.l.b16 %v259
    %v2434 = vunpack.c.h.b16 %v259
    %v2435 = vunpack.c.l.b16 %v260
    %v2436 = vunpack.c.h.b16 %v260
    %v2437 = vunpack.c.l.b16 %v261
    %v2438 = vunpack.c.h.b16 %v261
    %v2439 = vunpack.c.l.b16 %v262
    %v2440 = vunpack.c.h.b16 %v262
    %v2441 = vunpack.c.l.b16 %v263
    %v2442 = vunpack.c.h.b16 %v263
    %v2443 = vunpack.c.l.b16 %v264
    %v2444 = vunpack.c.h.b16 %v264
    %v2445 = vunpack.c.l.b16 %v265
    %v2446 = vunpack.c.h.b16 %v265
    %v2447 = vunpack.c.l.b16 %v266
    %v2448 = vunpack.c.h.b16 %v266
    %v2449 = vunpack.c.l.b16 %v267
    %v2450 = vunpack.c.h.b16 %v267
    %v2451 = vunpack.c.l.b16 %v268
    %v2452 = vunpack.c.h.b16 %v268
    %v2453 = vunpack.c.l.b16 %v269
    %v2454 = vunpack.c.h.b16 %v269
    %v2455 = vunpack.c.l.b16 %v270
    %v2456 = vunpack.c.h.b16 %v270
    %v2457 = vunpack.c.l.b16 %v271
    %v2458 = vunpack.c.h.b16 %v271
    %v2459 = vunpack.c.l.b16 %v272
    %v2460 = vunpack.c.h.b16 %v272
    %v2461 = vunpack.c.l.b16 %v273
    %v2462 = vunpack.c.h.b16 %v273
    %v2463 = vunpack.c.l.b16 %v274
    %v2464 = vunpack.c.h.b16 %v274
    %v2465 = vunpack.c.l.b16 %v275
    %v2466 = vunpack.c.h.b16 %v275
    %v2467 = vunpack.c.l.b16 %v276
    %v2468 = vunpack.c.h.b16 %v276
    %v2469 = vunpack.c.l.b16 %v277
    %v2470 = vunpack.c.h.b16 %v277
    %v2471 = vunpack.c.l.b16 %v278
    %v2472 = vunpack.c.h.b16 %v278
    %v2473 = vunpack.c.l.b16 %v279
    %v2474 = vunpack.c.h.b16 %v279
    %v2475 = vunpack.c.l.b16 %v280
    %v2476 = vunpack.c.h.b16 %v280
    %v2477 = vunpack.c.l.b16 %v281
    %v2478 = vunpack.c.h.b16 %v281
    %v2479 = vunpack.c.l.b16 %v282
    %v2480 = vunpack.c.h.b16 %v282
    %v2481 = vunpack.c.l.b16 %v283
    %v2482 = vunpack.c.h.b16 %v283
    %v2483 = vunpack.c.l.b16 %v284
    %v2484 = vunpack.c.h.b16 %v284
    %v2485 = vunpack.c.l.b16 %v285
    %v2486 = vunpack.c.h.b16 %v285
    %v2487 = vunpack.c.l.b16 %v286
    %v2488 = vunpack.c.h.b16 %v286
    %v2489 = vunpack.c.l.b16 %v287
    %v2490 = vunpack.c.h.b16 %v287
    %v2491 = vunpack.c.l.b16 %v288
    %v2492 = vunpack.c.h.b16 %v288
    %v2493 = vunpack.c.l.b16 %v289
    %v2494 = vunpack.c.h.b16 %v289
    %v2495 = vunpack.c.l.b16 %v290
    %v2496 = vunpack.c.h.b16 %v290
    %v2497 = vunpack.c.l.b16 %v291
    %v2498 = vunpack.c.h.b16 %v291
    %v2499 = vunpack.c.l.b16 %v292
    %v2500 = vunpack.c.h.b16 %v292
    %v2501 = vunpack.c.l.b16 %v293
    %v2502 = vunpack.c.h.b16 %v293
    %v2503 = vunpack.c.l.b16 %v294
    %v2504 = vunpack.c.h.b16 %v294
    %v2505 = vunpack.c.l.b16 %v295
    %v2506 = vunpack.c.h.b16 %v295
    %v2507 = vunpack.c.l.b16 %v296
    %v2508 = vunpack.c.h.b16 %v296
    %v2509 = vunpack.c.l.b16 %v297
    %v2510 = vunpack.c.h.b16 %v297
    %v2511 = vunpack.c.l.b16 %v298
    %v2512 = vunpack.c.h.b16 %v298
    %v2513 = vunpack.c.l.b16 %v299
    %v2514 = vunpack.c.h.b16 %v299
    %v2515 = vunpack.c.l.b16 %v300
    %v2516 = vunpack.c.h.b16 %v300
    %v2517 = vunpack.c.l.b16 %v301
    %v2518 = vunpack.c.h.b16 %v301
    %v2519 = vunpack.c.l.b16 %v302
    %v2520 = vunpack.c.h.b16 %v302
    %v2521 = vunpack.c.l.b16 %v303
    %v2522 = vunpack.c.h.b16 %v303
    %v2523 = vunpack.c.l.b16 %v304
    %v2524 = vunpack.c.h.b16 %v304
    %v2525 = vunpack.c.l.b16 %v305
    %v2526 = vunpack.c.h.b16 %v305
    %v2527 = vunpack.c.l.b16 %v306
    %v2528 = vunpack.c.h.b16 %v306
    %v2529 = vunpack.c.l.b16 %v307
    %v2530 = vunpack.c.h.b16 %v307
    %v2531 = vunpack.c.l.b16 %v308
    %v2532 = vunpack.c.h.b16 %v308
    %v2533 = vunpack.c.l.b16 %v309
    %v2534 = vunpack.c.h.b16 %v309
    %v2535 = vunpack.c.l.b16 %v310
    %v2536 = vunpack.c.h.b16 %v310
    %v2537 = vunpack.c.l.b16 %v311
    %v2538 = vunpack.c.h.b16 %v311
    %v2539 = vunpack.c.l.b16 %v312
    %v2540 = vunpack.c.h.b16 %v312
    %v2541 = vunpack.c.l.b16 %v313
    %v2542 = vunpack.c.h.b16 %v313
    %v2543 = vunpack.c.l.b16 %v314
    %v2544 = vunpack.c.h.b16 %v314
    %v2545 = vunpack.c.l.b16 %v315
    %v2546 = vunpack.c.h.b16 %v315
    %v2547 = vunpack.c.l.b16 %v316
    %v2548 = vunpack.c.h.b16 %v316
    %v2549 = vunpack.c.l.b16 %v317
    %v2550 = vunpack.c.h.b16 %v317
    %v2551 = vunpack.c.l.b16 %v318
    %v2552 = vunpack.c.h.b16 %v318
    %v2553 = vunpack.c.l.b16 %v319
    %v2554 = vunpack.c.h.b16 %v319
    %v2555 = vunpack.c.l.b16 %v320
    %v2556 = vunpack.c.h.b16 %v320
    %v2557 = vunpack.c.l.b16 %v321
    %v2558 = vunpack.c.h.b16 %v321
    %v2559 = vunpack.c.l.b16 %v322
    %v2560 = vunpack.c.h.b16 %v322
    %v2561 = vunpack.c.l.b16 %v323
    %v2562 = vunpack.c.h.b16 %v323
    %v2563 = vunpack.c.l.b16 %v324
    %v2564 = vunpack.c.h.b16 %v324
    %v2565 = vunpack.c.l.b16 %v325
    %v2566 = vunpack.c.h.b16 %v325
    %v2567 = vunpack.c.l.b16 %v326
    %v2568 = vunpack.c.h.b16 %v326
    %v2569 = vunpack.c.l.b16 %v327
    %v2570 = vunpack.c.h.b16 %v327
    %v2571 = vunpack.c.l.b16 %v328
    %v2572 = vunpack.c.h.b16 %v328
    %v2573 = vunpack.c.l.b16 %v329
    %v2574 = vunpack.c.h.b16 %v329
    %v2575 = vunpack.c.l.b16 %v330
    %v2576 = vunpack.c.h.b16 %v330
    %v2577 = vunpack.c.l.b16 %v331
    %v2578 = vunpack.c.h.b16 %v331
    %v2579 = vunpack.c.l.b16 %v332
    %v2580 = vunpack.c.h.b16 %v332
    %v2581 = vunpack.c.l.b16 %v333
    %v2582 = vunpack.c.h.b16 %v333
    %v2583 = vunpack.c.l.b16 %v334
    %v2584 = vunpack.c.h.b16 %v334
    %v2585 = vunpack.c.l.b16 %v335
    %v2586 = vunpack.c.h.b16 %v335
    %v2587 = vunpack.c.l.b16 %v336
    %v2588 = vunpack.c.h.b16 %v336
    %v2589 = vunpack.c.l.b16 %v337
    %v2590 = vunpack.c.h.b16 %v337
    %v2591 = vunpack.c.l.b16 %v338
    %v2592 = vunpack.c.h.b16 %v338
    %v2593 = vunpack.c.l.b16 %v339
    %v2594 = vunpack.c.h.b16 %v339
    %v2595 = vunpack.c.l.b16 %v340
    %v2596 = vunpack.c.h.b16 %v340
    %v2597 = vunpack.c.l.b16 %v341
    %v2598 = vunpack.c.h.b16 %v341
    %v2599 = vunpack.c.l.b16 %v342
    %v2600 = vunpack.c.h.b16 %v342
    %v2601 = vunpack.c.l.b16 %v343
    %v2602 = vunpack.c.h.b16 %v343
    %v2603 = vunpack.c.l.b16 %v344
    %v2604 = vunpack.c.h.b16 %v344
    %v2605 = vunpack.c.l.b16 %v345
    %v2606 = vunpack.c.h.b16 %v345
    %v2607 = vunpack.c.l.b16 %v346
    %v2608 = vunpack.c.h.b16 %v346
    %v2609 = vunpack.c.l.b16 %v347
    %v2610 = vunpack.c.h.b16 %v347
    %v2611 = vunpack.c.l.b16 %v348
    %v2612 = vunpack.c.h.b16 %v348
    %v2613 = vunpack.c.l.b16 %v349
    %v2614 = vunpack.c.h.b16 %v349
    %v2615 = vunpack.c.l.b16 %v350
    %v2616 = vunpack.c.h.b16 %v350
    %v2617 = vunpack.c.l.b16 %v351
    %v2618 = vunpack.c.h.b16 %v351
    %v2619 = vunpack.c.l.b16 %v352
    %v2620 = vunpack.c.h.b16 %v352
    %v2621 = vunpack.c.l.b16 %v353
    %v2622 = vunpack.c.h.b16 %v353
    %v2623 = vunpack.c.l.b16 %v354
    %v2624 = vunpack.c.h.b16 %v354
    %v2625 = vunpack.c.l.b16 %v355
    %v2626 = vunpack.c.h.b16 %v355
    %v2627 = vunpack.c.l.b16 %v356
    %v2628 = vunpack.c.h.b16 %v356
    %v2629 = vunpack.c.l.b16 %v357
    %v2630 = vunpack.c.h.b16 %v357
    %v2631 = vunpack.c.l.b16 %v358
    %v2632 = vunpack.c.h.b16 %v358
    %v2633 = vunpack.c.l.b16 %v359
    %v2634 = vunpack.c.h.b16 %v359
    %v2635 = vunpack.c.l.b16 %v360
    %v2636 = vunpack.c.h.b16 %v360
    %v2637 = vunpack.c.l.b16 %v361
    %v2638 = vunpack.c.h.b16 %v361
    %v2639 = vunpack.c.l.b16 %v362
    %v2640 = vunpack.c.h.b16 %v362
    %v2641 = vunpack.c.l.b16 %v363
    %v2642 = vunpack.c.h.b16 %v363
    %v2643 = vunpack.c.l.b16 %v364
    %v2644 = vunpack.c.h.b16 %v364
    %v2645 = vunpack.c.l.b16 %v365
    %v2646 = vunpack.c.h.b16 %v365
    %v2647 = vunpack.c.l.b16 %v366
    %v2648 = vunpack.c.h.b16 %v366
    %v2649 = vunpack.c.l.b16 %v367
    %v2650 = vunpack.c.h.b16 %v367
    %v2651 = vunpack.c.l.b16 %v368
    %v2652 = vunpack.c.h.b16 %v368
    %v2653 = vunpack.c.l.b16 %v369
    %v2654 = vunpack.c.h.b16 %v369
    %v2655 = vunpack.c.l.b16 %v370
    %v2656 = vunpack.c.h.b16 %v370
    %v2657 = vunpack.c.l.b16 %v371
    %v2658 = vunpack.c.h.b16 %v371
    %v2659 = vunpack.c.l.b16 %v372
    %v2660 = vunpack.c.h.b16 %v372
    %v2661 = vunpack.c.l.b16 %v373
    %v2662 = vunpack.c.h.b16 %v373
    %v2663 = vunpack.c.l.b16 %v374
    %v2664 = vunpack.c.h.b16 %v374
    %v2665 = vunpack.c.l.b16 %v375
    %v2666 = vunpack.c.h.b16 %v375
    %v2667 = vunpack.c.l.b16 %v376
    %v2668 = vunpack.c.h.b16 %v376
    %v2669 = vunpack.c.l.b16 %v377
    %v2670 = vunpack.c.h.b16 %v377
    %v2671 = vunpack.c.l.b16 %v378
    %v2672 = vunpack.c.h.b16 %v378
    %v2673 = vunpack.c.l.b16 %v379
    %v2674 = vunpack.c.h.b16 %v379
    %v2675 = vunpack.c.l.b16 %v380
    %v2676 = vunpack.c.h.b16 %v380
    %v2677 = vunpack.c.l.b16 %v381
    %v2678 = vunpack.c.h.b16 %v381
    %v2679 = vunpack.c.l.b16 %v382
    %v2680 = vunpack.c.h.b16 %v382
    %v2681 = vunpack.c.l.b16 %v383
    %v2682 = vunpack.c.h.b16 %v383
    %v2683 = vunpack.c.l.b16 %v384
    %v2684 = vunpack.c.h.b16 %v384
    %v2685 = vunpack.c.l.b16 %v385
    %v2686 = vunpack.c.h.b16 %v385
    %v2687 = vunpack.c.l.b16 %v386
    %v2688 = vunpack.c.h.b16 %v386
    %v2689 = vunpack.c.l.b16 %v387
    %v2690 = vunpack.c.h.b16 %v387
    %v2691 = vunpack.c.l.b16 %v388
    %v2692 = vunpack.c.h.b16 %v388
    %v2693 = vunpack.c.l.b16 %v389
    %v2694 = vunpack.c.h.b16 %v389
    %v2695 = vunpack.c.l.b16 %v390
    %v2696 = vunpack.c.h.b16 %v390
    %v2697 = vunpack.c.l.b16 %v391
    %v2698 = vunpack.c.h.b16 %v391
    %v2699 = vunpack.c.l.b16 %v392
    %v2700 = vunpack.c.h.b16 %v392
    %v2701 = vunpack.c.l.b16 %v393
    %v2702 = vunpack.c.h.b16 %v393
    %v2703 = vunpack.c.l.b16 %v394
    %v2704 = vunpack.c.h.b16 %v394
    %v2705 = vunpack.c.l.b16 %v395
    %v2706 = vunpack.c.h.b16 %v395
    %v2707 = vunpack.c.l.b16 %v396
    %v2708 = vunpack.c.h.b16 %v396
    %v2709 = vunpack.c.l.b16 %v397
    %v2710 = vunpack.c.h.b16 %v397
    %v2711 = vunpack.c.l.b16 %v398
    %v2712 = vunpack.c.h.b16 %v398
    %v2713 = vunpack.c.l.b16 %v399
    %v2714 = vunpack.c.h.b16 %v399
    %v2715 = vunpack.c.l.b16 %v400
    %v2716 = vunpack.c.h.b16 %v400
    %v2717 = vunpack.c.l.b16 %v401
    %v2718 = vunpack.c.h.b16 %v401
    %v2719 = vunpack.c.l.b16 %v402
    %v2720 = vunpack.c.h.b16 %v402
    %v2721 = vunpack.c.l.b16 %v403
    %v2722 = vunpack.c.h.b16 %v403
    %v2723 = vunpack.c.l.b16 %v404
    %v2724 = vunpack.c.h.b16 %v404
    %v2725 = vunpack.c.l.b16 %v405
    %v2726 = vunpack.c.h.b16 %v405
    %v2727 = vunpack.c.l.b16 %v406
    %v2728 = vunpack.c.h.b16 %v406
    %v2729 = vunpack.c.l.b16 %v407
    %v2730 = vunpack.c.h.b16 %v407
    %v2731 = vunpack.c.l.b16 %v408
    %v2732 = vunpack.c.h.b16 %v408
    %v2733 = vunpack.c.l.b16 %v409
    %v2734 = vunpack.c.h.b16 %v409
    %v2735 = vunpack.c.l.b16 %v410
    %v2736 = vunpack.c.h.b16 %v410
    %v2737 = vunpack.c.l.b16 %v411
    %v2738 = vunpack.c.h.b16 %v411
    %v2739 = vunpack.c.l.b16 %v412
    %v2740 = vunpack.c.h.b16 %v412
    %v2741 = vunpack.c.l.b16 %v413
    %v2742 = vunpack.c.h.b16 %v413
    %v2743 = vunpack.c.l.b16 %v414
    %v2744 = vunpack.c.h.b16 %v414
    %v2745 = vunpack.c.l.b16 %v415
    %v2746 = vunpack.c.h.b16 %v415
    %v2747 = vunpack.c.l.b16 %v416
    %v2748 = vunpack.c.h.b16 %v416
    %v2749 = vunpack.c.l.b16 %v417
    %v2750 = vunpack.c.h.b16 %v417
    %v2751 = vunpack.c.l.b16 %v418
    %v2752 = vunpack.c.h.b16 %v418
    %v2753 = vunpack.c.l.b16 %v419
    %v2754 = vunpack.c.h.b16 %v419
    %v2755 = vunpack.c.l.b16 %v420
    %v2756 = vunpack.c.h.b16 %v420
    %v2757 = vunpack.c.l.b16 %v421
    %v2758 = vunpack.c.h.b16 %v421
    %v2759 = vunpack.c.l.b16 %v422
    %v2760 = vunpack.c.h.b16 %v422
    %v2761 = vunpack.c.l.b16 %v423
    %v2762 = vunpack.c.h.b16 %v423
    %v2763 = vunpack.c.l.b16 %v424
    %v2764 = vunpack.c.h.b16 %v424
    %v2765 = vunpack.c.l.b16 %v425
    %v2766 = vunpack.c.h.b16 %v425
    %v2767 = vunpack.c.l.b16 %v426
    %v2768 = vunpack.c.h.b16 %v426
    %v2769 = vunpack.c.l.b16 %v427
    %v2770 = vunpack.c.h.b16 %v427
    %v2771 = vunpack.c.l.b16 %v428
    %v2772 = vunpack.c.h.b16 %v428
    %v2773 = vunpack.c.l.b16 %v429
    %v2774 = vunpack.c.h.b16 %v429
    %v2775 = vunpack.c.l.b16 %v430
    %v2776 = vunpack.c.h.b16 %v430
    %v2777 = vunpack.c.l.b16 %v431
    %v2778 = vunpack.c.h.b16 %v431
    %v2779 = vunpack.c.l.b16 %v432
    %v2780 = vunpack.c.h.b16 %v432
    %v2781 = vunpack.c.l.b16 %v433
    %v2782 = vunpack.c.h.b16 %v433
    %v2783 = vunpack.c.l.b16 %v434
    %v2784 = vunpack.c.h.b16 %v434
    %v2785 = vunpack.c.l.b16 %v435
    %v2786 = vunpack.c.h.b16 %v435
    %v2787 = vunpack.c.l.b16 %v436
    %v2788 = vunpack.c.h.b16 %v436
    %v2789 = vunpack.c.l.b16 %v437
    %v2790 = vunpack.c.h.b16 %v437
    %v2791 = vunpack.c.l.b16 %v438
    %v2792 = vunpack.c.h.b16 %v438
    %v2793 = vunpack.c.l.b16 %v439
    %v2794 = vunpack.c.h.b16 %v439
    %v2795 = vunpack.c.l.b16 %v440
    %v2796 = vunpack.c.h.b16 %v440
    %v2797 = vunpack.c.l.b16 %v441
    %v2798 = vunpack.c.h.b16 %v441
    %v2799 = vunpack.c.l.b16 %v442
    %v2800 = vunpack.c.h.b16 %v442
    %v2801 = vunpack.c.l.b16 %v443
    %v2802 = vunpack.c.h.b16 %v443
    %v2803 = vunpack.c.l.b16 %v444
    %v2804 = vunpack.c.h.b16 %v444
    %v2805 = vunpack.c.l.b16 %v445
    %v2806 = vunpack.c.h.b16 %v445
    %v2807 = vunpack.c.l.b16 %v446
    %v2808 = vunpack.c.h.b16 %v446
    %v2809 = vunpack.c.l.b16 %v447
    %v2810 = vunpack.c.h.b16 %v447
    %v2811 = vunpack.c.l.b16 %v448
    %v2812 = vunpack.c.h.b16 %v448
    %v2813 = vunpack.c.l.b16 %v449
    %v2814 = vunpack.c.h.b16 %v449
    %v2815 = vunpack.c.l.b16 %v450
    %v2816 = vunpack.c.h.b16 %v450
    %v2817 = vunpack.c.l.b16 %v451
    %v2818 = vunpack.c.h.b16 %v451
    %v2819 = vunpack.c.l.b16 %v452
    %v2820 = vunpack.c.h.b16 %v452
    %v2821 = vunpack.c.l.b16 %v453
    %v2822 = vunpack.c.h.b16 %v453
    %v2823 = vunpack.c.l.b16 %v454
    %v2824 = vunpack.c.h.b16 %v454
    %v2825 = vunpack.c.l.b16 %v455
    %v2826 = vunpack.c.h.b16 %v455
    %v2827 = vunpack.c.l.b16 %v456
    %v2828 = vunpack.c.h.b16 %v456
    %v2829 = vunpack.c.l.b16 %v457
    %v2830 = vunpack.c.h.b16 %v457
    %v2831 = vunpack.c.l.b16 %v458
    %v2832 = vunpack.c.h.b16 %v458
    %v2833 = vunpack.c.l.b16 %v459
    %v2834 = vunpack.c.h.b16 %v459
    %v2835 = vunpack.c.l.b16 %v460
    %v2836 = vunpack.c.h.b16 %v460
    %v2837 = vunpack.c.l.b16 %v461
    %v2838 = vunpack.c.h.b16 %v461
    %v2839 = vunpack.c.l.b16 %v462
    %v2840 = vunpack.c.h.b16 %v462
    %v2841 = vunpack.c.l.b16 %v463
    %v2842 = vunpack.c.h.b16 %v463
    %v2843 = vunpack.c.l.b16 %v464
    %v2844 = vunpack.c.h.b16 %v464
    %v2845 = vunpack.c.l.b16 %v465
    %v2846 = vunpack.c.h.b16 %v465
    %v2847 = vunpack.c.l.b16 %v466
    %v2848 = vunpack.c.h.b16 %v466
    %v2849 = vunpack.c.l.b16 %v467
    %v2850 = vunpack.c.h.b16 %v467
    %v2851 = vunpack.c.l.b16 %v468
    %v2852 = vunpack.c.h.b16 %v468
    %v2853 = vunpack.c.l.b16 %v469
    %v2854 = vunpack.c.h.b16 %v469
    %v2855 = vunpack.c.l.b16 %v470
    %v2856 = vunpack.c.h.b16 %v470
    %v2857 = vunpack.c.l.b16 %v471
    %v2858 = vunpack.c.h.b16 %v471
    %v2859 = vunpack.c.l.b16 %v472
    %v2860 = vunpack.c.h.b16 %v472
    %v2861 = vunpack.c.l.b16 %v473
    %v2862 = vunpack.c.h.b16 %v473
    %v2863 = vunpack.c.l.b16 %v474
    %v2864 = vunpack.c.h.b16 %v474
    %v2865 = vunpack.c.l.b16 %v475
    %v2866 = vunpack.c.h.b16 %v475
    %v2867 = vunpack.c.l.b16 %v476
    %v2868 = vunpack.c.h.b16 %v476
    %v2869 = vunpack.c.l.b16 %v477
    %v2870 = vunpack.c.h.b16 %v477
    %v2871 = vunpack.c.l.b16 %v478
    %v2872 = vunpack.c.h.b16 %v478
    %v2873 = vunpack.c.l.b16 %v479
    %v2874 = vunpack.c.h.b16 %v479
    %v2875 = vunpack.c.l.b16 %v480
    %v2876 = vunpack.c.h.b16 %v480
    %v2877 = vunpack.c.l.b16 %v481
    %v2878 = vunpack.c.h.b16 %v481
    %v2879 = vunpack.c.l.b16 %v482
    %v2880 = vunpack.c.h.b16 %v482
    %v2881 = vunpack.c.l.b16 %v483
    %v2882 = vunpack.c.h.b16 %v483
    %v2883 = vunpack.c.l.b16 %v484
    %v2884 = vunpack.c.h.b16 %v484
    %v2885 = vunpack.c.l.b16 %v485
    %v2886 = vunpack.c.h.b16 %v485
    %v2887 = vunpack.c.l.b16 %v486
    %v2888 = vunpack.c.h.b16 %v486
    %v2889 = vunpack.c.l.b16 %v487
    %v2890 = vunpack.c.h.b16 %v487
    %v2891 = vunpack.c.l.b16 %v488
    %v2892 = vunpack.c.h.b16 %v488
    %v2893 = vunpack.c.l.b16 %v489
    %v2894 = vunpack.c.h.b16 %v489
    %v2895 = vunpack.c.l.b16 %v490
    %v2896 = vunpack.c.h.b16 %v490
    %v2897 = vunpack.c.l.b16 %v491
    %v2898 = vunpack.c.h.b16 %v491
    %v2899 = vunpack.c.l.b16 %v492
    %v2900 = vunpack.c.h.b16 %v492
    %v2901 = vunpack.c.l.b16 %v493
    %v2902 = vunpack.c.h.b16 %v493
    %v2903 = vunpack.c.l.b16 %v494
    %v2904 = vunpack.c.h.b16 %v494
    %v2905 = vunpack.c.l.b16 %v495
    %v2906 = vunpack.c.h.b16 %v495
    %v2907 = vunpack.c.l.b16 %v496
    %v2908 = vunpack.c.h.b16 %v496
    %v2909 = vunpack.c.l.b16 %v497
    %v2910 = vunpack.c.h.b16 %v497
    %v2911 = vunpack.c.l.b16 %v498
    %v2912 = vunpack.c.h.b16 %v498
    %v2913 = vunpack.c.l.b16 %v499
    %v2914 = vunpack.c.h.b16 %v499
    %v2915 = vunpack.c.l.b16 %v500
    %v2916 = vunpack.c.h.b16 %v500
    %v2917 = vunpack.c.l.b16 %v501
    %v2918 = vunpack.c.h.b16 %v501
    %v2919 = vunpack.c.l.b16 %v502
    %v2920 = vunpack.c.h.b16 %v502
    %v2921 = vunpack.c.l.b16 %v503
    %v2922 = vunpack.c.h.b16 %v503
    %v2923 = vunpack.c.l.b16 %v504
    %v2924 = vunpack.c.h.b16 %v504
    %v2925 = vunpack.c.l.b16 %v505
    %v2926 = vunpack.c.h.b16 %v505
    %v2927 = vunpack.c.l.b16 %v506
    %v2928 = vunpack.c.h.b16 %v506
    %v2929 = vunpack.c.l.b16 %v507
    %v2930 = vunpack.c.h.b16 %v507
    %v2931 = vunpack.c.l.b16 %v508
    %v2932 = vunpack.c.h.b16 %v508
    %v2933 = vunpack.c.l.b16 %v509
    %v2934 = vunpack.c.h.b16 %v509
    %v2935 = vunpack.c.l.b16 %v510
    %v2936 = vunpack.c.h.b16 %v510
    %v2937 = vunpack.c.l.b16 %v511
    %v2938 = vunpack.c.h.b16 %v511
    %v2939 = vunpack.c.l.b16 %v512
    %v2940 = vunpack.c.h.b16 %v512
    %v2941 = vunpack.c.l.b16 %v513
    %v2942 = vunpack.c.h.b16 %v513
    %v2943 = vunpack.c.l.b16 %v514
    %v2944 = vunpack.c.h.b16 %v514
    %v2945 = vunpack.c.l.b16 %v515
    %v2946 = vunpack.c.h.b16 %v515
    %v2947 = vunpack.c.l.b16 %v516
    %v2948 = vunpack.c.h.b16 %v516
    %v2949 = vunpack.c.l.b16 %v517
    %v2950 = vunpack.c.h.b16 %v517
    %v2951 = vunpack.c.l.b16 %v518
    %v2952 = vunpack.c.h.b16 %v518
    %v2953 = vunpack.c.l.b16 %v519
    %v2954 = vunpack.c.h.b16 %v519
    %v2955 = vunpack.c.l.b16 %v520
    %v2956 = vunpack.c.h.b16 %v520
    %v2957 = vunpack.c.l.b16 %v521
    %v2958 = vunpack.c.h.b16 %v521
    %v2959 = vunpack.c.l.b16 %v522
    %v2960 = vunpack.c.h.b16 %v522
    %v2961 = vunpack.c.l.b16 %v523
    %v2962 = vunpack.c.h.b16 %v523
    %v2963 = vunpack.c.l.b16 %v524
    %v2964 = vunpack.c.h.b16 %v524
    %v2965 = vunpack.c.l.b16 %v525
    %v2966 = vunpack.c.h.b16 %v525
    %v2967 = vunpack.c.l.b16 %v526
    %v2968 = vunpack.c.h.b16 %v526
    %v2969 = vunpack.c.l.b16 %v527
    %v2970 = vunpack.c.h.b16 %v527
    %v2971 = vunpack.c.l.b16 %v528
    %v2972 = vunpack.c.h.b16 %v528
    %v2973 = vunpack.c.l.b16 %v529
    %v2974 = vunpack.c.h.b16 %v529
    %v2975 = vunpack.c.l.b16 %v530
    %v2976 = vunpack.c.h.b16 %v530
    %v2977 = vunpack.c.l.b16 %v531
    %v2978 = vunpack.c.h.b16 %v531
    %v2979 = vunpack.c.l.b16 %v532
    %v2980 = vunpack.c.h.b16 %v532
    %v2981 = vunpack.c.l.b16 %v533
    %v2982 = vunpack.c.h.b16 %v533
    %v2983 = vunpack.c.l.b16 %v534
    %v2984 = vunpack.c.h.b16 %v534
    %v2985 = vunpack.c.l.b16 %v535
    %v2986 = vunpack.c.h.b16 %v535
    %v2987 = vunpack.c.l.b16 %v536
    %v2988 = vunpack.c.h.b16 %v536
    %v2989 = vunpack.c.l.b16 %v537
    %v2990 = vunpack.c.h.b16 %v537
    %v2991 = vunpack.c.l.b16 %v538
    %v2992 = vunpack.c.h.b16 %v538
    %v2993 = vunpack.c.l.b16 %v539
    %v2994 = vunpack.c.h.b16 %v539
    %v2995 = vunpack.c.l.b16 %v540
    %v2996 = vunpack.c.h.b16 %v540
    %v2997 = vunpack.c.l.b16 %v541
    %v2998 = vunpack.c.h.b16 %v541
    %v2999 = vunpack.c.l.b16 %v542
    %v3000 = vunpack.c.h.b16 %v542
    %v3001 = vunpack.c.l.b16 %v543
    %v3002 = vunpack.c.h.b16 %v543
    %v3003 = vunpack.c.l.b16 %v544
    %v3004 = vunpack.c.h.b16 %v544
    %v3005 = vunpack.c.l.b16 %v545
    %v3006 = vunpack.c.h.b16 %v545
    %v3007 = vunpack.c.l.b16 %v546
    %v3008 = vunpack.c.h.b16 %v546
    %v3009 = vunpack.c.l.b16 %v547
    %v3010 = vunpack.c.h.b16 %v547
    %v3011 = vunpack.c.l.b16 %v548
    %v3012 = vunpack.c.h.b16 %v548
    %v3013 = vunpack.c.l.b16 %v549
    %v3014 = vunpack.c.h.b16 %v549
    %v3015 = vunpack.c.l.b16 %v550
    %v3016 = vunpack.c.h.b16 %v550
    %v3017 = vunpack.c.l.b16 %v551
    %v3018 = vunpack.c.h.b16 %v551
    %v3019 = vunpack.c.l.b16 %v552
    %v3020 = vunpack.c.h.b16 %v552
    %v3021 = vunpack.c.l.b16 %v553
    %v3022 = vunpack.c.h.b16 %v553
    %v3023 = vunpack.c.l.b16 %v554
    %v3024 = vunpack.c.h.b16 %v554
    %v3025 = vunpack.c.l.b16 %v555
    %v3026 = vunpack.c.h.b16 %v555
    %v3027 = vunpack.c.l.b16 %v556
    %v3028 = vunpack.c.h.b16 %v556
    %v3029 = vunpack.c.l.b16 %v557
    %v3030 = vunpack.c.h.b16 %v557
    %v3031 = vunpack.c.l.b16 %v558
    %v3032 = vunpack.c.h.b16 %v558
    %v3033 = vunpack.c.l.b16 %v559
    %v3034 = vunpack.c.h.b16 %v559
    %v3035 = vunpack.c.l.b16 %v560
    %v3036 = vunpack.c.h.b16 %v560
    %v3037 = vunpack.c.l.b16 %v561
    %v3038 = vunpack.c.h.b16 %v561
    %v3039 = vunpack.c.l.b16 %v562
    %v3040 = vunpack.c.h.b16 %v562
    %v3041 = vunpack.c.l.b16 %v563
    %v3042 = vunpack.c.h.b16 %v563
    %v3043 = vunpack.c.l.b16 %v564
    %v3044 = vunpack.c.h.b16 %v564
    %v3045 = vunpack.c.l.b16 %v565
    %v3046 = vunpack.c.h.b16 %v565
    %v3047 = vunpack.c.l.b16 %v566
    %v3048 = vunpack.c.h.b16 %v566
    %v3049 = vunpack.c.l.b16 %v567
    %v3050 = vunpack.c.h.b16 %v567
    %v3051 = vunpack.c.l.b16 %v568
    %v3052 = vunpack.c.h.b16 %v568
    %v3053 = vunpack.c.l.b16 %v569
    %v3054 = vunpack.c.h.b16 %v569
    %v3055 = vunpack.c.l.b16 %v570
    %v3056 = vunpack.c.h.b16 %v570
    %v3057 = vunpack.c.l.b16 %v571
    %v3058 = vunpack.c.h.b16 %v571
    %v3059 = vunpack.c.l.b16 %v572
    %v3060 = vunpack.c.h.b16 %v572
    %v3061 = vunpack.c.l.b16 %v573
    %v3062 = vunpack.c.h.b16 %v573
    %v3063 = vunpack.c.l.b16 %v574
    %v3064 = vunpack.c.h.b16 %v574
    %v3065 = vunpack.c.l.b16 %v575
    %v3066 = vunpack.c.h.b16 %v575
    %v3067 = vunpack.c.l.b16 %v576
    %v3068 = vunpack.c.h.b16 %v576
    %v3069 = vunpack.c.l.b16 %v577
    %v3070 = vunpack.c.h.b16 %v577
    %v3071 = vunpack.c.l.b16 %v578
    %v3072 = vunpack.c.h.b16 %v578
    %v3073 = vunpack.c.l.b16 %v579
    %v3074 = vunpack.c.h.b16 %v579
    %v3075 = vunpack.c.l.b16 %v580
    %v3076 = vunpack.c.h.b16 %v580
    %v3077 = vunpack.c.l.b16 %v581
    %v3078 = vunpack.c.h.b16 %v581
    %v3079 = vunpack.c.l.b16 %v582
    %v3080 = vunpack.c.h.b16 %v582
    %v3081 = vunpack.c.l.b16 %v583
    %v3082 = vunpack.c.h.b16 %v583
    %v3083 = vunpack.c.l.b16 %v584
    %v3084 = vunpack.c.h.b16 %v584
    %v3085 = vunpack.c.l.b16 %v585
    %v3086 = vunpack.c.h.b16 %v585
    %v3087 = vunpack.c.l.b16 %v586
    %v3088 = vunpack.c.h.b16 %v586
    %v3089 = vunpack.c.l.b16 %v587
    %v3090 = vunpack.c.h.b16 %v587
    %v3091 = vunpack.c.l.b16 %v588
    %v3092 = vunpack.c.h.b16 %v588
    %v3093 = vunpack.c.l.b16 %v589
    %v3094 = vunpack.c.h.b16 %v589
    %v3095 = vunpack.c.l.b16 %v590
    %v3096 = vunpack.c.h.b16 %v590
    %v3097 = vunpack.c.l.b16 %v591
    %v3098 = vunpack.c.h.b16 %v591
    %v3099 = vunpack.c.l.b16 %v592
    %v3100 = vunpack.c.h.b16 %v592
    %v3101 = vunpack.c.l.b16 %v593
    %v3102 = vunpack.c.h.b16 %v593
    %v3103 = vunpack.c.l.b16 %v594
    %v3104 = vunpack.c.h.b16 %v594
    %v3105 = vunpack.c.l.b16 %v595
    %v3106 = vunpack.c.h.b16 %v595
    %v3107 = vunpack.c.l.b16 %v596
    %v3108 = vunpack.c.h.b16 %v596
    %v3109 = vunpack.c.l.b16 %v597
    %v3110 = vunpack.c.h.b16 %v597
    %v3111 = vunpack.c.l.b16 %v598
    %v3112 = vunpack.c.h.b16 %v598
    %v3113 = vunpack.c.l.b16 %v599
    %v3114 = vunpack.c.h.b16 %v599
    %v3115 = vunpack.c.l.b16 %v600
    %v3116 = vunpack.c.h.b16 %v600
    %v3117 = vunpack.c.l.b16 %v601
    %v3118 = vunpack.c.h.b16 %v601
    %v3119 = vunpack.c.l.b16 %v602
    %v3120 = vunpack.c.h.b16 %v602
    %v3121 = vunpack.c.l.b16 %v603
    %v3122 = vunpack.c.h.b16 %v603
    %v3123 = vunpack.c.l.b16 %v604
    %v3124 = vunpack.c.h.b16 %v604
    %v3125 = vunpack.c.l.b16 %v605
    %v3126 = vunpack.c.h.b16 %v605
    %v3127 = vunpack.c.l.b16 %v606
    %v3128 = vunpack.c.h.b16 %v606
    %v3129 = vunpack.c.l.b16 %v607
    %v3130 = vunpack.c.h.b16 %v607
    %v3131 = vunpack.c.l.b16 %v608
    %v3132 = vunpack.c.h.b16 %v608
    %v3133 = vunpack.c.l.b16 %v609
    %v3134 = vunpack.c.h.b16 %v609
    %v3135 = vunpack.c.l.b16 %v610
    %v3136 = vunpack.c.h.b16 %v610
    %v3137 = vunpack.c.l.b16 %v611
    %v3138 = vunpack.c.h.b16 %v611
    %v3139 = vunpack.c.l.b16 %v612
    %v3140 = vunpack.c.h.b16 %v612
    %v3141 = vunpack.c.l.b16 %v613
    %v3142 = vunpack.c.h.b16 %v613
    %v3143 = vunpack.c.l.b16 %v614
    %v3144 = vunpack.c.h.b16 %v614
    %v3145 = vunpack.c.l.b16 %v615
    %v3146 = vunpack.c.h.b16 %v615
    %v3147 = vunpack.c.l.b16 %v616
    %v3148 = vunpack.c.h.b16 %v616
    %v3149 = vunpack.c.l.b16 %v617
    %v3150 = vunpack.c.h.b16 %v617
    %v3151 = vunpack.c.l.b16 %v618
    %v3152 = vunpack.c.h.b16 %v618
    %v3153 = vunpack.c.l.b16 %v619
    %v3154 = vunpack.c.h.b16 %v619
    %v3155 = vunpack.c.l.b16 %v620
    %v3156 = vunpack.c.h.b16 %v620
    %v3157 = vunpack.c.l.b16 %v621
    %v3158 = vunpack.c.h.b16 %v621
    %v3159 = vunpack.c.l.b16 %v622
    %v3160 = vunpack.c.h.b16 %v622
    %v3161 = vunpack.c.l.b16 %v623
    %v3162 = vunpack.c.h.b16 %v623
    %v3163 = vunpack.c.l.b16 %v624
    %v3164 = vunpack.c.h.b16 %v624
    %v3165 = vunpack.c.l.b16 %v625
    %v3166 = vunpack.c.h.b16 %v625
    %v3167 = vunpack.c.l.b16 %v626
    %v3168 = vunpack.c.h.b16 %v626
    %v3169 = vunpack.c.l.b16 %v627
    %v3170 = vunpack.c.h.b16 %v627
    %v3171 = vunpack.c.l.b16 %v628
    %v3172 = vunpack.c.h.b16 %v628
    %v3173 = vunpack.c.l.b16 %v629
    %v3174 = vunpack.c.h.b16 %v629
    %v3175 = vunpack.c.l.b16 %v630
    %v3176 = vunpack.c.h.b16 %v630
    %v3177 = vunpack.c.l.b16 %v631
    %v3178 = vunpack.c.h.b16 %v631
    %v3179 = vunpack.c.l.b16 %v632
    %v3180 = vunpack.c.h.b16 %v632
    %v3181 = vunpack.c.l.b16 %v633
    %v3182 = vunpack.c.h.b16 %v633
    %v3183 = vunpack.c.l.b16 %v634
    %v3184 = vunpack.c.h.b16 %v634
    %v3185 = vunpack.c.l.b16 %v635
    %v3186 = vunpack.c.h.b16 %v635
    %v3187 = vunpack.c.l.b16 %v636
    %v3188 = vunpack.c.h.b16 %v636
    %v3189 = vunpack.c.l.b16 %v637
    %v3190 = vunpack.c.h.b16 %v637
    %v3191 = vunpack.c.l.b16 %v638
    %v3192 = vunpack.c.h.b16 %v638
    %v3193 = vunpack.c.l.b16 %v639
    %v3194 = vunpack.c.h.b16 %v639
    %v3195 = vunpack.c.l.b16 %v640
    %v3196 = vunpack.c.h.b16 %v640
    %v3197 = vunpack.c.l.b16 %v641
    %v3198 = vunpack.c.h.b16 %v641
    %v3199 = vunpack.c.l.b16 %v642
    %v3200 = vunpack.c.h.b16 %v642
    %v3201 = vunpack.c.l.b16 %v643
    %v3202 = vunpack.c.h.b16 %v643
    %v3203 = vunpack.c.l.b16 %v644
    %v3204 = vunpack.c.h.b16 %v644
    %v3205 = vunpack.c.l.b16 %v645
    %v3206 = vunpack.c.h.b16 %v645
    %v3207 = vunpack.c.l.b16 %v646
    %v3208 = vunpack.c.h.b16 %v646
    %v3209 = vunpack.c.l.b16 %v647
    %v3210 = vunpack.c.h.b16 %v647
    %v3211 = vunpack.c.l.b16 %v648
    %v3212 = vunpack.c.h.b16 %v648
    %v3213 = vunpack.c.l.b16 %v649
    %v3214 = vunpack.c.h.b16 %v649
    %v3215 = vunpack.c.l.b16 %v650
    %v3216 = vunpack.c.h.b16 %v650
    %v3217 = vunpack.c.l.b16 %v651
    %v3218 = vunpack.c.h.b16 %v651
    %v3219 = vunpack.c.l.b16 %v652
    %v3220 = vunpack.c.h.b16 %v652
    %v3221 = vunpack.c.l.b16 %v653
    %v3222 = vunpack.c.h.b16 %v653
    %v3223 = vunpack.c.l.b16 %v654
    %v3224 = vunpack.c.h.b16 %v654
    %v3225 = vunpack.c.l.b16 %v655
    %v3226 = vunpack.c.h.b16 %v655
    %v3227 = vunpack.c.l.b16 %v656
    %v3228 = vunpack.c.h.b16 %v656
    %v3229 = vunpack.c.l.b16 %v657
    %v3230 = vunpack.c.h.b16 %v657
    %v3231 = vunpack.c.l.b16 %v658
    %v3232 = vunpack.c.h.b16 %v658
    %v3233 = vunpack.c.l.b16 %v659
    %v3234 = vunpack.c.h.b16 %v659
    %v3235 = vunpack.c.l.b16 %v660
    %v3236 = vunpack.c.h.b16 %v660
    %v3237 = vunpack.c.l.b16 %v661
    %v3238 = vunpack.c.h.b16 %v661
    %v3239 = vunpack.c.l.b16 %v662
    %v3240 = vunpack.c.h.b16 %v662
    %v3241 = vunpack.c.l.b16 %v663
    %v3242 = vunpack.c.h.b16 %v663
    %v3243 = vunpack.c.l.b16 %v664
    %v3244 = vunpack.c.h.b16 %v664
    %v3245 = vunpack.c.l.b16 %v665
    %v3246 = vunpack.c.h.b16 %v665
    %v3247 = vunpack.c.l.b16 %v666
    %v3248 = vunpack.c.h.b16 %v666
    %v3249 = vunpack.c.l.b16 %v667
    %v3250 = vunpack.c.h.b16 %v667
    %v3251 = vunpack.c.l.b16 %v668
    %v3252 = vunpack.c.h.b16 %v668
    %v3253 = vunpack.c.l.b16 %v669
    %v3254 = vunpack.c.h.b16 %v669
    %v3255 = vunpack.c.l.b16 %v670
    %v3256 = vunpack.c.h.b16 %v670
    %v3257 = vunpack.c.l.b16 %v671
    %v3258 = vunpack.c.h.b16 %v671
    %v3259 = vunpack.c.l.b16 %v672
    %v3260 = vunpack.c.h.b16 %v672
    %v3261 = vunpack.c.l.b16 %v673
    %v3262 = vunpack.c.h.b16 %v673
    %v3263 = vunpack.c.l.b16 %v674
    %v3264 = vunpack.c.h.b16 %v674
    %v3265 = vunpack.c.l.b16 %v675
    %v3266 = vunpack.c.h.b16 %v675
    %v3267 = vunpack.c.l.b16 %v676
    %v3268 = vunpack.c.h.b16 %v676
    %v3269 = vunpack.c.l.b16 %v677
    %v3270 = vunpack.c.h.b16 %v677
    %v3271 = vunpack.c.l.b16 %v678
    %v3272 = vunpack.c.h.b16 %v678
    %v3273 = vunpack.c.l.b16 %v679
    %v3274 = vunpack.c.h.b16 %v679
    %v3275 = vunpack.c.l.b16 %v680
    %v3276 = vunpack.c.h.b16 %v680
    %v3277 = vunpack.c.l.b16 %v681
    %v3278 = vunpack.c.h.b16 %v681
    %v3279 = vunpack.c.l.b16 %v682
    %v3280 = vunpack.c.h.b16 %v682
    %v3281 = vunpack.c.l.b16 %v683
    %v3282 = vunpack.c.h.b16 %v683
    %v3283 = vunpack.c.l.b16 %v684
    %v3284 = vunpack.c.h.b16 %v684
    %v3285 = vunpack.c.l.b16 %v685
    %v3286 = vunpack.c.h.b16 %v685
    %v3287 = vunpack.c.l.b16 %v686
    %v3288 = vunpack.c.h.b16 %v686
    %v3289 = vunpack.c.l.b16 %v687
    %v3290 = vunpack.c.h.b16 %v687
    %v3291 = vunpack.c.l.b16 %v688
    %v3292 = vunpack.c.h.b16 %v688
    %v3293 = vunpack.c.l.b16 %v689
    %v3294 = vunpack.c.h.b16 %v689
    %v3295 = vunpack.c.l.b16 %v690
    %v3296 = vunpack.c.h.b16 %v690
    %v3297 = vunpack.c.l.b16 %v691
    %v3298 = vunpack.c.h.b16 %v691
    %v3299 = vunpack.c.l.b16 %v692
    %v3300 = vunpack.c.h.b16 %v692
    %v3301 = vunpack.c.l.b16 %v693
    %v3302 = vunpack.c.h.b16 %v693
    %v3303 = vunpack.c.l.b16 %v694
    %v3304 = vunpack.c.h.b16 %v694
    %v3305 = vunpack.c.l.b16 %v695
    %v3306 = vunpack.c.h.b16 %v695
    %v3307 = vunpack.c.l.b16 %v696
    %v3308 = vunpack.c.h.b16 %v696
    %v3309 = vunpack.c.l.b16 %v697
    %v3310 = vunpack.c.h.b16 %v697
    %v3311 = vunpack.c.l.b16 %v698
    %v3312 = vunpack.c.h.b16 %v698
    %v3313 = vunpack.c.l.b16 %v699
    %v3314 = vunpack.c.h.b16 %v699
    %v3315 = vunpack.c.l.b16 %v700
    %v3316 = vunpack.c.h.b16 %v700
    %v3317 = vunpack.c.l.b16 %v701
    %v3318 = vunpack.c.h.b16 %v701
    %v3319 = vunpack.c.l.b16 %v702
    %v3320 = vunpack.c.h.b16 %v702
    %v3321 = vunpack.c.l.b16 %v703
    %v3322 = vunpack.c.h.b16 %v703
    %v3323 = vunpack.c.l.b16 %v704
    %v3324 = vunpack.c.h.b16 %v704
    %v3325 = vunpack.c.l.b16 %v705
    %v3326 = vunpack.c.h.b16 %v705
    %v3327 = vunpack.c.l.b16 %v706
    %v3328 = vunpack.c.h.b16 %v706
    %v3329 = vunpack.c.l.b16 %v707
    %v3330 = vunpack.c.h.b16 %v707
    %v3331 = vunpack.c.l.b16 %v708
    %v3332 = vunpack.c.h.b16 %v708
    %v3333 = vunpack.c.l.b16 %v709
    %v3334 = vunpack.c.h.b16 %v709
    %v3335 = vunpack.c.l.b16 %v710
    %v3336 = vunpack.c.h.b16 %v710
    %v3337 = vunpack.c.l.b16 %v711
    %v3338 = vunpack.c.h.b16 %v711
    %v3339 = vunpack.c.l.b16 %v712
    %v3340 = vunpack.c.h.b16 %v712
    %v3341 = vunpack.c.l.b16 %v713
    %v3342 = vunpack.c.h.b16 %v713
    %v3343 = vunpack.c.l.b16 %v714
    %v3344 = vunpack.c.h.b16 %v714
    %v3345 = vunpack.c.l.b16 %v715
    %v3346 = vunpack.c.h.b16 %v715
    %v3347 = vunpack.c.l.b16 %v716
    %v3348 = vunpack.c.h.b16 %v716
    %v3349 = vunpack.c.l.b16 %v717
    %v3350 = vunpack.c.h.b16 %v717
    %v3351 = vunpack.c.l.b16 %v718
    %v3352 = vunpack.c.h.b16 %v718
    %v3353 = vunpack.c.l.b16 %v719
    %v3354 = vunpack.c.h.b16 %v719
    %v3355 = vunpack.c.l.b16 %v720
    %v3356 = vunpack.c.h.b16 %v720
    %v3357 = vunpack.c.l.b16 %v721
    %v3358 = vunpack.c.h.b16 %v721
    %v3359 = vunpack.c.l.b16 %v722
    %v3360 = vunpack.c.h.b16 %v722
    %v3361 = vunpack.c.l.b16 %v723
    %v3362 = vunpack.c.h.b16 %v723
    %v3363 = vunpack.c.l.b16 %v724
    %v3364 = vunpack.c.h.b16 %v724
    %v3365 = vunpack.c.l.b16 %v725
    %v3366 = vunpack.c.h.b16 %v725
    %v3367 = vunpack.c.l.b16 %v726
    %v3368 = vunpack.c.h.b16 %v726
    %v3369 = vunpack.c.l.b16 %v727
    %v3370 = vunpack.c.h.b16 %v727
    %v3371 = vunpack.c.l.b16 %v728
    %v3372 = vunpack.c.h.b16 %v728
    %v3373 = vunpack.c.l.b16 %v729
    %v3374 = vunpack.c.h.b16 %v729
    %v3375 = vunpack.c.l.b16 %v730
    %v3376 = vunpack.c.h.b16 %v730
    %v3377 = vunpack.c.l.b16 %v731
    %v3378 = vunpack.c.h.b16 %v731
    %v3379 = vunpack.c.l.b16 %v732
    %v3380 = vunpack.c.h.b16 %v732
    %v3381 = vunpack.c.l.b16 %v733
    %v3382 = vunpack.c.h.b16 %v733
    %v3383 = vunpack.c.l.b16 %v734
    %v3384 = vunpack.c.h.b16 %v734
    %v3385 = vunpack.c.l.b16 %v735
    %v3386 = vunpack.c.h.b16 %v735
    %v3387 = vunpack.c.l.b16 %v736
    %v3388 = vunpack.c.h.b16 %v736
    %v3389 = vunpack.c.l.b16 %v737
    %v3390 = vunpack.c.h.b16 %v737
    %v3391 = vunpack.c.l.b16 %v738
    %v3392 = vunpack.c.h.b16 %v738
    %v3393 = vunpack.c.l.b16 %v739
    %v3394 = vunpack.c.h.b16 %v739
    %v3395 = vunpack.c.l.b16 %v740
    %v3396 = vunpack.c.h.b16 %v740
    %v3397 = vunpack.c.l.b16 %v741
    %v3398 = vunpack.c.h.b16 %v741
    %v3399 = vunpack.c.l.b16 %v742
    %v3400 = vunpack.c.h.b16 %v742
    %v3401 = vunpack.c.l.b16 %v743
    %v3402 = vunpack.c.h.b16 %v743
    %v3403 = vunpack.c.l.b16 %v744
    %v3404 = vunpack.c.h.b16 %v744
    %v3405 = vunpack.c.l.b16 %v745
    %v3406 = vunpack.c.h.b16 %v745
    %v3407 = vunpack.c.l.b16 %v746
    %v3408 = vunpack.c.h.b16 %v746
    %v3409 = vunpack.c.l.b16 %v747
    %v3410 = vunpack.c.h.b16 %v747
    %v3411 = vunpack.c.l.b16 %v748
    %v3412 = vunpack.c.h.b16 %v748
    %v3413 = vunpack.c.l.b16 %v749
    %v3414 = vunpack.c.h.b16 %v749
    %v3415 = vunpack.c.l.b16 %v750
    %v3416 = vunpack.c.h.b16 %v750
    %v3417 = vunpack.c.l.b16 %v751
    %v3418 = vunpack.c.h.b16 %v751
    %v3419 = vunpack.c.l.b16 %v752
    %v3420 = vunpack.c.h.b16 %v752
    %v3421 = vunpack.c.l.b16 %v753
    %v3422 = vunpack.c.h.b16 %v753
    %v3423 = vunpack.c.l.b16 %v754
    %v3424 = vunpack.c.h.b16 %v754
    %v3425 = vunpack.c.l.b16 %v755
    %v3426 = vunpack.c.h.b16 %v755
    %v3427 = vunpack.c.l.b16 %v756
    %v3428 = vunpack.c.h.b16 %v756
    %v3429 = vunpack.c.l.b16 %v757
    %v3430 = vunpack.c.h.b16 %v757
    %v3431 = vunpack.c.l.b16 %v758
    %v3432 = vunpack.c.h.b16 %v758
    %v3433 = vunpack.c.l.b16 %v759
    %v3434 = vunpack.c.h.b16 %v759
    %v3435 = vunpack.c.l.b16 %v760
    %v3436 = vunpack.c.h.b16 %v760
    %v3437 = vunpack.c.l.b16 %v761
    %v3438 = vunpack.c.h.b16 %v761
    %v3439 = vunpack.c.l.b16 %v762
    %v3440 = vunpack.c.h.b16 %v762
    %v3441 = vunpack.c.l.b16 %v763
    %v3442 = vunpack.c.h.b16 %v763
    %v3443 = vunpack.c.l.b16 %v764
    %v3444 = vunpack.c.h.b16 %v764
    %v3445 = vunpack.c.l.b16 %v765
    %v3446 = vunpack.c.h.b16 %v765
    %v3447 = vunpack.c.l.b16 %v766
    %v3448 = vunpack.c.h.b16 %v766
    %v3449 = vunpack.c.l.b16 %v767
    %v3450 = vunpack.c.h.b16 %v767
    %v3451 = vunpack.c.l.b16 %v768
    %v3452 = vunpack.c.h.b16 %v768
    %v3453 = vunpack.c.l.b16 %v769
    %v3454 = vunpack.c.h.b16 %v769
    %v3455 = vunpack.c.l.b16 %v770
    %v3456 = vunpack.c.h.b16 %v770
    %v3457 = vunpack.c.l.b16 %v771
    %v3458 = vunpack.c.h.b16 %v771
    %v3459 = vunpack.c.l.b16 %v772
    %v3460 = vunpack.c.h.b16 %v772
    %v3461 = vunpack.c.l.b16 %v773
    %v3462 = vunpack.c.h.b16 %v773
    %v3463 = vunpack.c.l.b16 %v774
    %v3464 = vunpack.c.h.b16 %v774
    %v3465 = vunpack.c.l.b16 %v775
    %v3466 = vunpack.c.h.b16 %v775
    %v3467 = vunpack.c.l.b16 %v776
    %v3468 = vunpack.c.h.b16 %v776
    %v3469 = vunpack.c.l.b16 %v777
    %v3470 = vunpack.c.h.b16 %v777
    %v3471 = vunpack.c.l.b16 %v778
    %v3472 = vunpack.c.h.b16 %v778
    %v3473 = vunpack.c.l.b16 %v779
    %v3474 = vunpack.c.h.b16 %v779
    %v3475 = vunpack.c.l.b16 %v780
    %v3476 = vunpack.c.h.b16 %v780
    %v3477 = vunpack.c.l.b16 %v781
    %v3478 = vunpack.c.h.b16 %v781
    %v3479 = vunpack.c.l.b16 %v782
    %v3480 = vunpack.c.h.b16 %v782
    %v3481 = vunpack.c.l.b16 %v783
    %v3482 = vunpack.c.h.b16 %v783
    %v3483 = vunpack.c.l.b16 %v784
    %v3484 = vunpack.c.h.b16 %v784
    %v3485 = vunpack.c.l.b16 %v785
    %v3486 = vunpack.c.h.b16 %v785
    %v3487 = vunpack.c.l.b16 %v786
    %v3488 = vunpack.c.h.b16 %v786
    %v3489 = vunpack.c.l.b16 %v787
    %v3490 = vunpack.c.h.b16 %v787
    %v3491 = vunpack.c.l.b16 %v788
    %v3492 = vunpack.c.h.b16 %v788
    %v3493 = vunpack.c.l.b16 %v789
    %v3494 = vunpack.c.h.b16 %v789
    %v3495 = vunpack.c.l.b16 %v790
    %v3496 = vunpack.c.h.b16 %v790
    %v3497 = vunpack.c.l.b16 %v791
    %v3498 = vunpack.c.h.b16 %v791
    %v3499 = vunpack.c.l.b16 %v792
    %v3500 = vunpack.c.h.b16 %v792
    %v3501 = vunpack.c.l.b16 %v793
    %v3502 = vunpack.c.h.b16 %v793
    %v3503 = vunpack.c.l.b16 %v794
    %v3504 = vunpack.c.h.b16 %v794
    %v3505 = vunpack.c.l.b16 %v795
    %v3506 = vunpack.c.h.b16 %v795
    %v3507 = vunpack.c.l.b16 %v796
    %v3508 = vunpack.c.h.b16 %v796
    %v3509 = vunpack.c.l.b16 %v797
    %v3510 = vunpack.c.h.b16 %v797
    %v3511 = vunpack.c.l.b16 %v798
    %v3512 = vunpack.c.h.b16 %v798
    %v3513 = vunpack.c.l.b16 %v799
    %v3514 = vunpack.c.h.b16 %v799
    %v3515 = vunpack.c.l.b16 %v800
    %v3516 = vunpack.c.h.b16 %v800
    %v3517 = vunpack.c.l.b16 %v801
    %v3518 = vunpack.c.h.b16 %v801
    %v3519 = vunpack.c.l.b16 %v802
    %v3520 = vunpack.c.h.b16 %v802
    %v3521 = vunpack.c.l.b16 %v803
    %v3522 = vunpack.c.h.b16 %v803
    %v3523 = vunpack.c.l.b16 %v804
    %v3524 = vunpack.c.h.b16 %v804
    %v3525 = vunpack.c.l.b16 %v805
    %v3526 = vunpack.c.h.b16 %v805
    %v3527 = vunpack.c.l.b16 %v806
    %v3528 = vunpack.c.h.b16 %v806
    %v3529 = vunpack.c.l.b16 %v807
    %v3530 = vunpack.c.h.b16 %v807
    %v3531 = vunpack.c.l.b16 %v808
    %v3532 = vunpack.c.h.b16 %v808
    %v3533 = vunpack.c.l.b16 %v809
    %v3534 = vunpack.c.h.b16 %v809
    %v3535 = vunpack.c.l.b16 %v810
    %v3536 = vunpack.c.h.b16 %v810
    %v3537 = vunpack.c.l.b16 %v811
    %v3538 = vunpack.c.h.b16 %v811
    %v3539 = vunpack.c.l.b16 %v812
    %v3540 = vunpack.c.h.b16 %v812
    %v3541 = vunpack.c.l.b16 %v813
    %v3542 = vunpack.c.h.b16 %v813
    %v3543 = vunpack.c.l.b16 %v814
    %v3544 = vunpack.c.h.b16 %v814
    %v3545 = vunpack.c.l.b16 %v815
    %v3546 = vunpack.c.h.b16 %v815
    %v3547 = vunpack.c.l.b16 %v816
    %v3548 = vunpack.c.h.b16 %v816
    %v3549 = vunpack.c.l.b16 %v817
    %v3550 = vunpack.c.h.b16 %v817
    %v3551 = vunpack.c.l.b16 %v818
    %v3552 = vunpack.c.h.b16 %v818
    %v3553 = vunpack.c.l.b16 %v819
    %v3554 = vunpack.c.h.b16 %v819
    %v3555 = vunpack.c.l.b16 %v820
    %v3556 = vunpack.c.h.b16 %v820
    %v3557 = vunpack.c.l.b16 %v821
    %v3558 = vunpack.c.h.b16 %v821
    %v3559 = vunpack.c.l.b16 %v822
    %v3560 = vunpack.c.h.b16 %v822
    %v3561 = vunpack.c.l.b16 %v823
    %v3562 = vunpack.c.h.b16 %v823
    %v3563 = vunpack.c.l.b16 %v824
    %v3564 = vunpack.c.h.b16 %v824
    %v3565 = vunpack.c.l.b16 %v825
    %v3566 = vunpack.c.h.b16 %v825
    %v3567 = vunpack.c.l.b16 %v826
    %v3568 = vunpack.c.h.b16 %v826
    %v3569 = vunpack.c.l.b16 %v827
    %v3570 = vunpack.c.h.b16 %v827
    %v3571 = vunpack.c.l.b16 %v828
    %v3572 = vunpack.c.h.b16 %v828
    %v3573 = vunpack.c.l.b16 %v829
    %v3574 = vunpack.c.h.b16 %v829
    %v3575 = vunpack.c.l.b16 %v830
    %v3576 = vunpack.c.h.b16 %v830
    %v3577 = vunpack.c.l.b16 %v831
    %v3578 = vunpack.c.h.b16 %v831
    %v3579 = vunpack.c.l.b16 %v832
    %v3580 = vunpack.c.h.b16 %v832
    %v3581 = vunpack.c.l.b16 %v833
    %v3582 = vunpack.c.h.b16 %v833
    %v3583 = vunpack.c.l.b16 %v834
    %v3584 = vunpack.c.h.b16 %v834
    %v3585 = vunpack.c.l.b16 %v835
    %v3586 = vunpack.c.h.b16 %v835
    %v3587 = vunpack.c.l.b16 %v836
    %v3588 = vunpack.c.h.b16 %v836
    %v3589 = vunpack.c.l.b16 %v837
    %v3590 = vunpack.c.h.b16 %v837
    %v3591 = vunpack.c.l.b16 %v838
    %v3592 = vunpack.c.h.b16 %v838
    %v3593 = vunpack.c.l.b16 %v839
    %v3594 = vunpack.c.h.b16 %v839
    %v3595 = vunpack.c.l.b16 %v840
    %v3596 = vunpack.c.h.b16 %v840
    %v3597 = vunpack.c.l.b16 %v841
    %v3598 = vunpack.c.h.b16 %v841
    %v3599 = vunpack.c.l.b16 %v842
    %v3600 = vunpack.c.h.b16 %v842
    %v3601 = vunpack.c.l.b16 %v843
    %v3602 = vunpack.c.h.b16 %v843
    %v3603 = vunpack.c.l.b16 %v844
    %v3604 = vunpack.c.h.b16 %v844
    %v3605 = vunpack.c.l.b16 %v845
    %v3606 = vunpack.c.h.b16 %v845
    %v3607 = vunpack.c.l.b16 %v846
    %v3608 = vunpack.c.h.b16 %v846
    %v3609 = vunpack.c.l.b16 %v847
    %v3610 = vunpack.c.h.b16 %v847
    %v3611 = vunpack.c.l.b16 %v848
    %v3612 = vunpack.c.h.b16 %v848
    %v3613 = vunpack.c.l.b16 %v849
    %v3614 = vunpack.c.h.b16 %v849
    %v3615 = vunpack.c.l.b16 %v850
    %v3616 = vunpack.c.h.b16 %v850
    %v3617 = vunpack.c.l.b16 %v851
    %v3618 = vunpack.c.h.b16 %v851
    %v3619 = vunpack.c.l.b16 %v852
    %v3620 = vunpack.c.h.b16 %v852
    %v3621 = vunpack.c.l.b16 %v853
    %v3622 = vunpack.c.h.b16 %v853
    %v3623 = vunpack.c.l.b16 %v854
    %v3624 = vunpack.c.h.b16 %v854
    %v3625 = vunpack.c.l.b16 %v855
    %v3626 = vunpack.c.h.b16 %v855
    %v3627 = vunpack.c.l.b16 %v856
    %v3628 = vunpack.c.h.b16 %v856
    %v3629 = vunpack.c.l.b16 %v857
    %v3630 = vunpack.c.h.b16 %v857
    %v3631 = vunpack.c.l.b16 %v858
    %v3632 = vunpack.c.h.b16 %v858
    %v3633 = vunpack.c.l.b16 %v859
    %v3634 = vunpack.c.h.b16 %v859
    %v3635 = vunpack.c.l.b16 %v860
    %v3636 = vunpack.c.h.b16 %v860
    %v3637 = vunpack.c.l.b16 %v861
    %v3638 = vunpack.c.h.b16 %v861
    %v3639 = vunpack.c.l.b16 %v862
    %v3640 = vunpack.c.h.b16 %v862
    %v3641 = vunpack.c.l.b16 %v863
    %v3642 = vunpack.c.h.b16 %v863
    %v3643 = vunpack.c.l.b16 %v864
    %v3644 = vunpack.c.h.b16 %v864
    %v3645 = vunpack.c.l.b16 %v865
    %v3646 = vunpack.c.h.b16 %v865
    %v3647 = vunpack.c.l.b16 %v866
    %v3648 = vunpack.c.h.b16 %v866
    %v3649 = vunpack.c.l.b16 %v867
    %v3650 = vunpack.c.h.b16 %v867
    %v3651 = vunpack.c.l.b16 %v868
    %v3652 = vunpack.c.h.b16 %v868
    %v3653 = vunpack.c.l.b16 %v869
    %v3654 = vunpack.c.h.b16 %v869
    %v3655 = vunpack.c.l.b16 %v870
    %v3656 = vunpack.c.h.b16 %v870
    %v3657 = vunpack.c.l.b16 %v871
    %v3658 = vunpack.c.h.b16 %v871
    %v3659 = vunpack.c.l.b16 %v872
    %v3660 = vunpack.c.h.b16 %v872
    %v3661 = vunpack.c.l.b16 %v873
    %v3662 = vunpack.c.h.b16 %v873
    %v3663 = vunpack.c.l.b16 %v874
    %v3664 = vunpack.c.h.b16 %v874
    %v3665 = vunpack.c.l.b16 %v875
    %v3666 = vunpack.c.h.b16 %v875
    %v3667 = vunpack.c.l.b16 %v876
    %v3668 = vunpack.c.h.b16 %v876
    %v3669 = vunpack.c.l.b16 %v877
    %v3670 = vunpack.c.h.b16 %v877
    %v3671 = vunpack.c.l.b16 %v878
    %v3672 = vunpack.c.h.b16 %v878
    %v3673 = vunpack.c.l.b16 %v879
    %v3674 = vunpack.c.h.b16 %v879
    %v3675 = vunpack.c.l.b16 %v880
    %v3676 = vunpack.c.h.b16 %v880
    %v3677 = vunpack.c.l.b16 %v881
    %v3678 = vunpack.c.h.b16 %v881
    %v3679 = vunpack.c.l.b16 %v882
    %v3680 = vunpack.c.h.b16 %v882
    %v3681 = vunpack.c.l.b16 %v883
    %v3682 = vunpack.c.h.b16 %v883
    %v3683 = vunpack.c.l.b16 %v884
    %v3684 = vunpack.c.h.b16 %v884
    %v3685 = vunpack.c.l.b16 %v885
    %v3686 = vunpack.c.h.b16 %v885
    %v3687 = vunpack.c.l.b16 %v886
    %v3688 = vunpack.c.h.b16 %v886
    %v3689 = vunpack.c.l.b16 %v887
    %v3690 = vunpack.c.h.b16 %v887
    %v3691 = vunpack.c.l.b16 %v888
    %v3692 = vunpack.c.h.b16 %v888
    %v3693 = vunpack.c.l.b16 %v889
    %v3694 = vunpack.c.h.b16 %v889
    %v3695 = vunpack.c.l.b16 %v890
    %v3696 = vunpack.c.h.b16 %v890
    %v3697 = vunpack.c.l.b16 %v891
    %v3698 = vunpack.c.h.b16 %v891
    %v3699 = vunpack.c.l.b16 %v892
    %v3700 = vunpack.c.h.b16 %v892
    %v3701 = vunpack.c.l.b16 %v893
    %v3702 = vunpack.c.h.b16 %v893
    %v3703 = vunpack.c.l.b16 %v894
    %v3704 = vunpack.c.h.b16 %v894
    %v3705 = vunpack.c.l.b16 %v895
    %v3706 = vunpack.c.h.b16 %v895
    %v3707 = vunpack.c.l.b16 %v896
    %v3708 = vunpack.c.h.b16 %v896
    %v3709 = vunpack.c.l.b16 %v897
    %v3710 = vunpack.c.h.b16 %v897
    %v3711 = vunpack.c.l.b16 %v898
    %v3712 = vunpack.c.h.b16 %v898
    %v3713 = vunpack.c.l.b16 %v899
    %v3714 = vunpack.c.h.b16 %v899
    %v3715 = vunpack.c.l.b16 %v900
    %v3716 = vunpack.c.h.b16 %v900
    %v3717 = vunpack.c.l.b16 %v901
    %v3718 = vunpack.c.h.b16 %v901
    %v3719 = vunpack.c.l.b16 %v902
    %v3720 = vunpack.c.h.b16 %v902
    %v3721 = vunpack.c.l.b16 %v903
    %v3722 = vunpack.c.h.b16 %v903
    %v3723 = vunpack.c.l.b16 %v904
    %v3724 = vunpack.c.h.b16 %v904
    %v3725 = vunpack.c.l.b16 %v905
    %v3726 = vunpack.c.h.b16 %v905
    %v3727 = vunpack.c.l.b16 %v906
    %v3728 = vunpack.c.h.b16 %v906
    %v3729 = vunpack.c.l.b16 %v907
    %v3730 = vunpack.c.h.b16 %v907
    %v3731 = vunpack.c.l.b16 %v908
    %v3732 = vunpack.c.h.b16 %v908
    %v3733 = vunpack.c.l.b16 %v909
    %v3734 = vunpack.c.h.b16 %v909
    %v3735 = vunpack.c.l.b16 %v910
    %v3736 = vunpack.c.h.b16 %v910
    %v3737 = vunpack.c.l.b16 %v911
    %v3738 = vunpack.c.h.b16 %v911
    %v3739 = vunpack.c.l.b16 %v912
    %v3740 = vunpack.c.h.b16 %v912
    %v3741 = vunpack.c.l.b16 %v913
    %v3742 = vunpack.c.h.b16 %v913
    %v3743 = vunpack.c.l.b16 %v914
    %v3744 = vunpack.c.h.b16 %v914
    %v3745 = vunpack.c.l.b16 %v915
    %v3746 = vunpack.c.h.b16 %v915
    %v3747 = vunpack.c.l.b16 %v916
    %v3748 = vunpack.c.h.b16 %v916
    %v3749 = vunpack.c.l.b16 %v917
    %v3750 = vunpack.c.h.b16 %v917
    %v3751 = vunpack.c.l.b16 %v918
    %v3752 = vunpack.c.h.b16 %v918
    %v3753 = vunpack.c.l.b16 %v919
    %v3754 = vunpack.c.h.b16 %v919
    %v3755 = vunpack.c.l.b16 %v920
    %v3756 = vunpack.c.h.b16 %v920
    %v3757 = vunpack.c.l.b16 %v921
    %v3758 = vunpack.c.h.b16 %v921
    %v3759 = vunpack.c.l.b16 %v922
    %v3760 = vunpack.c.h.b16 %v922
    %v3761 = vunpack.c.l.b16 %v923
    %v3762 = vunpack.c.h.b16 %v923
    %v3763 = vunpack.c.l.b16 %v924
    %v3764 = vunpack.c.h.b16 %v924
    %v3765 = vunpack.c.l.b16 %v925
    %v3766 = vunpack.c.h.b16 %v925
    %v3767 = vunpack.c.l.b16 %v926
    %v3768 = vunpack.c.h.b16 %v926
    %v3769 = vunpack.c.l.b16 %v927
    %v3770 = vunpack.c.h.b16 %v927
    %v3771 = vunpack.c.l.b16 %v928
    %v3772 = vunpack.c.h.b16 %v928
    %v3773 = vunpack.c.l.b16 %v929
    %v3774 = vunpack.c.h.b16 %v929
    %v3775 = vunpack.c.l.b16 %v930
    %v3776 = vunpack.c.h.b16 %v930
    %v3777 = vunpack.c.l.b16 %v931
    %v3778 = vunpack.c.h.b16 %v931
    %v3779 = vunpack.c.l.b16 %v932
    %v3780 = vunpack.c.h.b16 %v932
    %v3781 = vunpack.c.l.b16 %v933
    %v3782 = vunpack.c.h.b16 %v933
    %v3783 = vunpack.c.l.b16 %v934
    %v3784 = vunpack.c.h.b16 %v934
    %v3785 = vunpack.c.l.b16 %v935
    %v3786 = vunpack.c.h.b16 %v935
    %v3787 = vunpack.c.l.b16 %v936
    %v3788 = vunpack.c.h.b16 %v936
    %v3789 = vunpack.c.l.b16 %v937
    %v3790 = vunpack.c.h.b16 %v937
    %v3791 = vunpack.c.l.b16 %v938
    %v3792 = vunpack.c.h.b16 %v938
    %v3793 = vunpack.c.l.b16 %v939
    %v3794 = vunpack.c.h.b16 %v939
    %v3795 = vunpack.c.l.b16 %v940
    %v3796 = vunpack.c.h.b16 %v940
    %v3797 = vunpack.c.l.b16 %v941
    %v3798 = vunpack.c.h.b16 %v941
    %v3799 = vunpack.c.l.b16 %v942
    %v3800 = vunpack.c.h.b16 %v942
    %v3801 = vunpack.c.l.b16 %v943
    %v3802 = vunpack.c.h.b16 %v943
    %v3803 = vunpack.c.l.b16 %v944
    %v3804 = vunpack.c.h.b16 %v944
    %v3805 = vunpack.c.l.b16 %v945
    %v3806 = vunpack.c.h.b16 %v945
    %v3807 = vunpack.c.l.b16 %v946
    %v3808 = vunpack.c.h.b16 %v946
    %v3809 = vunpack.c.l.b16 %v947
    %v3810 = vunpack.c.h.b16 %v947
    %v3811 = vunpack.c.l.b16 %v948
    %v3812 = vunpack.c.h.b16 %v948
    %v3813 = vunpack.c.l.b16 %v949
    %v3814 = vunpack.c.h.b16 %v949
    %v3815 = vunpack.c.l.b16 %v950
    %v3816 = vunpack.c.h.b16 %v950
    %v3817 = vunpack.c.l.b16 %v951
    %v3818 = vunpack.c.h.b16 %v951
    %v3819 = vunpack.c.l.b16 %v952
    %v3820 = vunpack.c.h.b16 %v952
    %v3821 = vunpack.c.l.b16 %v953
    %v3822 = vunpack.c.h.b16 %v953
    %v3823 = vunpack.c.l.b16 %v954
    %v3824 = vunpack.c.h.b16 %v954
    %v3825 = vunpack.c.l.b16 %v955
    %v3826 = vunpack.c.h.b16 %v955
    %v3827 = vunpack.c.l.b16 %v956
    %v3828 = vunpack.c.h.b16 %v956
    %v3829 = vunpack.c.l.b16 %v957
    %v3830 = vunpack.c.h.b16 %v957
    %v3831 = vunpack.c.l.b16 %v958
    %v3832 = vunpack.c.h.b16 %v958
    %v3833 = vunpack.c.l.b16 %v959
    %v3834 = vunpack.c.h.b16 %v959
    %v3835 = vunpack.c.l.b16 %v960
    %v3836 = vunpack.c.h.b16 %v960
    %v3837 = vunpack.c.l.b16 %v961
    %v3838 = vunpack.c.h.b16 %v961
    %v3839 = vunpack.c.l.b16 %v962
    %v3840 = vunpack.c.h.b16 %v962
    %v3841 = vunpack.c.l.b16 %v963
    %v3842 = vunpack.c.h.b16 %v963
    %v3843 = vunpack.c.l.b16 %v964
    %v3844 = vunpack.c.h.b16 %v964
    %v3845 = vunpack.c.l.b16 %v965
    %v3846 = vunpack.c.h.b16 %v965
    %v3847 = vunpack.c.l.b16 %v966
    %v3848 = vunpack.c.h.b16 %v966
    %v3849 = vunpack.c.l.b16 %v967
    %v3850 = vunpack.c.h.b16 %v967
    %v3851 = vunpack.c.l.b16 %v968
    %v3852 = vunpack.c.h.b16 %v968
    %v3853 = vunpack.c.l.b16 %v969
    %v3854 = vunpack.c.h.b16 %v969
    %v3855 = vunpack.c.l.b16 %v970
    %v3856 = vunpack.c.h.b16 %v970
    %v3857 = vunpack.c.l.b16 %v971
    %v3858 = vunpack.c.h.b16 %v971
    %v3859 = vunpack.c.l.b16 %v972
    %v3860 = vunpack.c.h.b16 %v972
    %v3861 = vunpack.c.l.b16 %v973
    %v3862 = vunpack.c.h.b16 %v973
    %v3863 = vunpack.c.l.b16 %v974
    %v3864 = vunpack.c.h.b16 %v974
    %v3865 = vunpack.c.l.b16 %v975
    %v3866 = vunpack.c.h.b16 %v975
    %v3867 = vunpack.c.l.b16 %v976
    %v3868 = vunpack.c.h.b16 %v976
    %v3869 = vunpack.c.l.b16 %v977
    %v3870 = vunpack.c.h.b16 %v977
    %v3871 = vunpack.c.l.b16 %v978
    %v3872 = vunpack.c.h.b16 %v978
    %v3873 = vunpack.c.l.b16 %v979
    %v3874 = vunpack.c.h.b16 %v979
    %v3875 = vunpack.c.l.b16 %v980
    %v3876 = vunpack.c.h.b16 %v980
    %v3877 = vunpack.c.l.b16 %v981
    %v3878 = vunpack.c.h.b16 %v981
    %v3879 = vunpack.c.l.b16 %v982
    %v3880 = vunpack.c.h.b16 %v982
    %v3881 = vunpack.c.l.b16 %v983
    %v3882 = vunpack.c.h.b16 %v983
    %v3883 = vunpack.c.l.b16 %v984
    %v3884 = vunpack.c.h.b16 %v984
    %v3885 = vunpack.c.l.b16 %v985
    %v3886 = vunpack.c.h.b16 %v985
    %v3887 = vunpack.c.l.b16 %v986
    %v3888 = vunpack.c.h.b16 %v986
    %v3889 = vunpack.c.l.b16 %v987
    %v3890 = vunpack.c.h.b16 %v987
    %v3891 = vunpack.c.l.b16 %v988
    %v3892 = vunpack.c.h.b16 %v988
    %v3893 = vunpack.c.l.b16 %v989
    %v3894 = vunpack.c.h.b16 %v989
    %v3895 = vunpack.c.l.b16 %v990
    %v3896 = vunpack.c.h.b16 %v990
    %v3897 = vunpack.c.l.b16 %v991
    %v3898 = vunpack.c.h.b16 %v991
    %v3899 = vunpack.c.l.b16 %v992
    %v3900 = vunpack.c.h.b16 %v992
    %v3901 = vunpack.c.l.b16 %v993
    %v3902 = vunpack.c.h.b16 %v993
    %v3903 = vunpack.c.l.b16 %v994
    %v3904 = vunpack.c.h.b16 %v994
    %v3905 = vunpack.c.l.b16 %v995
    %v3906 = vunpack.c.h.b16 %v995
    %v3907 = vunpack.c.l.b16 %v996
    %v3908 = vunpack.c.h.b16 %v996
    %v3909 = vunpack.c.l.b16 %v997
    %v3910 = vunpack.c.h.b16 %v997
    %v3911 = vunpack.c.l.b16 %v998
    %v3912 = vunpack.c.h.b16 %v998
    %v3913 = vunpack.c.l.b16 %v999
    %v3914 = vunpack.c.h.b16 %v999
    %v3915 = vunpack.c.l.b16 %v1000
    %v3916 = vunpack.c.h.b16 %v1000
    %v3917 = vunpack.c.l.b16 %v1001
    %v3918 = vunpack.c.h.b16 %v1001
    %v3919 = vunpack.c.l.b16 %v1002
    %v3920 = vunpack.c.h.b16 %v1002
    %v3921 = vunpack.c.l.b16 %v1003
    %v3922 = vunpack.c.h.b16 %v1003
    %v3923 = vunpack.c.l.b16 %v1004
    %v3924 = vunpack.c.h.b16 %v1004
    %v3925 = vunpack.c.l.b16 %v1005
    %v3926 = vunpack.c.h.b16 %v1005
    %v3927 = vunpack.c.l.b16 %v1006
    %v3928 = vunpack.c.h.b16 %v1006
    %v3929 = vunpack.c.l.b16 %v1007
    %v3930 = vunpack.c.h.b16 %v1007
    %v3931 = vunpack.c.l.b16 %v1008
    %v3932 = vunpack.c.h.b16 %v1008
    %v3933 = vunpack.c.l.b16 %v1009
    %v3934 = vunpack.c.h.b16 %v1009
    %v3935 = vunpack.c.l.b16 %v1010
    %v3936 = vunpack.c.h.b16 %v1010
    %v3937 = vunpack.c.l.b16 %v1011
    %v3938 = vunpack.c.h.b16 %v1011
    %v3939 = vunpack.c.l.b16 %v1012
    %v3940 = vunpack.c.h.b16 %v1012
    %v3941 = vunpack.c.l.b16 %v1013
    %v3942 = vunpack.c.h.b16 %v1013
    %v3943 = vunpack.c.l.b16 %v1014
    %v3944 = vunpack.c.h.b16 %v1014
    %v3945 = vunpack.c.l.b16 %v1015
    %v3946 = vunpack.c.h.b16 %v1015
    %v3947 = vunpack.c.l.b16 %v1016
    %v3948 = vunpack.c.h.b16 %v1016
    %v3949 = vunpack.c.l.b16 %v1017
    %v3950 = vunpack.c.h.b16 %v1017
    %v3951 = vunpack.c.l.b16 %v1018
    %v3952 = vunpack.c.h.b16 %v1018
    %v3953 = vunpack.c.l.b16 %v1019
    %v3954 = vunpack.c.h.b16 %v1019
    %v3955 = vunpack.c.l.b16 %v1020
    %v3956 = vunpack.c.h.b16 %v1020
    %v3957 = vunpack.c.l.b16 %v1021
    %v3958 = vunpack.c.h.b16 %v1021
    %v3959 = vunpack.c.l.b16 %v1022
    %v3960 = vunpack.c.h.b16 %v1022
    %v3961 = vunpack.c.l.b16 %v1023
    %v3962 = vunpack.c.h.b16 %v1023
    %v3963 = vunpack.c.l.b16 %v1024
    %v3964 = vunpack.c.h.b16 %v1024
    %v3965 = vunpack.c.l.b16 %v1025
    %v3966 = vunpack.c.h.b16 %v1025
    %v3967 = vunpack.c.l.b16 %v1026
    %v3968 = vunpack.c.h.b16 %v1026
    %v3969 = vunpack.c.l.b16 %v1027
    %v3970 = vunpack.c.h.b16 %v1027
    %v3971 = vunpack.c.l.b16 %v1028
    %v3972 = vunpack.c.h.b16 %v1028
    %v3973 = vunpack.c.l.b16 %v1029
    %v3974 = vunpack.c.h.b16 %v1029
    %v3975 = vunpack.c.l.b16 %v1030
    %v3976 = vunpack.c.h.b16 %v1030
    %v3977 = vunpack.c.l.b16 %v1031
    %v3978 = vunpack.c.h.b16 %v1031
    %v3979 = vunpack.c.l.b16 %v1032
    %v3980 = vunpack.c.h.b16 %v1032
    %v3981 = vunpack.c.l.b16 %v1033
    %v3982 = vunpack.c.h.b16 %v1033
    %v3983 = vunpack.c.l.b16 %v1034
    %v3984 = vunpack.c.h.b16 %v1034
    %v3985 = vunpack.c.l.b16 %v1035
    %v3986 = vunpack.c.h.b16 %v1035
    %v3987 = vunpack.c.l.b16 %v1036
    %v3988 = vunpack.c.h.b16 %v1036
    %v3989 = vunpack.c.l.b16 %v1037
    %v3990 = vunpack.c.h.b16 %v1037
    %v3991 = vunpack.c.l.b16 %v1038
    %v3992 = vunpack.c.h.b16 %v1038
    %v3993 = vunpack.c.l.b16 %v1039
    %v3994 = vunpack.c.h.b16 %v1039
    %v3995 = vunpack.c.l.b16 %v1040
    %v3996 = vunpack.c.h.b16 %v1040
    %v3997 = vunpack.c.l.b16 %v1041
    %v3998 = vunpack.c.h.b16 %v1041
    %v3999 = vunpack.c.l.b16 %v1042
    %v4000 = vunpack.c.h.b16 %v1042
    %v4001 = vunpack.c.l.b16 %v1043
    %v4002 = vunpack.c.h.b16 %v1043
    %v4003 = vunpack.c.l.b16 %v1044
    %v4004 = vunpack.c.h.b16 %v1044
    %v4005 = vunpack.c.l.b16 %v1045
    %v4006 = vunpack.c.h.b16 %v1045
    %v4007 = vunpack.c.l.b16 %v1046
    %v4008 = vunpack.c.h.b16 %v1046
    %v4009 = vunpack.c.l.b16 %v1047
    %v4010 = vunpack.c.h.b16 %v1047
    %v4011 = vunpack.c.l.b16 %v1048
    %v4012 = vunpack.c.h.b16 %v1048
    %v4013 = vunpack.c.l.b16 %v1049
    %v4014 = vunpack.c.h.b16 %v1049
    %v4015 = vunpack.c.l.b16 %v1050
    %v4016 = vunpack.c.h.b16 %v1050
    %v4017 = vunpack.c.l.b16 %v1051
    %v4018 = vunpack.c.h.b16 %v1051
    %v4019 = vunpack.c.l.b16 %v1052
    %v4020 = vunpack.c.h.b16 %v1052
    %v4021 = vunpack.c.l.b16 %v1053
    %v4022 = vunpack.c.h.b16 %v1053
    %v4023 = vunpack.c.l.b16 %v1054
    %v4024 = vunpack.c.h.b16 %v1054
    %v4025 = vunpack.c.l.b16 %v1055
    %v4026 = vunpack.c.h.b16 %v1055
    %v4027 = vunpack.c.l.b16 %v1056
    %v4028 = vunpack.c.h.b16 %v1056
    %v4029 = vunpack.c.l.b16 %v1057
    %v4030 = vunpack.c.h.b16 %v1057
    %v4031 = vunpack.c.l.b16 %v1058
    %v4032 = vunpack.c.h.b16 %v1058
    %v4033 = vunpack.c.l.b16 %v1059
    %v4034 = vunpack.c.h.b16 %v1059
    %v4035 = vunpack.c.l.b16 %v1060
    %v4036 = vunpack.c.h.b16 %v1060
    %v4037 = vunpack.c.l.b16 %v1061
    %v4038 = vunpack.c.h.b16 %v1061
    %v4039 = vunpack.c.l.b16 %v1062
    %v4040 = vunpack.c.h.b16 %v1062
    %v4041 = vunpack.c.l.b16 %v1063
    %v4042 = vunpack.c.h.b16 %v1063
    %v4043 = vunpack.c.l.b16 %v1064
    %v4044 = vunpack.c.h.b16 %v1064
    %v4045 = vunpack.c.l.b16 %v1065
    %v4046 = vunpack.c.h.b16 %v1065
    %v4047 = vunpack.c.l.b16 %v1066
    %v4048 = vunpack.c.h.b16 %v1066
    %v4049 = vunpack.c.l.b16 %v1067
    %v4050 = vunpack.c.h.b16 %v1067
    %v4051 = vunpack.c.l.b16 %v1068
    %v4052 = vunpack.c.h.b16 %v1068
    %v4053 = vunpack.c.l.b16 %v1069
    %v4054 = vunpack.c.h.b16 %v1069
    %v4055 = vunpack.c.l.b16 %v1070
    %v4056 = vunpack.c.h.b16 %v1070
    %v4057 = vunpack.c.l.b16 %v1071
    %v4058 = vunpack.c.h.b16 %v1071
    %v4059 = vunpack.c.l.b16 %v1072
    %v4060 = vunpack.c.h.b16 %v1072
    %v4061 = vunpack.c.l.b16 %v1073
    %v4062 = vunpack.c.h.b16 %v1073
    %v4063 = vunpack.c.l.b16 %v1074
    %v4064 = vunpack.c.h.b16 %v1074
    %v4065 = vunpack.c.l.b16 %v1075
    %v4066 = vunpack.c.h.b16 %v1075
    %v4067 = vunpack.c.l.b16 %v1076
    %v4068 = vunpack.c.h.b16 %v1076
    %v4069 = vunpack.c.l.b16 %v1077
    %v4070 = vunpack.c.h.b16 %v1077
    %v4071 = vunpack.c.l.b16 %v1078
    %v4072 = vunpack.c.h.b16 %v1078
    %v4073 = vunpack.c.l.b16 %v1079
    %v4074 = vunpack.c.h.b16 %v1079
    %v4075 = vunpack.c.l.b16 %v1080
    %v4076 = vunpack.c.h.b16 %v1080
    %v4077 = vunpack.c.l.b16 %v1081
    %v4078 = vunpack.c.h.b16 %v1081
    %v4079 = vunpack.c.l.b16 %v1082
    %v4080 = vunpack.c.h.b16 %v1082
    %v4081 = vunpack.c.l.b16 %v1083
    %v4082 = vunpack.c.h.b16 %v1083
    %v4083 = vunpack.c.l.b16 %v1084
    %v4084 = vunpack.c.h.b16 %v1084
    %v4085 = vunpack.c.l.b16 %v1085
    %v4086 = vunpack.c.h.b16 %v1085
    %v4087 = vunpack.c.l.b16 %v1086
    %v4088 = vunpack.c.h.b16 %v1086
    %v4089 = vunpack.c.l.b16 %v1087
    %v4090 = vunpack.c.h.b16 %v1087
    %v4091 = vunpack.c.l.b16 %v1088
    %v4092 = vunpack.c.h.b16 %v1088
    %v4093 = vunpack.c.l.b16 %v1089
    %v4094 = vunpack.c.h.b16 %v1089
    %v4095 = vunpack.c.l.b16 %v1090
    %v4096 = vunpack.c.h.b16 %v1090
    %v4097 = vunpack.c.l.b16 %v1091
    %v4098 = vunpack.c.h.b16 %v1091
    %v4099 = vunpack.c.l.b16 %v1092
    %v4100 = vunpack.c.h.b16 %v1092
    %v4101 = vunpack.c.l.b16 %v1093
    %v4102 = vunpack.c.h.b16 %v1093
    %v4103 = vunpack.c.l.b16 %v1094
    %v4104 = vunpack.c.h.b16 %v1094
    %v4105 = vunpack.c.l.b16 %v1095
    %v4106 = vunpack.c.h.b16 %v1095
    %v4107 = vunpack.c.l.b16 %v1096
    %v4108 = vunpack.c.h.b16 %v1096
    %v4109 = vunpack.c.l.b16 %v1097
    %v4110 = vunpack.c.h.b16 %v1097
    %v4111 = vunpack.c.l.b16 %v1098
    %v4112 = vunpack.c.h.b16 %v1098
    %v4113 = vunpack.c.l.b16 %v1099
    %v4114 = vunpack.c.h.b16 %v1099
    %v4115 = vunpack.c.l.b16 %v1100
    %v4116 = vunpack.c.h.b16 %v1100
    %v4117 = vunpack.c.l.b16 %v1101
    %v4118 = vunpack.c.h.b16 %v1101
    %v4119 = vunpack.c.l.b16 %v1102
    %v4120 = vunpack.c.h.b16 %v1102
    %v4121 = vunpack.c.l.b16 %v1103
    %v4122 = vunpack.c.h.b16 %v1103
    %v4123 = vunpack.c.l.b16 %v1104
    %v4124 = vunpack.c.h.b16 %v1104
    %v4125 = vunpack.c.l.b16 %v1105
    %v4126 = vunpack.c.h.b16 %v1105
    %v4127 = vunpack.c.l.b16 %v1106
    %v4128 = vunpack.c.h.b16 %v1106
    %v4129 = vunpack.c.l.b16 %v1107
    %v4130 = vunpack.c.h.b16 %v1107
    %v4131 = vunpack.c.l.b16 %v1108
    %v4132 = vunpack.c.h.b16 %v1108
    %v4133 = vunpack.c.l.b16 %v1109
    %v4134 = vunpack.c.h.b16 %v1109
    %v4135 = vunpack.c.l.b16 %v1110
    %v4136 = vunpack.c.h.b16 %v1110
    %v4137 = vunpack.c.l.b16 %v1111
    %v4138 = vunpack.c.h.b16 %v1111
    %v4139 = vunpack.c.l.b16 %v1112
    %v4140 = vunpack.c.h.b16 %v1112
    %v4141 = vunpack.c.l.b16 %v1113
    %v4142 = vunpack.c.h.b16 %v1113
    %v4143 = vunpack.c.l.b16 %v1114
    %v4144 = vunpack.c.h.b16 %v1114
    %v4145 = vunpack.c.l.b16 %v1115
    %v4146 = vunpack.c.h.b16 %v1115
    %v4147 = vunpack.c.l.b16 %v1116
    %v4148 = vunpack.c.h.b16 %v1116
    %v4149 = vunpack.c.l.b16 %v1117
    %v4150 = vunpack.c.h.b16 %v1117
    %v4151 = vunpack.c.l.b16 %v1118
    %v4152 = vunpack.c.h.b16 %v1118
    %v4153 = vunpack.c.l.b16 %v1119
    %v4154 = vunpack.c.h.b16 %v1119
    %v4155 = vunpack.c.l.b16 %v1120
    %v4156 = vunpack.c.h.b16 %v1120
    %v4157 = vunpack.c.l.b16 %v1121
    %v4158 = vunpack.c.h.b16 %v1121
    %v4159 = vunpack.c.l.b16 %v1122
    %v4160 = vunpack.c.h.b16 %v1122
    %v4161 = vunpack.c.l.b16 %v1123
    %v4162 = vunpack.c.h.b16 %v1123
    %v4163 = vunpack.c.l.b16 %v1124
    %v4164 = vunpack.c.h.b16 %v1124
    %v4165 = vunpack.c.l.b16 %v1125
    %v4166 = vunpack.c.h.b16 %v1125
    %v4167 = vunpack.c.l.b16 %v1126
    %v4168 = vunpack.c.h.b16 %v1126
    %v4169 = vunpack.c.l.b16 %v1127
    %v4170 = vunpack.c.h.b16 %v1127
    %v4171 = vunpack.c.l.b16 %v1128
    %v4172 = vunpack.c.h.b16 %v1128
    %v4173 = vunpack.c.l.b16 %v1129
    %v4174 = vunpack.c.h.b16 %v1129
    %v4175 = vunpack.c.l.b16 %v1130
    %v4176 = vunpack.c.h.b16 %v1130
    %v4177 = vunpack.c.l.b16 %v1131
    %v4178 = vunpack.c.h.b16 %v1131
    %v4179 = vunpack.c.l.b16 %v1132
    %v4180 = vunpack.c.h.b16 %v1132
    %v4181 = vunpack.c.l.b16 %v1133
    %v4182 = vunpack.c.h.b16 %v1133
    %v4183 = vunpack.c.l.b16 %v1134
    %v4184 = vunpack.c.h.b16 %v1134
    %v4185 = vunpack.c.l.b16 %v1135
    %v4186 = vunpack.c.h.b16 %v1135
    %v4187 = vunpack.c.l.b16 %v1136
    %v4188 = vunpack.c.h.b16 %v1136
    %v4189 = vunpack.c.l.b16 %v1137
    %v4190 = vunpack.c.h.b16 %v1137
    %v4191 = vunpack.c.l.b16 %v1138
    %v4192 = vunpack.c.h.b16 %v1138
    %v4193 = vunpack.c.l.b16 %v1139
    %v4194 = vunpack.c.h.b16 %v1139
    %v4195 = vunpack.c.l.b16 %v1140
    %v4196 = vunpack.c.h.b16 %v1140
    %v4197 = vunpack.c.l.b16 %v1141
    %v4198 = vunpack.c.h.b16 %v1141
    %v4199 = vunpack.c.l.b16 %v1142
    %v4200 = vunpack.c.h.b16 %v1142
    %v4201 = vunpack.c.l.b16 %v1143
    %v4202 = vunpack.c.h.b16 %v1143
    %v4203 = vunpack.c.l.b16 %v1144
    %v4204 = vunpack.c.h.b16 %v1144
    %v4205 = vunpack.c.l.b16 %v1145
    %v4206 = vunpack.c.h.b16 %v1145
    %v4207 = vunpack.c.l.b16 %v1146
    %v4208 = vunpack.c.h.b16 %v1146
    %v4209 = vunpack.c.l.b16 %v1147
    %v4210 = vunpack.c.h.b16 %v1147
    %v4211 = vunpack.c.l.b16 %v1148
    %v4212 = vunpack.c.h.b16 %v1148
    %v4213 = vunpack.c.l.b16 %v1149
    %v4214 = vunpack.c.h.b16 %v1149
    %v4215 = vunpack.c.l.b16 %v1150
    %v4216 = vunpack.c.h.b16 %v1150
    %v4217 = vunpack.c.l.b16 %v1151
    %v4218 = vunpack.c.h.b16 %v1151
    %v4219 = vunpack.c.l.b16 %v1152
    %v4220 = vunpack.c.h.b16 %v1152
    %v4221 = vunpack.c.l.b16 %v1153
    %v4222 = vunpack.c.h.b16 %v1153
    %v4223 = vunpack.c.l.b16 %v1154
    %v4224 = vunpack.c.h.b16 %v1154
    %v4225 = vunpack.c.l.b16 %v1155
    %v4226 = vunpack.c.h.b16 %v1155
    %v4227 = vunpack.c.l.b16 %v1156
    %v4228 = vunpack.c.h.b16 %v1156
    %v4229 = vunpack.c.l.b16 %v1157
    %v4230 = vunpack.c.h.b16 %v1157
    %v4231 = vunpack.c.l.b16 %v1158
    %v4232 = vunpack.c.h.b16 %v1158
    %v4233 = vunpack.c.l.b16 %v1159
    %v4234 = vunpack.c.h.b16 %v1159
    %v4235 = vunpack.c.l.b16 %v1160
    %v4236 = vunpack.c.h.b16 %v1160
    %v4237 = vunpack.c.l.b16 %v1161
    %v4238 = vunpack.c.h.b16 %v1161
    %v4239 = vunpack.c.l.b16 %v1162
    %v4240 = vunpack.c.h.b16 %v1162
    %v4241 = vunpack.c.l.b16 %v1163
    %v4242 = vunpack.c.h.b16 %v1163
    %v4243 = vunpack.c.l.b16 %v1164
    %v4244 = vunpack.c.h.b16 %v1164
    %v4245 = vunpack.c.l.b16 %v1165
    %v4246 = vunpack.c.h.b16 %v1165
    %v4247 = vunpack.c.l.b16 %v1166
    %v4248 = vunpack.c.h.b16 %v1166
    %v4249 = vunpack.c.l.b16 %v1167
    %v4250 = vunpack.c.h.b16 %v1167
    %v4251 = vunpack.c.l.b16 %v1168
    %v4252 = vunpack.c.h.b16 %v1168
    %v4253 = vunpack.c.l.b16 %v1169
    %v4254 = vunpack.c.h.b16 %v1169
    %v4255 = vunpack.c.l.b16 %v1170
    %v4256 = vunpack.c.h.b16 %v1170
    %v4257 = vunpack.c.l.b16 %v1171
    %v4258 = vunpack.c.h.b16 %v1171
    %v4259 = vunpack.c.l.b16 %v1172
    %v4260 = vunpack.c.h.b16 %v1172
    %v4261 = vunpack.c.l.b16 %v1173
    %v4262 = vunpack.c.h.b16 %v1173
    %v4263 = vunpack.c.l.b16 %v1174
    %v4264 = vunpack.c.h.b16 %v1174
    %v4265 = vunpack.c.l.b16 %v1175
    %v4266 = vunpack.c.h.b16 %v1175
    %v4267 = vunpack.c.l.b16 %v1176
    %v4268 = vunpack.c.h.b16 %v1176
    %v4269 = vunpack.c.l.b16 %v1177
    %v4270 = vunpack.c.h.b16 %v1177
    %v4271 = vunpack.c.l.b16 %v1178
    %v4272 = vunpack.c.h.b16 %v1178
    %v4273 = vunpack.c.l.b16 %v1179
    %v4274 = vunpack.c.h.b16 %v1179
    %v4275 = vunpack.c.l.b16 %v1180
    %v4276 = vunpack.c.h.b16 %v1180
    %v4277 = vunpack.c.l.b16 %v1181
    %v4278 = vunpack.c.h.b16 %v1181
    %v4279 = vunpack.c.l.b16 %v1182
    %v4280 = vunpack.c.h.b16 %v1182
    %v4281 = vunpack.c.l.b16 %v1183
    %v4282 = vunpack.c.h.b16 %v1183
    %v4283 = vunpack.c.l.b16 %v1184
    %v4284 = vunpack.c.h.b16 %v1184
    %v4285 = vunpack.c.l.b16 %v1185
    %v4286 = vunpack.c.h.b16 %v1185
    %v4287 = vunpack.c.l.b16 %v1186
    %v4288 = vunpack.c.h.b16 %v1186
    %v4289 = vunpack.c.l.b16 %v1187
    %v4290 = vunpack.c.h.b16 %v1187
    %v4291 = vunpack.c.l.b16 %v1188
    %v4292 = vunpack.c.h.b16 %v1188
    %v4293 = vunpack.c.l.b16 %v1189
    %v4294 = vunpack.c.h.b16 %v1189
    %v4295 = vunpack.c.l.b16 %v1190
    %v4296 = vunpack.c.h.b16 %v1190
    %v4297 = vunpack.c.l.b16 %v1191
    %v4298 = vunpack.c.h.b16 %v1191
    %v4299 = vunpack.c.l.b16 %v1192
    %v4300 = vunpack.c.h.b16 %v1192
    %v4301 = vunpack.c.l.b16 %v1193
    %v4302 = vunpack.c.h.b16 %v1193
    %v4303 = vunpack.c.l.b16 %v1194
    %v4304 = vunpack.c.h.b16 %v1194
    %v4305 = vunpack.c.l.b16 %v1195
    %v4306 = vunpack.c.h.b16 %v1195
    %v4307 = vunpack.c.l.b16 %v1196
    %v4308 = vunpack.c.h.b16 %v1196
    %v4309 = vunpack.c.l.b16 %v1197
    %v4310 = vunpack.c.h.b16 %v1197
    %v4311 = vunpack.c.l.b16 %v1198
    %v4312 = vunpack.c.h.b16 %v1198
    %v4313 = vunpack.c.l.b16 %v1199
    %v4314 = vunpack.c.h.b16 %v1199
    %v4315 = vunpack.c.l.b16 %v1200
    %v4316 = vunpack.c.h.b16 %v1200
    %v4317 = vunpack.c.l.b16 %v1201
    %v4318 = vunpack.c.h.b16 %v1201
    %v4319 = vunpack.c.l.b16 %v1202
    %v4320 = vunpack.c.h.b16 %v1202
    %v4321 = vunpack.c.l.b16 %v1203
    %v4322 = vunpack.c.h.b16 %v1203
    %v4323 = vunpack.c.l.b16 %v1204
    %v4324 = vunpack.c.h.b16 %v1204
    %v4325 = vunpack.c.l.b16 %v1205
    %v4326 = vunpack.c.h.b16 %v1205
    %v4327 = vunpack.c.l.b16 %v1206
    %v4328 = vunpack.c.h.b16 %v1206
    %v4329 = vunpack.c.l.b16 %v1207
    %v4330 = vunpack.c.h.b16 %v1207
    %v4331 = vunpack.c.l.b16 %v1208
    %v4332 = vunpack.c.h.b16 %v1208
    %v4333 = vunpack.c.l.b16 %v1209
    %v4334 = vunpack.c.h.b16 %v1209
    %v4335 = vunpack.c.l.b16 %v1210
    %v4336 = vunpack.c.h.b16 %v1210
    %v4337 = vunpack.c.l.b16 %v1211
    %v4338 = vunpack.c.h.b16 %v1211
    %v4339 = vunpack.c.l.b16 %v1212
    %v4340 = vunpack.c.h.b16 %v1212
    %v4341 = vunpack.c.l.b16 %v1213
    %v4342 = vunpack.c.h.b16 %v1213
    %v4343 = vunpack.c.l.b16 %v1214
    %v4344 = vunpack.c.h.b16 %v1214
    %v4345 = vunpack.c.l.b16 %v1215
    %v4346 = vunpack.c.h.b16 %v1215
    %v4347 = vunpack.c.l.b16 %v1216
    %v4348 = vunpack.c.h.b16 %v1216
    %v4349 = vunpack.c.l.b16 %v1217
    %v4350 = vunpack.c.h.b16 %v1217
    %v4351 = vunpack.c.l.b16 %v1218
    %v4352 = vunpack.c.h.b16 %v1218
    %v4353 = vunpack.c.l.b16 %v1219
    %v4354 = vunpack.c.h.b16 %v1219
    %v4355 = vunpack.c.l.b16 %v1220
    %v4356 = vunpack.c.h.b16 %v1220
    %v4357 = vpack.c.b16 %v2325, %v2309
    %v4358 = vpack.c.b16 %v2326, %v2310
    %v4359 = vpack.c.b16 %v2327, %v2311
    %v4360 = vpack.c.b16 %v2328, %v2312
    %v4361 = vpack.c.b16 %v2329, %v2313
    %v4362 = vpack.c.b16 %v2330, %v2314
    %v4363 = vpack.c.b16 %v2331, %v2315
    %v4364 = vpack.c.b16 %v2332, %v2316
    %v4365 = vpack.c.b16 %v2333, %v2317
    %v4366 = vpack.c.b16 %v2334, %v2318
    %v4367 = vpack.c.b16 %v2335, %v2319
    %v4368 = vpack.c.b16 %v2336, %v2320
    %v4369 = vpack.c.b16 %v2337, %v2321
    %v4370 = vpack.c.b16 %v2338, %v2322
    %v4371 = vpack.c.b16 %v2339, %v2323
    %v4372 = vpack.c.b16 %v2340, %v2324
    %v4373 = vpack.c.b16 %v2357, %v2341
    %v4374 = vpack.c.b16 %v2358, %v2342
    %v4375 = vpack.c.b16 %v2359, %v2343
    %v4376 = vpack.c.b16 %v2360, %v2344
    %v4377 = vpack.c.b16 %v2361, %v2345
    %v4378 = vpack.c.b16 %v2362, %v2346
    %v4379 = vpack.c.b16 %v2363, %v2347
    %v4380 = vpack.c.b16 %v2364, %v2348
    %v4381 = vpack.c.b16 %v2365, %v2349
    %v4382 = vpack.c.b16 %v2366, %v2350
    %v4383 = vpack.c.b16 %v2367, %v2351
    %v4384 = vpack.c.b16 %v2368, %v2352
    %v4385 = vpack.c.b16 %v2369, %v2353
    %v4386 = vpack.c.b16 %v2370, %v2354
    %v4387 = vpack.c.b16 %v2371, %v2355
    %v4388 = vpack.c.b16 %v2372, %v2356
    %v4389 = vpack.c.b16 %v2389, %v2373
    %v4390 = vpack.c.b16 %v2390, %v2374
    %v4391 = vpack.c.b16 %v2391, %v2375
    %v4392 = vpack.c.b16 %v2392, %v2376
    %v4393 = vpack.c.b16 %v2393, %v2377
    %v4394 = vpack.c.b16 %v2394, %v2378
    %v4395 = vpack.c.b16 %v2395, %v2379
    %v4396 = vpack.c.b16 %v2396, %v2380
    %v4397 = vpack.c.b16 %v2397, %v2381
    %v4398 = vpack.c.b16 %v2398, %v2382
    %v4399 = vpack.c.b16 %v2399, %v2383
    %v4400 = vpack.c.b16 %v2400, %v2384
    %v4401 = vpack.c.b16 %v2401, %v2385
    %v4402 = vpack.c.b16 %v2402, %v2386
    %v4403 = vpack.c.b16 %v2403, %v2387
    %v4404 = vpack.c.b16 %v2404, %v2388
    %v4405 = vpack.c.b16 %v2421, %v2405
    %v4406 = vpack.c.b16 %v2422, %v2406
    %v4407 = vpack.c.b16 %v2423, %v2407
    %v4408 = vpack.c.b16 %v2424, %v2408
    %v4409 = vpack.c.b16 %v2425, %v2409
    %v4410 = vpack.c.b16 %v2426, %v2410
    %v4411 = vpack.c.b16 %v2427, %v2411
    %v4412 = vpack.c.b16 %v2428, %v2412
    %v4413 = vpack.c.b16 %v2429, %v2413
    %v4414 = vpack.c.b16 %v2430, %v2414
    %v4415 = vpack.c.b16 %v2431, %v2415
    %v4416 = vpack.c.b16 %v2432, %v2416
    %v4417 = vpack.c.b16 %v2433, %v2417
    %v4418 = vpack.c.b16 %v2434, %v2418
    %v4419 = vpack.c.b16 %v2435, %v2419
    %v4420 = vpack.c.b16 %v2436, %v2420
    %v4421 = vpack.c.b16 %v2453, %v2437
    %v4422 = vpack.c.b16 %v2454, %v2438
    %v4423 = vpack.c.b16 %v2455, %v2439
    %v4424 = vpack.c.b16 %v2456, %v2440
    %v4425 = vpack.c.b16 %v2457, %v2441
    %v4426 = vpack.c.b16 %v2458, %v2442
    %v4427 = vpack.c.b16 %v2459, %v2443
    %v4428 = vpack.c.b16 %v2460, %v2444
    %v4429 = vpack.c.b16 %v2461, %v2445
    %v4430 = vpack.c.b16 %v2462, %v2446
    %v4431 = vpack.c.b16 %v2463, %v2447
    %v4432 = vpack.c.b16 %v2464, %v2448
    %v4433 = vpack.c.b16 %v2465, %v2449
    %v4434 = vpack.c.b16 %v2466, %v2450
    %v4435 = vpack.c.b16 %v2467, %v2451
    %v4436 = vpack.c.b16 %v2468, %v2452
    %v4437 = vpack.c.b16 %v2485, %v2469
    %v4438 = vpack.c.b16 %v2486, %v2470
    %v4439 = vpack.c.b16 %v2487, %v2471
    %v4440 = vpack.c.b16 %v2488, %v2472
    %v4441 = vpack.c.b16 %v2489, %v2473
    %v4442 = vpack.c.b16 %v2490, %v2474
    %v4443 = vpack.c.b16 %v2491, %v2475
    %v4444 = vpack.c.b16 %v2492, %v2476
    %v4445 = vpack.c.b16 %v2493, %v2477
    %v4446 = vpack.c.b16 %v2494, %v2478
    %v4447 = vpack.c.b16 %v2495, %v2479
    %v4448 = vpack.c.b16 %v2496, %v2480
    %v4449 = vpack.c.b16 %v2497, %v2481
    %v4450 = vpack.c.b16 %v2498, %v2482
    %v4451 = vpack.c.b16 %v2499, %v2483
    %v4452 = vpack.c.b16 %v2500, %v2484
    %v4453 = vpack.c.b16 %v2517, %v2501
    %v4454 = vpack.c.b16 %v2518, %v2502
    %v4455 = vpack.c.b16 %v2519, %v2503
    %v4456 = vpack.c.b16 %v2520, %v2504
    %v4457 = vpack.c.b16 %v2521, %v2505
    %v4458 = vpack.c.b16 %v2522, %v2506
    %v4459 = vpack.c.b16 %v2523, %v2507
    %v4460 = vpack.c.b16 %v2524, %v2508
    %v4461 = vpack.c.b16 %v2525, %v2509
    %v4462 = vpack.c.b16 %v2526, %v2510
    %v4463 = vpack.c.b16 %v2527, %v2511
    %v4464 = vpack.c.b16 %v2528, %v2512
    %v4465 = vpack.c.b16 %v2529, %v2513
    %v4466 = vpack.c.b16 %v2530, %v2514
    %v4467 = vpack.c.b16 %v2531, %v2515
    %v4468 = vpack.c.b16 %v2532, %v2516
    %v4469 = vpack.c.b16 %v2549, %v2533
    %v4470 = vpack.c.b16 %v2550, %v2534
    %v4471 = vpack.c.b16 %v2551, %v2535
    %v4472 = vpack.c.b16 %v2552, %v2536
    %v4473 = vpack.c.b16 %v2553, %v2537
    %v4474 = vpack.c.b16 %v2554, %v2538
    %v4475 = vpack.c.b16 %v2555, %v2539
    %v4476 = vpack.c.b16 %v2556, %v2540
    %v4477 = vpack.c.b16 %v2557, %v2541
    %v4478 = vpack.c.b16 %v2558, %v2542
    %v4479 = vpack.c.b16 %v2559, %v2543
    %v4480 = vpack.c.b16 %v2560, %v2544
    %v4481 = vpack.c.b16 %v2561, %v2545
    %v4482 = vpack.c.b16 %v2562, %v2546
    %v4483 = vpack.c.b16 %v2563, %v2547
    %v4484 = vpack.c.b16 %v2564, %v2548
    %v4485 = vpack.c.b16 %v2581, %v2565
    %v4486 = vpack.c.b16 %v2582, %v2566
    %v4487 = vpack.c.b16 %v2583, %v2567
    %v4488 = vpack.c.b16 %v2584, %v2568
    %v4489 = vpack.c.b16 %v2585, %v2569
    %v4490 = vpack.c.b16 %v2586, %v2570
    %v4491 = vpack.c.b16 %v2587, %v2571
    %v4492 = vpack.c.b16 %v2588, %v2572
    %v4493 = vpack.c.b16 %v2589, %v2573
    %v4494 = vpack.c.b16 %v2590, %v2574
    %v4495 = vpack.c.b16 %v2591, %v2575
    %v4496 = vpack.c.b16 %v2592, %v2576
    %v4497 = vpack.c.b16 %v2593, %v2577
    %v4498 = vpack.c.b16 %v2594, %v2578
    %v4499 = vpack.c.b16 %v2595, %v2579
    %v4500 = vpack.c.b16 %v2596, %v2580
    %v4501 = vpack.c.b16 %v2613, %v2597
    %v4502 = vpack.c.b16 %v2614, %v2598
    %v4503 = vpack.c.b16 %v2615, %v2599
    %v4504 = vpack.c.b16 %v2616, %v2600
    %v4505 = vpack.c.b16 %v2617, %v2601
    %v4506 = vpack.c.b16 %v2618, %v2602
    %v4507 = vpack.c.b16 %v2619, %v2603
    %v4508 = vpack.c.b16 %v2620, %v2604
    %v4509 = vpack.c.b16 %v2621, %v2605
    %v4510 = vpack.c.b16 %v2622, %v2606
    %v4511 = vpack.c.b16 %v2623, %v2607
    %v4512 = vpack.c.b16 %v2624, %v2608
    %v4513 = vpack.c.b16 %v2625, %v2609
    %v4514 = vpack.c.b16 %v2626, %v2610
    %v4515 = vpack.c.b16 %v2627, %v2611
    %v4516 = vpack.c.b16 %v2628, %v2612
    %v4517 = vpack.c.b16 %v2645, %v2629
    %v4518 = vpack.c.b16 %v2646, %v2630
    %v4519 = vpack.c.b16 %v2647, %v2631
    %v4520 = vpack.c.b16 %v2648, %v2632
    %v4521 = vpack.c.b16 %v2649, %v2633
    %v4522 = vpack.c.b16 %v2650, %v2634
    %v4523 = vpack.c.b16 %v2651, %v2635
    %v4524 = vpack.c.b16 %v2652, %v2636
    %v4525 = vpack.c.b16 %v2653, %v2637
    %v4526 = vpack.c.b16 %v2654, %v2638
    %v4527 = vpack.c.b16 %v2655, %v2639
    %v4528 = vpack.c.b16 %v2656, %v2640
    %v4529 = vpack.c.b16 %v2657, %v2641
    %v4530 = vpack.c.b16 %v2658, %v2642
    %v4531 = vpack.c.b16 %v2659, %v2643
    %v4532 = vpack.c.b16 %v2660, %v2644
    %v4533 = vpack.c.b16 %v2677, %v2661
    %v4534 = vpack.c.b16 %v2678, %v2662
    %v4535 = vpack.c.b16 %v2679, %v2663
    %v4536 = vpack.c.b16 %v2680, %v2664
    %v4537 = vpack.c.b16 %v2681, %v2665
    %v4538 = vpack.c.b16 %v2682, %v2666
    %v4539 = vpack.c.b16 %v2683, %v2667
    %v4540 = vpack.c.b16 %v2684, %v2668
    %v4541 = vpack.c.b16 %v2685, %v2669
    %v4542 = vpack.c.b16 %v2686, %v2670
    %v4543 = vpack.c.b16 %v2687, %v2671
    %v4544 = vpack.c.b16 %v2688, %v2672
    %v4545 = vpack.c.b16 %v2689, %v2673
    %v4546 = vpack.c.b16 %v2690, %v2674
    %v4547 = vpack.c.b16 %v2691, %v2675
    %v4548 = vpack.c.b16 %v2692, %v2676
    %v4549 = vpack.c.b16 %v2709, %v2693
    %v4550 = vpack.c.b16 %v2710, %v2694
    %v4551 = vpack.c.b16 %v2711, %v2695
    %v4552 = vpack.c.b16 %v2712, %v2696
    %v4553 = vpack.c.b16 %v2713, %v2697
    %v4554 = vpack.c.b16 %v2714, %v2698
    %v4555 = vpack.c.b16 %v2715, %v2699
    %v4556 = vpack.c.b16 %v2716, %v2700
    %v4557 = vpack.c.b16 %v2717, %v2701
    %v4558 = vpack.c.b16 %v2718, %v2702
    %v4559 = vpack.c.b16 %v2719, %v2703
    %v4560 = vpack.c.b16 %v2720, %v2704
    %v4561 = vpack.c.b16 %v2721, %v2705
    %v4562 = vpack.c.b16 %v2722, %v2706
    %v4563 = vpack.c.b16 %v2723, %v2707
    %v4564 = vpack.c.b16 %v2724, %v2708
    %v4565 = vpack.c.b16 %v2741, %v2725
    %v4566 = vpack.c.b16 %v2742, %v2726
    %v4567 = vpack.c.b16 %v2743, %v2727
    %v4568 = vpack.c.b16 %v2744, %v2728
    %v4569 = vpack.c.b16 %v2745, %v2729
    %v4570 = vpack.c.b16 %v2746, %v2730
    %v4571 = vpack.c.b16 %v2747, %v2731
    %v4572 = vpack.c.b16 %v2748, %v2732
    %v4573 = vpack.c.b16 %v2749, %v2733
    %v4574 = vpack.c.b16 %v2750, %v2734
    %v4575 = vpack.c.b16 %v2751, %v2735
    %v4576 = vpack.c.b16 %v2752, %v2736
    %v4577 = vpack.c.b16 %v2753, %v2737
    %v4578 = vpack.c.b16 %v2754, %v2738
    %v4579 = vpack.c.b16 %v2755, %v2739
    %v4580 = vpack.c.b16 %v2756, %v2740
    %v4581 = vpack.c.b16 %v2773, %v2757
    %v4582 = vpack.c.b16 %v2774, %v2758
    %v4583 = vpack.c.b16 %v2775, %v2759
    %v4584 = vpack.c.b16 %v2776, %v2760
    %v4585 = vpack.c.b16 %v2777, %v2761
    %v4586 = vpack.c.b16 %v2778, %v2762
    %v4587 = vpack.c.b16 %v2779, %v2763
    %v4588 = vpack.c.b16 %v2780, %v2764
    %v4589 = vpack.c.b16 %v2781, %v2765
    %v4590 = vpack.c.b16 %v2782, %v2766
    %v4591 = vpack.c.b16 %v2783, %v2767
    %v4592 = vpack.c.b16 %v2784, %v2768
    %v4593 = vpack.c.b16 %v2785, %v2769
    %v4594 = vpack.c.b16 %v2786, %v2770
    %v4595 = vpack.c.b16 %v2787, %v2771
    %v4596 = vpack.c.b16 %v2788, %v2772
    %v4597 = vpack.c.b16 %v2805, %v2789
    %v4598 = vpack.c.b16 %v2806, %v2790
    %v4599 = vpack.c.b16 %v2807, %v2791
    %v4600 = vpack.c.b16 %v2808, %v2792
    %v4601 = vpack.c.b16 %v2809, %v2793
    %v4602 = vpack.c.b16 %v2810, %v2794
    %v4603 = vpack.c.b16 %v2811, %v2795
    %v4604 = vpack.c.b16 %v2812, %v2796
    %v4605 = vpack.c.b16 %v2813, %v2797
    %v4606 = vpack.c.b16 %v2814, %v2798
    %v4607 = vpack.c.b16 %v2815, %v2799
    %v4608 = vpack.c.b16 %v2816, %v2800
    %v4609 = vpack.c.b16 %v2817, %v2801
    %v4610 = vpack.c.b16 %v2818, %v2802
    %v4611 = vpack.c.b16 %v2819, %v2803
    %v4612 = vpack.c.b16 %v2820, %v2804
    %v4613 = vpack.c.b16 %v2837, %v2821
    %v4614 = vpack.c.b16 %v2838, %v2822
    %v4615 = vpack.c.b16 %v2839, %v2823
    %v4616 = vpack.c.b16 %v2840, %v2824
    %v4617 = vpack.c.b16 %v2841, %v2825
    %v4618 = vpack.c.b16 %v2842, %v2826
    %v4619 = vpack.c.b16 %v2843, %v2827
    %v4620 = vpack.c.b16 %v2844, %v2828
    %v4621 = vpack.c.b16 %v2845, %v2829
    %v4622 = vpack.c.b16 %v2846, %v2830
    %v4623 = vpack.c.b16 %v2847, %v2831
    %v4624 = vpack.c.b16 %v2848, %v2832
    %v4625 = vpack.c.b16 %v2849, %v2833
    %v4626 = vpack.c.b16 %v2850, %v2834
    %v4627 = vpack.c.b16 %v2851, %v2835
    %v4628 = vpack.c.b16 %v2852, %v2836
    %v4629 = vpack.c.b16 %v2869, %v2853
    %v4630 = vpack.c.b16 %v2870, %v2854
    %v4631 = vpack.c.b16 %v2871, %v2855
    %v4632 = vpack.c.b16 %v2872, %v2856
    %v4633 = vpack.c.b16 %v2873, %v2857
    %v4634 = vpack.c.b16 %v2874, %v2858
    %v4635 = vpack.c.b16 %v2875, %v2859
    %v4636 = vpack.c.b16 %v2876, %v2860
    %v4637 = vpack.c.b16 %v2877, %v2861
    %v4638 = vpack.c.b16 %v2878, %v2862
    %v4639 = vpack.c.b16 %v2879, %v2863
    %v4640 = vpack.c.b16 %v2880, %v2864
    %v4641 = vpack.c.b16 %v2881, %v2865
    %v4642 = vpack.c.b16 %v2882, %v2866
    %v4643 = vpack.c.b16 %v2883, %v2867
    %v4644 = vpack.c.b16 %v2884, %v2868
    %v4645 = vpack.c.b16 %v2901, %v2885
    %v4646 = vpack.c.b16 %v2902, %v2886
    %v4647 = vpack.c.b16 %v2903, %v2887
    %v4648 = vpack.c.b16 %v2904, %v2888
    %v4649 = vpack.c.b16 %v2905, %v2889
    %v4650 = vpack.c.b16 %v2906, %v2890
    %v4651 = vpack.c.b16 %v2907, %v2891
    %v4652 = vpack.c.b16 %v2908, %v2892
    %v4653 = vpack.c.b16 %v2909, %v2893
    %v4654 = vpack.c.b16 %v2910, %v2894
    %v4655 = vpack.c.b16 %v2911, %v2895
    %v4656 = vpack.c.b16 %v2912, %v2896
    %v4657 = vpack.c.b16 %v2913, %v2897
    %v4658 = vpack.c.b16 %v2914, %v2898
    %v4659 = vpack.c.b16 %v2915, %v2899
    %v4660 = vpack.c.b16 %v2916, %v2900
    %v4661 = vpack.c.b16 %v2933, %v2917
    %v4662 = vpack.c.b16 %v2934, %v2918
    %v4663 = vpack.c.b16 %v2935, %v2919
    %v4664 = vpack.c.b16 %v2936, %v2920
    %v4665 = vpack.c.b16 %v2937, %v2921
    %v4666 = vpack.c.b16 %v2938, %v2922
    %v4667 = vpack.c.b16 %v2939, %v2923
    %v4668 = vpack.c.b16 %v2940, %v2924
    %v4669 = vpack.c.b16 %v2941, %v2925
    %v4670 = vpack.c.b16 %v2942, %v2926
    %v4671 = vpack.c.b16 %v2943, %v2927
    %v4672 = vpack.c.b16 %v2944, %v2928
    %v4673 = vpack.c.b16 %v2945, %v2929
    %v4674 = vpack.c.b16 %v2946, %v2930
    %v4675 = vpack.c.b16 %v2947, %v2931
    %v4676 = vpack.c.b16 %v2948, %v2932
    %v4677 = vpack.c.b16 %v2965, %v2949
    %v4678 = vpack.c.b16 %v2966, %v2950
    %v4679 = vpack.c.b16 %v2967, %v2951
    %v4680 = vpack.c.b16 %v2968, %v2952
    %v4681 = vpack.c.b16 %v2969, %v2953
    %v4682 = vpack.c.b16 %v2970, %v2954
    %v4683 = vpack.c.b16 %v2971, %v2955
    %v4684 = vpack.c.b16 %v2972, %v2956
    %v4685 = vpack.c.b16 %v2973, %v2957
    %v4686 = vpack.c.b16 %v2974, %v2958
    %v4687 = vpack.c.b16 %v2975, %v2959
    %v4688 = vpack.c.b16 %v2976, %v2960
    %v4689 = vpack.c.b16 %v2977, %v2961
    %v4690 = vpack.c.b16 %v2978, %v2962
    %v4691 = vpack.c.b16 %v2979, %v2963
    %v4692 = vpack.c.b16 %v2980, %v2964
    %v4693 = vpack.c.b16 %v2997, %v2981
    %v4694 = vpack.c.b16 %v2998, %v2982
    %v4695 = vpack.c.b16 %v2999, %v2983
    %v4696 = vpack.c.b16 %v3000, %v2984
    %v4697 = vpack.c.b16 %v3001, %v2985
    %v4698 = vpack.c.b16 %v3002, %v2986
    %v4699 = vpack.c.b16 %v3003, %v2987
    %v4700 = vpack.c.b16 %v3004, %v2988
    %v4701 = vpack.c.b16 %v3005, %v2989
    %v4702 = vpack.c.b16 %v3006, %v2990
    %v4703 = vpack.c.b16 %v3007, %v2991
    %v4704 = vpack.c.b16 %v3008, %v2992
    %v4705 = vpack.c.b16 %v3009, %v2993
    %v4706 = vpack.c.b16 %v3010, %v2994
    %v4707 = vpack.c.b16 %v3011, %v2995
    %v4708 = vpack.c.b16 %v3012, %v2996
    %v4709 = vpack.c.b16 %v3029, %v3013
    %v4710 = vpack.c.b16 %v3030, %v3014
    %v4711 = vpack.c.b16 %v3031, %v3015
    %v4712 = vpack.c.b16 %v3032, %v3016
    %v4713 = vpack.c.b16 %v3033, %v3017
    %v4714 = vpack.c.b16 %v3034, %v3018
    %v4715 = vpack.c.b16 %v3035, %v3019
    %v4716 = vpack.c.b16 %v3036, %v3020
    %v4717 = vpack.c.b16 %v3037, %v3021
    %v4718 = vpack.c.b16 %v3038, %v3022
    %v4719 = vpack.c.b16 %v3039, %v3023
    %v4720 = vpack.c.b16 %v3040, %v3024
    %v4721 = vpack.c.b16 %v3041, %v3025
    %v4722 = vpack.c.b16 %v3042, %v3026
    %v4723 = vpack.c.b16 %v3043, %v3027
    %v4724 = vpack.c.b16 %v3044, %v3028
    %v4725 = vpack.c.b16 %v3061, %v3045
    %v4726 = vpack.c.b16 %v3062, %v3046
    %v4727 = vpack.c.b16 %v3063, %v3047
    %v4728 = vpack.c.b16 %v3064, %v3048
    %v4729 = vpack.c.b16 %v3065, %v3049
    %v4730 = vpack.c.b16 %v3066, %v3050
    %v4731 = vpack.c.b16 %v3067, %v3051
    %v4732 = vpack.c.b16 %v3068, %v3052
    %v4733 = vpack.c.b16 %v3069, %v3053
    %v4734 = vpack.c.b16 %v3070, %v3054
    %v4735 = vpack.c.b16 %v3071, %v3055
    %v4736 = vpack.c.b16 %v3072, %v3056
    %v4737 = vpack.c.b16 %v3073, %v3057
    %v4738 = vpack.c.b16 %v3074, %v3058
    %v4739 = vpack.c.b16 %v3075, %v3059
    %v4740 = vpack.c.b16 %v3076, %v3060
    %v4741 = vpack.c.b16 %v3093, %v3077
    %v4742 = vpack.c.b16 %v3094, %v3078
    %v4743 = vpack.c.b16 %v3095, %v3079
    %v4744 = vpack.c.b16 %v3096, %v3080
    %v4745 = vpack.c.b16 %v3097, %v3081
    %v4746 = vpack.c.b16 %v3098, %v3082
    %v4747 = vpack.c.b16 %v3099, %v3083
    %v4748 = vpack.c.b16 %v3100, %v3084
    %v4749 = vpack.c.b16 %v3101, %v3085
    %v4750 = vpack.c.b16 %v3102, %v3086
    %v4751 = vpack.c.b16 %v3103, %v3087
    %v4752 = vpack.c.b16 %v3104, %v3088
    %v4753 = vpack.c.b16 %v3105, %v3089
    %v4754 = vpack.c.b16 %v3106, %v3090
    %v4755 = vpack.c.b16 %v3107, %v3091
    %v4756 = vpack.c.b16 %v3108, %v3092
    %v4757 = vpack.c.b16 %v3125, %v3109
    %v4758 = vpack.c.b16 %v3126, %v3110
    %v4759 = vpack.c.b16 %v3127, %v3111
    %v4760 = vpack.c.b16 %v3128, %v3112
    %v4761 = vpack.c.b16 %v3129, %v3113
    %v4762 = vpack.c.b16 %v3130, %v3114
    %v4763 = vpack.c.b16 %v3131, %v3115
    %v4764 = vpack.c.b16 %v3132, %v3116
    %v4765 = vpack.c.b16 %v3133, %v3117
    %v4766 = vpack.c.b16 %v3134, %v3118
    %v4767 = vpack.c.b16 %v3135, %v3119
    %v4768 = vpack.c.b16 %v3136, %v3120
    %v4769 = vpack.c.b16 %v3137, %v3121
    %v4770 = vpack.c.b16 %v3138, %v3122
    %v4771 = vpack.c.b16 %v3139, %v3123
    %v4772 = vpack.c.b16 %v3140, %v3124
    %v4773 = vpack.c.b16 %v3157, %v3141
    %v4774 = vpack.c.b16 %v3158, %v3142
    %v4775 = vpack.c.b16 %v3159, %v3143
    %v4776 = vpack.c.b16 %v3160, %v3144
    %v4777 = vpack.c.b16 %v3161, %v3145
    %v4778 = vpack.c.b16 %v3162, %v3146
    %v4779 = vpack.c.b16 %v3163, %v3147
    %v4780 = vpack.c.b16 %v3164, %v3148
    %v4781 = vpack.c.b16 %v3165, %v3149
    %v4782 = vpack.c.b16 %v3166, %v3150
    %v4783 = vpack.c.b16 %v3167, %v3151
    %v4784 = vpack.c.b16 %v3168, %v3152
    %v4785 = vpack.c.b16 %v3169, %v3153
    %v4786 = vpack.c.b16 %v3170, %v3154
    %v4787 = vpack.c.b16 %v3171, %v3155
    %v4788 = vpack.c.b16 %v3172, %v3156
    %v4789 = vpack.c.b16 %v3189, %v3173
    %v4790 = vpack.c.b16 %v3190, %v3174
    %v4791 = vpack.c.b16 %v3191, %v3175
    %v4792 = vpack.c.b16 %v3192, %v3176
    %v4793 = vpack.c.b16 %v3193, %v3177
    %v4794 = vpack.c.b16 %v3194, %v3178
    %v4795 = vpack.c.b16 %v3195, %v3179
    %v4796 = vpack.c.b16 %v3196, %v3180
    %v4797 = vpack.c.b16 %v3197, %v3181
    %v4798 = vpack.c.b16 %v3198, %v3182
    %v4799 = vpack.c.b16 %v3199, %v3183
    %v4800 = vpack.c.b16 %v3200, %v3184
    %v4801 = vpack.c.b16 %v3201, %v3185
    %v4802 = vpack.c.b16 %v3202, %v3186
    %v4803 = vpack.c.b16 %v3203, %v3187
    %v4804 = vpack.c.b16 %v3204, %v3188
    %v4805 = vpack.c.b16 %v3221, %v3205
    %v4806 = vpack.c.b16 %v3222, %v3206
    %v4807 = vpack.c.b16 %v3223, %v3207
    %v4808 = vpack.c.b16 %v3224, %v3208
    %v4809 = vpack.c.b16 %v3225, %v3209
    %v4810 = vpack.c.b16 %v3226, %v3210
    %v4811 = vpack.c.b16 %v3227, %v3211
    %v4812 = vpack.c.b16 %v3228, %v3212
    %v4813 = vpack.c.b16 %v3229, %v3213
    %v4814 = vpack.c.b16 %v3230, %v3214
    %v4815 = vpack.c.b16 %v3231, %v3215
    %v4816 = vpack.c.b16 %v3232, %v3216
    %v4817 = vpack.c.b16 %v3233, %v3217
    %v4818 = vpack.c.b16 %v3234, %v3218
    %v4819 = vpack.c.b16 %v3235, %v3219
    %v4820 = vpack.c.b16 %v3236, %v3220
    %v4821 = vpack.c.b16 %v3253, %v3237
    %v4822 = vpack.c.b16 %v3254, %v3238
    %v4823 = vpack.c.b16 %v3255, %v3239
    %v4824 = vpack.c.b16 %v3256, %v3240
    %v4825 = vpack.c.b16 %v3257, %v3241
    %v4826 = vpack.c.b16 %v3258, %v3242
    %v4827 = vpack.c.b16 %v3259, %v3243
    %v4828 = vpack.c.b16 %v3260, %v3244
    %v4829 = vpack.c.b16 %v3261, %v3245
    %v4830 = vpack.c.b16 %v3262, %v3246
    %v4831 = vpack.c.b16 %v3263, %v3247
    %v4832 = vpack.c.b16 %v3264, %v3248
    %v4833 = vpack.c.b16 %v3265, %v3249
    %v4834 = vpack.c.b16 %v3266, %v3250
    %v4835 = vpack.c.b16 %v3267, %v3251
    %v4836 = vpack.c.b16 %v3268, %v3252
    %v4837 = vpack.c.b16 %v3285, %v3269
    %v4838 = vpack.c.b16 %v3286, %v3270
    %v4839 = vpack.c.b16 %v3287, %v3271
    %v4840 = vpack.c.b16 %v3288, %v3272
    %v4841 = vpack.c.b16 %v3289, %v3273
    %v4842 = vpack.c.b16 %v3290, %v3274
    %v4843 = vpack.c.b16 %v3291, %v3275
    %v4844 = vpack.c.b16 %v3292, %v3276
    %v4845 = vpack.c.b16 %v3293, %v3277
    %v4846 = vpack.c.b16 %v3294, %v3278
    %v4847 = vpack.c.b16 %v3295, %v3279
    %v4848 = vpack.c.b16 %v3296, %v3280
    %v4849 = vpack.c.b16 %v3297, %v3281
    %v4850 = vpack.c.b16 %v3298, %v3282
    %v4851 = vpack.c.b16 %v3299, %v3283
    %v4852 = vpack.c.b16 %v3300, %v3284
    %v4853 = vpack.c.b16 %v3317, %v3301
    %v4854 = vpack.c.b16 %v3318, %v3302
    %v4855 = vpack.c.b16 %v3319, %v3303
    %v4856 = vpack.c.b16 %v3320, %v3304
    %v4857 = vpack.c.b16 %v3321, %v3305
    %v4858 = vpack.c.b16 %v3322, %v3306
    %v4859 = vpack.c.b16 %v3323, %v3307
    %v4860 = vpack.c.b16 %v3324, %v3308
    %v4861 = vpack.c.b16 %v3325, %v3309
    %v4862 = vpack.c.b16 %v3326, %v3310
    %v4863 = vpack.c.b16 %v3327, %v3311
    %v4864 = vpack.c.b16 %v3328, %v3312
    %v4865 = vpack.c.b16 %v3329, %v3313
    %v4866 = vpack.c.b16 %v3330, %v3314
    %v4867 = vpack.c.b16 %v3331, %v3315
    %v4868 = vpack.c.b16 %v3332, %v3316
    %v4869 = vpack.c.b16 %v3349, %v3333
    %v4870 = vpack.c.b16 %v3350, %v3334
    %v4871 = vpack.c.b16 %v3351, %v3335
    %v4872 = vpack.c.b16 %v3352, %v3336
    %v4873 = vpack.c.b16 %v3353, %v3337
    %v4874 = vpack.c.b16 %v3354, %v3338
    %v4875 = vpack.c.b16 %v3355, %v3339
    %v4876 = vpack.c.b16 %v3356, %v3340
    %v4877 = vpack.c.b16 %v3357, %v3341
    %v4878 = vpack.c.b16 %v3358, %v3342
    %v4879 = vpack.c.b16 %v3359, %v3343
    %v4880 = vpack.c.b16 %v3360, %v3344
    %v4881 = vpack.c.b16 %v3361, %v3345
    %v4882 = vpack.c.b16 %v3362, %v3346
    %v4883 = vpack.c.b16 %v3363, %v3347
    %v4884 = vpack.c.b16 %v3364, %v3348
    %v4885 = vpack.c.b16 %v3381, %v3365
    %v4886 = vpack.c.b16 %v3382, %v3366
    %v4887 = vpack.c.b16 %v3383, %v3367
    %v4888 = vpack.c.b16 %v3384, %v3368
    %v4889 = vpack.c.b16 %v3385, %v3369
    %v4890 = vpack.c.b16 %v3386, %v3370
    %v4891 = vpack.c.b16 %v3387, %v3371
    %v4892 = vpack.c.b16 %v3388, %v3372
    %v4893 = vpack.c.b16 %v3389, %v3373
    %v4894 = vpack.c.b16 %v3390, %v3374
    %v4895 = vpack.c.b16 %v3391, %v3375
    %v4896 = vpack.c.b16 %v3392, %v3376
    %v4897 = vpack.c.b16 %v3393, %v3377
    %v4898 = vpack.c.b16 %v3394, %v3378
    %v4899 = vpack.c.b16 %v3395, %v3379
    %v4900 = vpack.c.b16 %v3396, %v3380
    %v4901 = vpack.c.b16 %v3413, %v3397
    %v4902 = vpack.c.b16 %v3414, %v3398
    %v4903 = vpack.c.b16 %v3415, %v3399
    %v4904 = vpack.c.b16 %v3416, %v3400
    %v4905 = vpack.c.b16 %v3417, %v3401
    %v4906 = vpack.c.b16 %v3418, %v3402
    %v4907 = vpack.c.b16 %v3419, %v3403
    %v4908 = vpack.c.b16 %v3420, %v3404
    %v4909 = vpack.c.b16 %v3421, %v3405
    %v4910 = vpack.c.b16 %v3422, %v3406
    %v4911 = vpack.c.b16 %v3423, %v3407
    %v4912 = vpack.c.b16 %v3424, %v3408
    %v4913 = vpack.c.b16 %v3425, %v3409
    %v4914 = vpack.c.b16 %v3426, %v3410
    %v4915 = vpack.c.b16 %v3427, %v3411
    %v4916 = vpack.c.b16 %v3428, %v3412
    %v4917 = vpack.c.b16 %v3445, %v3429
    %v4918 = vpack.c.b16 %v3446, %v3430
    %v4919 = vpack.c.b16 %v3447, %v3431
    %v4920 = vpack.c.b16 %v3448, %v3432
    %v4921 = vpack.c.b16 %v3449, %v3433
    %v4922 = vpack.c.b16 %v3450, %v3434
    %v4923 = vpack.c.b16 %v3451, %v3435
    %v4924 = vpack.c.b16 %v3452, %v3436
    %v4925 = vpack.c.b16 %v3453, %v3437
    %v4926 = vpack.c.b16 %v3454, %v3438
    %v4927 = vpack.c.b16 %v3455, %v3439
    %v4928 = vpack.c.b16 %v3456, %v3440
    %v4929 = vpack.c.b16 %v3457, %v3441
    %v4930 = vpack.c.b16 %v3458, %v3442
    %v4931 = vpack.c.b16 %v3459, %v3443
    %v4932 = vpack.c.b16 %v3460, %v3444
    %v4933 = vpack.c.b16 %v3477, %v3461
    %v4934 = vpack.c.b16 %v3478, %v3462
    %v4935 = vpack.c.b16 %v3479, %v3463
    %v4936 = vpack.c.b16 %v3480, %v3464
    %v4937 = vpack.c.b16 %v3481, %v3465
    %v4938 = vpack.c.b16 %v3482, %v3466
    %v4939 = vpack.c.b16 %v3483, %v3467
    %v4940 = vpack.c.b16 %v3484, %v3468
    %v4941 = vpack.c.b16 %v3485, %v3469
    %v4942 = vpack.c.b16 %v3486, %v3470
    %v4943 = vpack.c.b16 %v3487, %v3471
    %v4944 = vpack.c.b16 %v3488, %v3472
    %v4945 = vpack.c.b16 %v3489, %v3473
    %v4946 = vpack.c.b16 %v3490, %v3474
    %v4947 = vpack.c.b16 %v3491, %v3475
    %v4948 = vpack.c.b16 %v3492, %v3476
    %v4949 = vpack.c.b16 %v3509, %v3493
    %v4950 = vpack.c.b16 %v3510, %v3494
    %v4951 = vpack.c.b16 %v3511, %v3495
    %v4952 = vpack.c.b16 %v3512, %v3496
    %v4953 = vpack.c.b16 %v3513, %v3497
    %v4954 = vpack.c.b16 %v3514, %v3498
    %v4955 = vpack.c.b16 %v3515, %v3499
    %v4956 = vpack.c.b16 %v3516, %v3500
    %v4957 = vpack.c.b16 %v3517, %v3501
    %v4958 = vpack.c.b16 %v3518, %v3502
    %v4959 = vpack.c.b16 %v3519, %v3503
    %v4960 = vpack.c.b16 %v3520, %v3504
    %v4961 = vpack.c.b16 %v3521, %v3505
    %v4962 = vpack.c.b16 %v3522, %v3506
    %v4963 = vpack.c.b16 %v3523, %v3507
    %v4964 = vpack.c.b16 %v3524, %v3508
    %v4965 = vpack.c.b16 %v3541, %v3525
    %v4966 = vpack.c.b16 %v3542, %v3526
    %v4967 = vpack.c.b16 %v3543, %v3527
    %v4968 = vpack.c.b16 %v3544, %v3528
    %v4969 = vpack.c.b16 %v3545, %v3529
    %v4970 = vpack.c.b16 %v3546, %v3530
    %v4971 = vpack.c.b16 %v3547, %v3531
    %v4972 = vpack.c.b16 %v3548, %v3532
    %v4973 = vpack.c.b16 %v3549, %v3533
    %v4974 = vpack.c.b16 %v3550, %v3534
    %v4975 = vpack.c.b16 %v3551, %v3535
    %v4976 = vpack.c.b16 %v3552, %v3536
    %v4977 = vpack.c.b16 %v3553, %v3537
    %v4978 = vpack.c.b16 %v3554, %v3538
    %v4979 = vpack.c.b16 %v3555, %v3539
    %v4980 = vpack.c.b16 %v3556, %v3540
    %v4981 = vpack.c.b16 %v3573, %v3557
    %v4982 = vpack.c.b16 %v3574, %v3558
    %v4983 = vpack.c.b16 %v3575, %v3559
    %v4984 = vpack.c.b16 %v3576, %v3560
    %v4985 = vpack.c.b16 %v3577, %v3561
    %v4986 = vpack.c.b16 %v3578, %v3562
    %v4987 = vpack.c.b16 %v3579, %v3563
    %v4988 = vpack.c.b16 %v3580, %v3564
    %v4989 = vpack.c.b16 %v3581, %v3565
    %v4990 = vpack.c.b16 %v3582, %v3566
    %v4991 = vpack.c.b16 %v3583, %v3567
    %v4992 = vpack.c.b16 %v3584, %v3568
    %v4993 = vpack.c.b16 %v3585, %v3569
    %v4994 = vpack.c.b16 %v3586, %v3570
    %v4995 = vpack.c.b16 %v3587, %v3571
    %v4996 = vpack.c.b16 %v3588, %v3572
    %v4997 = vpack.c.b16 %v3605, %v3589
    %v4998 = vpack.c.b16 %v3606, %v3590
    %v4999 = vpack.c.b16 %v3607, %v3591
    %v5000 = vpack.c.b16 %v3608, %v3592
    %v5001 = vpack.c.b16 %v3609, %v3593
    %v5002 = vpack.c.b16 %v3610, %v3594
    %v5003 = vpack.c.b16 %v3611, %v3595
    %v5004 = vpack.c.b16 %v3612, %v3596
    %v5005 = vpack.c.b16 %v3613, %v3597
    %v5006 = vpack.c.b16 %v3614, %v3598
    %v5007 = vpack.c.b16 %v3615, %v3599
    %v5008 = vpack.c.b16 %v3616, %v3600
    %v5009 = vpack.c.b16 %v3617, %v3601
    %v5010 = vpack.c.b16 %v3618, %v3602
    %v5011 = vpack.c.b16 %v3619, %v3603
    %v5012 = vpack.c.b16 %v3620, %v3604
    %v5013 = vpack.c.b16 %v3637, %v3621
    %v5014 = vpack.c.b16 %v3638, %v3622
    %v5015 = vpack.c.b16 %v3639, %v3623
    %v5016 = vpack.c.b16 %v3640, %v3624
    %v5017 = vpack.c.b16 %v3641, %v3625
    %v5018 = vpack.c.b16 %v3642, %v3626
    %v5019 = vpack.c.b16 %v3643, %v3627
    %v5020 = vpack.c.b16 %v3644, %v3628
    %v5021 = vpack.c.b16 %v3645, %v3629
    %v5022 = vpack.c.b16 %v3646, %v3630
    %v5023 = vpack.c.b16 %v3647, %v3631
    %v5024 = vpack.c.b16 %v3648, %v3632
    %v5025 = vpack.c.b16 %v3649, %v3633
    %v5026 = vpack.c.b16 %v3650, %v3634
    %v5027 = vpack.c.b16 %v3651, %v3635
    %v5028 = vpack.c.b16 %v3652, %v3636
    %v5029 = vpack.c.b16 %v3669, %v3653
    %v5030 = vpack.c.b16 %v3670, %v3654
    %v5031 = vpack.c.b16 %v3671, %v3655
    %v5032 = vpack.c.b16 %v3672, %v3656
    %v5033 = vpack.c.b16 %v3673, %v3657
    %v5034 = vpack.c.b16 %v3674, %v3658
    %v5035 = vpack.c.b16 %v3675, %v3659
    %v5036 = vpack.c.b16 %v3676, %v3660
    %v5037 = vpack.c.b16 %v3677, %v3661
    %v5038 = vpack.c.b16 %v3678, %v3662
    %v5039 = vpack.c.b16 %v3679, %v3663
    %v5040 = vpack.c.b16 %v3680, %v3664
    %v5041 = vpack.c.b16 %v3681, %v3665
    %v5042 = vpack.c.b16 %v3682, %v3666
    %v5043 = vpack.c.b16 %v3683, %v3667
    %v5044 = vpack.c.b16 %v3684, %v3668
    %v5045 = vpack.c.b16 %v3701, %v3685
    %v5046 = vpack.c.b16 %v3702, %v3686
    %v5047 = vpack.c.b16 %v3703, %v3687
    %v5048 = vpack.c.b16 %v3704, %v3688
    %v5049 = vpack.c.b16 %v3705, %v3689
    %v5050 = vpack.c.b16 %v3706, %v3690
    %v5051 = vpack.c.b16 %v3707, %v3691
    %v5052 = vpack.c.b16 %v3708, %v3692
    %v5053 = vpack.c.b16 %v3709, %v3693
    %v5054 = vpack.c.b16 %v3710, %v3694
    %v5055 = vpack.c.b16 %v3711, %v3695
    %v5056 = vpack.c.b16 %v3712, %v3696
    %v5057 = vpack.c.b16 %v3713, %v3697
    %v5058 = vpack.c.b16 %v3714, %v3698
    %v5059 = vpack.c.b16 %v3715, %v3699
    %v5060 = vpack.c.b16 %v3716, %v3700
    %v5061 = vpack.c.b16 %v3733, %v3717
    %v5062 = vpack.c.b16 %v3734, %v3718
    %v5063 = vpack.c.b16 %v3735, %v3719
    %v5064 = vpack.c.b16 %v3736, %v3720
    %v5065 = vpack.c.b16 %v3737, %v3721
    %v5066 = vpack.c.b16 %v3738, %v3722
    %v5067 = vpack.c.b16 %v3739, %v3723
    %v5068 = vpack.c.b16 %v3740, %v3724
    %v5069 = vpack.c.b16 %v3741, %v3725
    %v5070 = vpack.c.b16 %v3742, %v3726
    %v5071 = vpack.c.b16 %v3743, %v3727
    %v5072 = vpack.c.b16 %v3744, %v3728
    %v5073 = vpack.c.b16 %v3745, %v3729
    %v5074 = vpack.c.b16 %v3746, %v3730
    %v5075 = vpack.c.b16 %v3747, %v3731
    %v5076 = vpack.c.b16 %v3748, %v3732
    %v5077 = vpack.c.b16 %v3765, %v3749
    %v5078 = vpack.c.b16 %v3766, %v3750
    %v5079 = vpack.c.b16 %v3767, %v3751
    %v5080 = vpack.c.b16 %v3768, %v3752
    %v5081 = vpack.c.b16 %v3769, %v3753
    %v5082 = vpack.c.b16 %v3770, %v3754
    %v5083 = vpack.c.b16 %v3771, %v3755
    %v5084 = vpack.c.b16 %v3772, %v3756
    %v5085 = vpack.c.b16 %v3773, %v3757
    %v5086 = vpack.c.b16 %v3774, %v3758
    %v5087 = vpack.c.b16 %v3775, %v3759
    %v5088 = vpack.c.b16 %v3776, %v3760
    %v5089 = vpack.c.b16 %v3777, %v3761
    %v5090 = vpack.c.b16 %v3778, %v3762
    %v5091 = vpack.c.b16 %v3779, %v3763
    %v5092 = vpack.c.b16 %v3780, %v3764
    %v5093 = vpack.c.b16 %v3797, %v3781
    %v5094 = vpack.c.b16 %v3798, %v3782
    %v5095 = vpack.c.b16 %v3799, %v3783
    %v5096 = vpack.c.b16 %v3800, %v3784
    %v5097 = vpack.c.b16 %v3801, %v3785
    %v5098 = vpack.c.b16 %v3802, %v3786
    %v5099 = vpack.c.b16 %v3803, %v3787
    %v5100 = vpack.c.b16 %v3804, %v3788
    %v5101 = vpack.c.b16 %v3805, %v3789
    %v5102 = vpack.c.b16 %v3806, %v3790
    %v5103 = vpack.c.b16 %v3807, %v3791
    %v5104 = vpack.c.b16 %v3808, %v3792
    %v5105 = vpack.c.b16 %v3809, %v3793
    %v5106 = vpack.c.b16 %v3810, %v3794
    %v5107 = vpack.c.b16 %v3811, %v3795
    %v5108 = vpack.c.b16 %v3812, %v3796
    %v5109 = vpack.c.b16 %v3829, %v3813
    %v5110 = vpack.c.b16 %v3830, %v3814
    %v5111 = vpack.c.b16 %v3831, %v3815
    %v5112 = vpack.c.b16 %v3832, %v3816
    %v5113 = vpack.c.b16 %v3833, %v3817
    %v5114 = vpack.c.b16 %v3834, %v3818
    %v5115 = vpack.c.b16 %v3835, %v3819
    %v5116 = vpack.c.b16 %v3836, %v3820
    %v5117 = vpack.c.b16 %v3837, %v3821
    %v5118 = vpack.c.b16 %v3838, %v3822
    %v5119 = vpack.c.b16 %v3839, %v3823
    %v5120 = vpack.c.b16 %v3840, %v3824
    %v5121 = vpack.c.b16 %v3841, %v3825
    %v5122 = vpack.c.b16 %v3842, %v3826
    %v5123 = vpack.c.b16 %v3843, %v3827
    %v5124 = vpack.c.b16 %v3844, %v3828
    %v5125 = vpack.c.b16 %v3861, %v3845
    %v5126 = vpack.c.b16 %v3862, %v3846
    %v5127 = vpack.c.b16 %v3863, %v3847
    %v5128 = vpack.c.b16 %v3864, %v3848
    %v5129 = vpack.c.b16 %v3865, %v3849
    %v5130 = vpack.c.b16 %v3866, %v3850
    %v5131 = vpack.c.b16 %v3867, %v3851
    %v5132 = vpack.c.b16 %v3868, %v3852
    %v5133 = vpack.c.b16 %v3869, %v3853
    %v5134 = vpack.c.b16 %v3870, %v3854
    %v5135 = vpack.c.b16 %v3871, %v3855
    %v5136 = vpack.c.b16 %v3872, %v3856
    %v5137 = vpack.c.b16 %v3873, %v3857
    %v5138 = vpack.c.b16 %v3874, %v3858
    %v5139 = vpack.c.b16 %v3875, %v3859
    %v5140 = vpack.c.b16 %v3876, %v3860
    %v5141 = vpack.c.b16 %v3893, %v3877
    %v5142 = vpack.c.b16 %v3894, %v3878
    %v5143 = vpack.c.b16 %v3895, %v3879
    %v5144 = vpack.c.b16 %v3896, %v3880
    %v5145 = vpack.c.b16 %v3897, %v3881
    %v5146 = vpack.c.b16 %v3898, %v3882
    %v5147 = vpack.c.b16 %v3899, %v3883
    %v5148 = vpack.c.b16 %v3900, %v3884
    %v5149 = vpack.c.b16 %v3901, %v3885
    %v5150 = vpack.c.b16 %v3902, %v3886
    %v5151 = vpack.c.b16 %v3903, %v3887
    %v5152 = vpack.c.b16 %v3904, %v3888
    %v5153 = vpack.c.b16 %v3905, %v3889
    %v5154 = vpack.c.b16 %v3906, %v3890
    %v5155 = vpack.c.b16 %v3907, %v3891
    %v5156 = vpack.c.b16 %v3908, %v3892
    %v5157 = vpack.c.b16 %v3925, %v3909
    %v5158 = vpack.c.b16 %v3926, %v3910
    %v5159 = vpack.c.b16 %v3927, %v3911
    %v5160 = vpack.c.b16 %v3928, %v3912
    %v5161 = vpack.c.b16 %v3929, %v3913
    %v5162 = vpack.c.b16 %v3930, %v3914
    %v5163 = vpack.c.b16 %v3931, %v3915
    %v5164 = vpack.c.b16 %v3932, %v3916
    %v5165 = vpack.c.b16 %v3933, %v3917
    %v5166 = vpack.c.b16 %v3934, %v3918
    %v5167 = vpack.c.b16 %v3935, %v3919
    %v5168 = vpack.c.b16 %v3936, %v3920
    %v5169 = vpack.c.b16 %v3937, %v3921
    %v5170 = vpack.c.b16 %v3938, %v3922
    %v5171 = vpack.c.b16 %v3939, %v3923
    %v5172 = vpack.c.b16 %v3940, %v3924
    %v5173 = vpack.c.b16 %v3957, %v3941
    %v5174 = vpack.c.b16 %v3958, %v3942
    %v5175 = vpack.c.b16 %v3959, %v3943
    %v5176 = vpack.c.b16 %v3960, %v3944
    %v5177 = vpack.c.b16 %v3961, %v3945
    %v5178 = vpack.c.b16 %v3962, %v3946
    %v5179 = vpack.c.b16 %v3963, %v3947
    %v5180 = vpack.c.b16 %v3964, %v3948
    %v5181 = vpack.c.b16 %v3965, %v3949
    %v5182 = vpack.c.b16 %v3966, %v3950
    %v5183 = vpack.c.b16 %v3967, %v3951
    %v5184 = vpack.c.b16 %v3968, %v3952
    %v5185 = vpack.c.b16 %v3969, %v3953
    %v5186 = vpack.c.b16 %v3970, %v3954
    %v5187 = vpack.c.b16 %v3971, %v3955
    %v5188 = vpack.c.b16 %v3972, %v3956
    %v5189 = vpack.c.b16 %v3989, %v3973
    %v5190 = vpack.c.b16 %v3990, %v3974
    %v5191 = vpack.c.b16 %v3991, %v3975
    %v5192 = vpack.c.b16 %v3992, %v3976
    %v5193 = vpack.c.b16 %v3993, %v3977
    %v5194 = vpack.c.b16 %v3994, %v3978
    %v5195 = vpack.c.b16 %v3995, %v3979
    %v5196 = vpack.c.b16 %v3996, %v3980
    %v5197 = vpack.c.b16 %v3997, %v3981
    %v5198 = vpack.c.b16 %v3998, %v3982
    %v5199 = vpack.c.b16 %v3999, %v3983
    %v5200 = vpack.c.b16 %v4000, %v3984
    %v5201 = vpack.c.b16 %v4001, %v3985
    %v5202 = vpack.c.b16 %v4002, %v3986
    %v5203 = vpack.c.b16 %v4003, %v3987
    %v5204 = vpack.c.b16 %v4004, %v3988
    %v5205 = vpack.c.b16 %v4021, %v4005
    %v5206 = vpack.c.b16 %v4022, %v4006
    %v5207 = vpack.c.b16 %v4023, %v4007
    %v5208 = vpack.c.b16 %v4024, %v4008
    %v5209 = vpack.c.b16 %v4025, %v4009
    %v5210 = vpack.c.b16 %v4026, %v4010
    %v5211 = vpack.c.b16 %v4027, %v4011
    %v5212 = vpack.c.b16 %v4028, %v4012
    %v5213 = vpack.c.b16 %v4029, %v4013
    %v5214 = vpack.c.b16 %v4030, %v4014
    %v5215 = vpack.c.b16 %v4031, %v4015
    %v5216 = vpack.c.b16 %v4032, %v4016
    %v5217 = vpack.c.b16 %v4033, %v4017
    %v5218 = vpack.c.b16 %v4034, %v4018
    %v5219 = vpack.c.b16 %v4035, %v4019
    %v5220 = vpack.c.b16 %v4036, %v4020
    %v5221 = vpack.c.b16 %v4053, %v4037
    %v5222 = vpack.c.b16 %v4054, %v4038
    %v5223 = vpack.c.b16 %v4055, %v4039
    %v5224 = vpack.c.b16 %v4056, %v4040
    %v5225 = vpack.c.b16 %v4057, %v4041
    %v5226 = vpack.c.b16 %v4058, %v4042
    %v5227 = vpack.c.b16 %v4059, %v4043
    %v5228 = vpack.c.b16 %v4060, %v4044
    %v5229 = vpack.c.b16 %v4061, %v4045
    %v5230 = vpack.c.b16 %v4062, %v4046
    %v5231 = vpack.c.b16 %v4063, %v4047
    %v5232 = vpack.c.b16 %v4064, %v4048
    %v5233 = vpack.c.b16 %v4065, %v4049
    %v5234 = vpack.c.b16 %v4066, %v4050
    %v5235 = vpack.c.b16 %v4067, %v4051
    %v5236 = vpack.c.b16 %v4068, %v4052
    %v5237 = vpack.c.b16 %v4085, %v4069
    %v5238 = vpack.c.b16 %v4086, %v4070
    %v5239 = vpack.c.b16 %v4087, %v4071
    %v5240 = vpack.c.b16 %v4088, %v4072
    %v5241 = vpack.c.b16 %v4089, %v4073
    %v5242 = vpack.c.b16 %v4090, %v4074
    %v5243 = vpack.c.b16 %v4091, %v4075
    %v5244 = vpack.c.b16 %v4092, %v4076
    %v5245 = vpack.c.b16 %v4093, %v4077
    %v5246 = vpack.c.b16 %v4094, %v4078
    %v5247 = vpack.c.b16 %v4095, %v4079
    %v5248 = vpack.c.b16 %v4096, %v4080
    %v5249 = vpack.c.b16 %v4097, %v4081
    %v5250 = vpack.c.b16 %v4098, %v4082
    %v5251 = vpack.c.b16 %v4099, %v4083
    %v5252 = vpack.c.b16 %v4100, %v4084
    %v5253 = vpack.c.b16 %v4117, %v4101
    %v5254 = vpack.c.b16 %v4118, %v4102
    %v5255 = vpack.c.b16 %v4119, %v4103
    %v5256 = vpack.c.b16 %v4120, %v4104
    %v5257 = vpack.c.b16 %v4121, %v4105
    %v5258 = vpack.c.b16 %v4122, %v4106
    %v5259 = vpack.c.b16 %v4123, %v4107
    %v5260 = vpack.c.b16 %v4124, %v4108
    %v5261 = vpack.c.b16 %v4125, %v4109
    %v5262 = vpack.c.b16 %v4126, %v4110
    %v5263 = vpack.c.b16 %v4127, %v4111
    %v5264 = vpack.c.b16 %v4128, %v4112
    %v5265 = vpack.c.b16 %v4129, %v4113
    %v5266 = vpack.c.b16 %v4130, %v4114
    %v5267 = vpack.c.b16 %v4131, %v4115
    %v5268 = vpack.c.b16 %v4132, %v4116
    %v5269 = vpack.c.b16 %v4149, %v4133
    %v5270 = vpack.c.b16 %v4150, %v4134
    %v5271 = vpack.c.b16 %v4151, %v4135
    %v5272 = vpack.c.b16 %v4152, %v4136
    %v5273 = vpack.c.b16 %v4153, %v4137
    %v5274 = vpack.c.b16 %v4154, %v4138
    %v5275 = vpack.c.b16 %v4155, %v4139
    %v5276 = vpack.c.b16 %v4156, %v4140
    %v5277 = vpack.c.b16 %v4157, %v4141
    %v5278 = vpack.c.b16 %v4158, %v4142
    %v5279 = vpack.c.b16 %v4159, %v4143
    %v5280 = vpack.c.b16 %v4160, %v4144
    %v5281 = vpack.c.b16 %v4161, %v4145
    %v5282 = vpack.c.b16 %v4162, %v4146
    %v5283 = vpack.c.b16 %v4163, %v4147
    %v5284 = vpack.c.b16 %v4164, %v4148
    %v5285 = vpack.c.b16 %v4181, %v4165
    %v5286 = vpack.c.b16 %v4182, %v4166
    %v5287 = vpack.c.b16 %v4183, %v4167
    %v5288 = vpack.c.b16 %v4184, %v4168
    %v5289 = vpack.c.b16 %v4185, %v4169
    %v5290 = vpack.c.b16 %v4186, %v4170
    %v5291 = vpack.c.b16 %v4187, %v4171
    %v5292 = vpack.c.b16 %v4188, %v4172
    %v5293 = vpack.c.b16 %v4189, %v4173
    %v5294 = vpack.c.b16 %v4190, %v4174
    %v5295 = vpack.c.b16 %v4191, %v4175
    %v5296 = vpack.c.b16 %v4192, %v4176
    %v5297 = vpack.c.b16 %v4193, %v4177
    %v5298 = vpack.c.b16 %v4194, %v4178
    %v5299 = vpack.c.b16 %v4195, %v4179
    %v5300 = vpack.c.b16 %v4196, %v4180
    %v5301 = vpack.c.b16 %v4213, %v4197
    %v5302 = vpack.c.b16 %v4214, %v4198
    %v5303 = vpack.c.b16 %v4215, %v4199
    %v5304 = vpack.c.b16 %v4216, %v4200
    %v5305 = vpack.c.b16 %v4217, %v4201
    %v5306 = vpack.c.b16 %v4218, %v4202
    %v5307 = vpack.c.b16 %v4219, %v4203
    %v5308 = vpack.c.b16 %v4220, %v4204
    %v5309 = vpack.c.b16 %v4221, %v4205
    %v5310 = vpack.c.b16 %v4222, %v4206
    %v5311 = vpack.c.b16 %v4223, %v4207
    %v5312 = vpack.c.b16 %v4224, %v4208
    %v5313 = vpack.c.b16 %v4225, %v4209
    %v5314 = vpack.c.b16 %v4226, %v4210
    %v5315 = vpack.c.b16 %v4227, %v4211
    %v5316 = vpack.c.b16 %v4228, %v4212
    %v5317 = vpack.c.b16 %v4245, %v4229
    %v5318 = vpack.c.b16 %v4246, %v4230
    %v5319 = vpack.c.b16 %v4247, %v4231
    %v5320 = vpack.c.b16 %v4248, %v4232
    %v5321 = vpack.c.b16 %v4249, %v4233
    %v5322 = vpack.c.b16 %v4250, %v4234
    %v5323 = vpack.c.b16 %v4251, %v4235
    %v5324 = vpack.c.b16 %v4252, %v4236
    %v5325 = vpack.c.b16 %v4253, %v4237
    %v5326 = vpack.c.b16 %v4254, %v4238
    %v5327 = vpack.c.b16 %v4255, %v4239
    %v5328 = vpack.c.b16 %v4256, %v4240
    %v5329 = vpack.c.b16 %v4257, %v4241
    %v5330 = vpack.c.b16 %v4258, %v4242
    %v5331 = vpack.c.b16 %v4259, %v4243
    %v5332 = vpack.c.b16 %v4260, %v4244
    %v5333 = vpack.c.b16 %v4277, %v4261
    %v5334 = vpack.c.b16 %v4278, %v4262
    %v5335 = vpack.c.b16 %v4279, %v4263
    %v5336 = vpack.c.b16 %v4280, %v4264
    %v5337 = vpack.c.b16 %v4281, %v4265
    %v5338 = vpack.c.b16 %v4282, %v4266
    %v5339 = vpack.c.b16 %v4283, %v4267
    %v5340 = vpack.c.b16 %v4284, %v4268
    %v5341 = vpack.c.b16 %v4285, %v4269
    %v5342 = vpack.c.b16 %v4286, %v4270
    %v5343 = vpack.c.b16 %v4287, %v4271
    %v5344 = vpack.c.b16 %v4288, %v4272
    %v5345 = vpack.c.b16 %v4289, %v4273
    %v5346 = vpack.c.b16 %v4290, %v4274
    %v5347 = vpack.c.b16 %v4291, %v4275
    %v5348 = vpack.c.b16 %v4292, %v4276
    %v5349 = vpack.c.b16 %v4309, %v4293
    %v5350 = vpack.c.b16 %v4310, %v4294
    %v5351 = vpack.c.b16 %v4311, %v4295
    %v5352 = vpack.c.b16 %v4312, %v4296
    %v5353 = vpack.c.b16 %v4313, %v4297
    %v5354 = vpack.c.b16 %v4314, %v4298
    %v5355 = vpack.c.b16 %v4315, %v4299
    %v5356 = vpack.c.b16 %v4316, %v4300
    %v5357 = vpack.c.b16 %v4317, %v4301
    %v5358 = vpack.c.b16 %v4318, %v4302
    %v5359 = vpack.c.b16 %v4319, %v4303
    %v5360 = vpack.c.b16 %v4320, %v4304
    %v5361 = vpack.c.b16 %v4321, %v4305
    %v5362 = vpack.c.b16 %v4322, %v4306
    %v5363 = vpack.c.b16 %v4323, %v4307
    %v5364 = vpack.c.b16 %v4324, %v4308
    %v5365 = vpack.c.b16 %v4341, %v4325
    %v5366 = vpack.c.b16 %v4342, %v4326
    %v5367 = vpack.c.b16 %v4343, %v4327
    %v5368 = vpack.c.b16 %v4344, %v4328
    %v5369 = vpack.c.b16 %v4345, %v4329
    %v5370 = vpack.c.b16 %v4346, %v4330
    %v5371 = vpack.c.b16 %v4347, %v4331
    %v5372 = vpack.c.b16 %v4348, %v4332
    %v5373 = vpack.c.b16 %v4349, %v4333
    %v5374 = vpack.c.b16 %v4350, %v4334
    %v5375 = vpack.c.b16 %v4351, %v4335
    %v5376 = vpack.c.b16 %v4352, %v4336
    %v5377 = vpack.c.b16 %v4353, %v4337
    %v5378 = vpack.c.b16 %v4354, %v4338
    %v5379 = vpack.c.b16 %v4355, %v4339
    %v5380 = vpack.c.b16 %v4356, %v4340
    %6405 = vmatpush.bf16.msra.mxu0 %v4469
    %6406 = vmatpush.bf16.msra.mxu0 %v4453
    %6407 = vmatpush.bf16.msra.mxu0 %v4437
    %6408 = vmatpush.bf16.msra.mxu0 %v4421
    %6409 = vmatpush.bf16.msra.mxu0 %v4405
    %6410 = vmatpush.bf16.msra.mxu0 %v4389
    %6411 = vmatpush.bf16.msra.mxu0 %v4373
    %6412 = vmatpush.bf16.msra.mxu0 %v4357
    %6413 = vmatmul.bf16.gmra.mxu0 %v1269
    %v6414 = vpop.f32.mrf.mxu0
    %v6415 = vadd.f32 %v1225, %v6414
    %v6416 = vpop.f32.mrf.mxu0
    %6417 = vdwg.mxu0
    %6418 = vmatpush.bf16.msra.mxu0 %v4597
    %6419 = vmatpush.bf16.msra.mxu0 %v4581
    %6420 = vmatpush.bf16.msra.mxu0 %v4565
    %6421 = vmatpush.bf16.msra.mxu0 %v4549
    %6422 = vmatpush.bf16.msra.mxu0 %v4533
    %6423 = vmatpush.bf16.msra.mxu0 %v4517
    %6424 = vmatpush.bf16.msra.mxu0 %v4501
    %6425 = vmatpush.bf16.msra.mxu0 %v4485
    %6426 = vmatmul.bf16.gmra.mxu0 %v1270
    %v6427 = vpop.f32.mrf.mxu0
    %v6428 = vadd.f32 %v6415, %v6427
    %v6429 = vpop.f32.mrf.mxu0
    %6430 = vdwg.mxu0
    %6431 = vmatpush.bf16.msra.mxu0 %v4725
    %6432 = vmatpush.bf16.msra.mxu0 %v4709
    %6433 = vmatpush.bf16.msra.mxu0 %v4693
    %6434 = vmatpush.bf16.msra.mxu0 %v4677
    %6435 = vmatpush.bf16.msra.mxu0 %v4661
    %6436 = vmatpush.bf16.msra.mxu0 %v4645
    %6437 = vmatpush.bf16.msra.mxu0 %v4629
    %6438 = vmatpush.bf16.msra.mxu0 %v4613
    %6439 = vmatmul.bf16.gmra.mxu0 %v1271
    %v6440 = vpop.f32.mrf.mxu0
    %v6441 = vadd.f32 %v6428, %v6440
    %v6442 = vpop.f32.mrf.mxu0
    %6443 = vdwg.mxu0
    %6444 = vmatpush.bf16.msra.mxu0 %v4853
    %6445 = vmatpush.bf16.msra.mxu0 %v4837
    %6446 = vmatpush.bf16.msra.mxu0 %v4821
    %6447 = vmatpush.bf16.msra.mxu0 %v4805
    %6448 = vmatpush.bf16.msra.mxu0 %v4789
    %6449 = vmatpush.bf16.msra.mxu0 %v4773
    %6450 = vmatpush.bf16.msra.mxu0 %v4757
    %6451 = vmatpush.bf16.msra.mxu0 %v4741
    %6452 = vmatmul.bf16.gmra.mxu0 %v1272
    %v6453 = vpop.f32.mrf.mxu0
    %v6454 = vadd.f32 %v6441, %v6453
    %v6455 = vpop.f32.mrf.mxu0
    %6456 = vdwg.mxu0
    %6457 = vmatpush.bf16.msra.mxu0 %v4981
    %6458 = vmatpush.bf16.msra.mxu0 %v4965
    %6459 = vmatpush.bf16.msra.mxu0 %v4949
    %6460 = vmatpush.bf16.msra.mxu0 %v4933
    %6461 = vmatpush.bf16.msra.mxu0 %v4917
    %6462 = vmatpush.bf16.msra.mxu0 %v4901
    %6463 = vmatpush.bf16.msra.mxu0 %v4885
    %6464 = vmatpush.bf16.msra.mxu0 %v4869
    %6465 = vmatmul.bf16.gmra.mxu0 %v1273
    %v6466 = vpop.f32.mrf.mxu0
    %v6467 = vadd.f32 %v6454, %v6466
    %v6468 = vpop.f32.mrf.mxu0
    %6469 = vdwg.mxu0
    %6470 = vmatpush.bf16.msra.mxu0 %v5109
    %6471 = vmatpush.bf16.msra.mxu0 %v5093
    %6472 = vmatpush.bf16.msra.mxu0 %v5077
    %6473 = vmatpush.bf16.msra.mxu0 %v5061
    %6474 = vmatpush.bf16.msra.mxu0 %v5045
    %6475 = vmatpush.bf16.msra.mxu0 %v5029
    %6476 = vmatpush.bf16.msra.mxu0 %v5013
    %6477 = vmatpush.bf16.msra.mxu0 %v4997
    %6478 = vmatmul.bf16.gmra.mxu0 %v1274
    %v6479 = vpop.f32.mrf.mxu0
    %v6480 = vadd.f32 %v6467, %v6479
    %v6481 = vpop.f32.mrf.mxu0
    %6482 = vdwg.mxu0
    %6483 = vmatpush.bf16.msra.mxu0 %v5237
    %6484 = vmatpush.bf16.msra.mxu0 %v5221
    %6485 = vmatpush.bf16.msra.mxu0 %v5205
    %6486 = vmatpush.bf16.msra.mxu0 %v5189
    %6487 = vmatpush.bf16.msra.mxu0 %v5173
    %6488 = vmatpush.bf16.msra.mxu0 %v5157
    %6489 = vmatpush.bf16.msra.mxu0 %v5141
    %6490 = vmatpush.bf16.msra.mxu0 %v5125
    %6491 = vmatmul.bf16.gmra.mxu0 %v1275
    %v6492 = vpop.f32.mrf.mxu0
    %v6493 = vadd.f32 %v6480, %v6492
    %v6494 = vpop.f32.mrf.mxu0
    %6495 = vdwg.mxu0
    %6496 = vmatpush.bf16.msra.mxu0 %v5365
    %6497 = vmatpush.bf16.msra.mxu0 %v5349
    %6498 = vmatpush.bf16.msra.mxu0 %v5333
    %6499 = vmatpush.bf16.msra.mxu0 %v5317
    %6500 = vmatpush.bf16.msra.mxu0 %v5301
    %6501 = vmatpush.bf16.msra.mxu0 %v5285
    %6502 = vmatpush.bf16.msra.mxu0 %v5269
    %6503 = vmatpush.bf16.msra.mxu0 %v5253
    %6504 = vmatmul.bf16.gmra.mxu0 %v1276
    %v6505 = vpop.f32.mrf.mxu0
    %v6506 = vadd.f32 %v6493, %v6505
    %v6507 = vpop.f32.mrf.mxu0
    %6508 = vdwg.mxu0
    %6509 = vmatpush.bf16.msra.mxu0 %v4470
    %6510 = vmatpush.bf16.msra.mxu0 %v4454
    %6511 = vmatpush.bf16.msra.mxu0 %v4438
    %6512 = vmatpush.bf16.msra.mxu0 %v4422
    %6513 = vmatpush.bf16.msra.mxu0 %v4406
    %6514 = vmatpush.bf16.msra.mxu0 %v4390
    %6515 = vmatpush.bf16.msra.mxu0 %v4374
    %6516 = vmatpush.bf16.msra.mxu0 %v4358
    %6517 = vmatmul.bf16.gmra.mxu0 %v1269
    %v6518 = vpop.f32.mrf.mxu0
    %v6519 = vadd.f32 %v1226, %v6518
    %v6520 = vpop.f32.mrf.mxu0
    %6521 = vdwg.mxu0
    %6522 = vmatpush.bf16.msra.mxu0 %v4598
    %6523 = vmatpush.bf16.msra.mxu0 %v4582
    %6524 = vmatpush.bf16.msra.mxu0 %v4566
    %6525 = vmatpush.bf16.msra.mxu0 %v4550
    %6526 = vmatpush.bf16.msra.mxu0 %v4534
    %6527 = vmatpush.bf16.msra.mxu0 %v4518
    %6528 = vmatpush.bf16.msra.mxu0 %v4502
    %6529 = vmatpush.bf16.msra.mxu0 %v4486
    %6530 = vmatmul.bf16.gmra.mxu0 %v1270
    %v6531 = vpop.f32.mrf.mxu0
    %v6532 = vadd.f32 %v6519, %v6531
    %v6533 = vpop.f32.mrf.mxu0
    %6534 = vdwg.mxu0
    %6535 = vmatpush.bf16.msra.mxu0 %v4726
    %6536 = vmatpush.bf16.msra.mxu0 %v4710
    %6537 = vmatpush.bf16.msra.mxu0 %v4694
    %6538 = vmatpush.bf16.msra.mxu0 %v4678
    %6539 = vmatpush.bf16.msra.mxu0 %v4662
    %6540 = vmatpush.bf16.msra.mxu0 %v4646
    %6541 = vmatpush.bf16.msra.mxu0 %v4630
    %6542 = vmatpush.bf16.msra.mxu0 %v4614
    %6543 = vmatmul.bf16.gmra.mxu0 %v1271
    %v6544 = vpop.f32.mrf.mxu0
    %v6545 = vadd.f32 %v6532, %v6544
    %v6546 = vpop.f32.mrf.mxu0
    %6547 = vdwg.mxu0
    %6548 = vmatpush.bf16.msra.mxu0 %v4854
    %6549 = vmatpush.bf16.msra.mxu0 %v4838
    %6550 = vmatpush.bf16.msra.mxu0 %v4822
    %6551 = vmatpush.bf16.msra.mxu0 %v4806
    %6552 = vmatpush.bf16.msra.mxu0 %v4790
    %6553 = vmatpush.bf16.msra.mxu0 %v4774
    %6554 = vmatpush.bf16.msra.mxu0 %v4758
    %6555 = vmatpush.bf16.msra.mxu0 %v4742
    %6556 = vmatmul.bf16.gmra.mxu0 %v1272
    %v6557 = vpop.f32.mrf.mxu0
    %v6558 = vadd.f32 %v6545, %v6557
    %v6559 = vpop.f32.mrf.mxu0
    %6560 = vdwg.mxu0
    %6561 = vmatpush.bf16.msra.mxu0 %v4982
    %6562 = vmatpush.bf16.msra.mxu0 %v4966
    %6563 = vmatpush.bf16.msra.mxu0 %v4950
    %6564 = vmatpush.bf16.msra.mxu0 %v4934
    %6565 = vmatpush.bf16.msra.mxu0 %v4918
    %6566 = vmatpush.bf16.msra.mxu0 %v4902
    %6567 = vmatpush.bf16.msra.mxu0 %v4886
    %6568 = vmatpush.bf16.msra.mxu0 %v4870
    %6569 = vmatmul.bf16.gmra.mxu0 %v1273
    %v6570 = vpop.f32.mrf.mxu0
    %v6571 = vadd.f32 %v6558, %v6570
    %v6572 = vpop.f32.mrf.mxu0
    %6573 = vdwg.mxu0
    %6574 = vmatpush.bf16.msra.mxu0 %v5110
    %6575 = vmatpush.bf16.msra.mxu0 %v5094
    %6576 = vmatpush.bf16.msra.mxu0 %v5078
    %6577 = vmatpush.bf16.msra.mxu0 %v5062
    %6578 = vmatpush.bf16.msra.mxu0 %v5046
    %6579 = vmatpush.bf16.msra.mxu0 %v5030
    %6580 = vmatpush.bf16.msra.mxu0 %v5014
    %6581 = vmatpush.bf16.msra.mxu0 %v4998
    %6582 = vmatmul.bf16.gmra.mxu0 %v1274
    %v6583 = vpop.f32.mrf.mxu0
    %v6584 = vadd.f32 %v6571, %v6583
    %v6585 = vpop.f32.mrf.mxu0
    %6586 = vdwg.mxu0
    %6587 = vmatpush.bf16.msra.mxu0 %v5238
    %6588 = vmatpush.bf16.msra.mxu0 %v5222
    %6589 = vmatpush.bf16.msra.mxu0 %v5206
    %6590 = vmatpush.bf16.msra.mxu0 %v5190
    %6591 = vmatpush.bf16.msra.mxu0 %v5174
    %6592 = vmatpush.bf16.msra.mxu0 %v5158
    %6593 = vmatpush.bf16.msra.mxu0 %v5142
    %6594 = vmatpush.bf16.msra.mxu0 %v5126
    %6595 = vmatmul.bf16.gmra.mxu0 %v1275
    %v6596 = vpop.f32.mrf.mxu0
    %v6597 = vadd.f32 %v6584, %v6596
    %v6598 = vpop.f32.mrf.mxu0
    %6599 = vdwg.mxu0
    %6600 = vmatpush.bf16.msra.mxu0 %v5366
    %6601 = vmatpush.bf16.msra.mxu0 %v5350
    %6602 = vmatpush.bf16.msra.mxu0 %v5334
    %6603 = vmatpush.bf16.msra.mxu0 %v5318
    %6604 = vmatpush.bf16.msra.mxu0 %v5302
    %6605 = vmatpush.bf16.msra.mxu0 %v5286
    %6606 = vmatpush.bf16.msra.mxu0 %v5270
    %6607 = vmatpush.bf16.msra.mxu0 %v5254
    %6608 = vmatmul.bf16.gmra.mxu0 %v1276
    %v6609 = vpop.f32.mrf.mxu0
    %v6610 = vadd.f32 %v6597, %v6609
    %v6611 = vpop.f32.mrf.mxu0
    %6612 = vdwg.mxu0
    %6613 = vmatpush.bf16.msra.mxu0 %v4471
    %6614 = vmatpush.bf16.msra.mxu0 %v4455
    %6615 = vmatpush.bf16.msra.mxu0 %v4439
    %6616 = vmatpush.bf16.msra.mxu0 %v4423
    %6617 = vmatpush.bf16.msra.mxu0 %v4407
    %6618 = vmatpush.bf16.msra.mxu0 %v4391
    %6619 = vmatpush.bf16.msra.mxu0 %v4375
    %6620 = vmatpush.bf16.msra.mxu0 %v4359
    %6621 = vmatmul.bf16.gmra.mxu0 %v1269
    %v6622 = vpop.f32.mrf.mxu0
    %v6623 = vadd.f32 %v1227, %v6622
    %v6624 = vpop.f32.mrf.mxu0
    %6625 = vdwg.mxu0
    %6626 = vmatpush.bf16.msra.mxu0 %v4599
    %6627 = vmatpush.bf16.msra.mxu0 %v4583
    %6628 = vmatpush.bf16.msra.mxu0 %v4567
    %6629 = vmatpush.bf16.msra.mxu0 %v4551
    %6630 = vmatpush.bf16.msra.mxu0 %v4535
    %6631 = vmatpush.bf16.msra.mxu0 %v4519
    %6632 = vmatpush.bf16.msra.mxu0 %v4503
    %6633 = vmatpush.bf16.msra.mxu0 %v4487
    %6634 = vmatmul.bf16.gmra.mxu0 %v1270
    %v6635 = vpop.f32.mrf.mxu0
    %v6636 = vadd.f32 %v6623, %v6635
    %v6637 = vpop.f32.mrf.mxu0
    %6638 = vdwg.mxu0
    %6639 = vmatpush.bf16.msra.mxu0 %v4727
    %6640 = vmatpush.bf16.msra.mxu0 %v4711
    %6641 = vmatpush.bf16.msra.mxu0 %v4695
    %6642 = vmatpush.bf16.msra.mxu0 %v4679
    %6643 = vmatpush.bf16.msra.mxu0 %v4663
    %6644 = vmatpush.bf16.msra.mxu0 %v4647
    %6645 = vmatpush.bf16.msra.mxu0 %v4631
    %6646 = vmatpush.bf16.msra.mxu0 %v4615
    %6647 = vmatmul.bf16.gmra.mxu0 %v1271
    %v6648 = vpop.f32.mrf.mxu0
    %v6649 = vadd.f32 %v6636, %v6648
    %v6650 = vpop.f32.mrf.mxu0
    %6651 = vdwg.mxu0
    %6652 = vmatpush.bf16.msra.mxu0 %v4855
    %6653 = vmatpush.bf16.msra.mxu0 %v4839
    %6654 = vmatpush.bf16.msra.mxu0 %v4823
    %6655 = vmatpush.bf16.msra.mxu0 %v4807
    %6656 = vmatpush.bf16.msra.mxu0 %v4791
    %6657 = vmatpush.bf16.msra.mxu0 %v4775
    %6658 = vmatpush.bf16.msra.mxu0 %v4759
    %6659 = vmatpush.bf16.msra.mxu0 %v4743
    %6660 = vmatmul.bf16.gmra.mxu0 %v1272
    %v6661 = vpop.f32.mrf.mxu0
    %v6662 = vadd.f32 %v6649, %v6661
    %v6663 = vpop.f32.mrf.mxu0
    %6664 = vdwg.mxu0
    %6665 = vmatpush.bf16.msra.mxu0 %v4983
    %6666 = vmatpush.bf16.msra.mxu0 %v4967
    %6667 = vmatpush.bf16.msra.mxu0 %v4951
    %6668 = vmatpush.bf16.msra.mxu0 %v4935
    %6669 = vmatpush.bf16.msra.mxu0 %v4919
    %6670 = vmatpush.bf16.msra.mxu0 %v4903
    %6671 = vmatpush.bf16.msra.mxu0 %v4887
    %6672 = vmatpush.bf16.msra.mxu0 %v4871
    %6673 = vmatmul.bf16.gmra.mxu0 %v1273
    %v6674 = vpop.f32.mrf.mxu0
    %v6675 = vadd.f32 %v6662, %v6674
    %v6676 = vpop.f32.mrf.mxu0
    %6677 = vdwg.mxu0
    %6678 = vmatpush.bf16.msra.mxu0 %v5111
    %6679 = vmatpush.bf16.msra.mxu0 %v5095
    %6680 = vmatpush.bf16.msra.mxu0 %v5079
    %6681 = vmatpush.bf16.msra.mxu0 %v5063
    %6682 = vmatpush.bf16.msra.mxu0 %v5047
    %6683 = vmatpush.bf16.msra.mxu0 %v5031
    %6684 = vmatpush.bf16.msra.mxu0 %v5015
    %6685 = vmatpush.bf16.msra.mxu0 %v4999
    %6686 = vmatmul.bf16.gmra.mxu0 %v1274
    %v6687 = vpop.f32.mrf.mxu0
    %v6688 = vadd.f32 %v6675, %v6687
    %v6689 = vpop.f32.mrf.mxu0
    %6690 = vdwg.mxu0
    %6691 = vmatpush.bf16.msra.mxu0 %v5239
    %6692 = vmatpush.bf16.msra.mxu0 %v5223
    %6693 = vmatpush.bf16.msra.mxu0 %v5207
    %6694 = vmatpush.bf16.msra.mxu0 %v5191
    %6695 = vmatpush.bf16.msra.mxu0 %v5175
    %6696 = vmatpush.bf16.msra.mxu0 %v5159
    %6697 = vmatpush.bf16.msra.mxu0 %v5143
    %6698 = vmatpush.bf16.msra.mxu0 %v5127
    %6699 = vmatmul.bf16.gmra.mxu0 %v1275
    %v6700 = vpop.f32.mrf.mxu0
    %v6701 = vadd.f32 %v6688, %v6700
    %v6702 = vpop.f32.mrf.mxu0
    %6703 = vdwg.mxu0
    %6704 = vmatpush.bf16.msra.mxu0 %v5367
    %6705 = vmatpush.bf16.msra.mxu0 %v5351
    %6706 = vmatpush.bf16.msra.mxu0 %v5335
    %6707 = vmatpush.bf16.msra.mxu0 %v5319
    %6708 = vmatpush.bf16.msra.mxu0 %v5303
    %6709 = vmatpush.bf16.msra.mxu0 %v5287
    %6710 = vmatpush.bf16.msra.mxu0 %v5271
    %6711 = vmatpush.bf16.msra.mxu0 %v5255
    %6712 = vmatmul.bf16.gmra.mxu0 %v1276
    %v6713 = vpop.f32.mrf.mxu0
    %v6714 = vadd.f32 %v6701, %v6713
    %v6715 = vpop.f32.mrf.mxu0
    %6716 = vdwg.mxu0
    %6717 = vmatpush.bf16.msra.mxu0 %v4472
    %6718 = vmatpush.bf16.msra.mxu0 %v4456
    %6719 = vmatpush.bf16.msra.mxu0 %v4440
    %6720 = vmatpush.bf16.msra.mxu0 %v4424
    %6721 = vmatpush.bf16.msra.mxu0 %v4408
    %6722 = vmatpush.bf16.msra.mxu0 %v4392
    %6723 = vmatpush.bf16.msra.mxu0 %v4376
    %6724 = vmatpush.bf16.msra.mxu0 %v4360
    %6725 = vmatmul.bf16.gmra.mxu0 %v1269
    %v6726 = vpop.f32.mrf.mxu0
    %v6727 = vadd.f32 %v1228, %v6726
    %v6728 = vpop.f32.mrf.mxu0
    %6729 = vdwg.mxu0
    %6730 = vmatpush.bf16.msra.mxu0 %v4600
    %6731 = vmatpush.bf16.msra.mxu0 %v4584
    %6732 = vmatpush.bf16.msra.mxu0 %v4568
    %6733 = vmatpush.bf16.msra.mxu0 %v4552
    %6734 = vmatpush.bf16.msra.mxu0 %v4536
    %6735 = vmatpush.bf16.msra.mxu0 %v4520
    %6736 = vmatpush.bf16.msra.mxu0 %v4504
    %6737 = vmatpush.bf16.msra.mxu0 %v4488
    %6738 = vmatmul.bf16.gmra.mxu0 %v1270
    %v6739 = vpop.f32.mrf.mxu0
    %v6740 = vadd.f32 %v6727, %v6739
    %v6741 = vpop.f32.mrf.mxu0
    %6742 = vdwg.mxu0
    %6743 = vmatpush.bf16.msra.mxu0 %v4728
    %6744 = vmatpush.bf16.msra.mxu0 %v4712
    %6745 = vmatpush.bf16.msra.mxu0 %v4696
    %6746 = vmatpush.bf16.msra.mxu0 %v4680
    %6747 = vmatpush.bf16.msra.mxu0 %v4664
    %6748 = vmatpush.bf16.msra.mxu0 %v4648
    %6749 = vmatpush.bf16.msra.mxu0 %v4632
    %6750 = vmatpush.bf16.msra.mxu0 %v4616
    %6751 = vmatmul.bf16.gmra.mxu0 %v1271
    %v6752 = vpop.f32.mrf.mxu0
    %v6753 = vadd.f32 %v6740, %v6752
    %v6754 = vpop.f32.mrf.mxu0
    %6755 = vdwg.mxu0
    %6756 = vmatpush.bf16.msra.mxu0 %v4856
    %6757 = vmatpush.bf16.msra.mxu0 %v4840
    %6758 = vmatpush.bf16.msra.mxu0 %v4824
    %6759 = vmatpush.bf16.msra.mxu0 %v4808
    %6760 = vmatpush.bf16.msra.mxu0 %v4792
    %6761 = vmatpush.bf16.msra.mxu0 %v4776
    %6762 = vmatpush.bf16.msra.mxu0 %v4760
    %6763 = vmatpush.bf16.msra.mxu0 %v4744
    %6764 = vmatmul.bf16.gmra.mxu0 %v1272
    %v6765 = vpop.f32.mrf.mxu0
    %v6766 = vadd.f32 %v6753, %v6765
    %v6767 = vpop.f32.mrf.mxu0
    %6768 = vdwg.mxu0
    %6769 = vmatpush.bf16.msra.mxu0 %v4984
    %6770 = vmatpush.bf16.msra.mxu0 %v4968
    %6771 = vmatpush.bf16.msra.mxu0 %v4952
    %6772 = vmatpush.bf16.msra.mxu0 %v4936
    %6773 = vmatpush.bf16.msra.mxu0 %v4920
    %6774 = vmatpush.bf16.msra.mxu0 %v4904
    %6775 = vmatpush.bf16.msra.mxu0 %v4888
    %6776 = vmatpush.bf16.msra.mxu0 %v4872
    %6777 = vmatmul.bf16.gmra.mxu0 %v1273
    %v6778 = vpop.f32.mrf.mxu0
    %v6779 = vadd.f32 %v6766, %v6778
    %v6780 = vpop.f32.mrf.mxu0
    %6781 = vdwg.mxu0
    %6782 = vmatpush.bf16.msra.mxu0 %v5112
    %6783 = vmatpush.bf16.msra.mxu0 %v5096
    %6784 = vmatpush.bf16.msra.mxu0 %v5080
    %6785 = vmatpush.bf16.msra.mxu0 %v5064
    %6786 = vmatpush.bf16.msra.mxu0 %v5048
    %6787 = vmatpush.bf16.msra.mxu0 %v5032
    %6788 = vmatpush.bf16.msra.mxu0 %v5016
    %6789 = vmatpush.bf16.msra.mxu0 %v5000
    %6790 = vmatmul.bf16.gmra.mxu0 %v1274
    %v6791 = vpop.f32.mrf.mxu0
    %v6792 = vadd.f32 %v6779, %v6791
    %v6793 = vpop.f32.mrf.mxu0
    %6794 = vdwg.mxu0
    %6795 = vmatpush.bf16.msra.mxu0 %v5240
    %6796 = vmatpush.bf16.msra.mxu0 %v5224
    %6797 = vmatpush.bf16.msra.mxu0 %v5208
    %6798 = vmatpush.bf16.msra.mxu0 %v5192
    %6799 = vmatpush.bf16.msra.mxu0 %v5176
    %6800 = vmatpush.bf16.msra.mxu0 %v5160
    %6801 = vmatpush.bf16.msra.mxu0 %v5144
    %6802 = vmatpush.bf16.msra.mxu0 %v5128
    %6803 = vmatmul.bf16.gmra.mxu0 %v1275
    %v6804 = vpop.f32.mrf.mxu0
    %v6805 = vadd.f32 %v6792, %v6804
    %v6806 = vpop.f32.mrf.mxu0
    %6807 = vdwg.mxu0
    %6808 = vmatpush.bf16.msra.mxu0 %v5368
    %6809 = vmatpush.bf16.msra.mxu0 %v5352
    %6810 = vmatpush.bf16.msra.mxu0 %v5336
    %6811 = vmatpush.bf16.msra.mxu0 %v5320
    %6812 = vmatpush.bf16.msra.mxu0 %v5304
    %6813 = vmatpush.bf16.msra.mxu0 %v5288
    %6814 = vmatpush.bf16.msra.mxu0 %v5272
    %6815 = vmatpush.bf16.msra.mxu0 %v5256
    %6816 = vmatmul.bf16.gmra.mxu0 %v1276
    %v6817 = vpop.f32.mrf.mxu0
    %v6818 = vadd.f32 %v6805, %v6817
    %v6819 = vpop.f32.mrf.mxu0
    %6820 = vdwg.mxu0
    %6821 = vmatpush.bf16.msra.mxu0 %v4473
    %6822 = vmatpush.bf16.msra.mxu0 %v4457
    %6823 = vmatpush.bf16.msra.mxu0 %v4441
    %6824 = vmatpush.bf16.msra.mxu0 %v4425
    %6825 = vmatpush.bf16.msra.mxu0 %v4409
    %6826 = vmatpush.bf16.msra.mxu0 %v4393
    %6827 = vmatpush.bf16.msra.mxu0 %v4377
    %6828 = vmatpush.bf16.msra.mxu0 %v4361
    %6829 = vmatmul.bf16.gmra.mxu0 %v1269
    %v6830 = vpop.f32.mrf.mxu0
    %v6831 = vadd.f32 %v1229, %v6830
    %v6832 = vpop.f32.mrf.mxu0
    %6833 = vdwg.mxu0
    %6834 = vmatpush.bf16.msra.mxu0 %v4601
    %6835 = vmatpush.bf16.msra.mxu0 %v4585
    %6836 = vmatpush.bf16.msra.mxu0 %v4569
    %6837 = vmatpush.bf16.msra.mxu0 %v4553
    %6838 = vmatpush.bf16.msra.mxu0 %v4537
    %6839 = vmatpush.bf16.msra.mxu0 %v4521
    %6840 = vmatpush.bf16.msra.mxu0 %v4505
    %6841 = vmatpush.bf16.msra.mxu0 %v4489
    %6842 = vmatmul.bf16.gmra.mxu0 %v1270
    %v6843 = vpop.f32.mrf.mxu0
    %v6844 = vadd.f32 %v6831, %v6843
    %v6845 = vpop.f32.mrf.mxu0
    %6846 = vdwg.mxu0
    %6847 = vmatpush.bf16.msra.mxu0 %v4729
    %6848 = vmatpush.bf16.msra.mxu0 %v4713
    %6849 = vmatpush.bf16.msra.mxu0 %v4697
    %6850 = vmatpush.bf16.msra.mxu0 %v4681
    %6851 = vmatpush.bf16.msra.mxu0 %v4665
    %6852 = vmatpush.bf16.msra.mxu0 %v4649
    %6853 = vmatpush.bf16.msra.mxu0 %v4633
    %6854 = vmatpush.bf16.msra.mxu0 %v4617
    %6855 = vmatmul.bf16.gmra.mxu0 %v1271
    %v6856 = vpop.f32.mrf.mxu0
    %v6857 = vadd.f32 %v6844, %v6856
    %v6858 = vpop.f32.mrf.mxu0
    %6859 = vdwg.mxu0
    %6860 = vmatpush.bf16.msra.mxu0 %v4857
    %6861 = vmatpush.bf16.msra.mxu0 %v4841
    %6862 = vmatpush.bf16.msra.mxu0 %v4825
    %6863 = vmatpush.bf16.msra.mxu0 %v4809
    %6864 = vmatpush.bf16.msra.mxu0 %v4793
    %6865 = vmatpush.bf16.msra.mxu0 %v4777
    %6866 = vmatpush.bf16.msra.mxu0 %v4761
    %6867 = vmatpush.bf16.msra.mxu0 %v4745
    %6868 = vmatmul.bf16.gmra.mxu0 %v1272
    %v6869 = vpop.f32.mrf.mxu0
    %v6870 = vadd.f32 %v6857, %v6869
    %v6871 = vpop.f32.mrf.mxu0
    %6872 = vdwg.mxu0
    %6873 = vmatpush.bf16.msra.mxu0 %v4985
    %6874 = vmatpush.bf16.msra.mxu0 %v4969
    %6875 = vmatpush.bf16.msra.mxu0 %v4953
    %6876 = vmatpush.bf16.msra.mxu0 %v4937
    %6877 = vmatpush.bf16.msra.mxu0 %v4921
    %6878 = vmatpush.bf16.msra.mxu0 %v4905
    %6879 = vmatpush.bf16.msra.mxu0 %v4889
    %6880 = vmatpush.bf16.msra.mxu0 %v4873
    %6881 = vmatmul.bf16.gmra.mxu0 %v1273
    %v6882 = vpop.f32.mrf.mxu0
    %v6883 = vadd.f32 %v6870, %v6882
    %v6884 = vpop.f32.mrf.mxu0
    %6885 = vdwg.mxu0
    %6886 = vmatpush.bf16.msra.mxu0 %v5113
    %6887 = vmatpush.bf16.msra.mxu0 %v5097
    %6888 = vmatpush.bf16.msra.mxu0 %v5081
    %6889 = vmatpush.bf16.msra.mxu0 %v5065
    %6890 = vmatpush.bf16.msra.mxu0 %v5049
    %6891 = vmatpush.bf16.msra.mxu0 %v5033
    %6892 = vmatpush.bf16.msra.mxu0 %v5017
    %6893 = vmatpush.bf16.msra.mxu0 %v5001
    %6894 = vmatmul.bf16.gmra.mxu0 %v1274
    %v6895 = vpop.f32.mrf.mxu0
    %v6896 = vadd.f32 %v6883, %v6895
    %v6897 = vpop.f32.mrf.mxu0
    %6898 = vdwg.mxu0
    %6899 = vmatpush.bf16.msra.mxu0 %v5241
    %6900 = vmatpush.bf16.msra.mxu0 %v5225
    %6901 = vmatpush.bf16.msra.mxu0 %v5209
    %6902 = vmatpush.bf16.msra.mxu0 %v5193
    %6903 = vmatpush.bf16.msra.mxu0 %v5177
    %6904 = vmatpush.bf16.msra.mxu0 %v5161
    %6905 = vmatpush.bf16.msra.mxu0 %v5145
    %6906 = vmatpush.bf16.msra.mxu0 %v5129
    %6907 = vmatmul.bf16.gmra.mxu0 %v1275
    %v6908 = vpop.f32.mrf.mxu0
    %v6909 = vadd.f32 %v6896, %v6908
    %v6910 = vpop.f32.mrf.mxu0
    %6911 = vdwg.mxu0
    %6912 = vmatpush.bf16.msra.mxu0 %v5369
    %6913 = vmatpush.bf16.msra.mxu0 %v5353
    %6914 = vmatpush.bf16.msra.mxu0 %v5337
    %6915 = vmatpush.bf16.msra.mxu0 %v5321
    %6916 = vmatpush.bf16.msra.mxu0 %v5305
    %6917 = vmatpush.bf16.msra.mxu0 %v5289
    %6918 = vmatpush.bf16.msra.mxu0 %v5273
    %6919 = vmatpush.bf16.msra.mxu0 %v5257
    %6920 = vmatmul.bf16.gmra.mxu0 %v1276
    %v6921 = vpop.f32.mrf.mxu0
    %v6922 = vadd.f32 %v6909, %v6921
    %v6923 = vpop.f32.mrf.mxu0
    %6924 = vdwg.mxu0
    %6925 = vmatpush.bf16.msra.mxu0 %v4474
    %6926 = vmatpush.bf16.msra.mxu0 %v4458
    %6927 = vmatpush.bf16.msra.mxu0 %v4442
    %6928 = vmatpush.bf16.msra.mxu0 %v4426
    %6929 = vmatpush.bf16.msra.mxu0 %v4410
    %6930 = vmatpush.bf16.msra.mxu0 %v4394
    %6931 = vmatpush.bf16.msra.mxu0 %v4378
    %6932 = vmatpush.bf16.msra.mxu0 %v4362
    %6933 = vmatmul.bf16.gmra.mxu0 %v1269
    %v6934 = vpop.f32.mrf.mxu0
    %v6935 = vadd.f32 %v1230, %v6934
    %v6936 = vpop.f32.mrf.mxu0
    %6937 = vdwg.mxu0
    %6938 = vmatpush.bf16.msra.mxu0 %v4602
    %6939 = vmatpush.bf16.msra.mxu0 %v4586
    %6940 = vmatpush.bf16.msra.mxu0 %v4570
    %6941 = vmatpush.bf16.msra.mxu0 %v4554
    %6942 = vmatpush.bf16.msra.mxu0 %v4538
    %6943 = vmatpush.bf16.msra.mxu0 %v4522
    %6944 = vmatpush.bf16.msra.mxu0 %v4506
    %6945 = vmatpush.bf16.msra.mxu0 %v4490
    %6946 = vmatmul.bf16.gmra.mxu0 %v1270
    %v6947 = vpop.f32.mrf.mxu0
    %v6948 = vadd.f32 %v6935, %v6947
    %v6949 = vpop.f32.mrf.mxu0
    %6950 = vdwg.mxu0
    %6951 = vmatpush.bf16.msra.mxu0 %v4730
    %6952 = vmatpush.bf16.msra.mxu0 %v4714
    %6953 = vmatpush.bf16.msra.mxu0 %v4698
    %6954 = vmatpush.bf16.msra.mxu0 %v4682
    %6955 = vmatpush.bf16.msra.mxu0 %v4666
    %6956 = vmatpush.bf16.msra.mxu0 %v4650
    %6957 = vmatpush.bf16.msra.mxu0 %v4634
    %6958 = vmatpush.bf16.msra.mxu0 %v4618
    %6959 = vmatmul.bf16.gmra.mxu0 %v1271
    %v6960 = vpop.f32.mrf.mxu0
    %v6961 = vadd.f32 %v6948, %v6960
    %v6962 = vpop.f32.mrf.mxu0
    %6963 = vdwg.mxu0
    %6964 = vmatpush.bf16.msra.mxu0 %v4858
    %6965 = vmatpush.bf16.msra.mxu0 %v4842
    %6966 = vmatpush.bf16.msra.mxu0 %v4826
    %6967 = vmatpush.bf16.msra.mxu0 %v4810
    %6968 = vmatpush.bf16.msra.mxu0 %v4794
    %6969 = vmatpush.bf16.msra.mxu0 %v4778
    %6970 = vmatpush.bf16.msra.mxu0 %v4762
    %6971 = vmatpush.bf16.msra.mxu0 %v4746
    %6972 = vmatmul.bf16.gmra.mxu0 %v1272
    %v6973 = vpop.f32.mrf.mxu0
    %v6974 = vadd.f32 %v6961, %v6973
    %v6975 = vpop.f32.mrf.mxu0
    %6976 = vdwg.mxu0
    %6977 = vmatpush.bf16.msra.mxu0 %v4986
    %6978 = vmatpush.bf16.msra.mxu0 %v4970
    %6979 = vmatpush.bf16.msra.mxu0 %v4954
    %6980 = vmatpush.bf16.msra.mxu0 %v4938
    %6981 = vmatpush.bf16.msra.mxu0 %v4922
    %6982 = vmatpush.bf16.msra.mxu0 %v4906
    %6983 = vmatpush.bf16.msra.mxu0 %v4890
    %6984 = vmatpush.bf16.msra.mxu0 %v4874
    %6985 = vmatmul.bf16.gmra.mxu0 %v1273
    %v6986 = vpop.f32.mrf.mxu0
    %v6987 = vadd.f32 %v6974, %v6986
    %v6988 = vpop.f32.mrf.mxu0
    %6989 = vdwg.mxu0
    %6990 = vmatpush.bf16.msra.mxu0 %v5114
    %6991 = vmatpush.bf16.msra.mxu0 %v5098
    %6992 = vmatpush.bf16.msra.mxu0 %v5082
    %6993 = vmatpush.bf16.msra.mxu0 %v5066
    %6994 = vmatpush.bf16.msra.mxu0 %v5050
    %6995 = vmatpush.bf16.msra.mxu0 %v5034
    %6996 = vmatpush.bf16.msra.mxu0 %v5018
    %6997 = vmatpush.bf16.msra.mxu0 %v5002
    %6998 = vmatmul.bf16.gmra.mxu0 %v1274
    %v6999 = vpop.f32.mrf.mxu0
    %v7000 = vadd.f32 %v6987, %v6999
    %v7001 = vpop.f32.mrf.mxu0
    %7002 = vdwg.mxu0
    %7003 = vmatpush.bf16.msra.mxu0 %v5242
    %7004 = vmatpush.bf16.msra.mxu0 %v5226
    %7005 = vmatpush.bf16.msra.mxu0 %v5210
    %7006 = vmatpush.bf16.msra.mxu0 %v5194
    %7007 = vmatpush.bf16.msra.mxu0 %v5178
    %7008 = vmatpush.bf16.msra.mxu0 %v5162
    %7009 = vmatpush.bf16.msra.mxu0 %v5146
    %7010 = vmatpush.bf16.msra.mxu0 %v5130
    %7011 = vmatmul.bf16.gmra.mxu0 %v1275
    %v7012 = vpop.f32.mrf.mxu0
    %v7013 = vadd.f32 %v7000, %v7012
    %v7014 = vpop.f32.mrf.mxu0
    %7015 = vdwg.mxu0
    %7016 = vmatpush.bf16.msra.mxu0 %v5370
    %7017 = vmatpush.bf16.msra.mxu0 %v5354
    %7018 = vmatpush.bf16.msra.mxu0 %v5338
    %7019 = vmatpush.bf16.msra.mxu0 %v5322
    %7020 = vmatpush.bf16.msra.mxu0 %v5306
    %7021 = vmatpush.bf16.msra.mxu0 %v5290
    %7022 = vmatpush.bf16.msra.mxu0 %v5274
    %7023 = vmatpush.bf16.msra.mxu0 %v5258
    %7024 = vmatmul.bf16.gmra.mxu0 %v1276
    %v7025 = vpop.f32.mrf.mxu0
    %v7026 = vadd.f32 %v7013, %v7025
    %v7027 = vpop.f32.mrf.mxu0
    %7028 = vdwg.mxu0
    %7029 = vmatpush.bf16.msra.mxu0 %v4475
    %7030 = vmatpush.bf16.msra.mxu0 %v4459
    %7031 = vmatpush.bf16.msra.mxu0 %v4443
    %7032 = vmatpush.bf16.msra.mxu0 %v4427
    %7033 = vmatpush.bf16.msra.mxu0 %v4411
    %7034 = vmatpush.bf16.msra.mxu0 %v4395
    %7035 = vmatpush.bf16.msra.mxu0 %v4379
    %7036 = vmatpush.bf16.msra.mxu0 %v4363
    %7037 = vmatmul.bf16.gmra.mxu0 %v1269
    %v7038 = vpop.f32.mrf.mxu0
    %v7039 = vadd.f32 %v1231, %v7038
    %v7040 = vpop.f32.mrf.mxu0
    %7041 = vdwg.mxu0
    %7042 = vmatpush.bf16.msra.mxu0 %v4603
    %7043 = vmatpush.bf16.msra.mxu0 %v4587
    %7044 = vmatpush.bf16.msra.mxu0 %v4571
    %7045 = vmatpush.bf16.msra.mxu0 %v4555
    %7046 = vmatpush.bf16.msra.mxu0 %v4539
    %7047 = vmatpush.bf16.msra.mxu0 %v4523
    %7048 = vmatpush.bf16.msra.mxu0 %v4507
    %7049 = vmatpush.bf16.msra.mxu0 %v4491
    %7050 = vmatmul.bf16.gmra.mxu0 %v1270
    %v7051 = vpop.f32.mrf.mxu0
    %v7052 = vadd.f32 %v7039, %v7051
    %v7053 = vpop.f32.mrf.mxu0
    %7054 = vdwg.mxu0
    %7055 = vmatpush.bf16.msra.mxu0 %v4731
    %7056 = vmatpush.bf16.msra.mxu0 %v4715
    %7057 = vmatpush.bf16.msra.mxu0 %v4699
    %7058 = vmatpush.bf16.msra.mxu0 %v4683
    %7059 = vmatpush.bf16.msra.mxu0 %v4667
    %7060 = vmatpush.bf16.msra.mxu0 %v4651
    %7061 = vmatpush.bf16.msra.mxu0 %v4635
    %7062 = vmatpush.bf16.msra.mxu0 %v4619
    %7063 = vmatmul.bf16.gmra.mxu0 %v1271
    %v7064 = vpop.f32.mrf.mxu0
    %v7065 = vadd.f32 %v7052, %v7064
    %v7066 = vpop.f32.mrf.mxu0
    %7067 = vdwg.mxu0
    %7068 = vmatpush.bf16.msra.mxu0 %v4859
    %7069 = vmatpush.bf16.msra.mxu0 %v4843
    %7070 = vmatpush.bf16.msra.mxu0 %v4827
    %7071 = vmatpush.bf16.msra.mxu0 %v4811
    %7072 = vmatpush.bf16.msra.mxu0 %v4795
    %7073 = vmatpush.bf16.msra.mxu0 %v4779
    %7074 = vmatpush.bf16.msra.mxu0 %v4763
    %7075 = vmatpush.bf16.msra.mxu0 %v4747
    %7076 = vmatmul.bf16.gmra.mxu0 %v1272
    %v7077 = vpop.f32.mrf.mxu0
    %v7078 = vadd.f32 %v7065, %v7077
    %v7079 = vpop.f32.mrf.mxu0
    %7080 = vdwg.mxu0
    %7081 = vmatpush.bf16.msra.mxu0 %v4987
    %7082 = vmatpush.bf16.msra.mxu0 %v4971
    %7083 = vmatpush.bf16.msra.mxu0 %v4955
    %7084 = vmatpush.bf16.msra.mxu0 %v4939
    %7085 = vmatpush.bf16.msra.mxu0 %v4923
    %7086 = vmatpush.bf16.msra.mxu0 %v4907
    %7087 = vmatpush.bf16.msra.mxu0 %v4891
    %7088 = vmatpush.bf16.msra.mxu0 %v4875
    %7089 = vmatmul.bf16.gmra.mxu0 %v1273
    %v7090 = vpop.f32.mrf.mxu0
    %v7091 = vadd.f32 %v7078, %v7090
    %v7092 = vpop.f32.mrf.mxu0
    %7093 = vdwg.mxu0
    %7094 = vmatpush.bf16.msra.mxu0 %v5115
    %7095 = vmatpush.bf16.msra.mxu0 %v5099
    %7096 = vmatpush.bf16.msra.mxu0 %v5083
    %7097 = vmatpush.bf16.msra.mxu0 %v5067
    %7098 = vmatpush.bf16.msra.mxu0 %v5051
    %7099 = vmatpush.bf16.msra.mxu0 %v5035
    %7100 = vmatpush.bf16.msra.mxu0 %v5019
    %7101 = vmatpush.bf16.msra.mxu0 %v5003
    %7102 = vmatmul.bf16.gmra.mxu0 %v1274
    %v7103 = vpop.f32.mrf.mxu0
    %v7104 = vadd.f32 %v7091, %v7103
    %v7105 = vpop.f32.mrf.mxu0
    %7106 = vdwg.mxu0
    %7107 = vmatpush.bf16.msra.mxu0 %v5243
    %7108 = vmatpush.bf16.msra.mxu0 %v5227
    %7109 = vmatpush.bf16.msra.mxu0 %v5211
    %7110 = vmatpush.bf16.msra.mxu0 %v5195
    %7111 = vmatpush.bf16.msra.mxu0 %v5179
    %7112 = vmatpush.bf16.msra.mxu0 %v5163
    %7113 = vmatpush.bf16.msra.mxu0 %v5147
    %7114 = vmatpush.bf16.msra.mxu0 %v5131
    %7115 = vmatmul.bf16.gmra.mxu0 %v1275
    %v7116 = vpop.f32.mrf.mxu0
    %v7117 = vadd.f32 %v7104, %v7116
    %v7118 = vpop.f32.mrf.mxu0
    %7119 = vdwg.mxu0
    %7120 = vmatpush.bf16.msra.mxu0 %v5371
    %7121 = vmatpush.bf16.msra.mxu0 %v5355
    %7122 = vmatpush.bf16.msra.mxu0 %v5339
    %7123 = vmatpush.bf16.msra.mxu0 %v5323
    %7124 = vmatpush.bf16.msra.mxu0 %v5307
    %7125 = vmatpush.bf16.msra.mxu0 %v5291
    %7126 = vmatpush.bf16.msra.mxu0 %v5275
    %7127 = vmatpush.bf16.msra.mxu0 %v5259
    %7128 = vmatmul.bf16.gmra.mxu0 %v1276
    %v7129 = vpop.f32.mrf.mxu0
    %v7130 = vadd.f32 %v7117, %v7129
    %v7131 = vpop.f32.mrf.mxu0
    %7132 = vdwg.mxu0
    %7133 = vmatpush.bf16.msra.mxu0 %v4476
    %7134 = vmatpush.bf16.msra.mxu0 %v4460
    %7135 = vmatpush.bf16.msra.mxu0 %v4444
    %7136 = vmatpush.bf16.msra.mxu0 %v4428
    %7137 = vmatpush.bf16.msra.mxu0 %v4412
    %7138 = vmatpush.bf16.msra.mxu0 %v4396
    %7139 = vmatpush.bf16.msra.mxu0 %v4380
    %7140 = vmatpush.bf16.msra.mxu0 %v4364
    %7141 = vmatmul.bf16.gmra.mxu0 %v1269
    %v7142 = vpop.f32.mrf.mxu0
    %v7143 = vadd.f32 %v1232, %v7142
    %v7144 = vpop.f32.mrf.mxu0
    %7145 = vdwg.mxu0
    %7146 = vmatpush.bf16.msra.mxu0 %v4604
    %7147 = vmatpush.bf16.msra.mxu0 %v4588
    %7148 = vmatpush.bf16.msra.mxu0 %v4572
    %7149 = vmatpush.bf16.msra.mxu0 %v4556
    %7150 = vmatpush.bf16.msra.mxu0 %v4540
    %7151 = vmatpush.bf16.msra.mxu0 %v4524
    %7152 = vmatpush.bf16.msra.mxu0 %v4508
    %7153 = vmatpush.bf16.msra.mxu0 %v4492
    %7154 = vmatmul.bf16.gmra.mxu0 %v1270
    %v7155 = vpop.f32.mrf.mxu0
    %v7156 = vadd.f32 %v7143, %v7155
    %v7157 = vpop.f32.mrf.mxu0
    %7158 = vdwg.mxu0
    %7159 = vmatpush.bf16.msra.mxu0 %v4732
    %7160 = vmatpush.bf16.msra.mxu0 %v4716
    %7161 = vmatpush.bf16.msra.mxu0 %v4700
    %7162 = vmatpush.bf16.msra.mxu0 %v4684
    %7163 = vmatpush.bf16.msra.mxu0 %v4668
    %7164 = vmatpush.bf16.msra.mxu0 %v4652
    %7165 = vmatpush.bf16.msra.mxu0 %v4636
    %7166 = vmatpush.bf16.msra.mxu0 %v4620
    %7167 = vmatmul.bf16.gmra.mxu0 %v1271
    %v7168 = vpop.f32.mrf.mxu0
    %v7169 = vadd.f32 %v7156, %v7168
    %v7170 = vpop.f32.mrf.mxu0
    %7171 = vdwg.mxu0
    %7172 = vmatpush.bf16.msra.mxu0 %v4860
    %7173 = vmatpush.bf16.msra.mxu0 %v4844
    %7174 = vmatpush.bf16.msra.mxu0 %v4828
    %7175 = vmatpush.bf16.msra.mxu0 %v4812
    %7176 = vmatpush.bf16.msra.mxu0 %v4796
    %7177 = vmatpush.bf16.msra.mxu0 %v4780
    %7178 = vmatpush.bf16.msra.mxu0 %v4764
    %7179 = vmatpush.bf16.msra.mxu0 %v4748
    %7180 = vmatmul.bf16.gmra.mxu0 %v1272
    %v7181 = vpop.f32.mrf.mxu0
    %v7182 = vadd.f32 %v7169, %v7181
    %v7183 = vpop.f32.mrf.mxu0
    %7184 = vdwg.mxu0
    %7185 = vmatpush.bf16.msra.mxu0 %v4988
    %7186 = vmatpush.bf16.msra.mxu0 %v4972
    %7187 = vmatpush.bf16.msra.mxu0 %v4956
    %7188 = vmatpush.bf16.msra.mxu0 %v4940
    %7189 = vmatpush.bf16.msra.mxu0 %v4924
    %7190 = vmatpush.bf16.msra.mxu0 %v4908
    %7191 = vmatpush.bf16.msra.mxu0 %v4892
    %7192 = vmatpush.bf16.msra.mxu0 %v4876
    %7193 = vmatmul.bf16.gmra.mxu0 %v1273
    %v7194 = vpop.f32.mrf.mxu0
    %v7195 = vadd.f32 %v7182, %v7194
    %v7196 = vpop.f32.mrf.mxu0
    %7197 = vdwg.mxu0
    %7198 = vmatpush.bf16.msra.mxu0 %v5116
    %7199 = vmatpush.bf16.msra.mxu0 %v5100
    %7200 = vmatpush.bf16.msra.mxu0 %v5084
    %7201 = vmatpush.bf16.msra.mxu0 %v5068
    %7202 = vmatpush.bf16.msra.mxu0 %v5052
    %7203 = vmatpush.bf16.msra.mxu0 %v5036
    %7204 = vmatpush.bf16.msra.mxu0 %v5020
    %7205 = vmatpush.bf16.msra.mxu0 %v5004
    %7206 = vmatmul.bf16.gmra.mxu0 %v1274
    %v7207 = vpop.f32.mrf.mxu0
    %v7208 = vadd.f32 %v7195, %v7207
    %v7209 = vpop.f32.mrf.mxu0
    %7210 = vdwg.mxu0
    %7211 = vmatpush.bf16.msra.mxu0 %v5244
    %7212 = vmatpush.bf16.msra.mxu0 %v5228
    %7213 = vmatpush.bf16.msra.mxu0 %v5212
    %7214 = vmatpush.bf16.msra.mxu0 %v5196
    %7215 = vmatpush.bf16.msra.mxu0 %v5180
    %7216 = vmatpush.bf16.msra.mxu0 %v5164
    %7217 = vmatpush.bf16.msra.mxu0 %v5148
    %7218 = vmatpush.bf16.msra.mxu0 %v5132
    %7219 = vmatmul.bf16.gmra.mxu0 %v1275
    %v7220 = vpop.f32.mrf.mxu0
    %v7221 = vadd.f32 %v7208, %v7220
    %v7222 = vpop.f32.mrf.mxu0
    %7223 = vdwg.mxu0
    %7224 = vmatpush.bf16.msra.mxu0 %v5372
    %7225 = vmatpush.bf16.msra.mxu0 %v5356
    %7226 = vmatpush.bf16.msra.mxu0 %v5340
    %7227 = vmatpush.bf16.msra.mxu0 %v5324
    %7228 = vmatpush.bf16.msra.mxu0 %v5308
    %7229 = vmatpush.bf16.msra.mxu0 %v5292
    %7230 = vmatpush.bf16.msra.mxu0 %v5276
    %7231 = vmatpush.bf16.msra.mxu0 %v5260
    %7232 = vmatmul.bf16.gmra.mxu0 %v1276
    %v7233 = vpop.f32.mrf.mxu0
    %v7234 = vadd.f32 %v7221, %v7233
    %v7235 = vpop.f32.mrf.mxu0
    %7236 = vdwg.mxu0
    %7237 = vmatpush.bf16.msra.mxu0 %v4477
    %7238 = vmatpush.bf16.msra.mxu0 %v4461
    %7239 = vmatpush.bf16.msra.mxu0 %v4445
    %7240 = vmatpush.bf16.msra.mxu0 %v4429
    %7241 = vmatpush.bf16.msra.mxu0 %v4413
    %7242 = vmatpush.bf16.msra.mxu0 %v4397
    %7243 = vmatpush.bf16.msra.mxu0 %v4381
    %7244 = vmatpush.bf16.msra.mxu0 %v4365
    %7245 = vmatmul.bf16.gmra.mxu0 %v1269
    %v7246 = vpop.f32.mrf.mxu0
    %v7247 = vadd.f32 %v1233, %v7246
    %v7248 = vpop.f32.mrf.mxu0
    %7249 = vdwg.mxu0
    %7250 = vmatpush.bf16.msra.mxu0 %v4605
    %7251 = vmatpush.bf16.msra.mxu0 %v4589
    %7252 = vmatpush.bf16.msra.mxu0 %v4573
    %7253 = vmatpush.bf16.msra.mxu0 %v4557
    %7254 = vmatpush.bf16.msra.mxu0 %v4541
    %7255 = vmatpush.bf16.msra.mxu0 %v4525
    %7256 = vmatpush.bf16.msra.mxu0 %v4509
    %7257 = vmatpush.bf16.msra.mxu0 %v4493
    %7258 = vmatmul.bf16.gmra.mxu0 %v1270
    %v7259 = vpop.f32.mrf.mxu0
    %v7260 = vadd.f32 %v7247, %v7259
    %v7261 = vpop.f32.mrf.mxu0
    %7262 = vdwg.mxu0
    %7263 = vmatpush.bf16.msra.mxu0 %v4733
    %7264 = vmatpush.bf16.msra.mxu0 %v4717
    %7265 = vmatpush.bf16.msra.mxu0 %v4701
    %7266 = vmatpush.bf16.msra.mxu0 %v4685
    %7267 = vmatpush.bf16.msra.mxu0 %v4669
    %7268 = vmatpush.bf16.msra.mxu0 %v4653
    %7269 = vmatpush.bf16.msra.mxu0 %v4637
    %7270 = vmatpush.bf16.msra.mxu0 %v4621
    %7271 = vmatmul.bf16.gmra.mxu0 %v1271
    %v7272 = vpop.f32.mrf.mxu0
    %v7273 = vadd.f32 %v7260, %v7272
    %v7274 = vpop.f32.mrf.mxu0
    %7275 = vdwg.mxu0
    %7276 = vmatpush.bf16.msra.mxu0 %v4861
    %7277 = vmatpush.bf16.msra.mxu0 %v4845
    %7278 = vmatpush.bf16.msra.mxu0 %v4829
    %7279 = vmatpush.bf16.msra.mxu0 %v4813
    %7280 = vmatpush.bf16.msra.mxu0 %v4797
    %7281 = vmatpush.bf16.msra.mxu0 %v4781
    %7282 = vmatpush.bf16.msra.mxu0 %v4765
    %7283 = vmatpush.bf16.msra.mxu0 %v4749
    %7284 = vmatmul.bf16.gmra.mxu0 %v1272
    %v7285 = vpop.f32.mrf.mxu0
    %v7286 = vadd.f32 %v7273, %v7285
    %v7287 = vpop.f32.mrf.mxu0
    %7288 = vdwg.mxu0
    %7289 = vmatpush.bf16.msra.mxu0 %v4989
    %7290 = vmatpush.bf16.msra.mxu0 %v4973
    %7291 = vmatpush.bf16.msra.mxu0 %v4957
    %7292 = vmatpush.bf16.msra.mxu0 %v4941
    %7293 = vmatpush.bf16.msra.mxu0 %v4925
    %7294 = vmatpush.bf16.msra.mxu0 %v4909
    %7295 = vmatpush.bf16.msra.mxu0 %v4893
    %7296 = vmatpush.bf16.msra.mxu0 %v4877
    %7297 = vmatmul.bf16.gmra.mxu0 %v1273
    %v7298 = vpop.f32.mrf.mxu0
    %v7299 = vadd.f32 %v7286, %v7298
    %v7300 = vpop.f32.mrf.mxu0
    %7301 = vdwg.mxu0
    %7302 = vmatpush.bf16.msra.mxu0 %v5117
    %7303 = vmatpush.bf16.msra.mxu0 %v5101
    %7304 = vmatpush.bf16.msra.mxu0 %v5085
    %7305 = vmatpush.bf16.msra.mxu0 %v5069
    %7306 = vmatpush.bf16.msra.mxu0 %v5053
    %7307 = vmatpush.bf16.msra.mxu0 %v5037
    %7308 = vmatpush.bf16.msra.mxu0 %v5021
    %7309 = vmatpush.bf16.msra.mxu0 %v5005
    %7310 = vmatmul.bf16.gmra.mxu0 %v1274
    %v7311 = vpop.f32.mrf.mxu0
    %v7312 = vadd.f32 %v7299, %v7311
    %v7313 = vpop.f32.mrf.mxu0
    %7314 = vdwg.mxu0
    %7315 = vmatpush.bf16.msra.mxu0 %v5245
    %7316 = vmatpush.bf16.msra.mxu0 %v5229
    %7317 = vmatpush.bf16.msra.mxu0 %v5213
    %7318 = vmatpush.bf16.msra.mxu0 %v5197
    %7319 = vmatpush.bf16.msra.mxu0 %v5181
    %7320 = vmatpush.bf16.msra.mxu0 %v5165
    %7321 = vmatpush.bf16.msra.mxu0 %v5149
    %7322 = vmatpush.bf16.msra.mxu0 %v5133
    %7323 = vmatmul.bf16.gmra.mxu0 %v1275
    %v7324 = vpop.f32.mrf.mxu0
    %v7325 = vadd.f32 %v7312, %v7324
    %v7326 = vpop.f32.mrf.mxu0
    %7327 = vdwg.mxu0
    %7328 = vmatpush.bf16.msra.mxu0 %v5373
    %7329 = vmatpush.bf16.msra.mxu0 %v5357
    %7330 = vmatpush.bf16.msra.mxu0 %v5341
    %7331 = vmatpush.bf16.msra.mxu0 %v5325
    %7332 = vmatpush.bf16.msra.mxu0 %v5309
    %7333 = vmatpush.bf16.msra.mxu0 %v5293
    %7334 = vmatpush.bf16.msra.mxu0 %v5277
    %7335 = vmatpush.bf16.msra.mxu0 %v5261
    %7336 = vmatmul.bf16.gmra.mxu0 %v1276
    %v7337 = vpop.f32.mrf.mxu0
    %v7338 = vadd.f32 %v7325, %v7337
    %v7339 = vpop.f32.mrf.mxu0
    %7340 = vdwg.mxu0
    %7341 = vmatpush.bf16.msra.mxu0 %v4478
    %7342 = vmatpush.bf16.msra.mxu0 %v4462
    %7343 = vmatpush.bf16.msra.mxu0 %v4446
    %7344 = vmatpush.bf16.msra.mxu0 %v4430
    %7345 = vmatpush.bf16.msra.mxu0 %v4414
    %7346 = vmatpush.bf16.msra.mxu0 %v4398
    %7347 = vmatpush.bf16.msra.mxu0 %v4382
    %7348 = vmatpush.bf16.msra.mxu0 %v4366
    %7349 = vmatmul.bf16.gmra.mxu0 %v1269
    %v7350 = vpop.f32.mrf.mxu0
    %v7351 = vadd.f32 %v1234, %v7350
    %v7352 = vpop.f32.mrf.mxu0
    %7353 = vdwg.mxu0
    %7354 = vmatpush.bf16.msra.mxu0 %v4606
    %7355 = vmatpush.bf16.msra.mxu0 %v4590
    %7356 = vmatpush.bf16.msra.mxu0 %v4574
    %7357 = vmatpush.bf16.msra.mxu0 %v4558
    %7358 = vmatpush.bf16.msra.mxu0 %v4542
    %7359 = vmatpush.bf16.msra.mxu0 %v4526
    %7360 = vmatpush.bf16.msra.mxu0 %v4510
    %7361 = vmatpush.bf16.msra.mxu0 %v4494
    %7362 = vmatmul.bf16.gmra.mxu0 %v1270
    %v7363 = vpop.f32.mrf.mxu0
    %v7364 = vadd.f32 %v7351, %v7363
    %v7365 = vpop.f32.mrf.mxu0
    %7366 = vdwg.mxu0
    %7367 = vmatpush.bf16.msra.mxu0 %v4734
    %7368 = vmatpush.bf16.msra.mxu0 %v4718
    %7369 = vmatpush.bf16.msra.mxu0 %v4702
    %7370 = vmatpush.bf16.msra.mxu0 %v4686
    %7371 = vmatpush.bf16.msra.mxu0 %v4670
    %7372 = vmatpush.bf16.msra.mxu0 %v4654
    %7373 = vmatpush.bf16.msra.mxu0 %v4638
    %7374 = vmatpush.bf16.msra.mxu0 %v4622
    %7375 = vmatmul.bf16.gmra.mxu0 %v1271
    %v7376 = vpop.f32.mrf.mxu0
    %v7377 = vadd.f32 %v7364, %v7376
    %v7378 = vpop.f32.mrf.mxu0
    %7379 = vdwg.mxu0
    %7380 = vmatpush.bf16.msra.mxu0 %v4862
    %7381 = vmatpush.bf16.msra.mxu0 %v4846
    %7382 = vmatpush.bf16.msra.mxu0 %v4830
    %7383 = vmatpush.bf16.msra.mxu0 %v4814
    %7384 = vmatpush.bf16.msra.mxu0 %v4798
    %7385 = vmatpush.bf16.msra.mxu0 %v4782
    %7386 = vmatpush.bf16.msra.mxu0 %v4766
    %7387 = vmatpush.bf16.msra.mxu0 %v4750
    %7388 = vmatmul.bf16.gmra.mxu0 %v1272
    %v7389 = vpop.f32.mrf.mxu0
    %v7390 = vadd.f32 %v7377, %v7389
    %v7391 = vpop.f32.mrf.mxu0
    %7392 = vdwg.mxu0
    %7393 = vmatpush.bf16.msra.mxu0 %v4990
    %7394 = vmatpush.bf16.msra.mxu0 %v4974
    %7395 = vmatpush.bf16.msra.mxu0 %v4958
    %7396 = vmatpush.bf16.msra.mxu0 %v4942
    %7397 = vmatpush.bf16.msra.mxu0 %v4926
    %7398 = vmatpush.bf16.msra.mxu0 %v4910
    %7399 = vmatpush.bf16.msra.mxu0 %v4894
    %7400 = vmatpush.bf16.msra.mxu0 %v4878
    %7401 = vmatmul.bf16.gmra.mxu0 %v1273
    %v7402 = vpop.f32.mrf.mxu0
    %v7403 = vadd.f32 %v7390, %v7402
    %v7404 = vpop.f32.mrf.mxu0
    %7405 = vdwg.mxu0
    %7406 = vmatpush.bf16.msra.mxu0 %v5118
    %7407 = vmatpush.bf16.msra.mxu0 %v5102
    %7408 = vmatpush.bf16.msra.mxu0 %v5086
    %7409 = vmatpush.bf16.msra.mxu0 %v5070
    %7410 = vmatpush.bf16.msra.mxu0 %v5054
    %7411 = vmatpush.bf16.msra.mxu0 %v5038
    %7412 = vmatpush.bf16.msra.mxu0 %v5022
    %7413 = vmatpush.bf16.msra.mxu0 %v5006
    %7414 = vmatmul.bf16.gmra.mxu0 %v1274
    %v7415 = vpop.f32.mrf.mxu0
    %v7416 = vadd.f32 %v7403, %v7415
    %v7417 = vpop.f32.mrf.mxu0
    %7418 = vdwg.mxu0
    %7419 = vmatpush.bf16.msra.mxu0 %v5246
    %7420 = vmatpush.bf16.msra.mxu0 %v5230
    %7421 = vmatpush.bf16.msra.mxu0 %v5214
    %7422 = vmatpush.bf16.msra.mxu0 %v5198
    %7423 = vmatpush.bf16.msra.mxu0 %v5182
    %7424 = vmatpush.bf16.msra.mxu0 %v5166
    %7425 = vmatpush.bf16.msra.mxu0 %v5150
    %7426 = vmatpush.bf16.msra.mxu0 %v5134
    %7427 = vmatmul.bf16.gmra.mxu0 %v1275
    %v7428 = vpop.f32.mrf.mxu0
    %v7429 = vadd.f32 %v7416, %v7428
    %v7430 = vpop.f32.mrf.mxu0
    %7431 = vdwg.mxu0
    %7432 = vmatpush.bf16.msra.mxu0 %v5374
    %7433 = vmatpush.bf16.msra.mxu0 %v5358
    %7434 = vmatpush.bf16.msra.mxu0 %v5342
    %7435 = vmatpush.bf16.msra.mxu0 %v5326
    %7436 = vmatpush.bf16.msra.mxu0 %v5310
    %7437 = vmatpush.bf16.msra.mxu0 %v5294
    %7438 = vmatpush.bf16.msra.mxu0 %v5278
    %7439 = vmatpush.bf16.msra.mxu0 %v5262
    %7440 = vmatmul.bf16.gmra.mxu0 %v1276
    %v7441 = vpop.f32.mrf.mxu0
    %v7442 = vadd.f32 %v7429, %v7441
    %v7443 = vpop.f32.mrf.mxu0
    %7444 = vdwg.mxu0
    %7445 = vmatpush.bf16.msra.mxu0 %v4479
    %7446 = vmatpush.bf16.msra.mxu0 %v4463
    %7447 = vmatpush.bf16.msra.mxu0 %v4447
    %7448 = vmatpush.bf16.msra.mxu0 %v4431
    %7449 = vmatpush.bf16.msra.mxu0 %v4415
    %7450 = vmatpush.bf16.msra.mxu0 %v4399
    %7451 = vmatpush.bf16.msra.mxu0 %v4383
    %7452 = vmatpush.bf16.msra.mxu0 %v4367
    %7453 = vmatmul.bf16.gmra.mxu0 %v1269
    %v7454 = vpop.f32.mrf.mxu0
    %v7455 = vadd.f32 %v1235, %v7454
    %v7456 = vpop.f32.mrf.mxu0
    %7457 = vdwg.mxu0
    %7458 = vmatpush.bf16.msra.mxu0 %v4607
    %7459 = vmatpush.bf16.msra.mxu0 %v4591
    %7460 = vmatpush.bf16.msra.mxu0 %v4575
    %7461 = vmatpush.bf16.msra.mxu0 %v4559
    %7462 = vmatpush.bf16.msra.mxu0 %v4543
    %7463 = vmatpush.bf16.msra.mxu0 %v4527
    %7464 = vmatpush.bf16.msra.mxu0 %v4511
    %7465 = vmatpush.bf16.msra.mxu0 %v4495
    %7466 = vmatmul.bf16.gmra.mxu0 %v1270
    %v7467 = vpop.f32.mrf.mxu0
    %v7468 = vadd.f32 %v7455, %v7467
    %v7469 = vpop.f32.mrf.mxu0
    %7470 = vdwg.mxu0
    %7471 = vmatpush.bf16.msra.mxu0 %v4735
    %7472 = vmatpush.bf16.msra.mxu0 %v4719
    %7473 = vmatpush.bf16.msra.mxu0 %v4703
    %7474 = vmatpush.bf16.msra.mxu0 %v4687
    %7475 = vmatpush.bf16.msra.mxu0 %v4671
    %7476 = vmatpush.bf16.msra.mxu0 %v4655
    %7477 = vmatpush.bf16.msra.mxu0 %v4639
    %7478 = vmatpush.bf16.msra.mxu0 %v4623
    %7479 = vmatmul.bf16.gmra.mxu0 %v1271
    %v7480 = vpop.f32.mrf.mxu0
    %v7481 = vadd.f32 %v7468, %v7480
    %v7482 = vpop.f32.mrf.mxu0
    %7483 = vdwg.mxu0
    %7484 = vmatpush.bf16.msra.mxu0 %v4863
    %7485 = vmatpush.bf16.msra.mxu0 %v4847
    %7486 = vmatpush.bf16.msra.mxu0 %v4831
    %7487 = vmatpush.bf16.msra.mxu0 %v4815
    %7488 = vmatpush.bf16.msra.mxu0 %v4799
    %7489 = vmatpush.bf16.msra.mxu0 %v4783
    %7490 = vmatpush.bf16.msra.mxu0 %v4767
    %7491 = vmatpush.bf16.msra.mxu0 %v4751
    %7492 = vmatmul.bf16.gmra.mxu0 %v1272
    %v7493 = vpop.f32.mrf.mxu0
    %v7494 = vadd.f32 %v7481, %v7493
    %v7495 = vpop.f32.mrf.mxu0
    %7496 = vdwg.mxu0
    %7497 = vmatpush.bf16.msra.mxu0 %v4991
    %7498 = vmatpush.bf16.msra.mxu0 %v4975
    %7499 = vmatpush.bf16.msra.mxu0 %v4959
    %7500 = vmatpush.bf16.msra.mxu0 %v4943
    %7501 = vmatpush.bf16.msra.mxu0 %v4927
    %7502 = vmatpush.bf16.msra.mxu0 %v4911
    %7503 = vmatpush.bf16.msra.mxu0 %v4895
    %7504 = vmatpush.bf16.msra.mxu0 %v4879
    %7505 = vmatmul.bf16.gmra.mxu0 %v1273
    %v7506 = vpop.f32.mrf.mxu0
    %v7507 = vadd.f32 %v7494, %v7506
    %v7508 = vpop.f32.mrf.mxu0
    %7509 = vdwg.mxu0
    %7510 = vmatpush.bf16.msra.mxu0 %v5119
    %7511 = vmatpush.bf16.msra.mxu0 %v5103
    %7512 = vmatpush.bf16.msra.mxu0 %v5087
    %7513 = vmatpush.bf16.msra.mxu0 %v5071
    %7514 = vmatpush.bf16.msra.mxu0 %v5055
    %7515 = vmatpush.bf16.msra.mxu0 %v5039
    %7516 = vmatpush.bf16.msra.mxu0 %v5023
    %7517 = vmatpush.bf16.msra.mxu0 %v5007
    %7518 = vmatmul.bf16.gmra.mxu0 %v1274
    %v7519 = vpop.f32.mrf.mxu0
    %v7520 = vadd.f32 %v7507, %v7519
    %v7521 = vpop.f32.mrf.mxu0
    %7522 = vdwg.mxu0
    %7523 = vmatpush.bf16.msra.mxu0 %v5247
    %7524 = vmatpush.bf16.msra.mxu0 %v5231
    %7525 = vmatpush.bf16.msra.mxu0 %v5215
    %7526 = vmatpush.bf16.msra.mxu0 %v5199
    %7527 = vmatpush.bf16.msra.mxu0 %v5183
    %7528 = vmatpush.bf16.msra.mxu0 %v5167
    %7529 = vmatpush.bf16.msra.mxu0 %v5151
    %7530 = vmatpush.bf16.msra.mxu0 %v5135
    %7531 = vmatmul.bf16.gmra.mxu0 %v1275
    %v7532 = vpop.f32.mrf.mxu0
    %v7533 = vadd.f32 %v7520, %v7532
    %v7534 = vpop.f32.mrf.mxu0
    %7535 = vdwg.mxu0
    %7536 = vmatpush.bf16.msra.mxu0 %v5375
    %7537 = vmatpush.bf16.msra.mxu0 %v5359
    %7538 = vmatpush.bf16.msra.mxu0 %v5343
    %7539 = vmatpush.bf16.msra.mxu0 %v5327
    %7540 = vmatpush.bf16.msra.mxu0 %v5311
    %7541 = vmatpush.bf16.msra.mxu0 %v5295
    %7542 = vmatpush.bf16.msra.mxu0 %v5279
    %7543 = vmatpush.bf16.msra.mxu0 %v5263
    %7544 = vmatmul.bf16.gmra.mxu0 %v1276
    %v7545 = vpop.f32.mrf.mxu0
    %v7546 = vadd.f32 %v7533, %v7545
    %v7547 = vpop.f32.mrf.mxu0
    %7548 = vdwg.mxu0
    %7549 = vmatpush.bf16.msra.mxu0 %v4480
    %7550 = vmatpush.bf16.msra.mxu0 %v4464
    %7551 = vmatpush.bf16.msra.mxu0 %v4448
    %7552 = vmatpush.bf16.msra.mxu0 %v4432
    %7553 = vmatpush.bf16.msra.mxu0 %v4416
    %7554 = vmatpush.bf16.msra.mxu0 %v4400
    %7555 = vmatpush.bf16.msra.mxu0 %v4384
    %7556 = vmatpush.bf16.msra.mxu0 %v4368
    %7557 = vmatmul.bf16.gmra.mxu0 %v1269
    %v7558 = vpop.f32.mrf.mxu0
    %v7559 = vadd.f32 %v1236, %v7558
    %v7560 = vpop.f32.mrf.mxu0
    %7561 = vdwg.mxu0
    %7562 = vmatpush.bf16.msra.mxu0 %v4608
    %7563 = vmatpush.bf16.msra.mxu0 %v4592
    %7564 = vmatpush.bf16.msra.mxu0 %v4576
    %7565 = vmatpush.bf16.msra.mxu0 %v4560
    %7566 = vmatpush.bf16.msra.mxu0 %v4544
    %7567 = vmatpush.bf16.msra.mxu0 %v4528
    %7568 = vmatpush.bf16.msra.mxu0 %v4512
    %7569 = vmatpush.bf16.msra.mxu0 %v4496
    %7570 = vmatmul.bf16.gmra.mxu0 %v1270
    %v7571 = vpop.f32.mrf.mxu0
    %v7572 = vadd.f32 %v7559, %v7571
    %v7573 = vpop.f32.mrf.mxu0
    %7574 = vdwg.mxu0
    %7575 = vmatpush.bf16.msra.mxu0 %v4736
    %7576 = vmatpush.bf16.msra.mxu0 %v4720
    %7577 = vmatpush.bf16.msra.mxu0 %v4704
    %7578 = vmatpush.bf16.msra.mxu0 %v4688
    %7579 = vmatpush.bf16.msra.mxu0 %v4672
    %7580 = vmatpush.bf16.msra.mxu0 %v4656
    %7581 = vmatpush.bf16.msra.mxu0 %v4640
    %7582 = vmatpush.bf16.msra.mxu0 %v4624
    %7583 = vmatmul.bf16.gmra.mxu0 %v1271
    %v7584 = vpop.f32.mrf.mxu0
    %v7585 = vadd.f32 %v7572, %v7584
    %v7586 = vpop.f32.mrf.mxu0
    %7587 = vdwg.mxu0
    %7588 = vmatpush.bf16.msra.mxu0 %v4864
    %7589 = vmatpush.bf16.msra.mxu0 %v4848
    %7590 = vmatpush.bf16.msra.mxu0 %v4832
    %7591 = vmatpush.bf16.msra.mxu0 %v4816
    %7592 = vmatpush.bf16.msra.mxu0 %v4800
    %7593 = vmatpush.bf16.msra.mxu0 %v4784
    %7594 = vmatpush.bf16.msra.mxu0 %v4768
    %7595 = vmatpush.bf16.msra.mxu0 %v4752
    %7596 = vmatmul.bf16.gmra.mxu0 %v1272
    %v7597 = vpop.f32.mrf.mxu0
    %v7598 = vadd.f32 %v7585, %v7597
    %v7599 = vpop.f32.mrf.mxu0
    %7600 = vdwg.mxu0
    %7601 = vmatpush.bf16.msra.mxu0 %v4992
    %7602 = vmatpush.bf16.msra.mxu0 %v4976
    %7603 = vmatpush.bf16.msra.mxu0 %v4960
    %7604 = vmatpush.bf16.msra.mxu0 %v4944
    %7605 = vmatpush.bf16.msra.mxu0 %v4928
    %7606 = vmatpush.bf16.msra.mxu0 %v4912
    %7607 = vmatpush.bf16.msra.mxu0 %v4896
    %7608 = vmatpush.bf16.msra.mxu0 %v4880
    %7609 = vmatmul.bf16.gmra.mxu0 %v1273
    %v7610 = vpop.f32.mrf.mxu0
    %v7611 = vadd.f32 %v7598, %v7610
    %v7612 = vpop.f32.mrf.mxu0
    %7613 = vdwg.mxu0
    %7614 = vmatpush.bf16.msra.mxu0 %v5120
    %7615 = vmatpush.bf16.msra.mxu0 %v5104
    %7616 = vmatpush.bf16.msra.mxu0 %v5088
    %7617 = vmatpush.bf16.msra.mxu0 %v5072
    %7618 = vmatpush.bf16.msra.mxu0 %v5056
    %7619 = vmatpush.bf16.msra.mxu0 %v5040
    %7620 = vmatpush.bf16.msra.mxu0 %v5024
    %7621 = vmatpush.bf16.msra.mxu0 %v5008
    %7622 = vmatmul.bf16.gmra.mxu0 %v1274
    %v7623 = vpop.f32.mrf.mxu0
    %v7624 = vadd.f32 %v7611, %v7623
    %v7625 = vpop.f32.mrf.mxu0
    %7626 = vdwg.mxu0
    %7627 = vmatpush.bf16.msra.mxu0 %v5248
    %7628 = vmatpush.bf16.msra.mxu0 %v5232
    %7629 = vmatpush.bf16.msra.mxu0 %v5216
    %7630 = vmatpush.bf16.msra.mxu0 %v5200
    %7631 = vmatpush.bf16.msra.mxu0 %v5184
    %7632 = vmatpush.bf16.msra.mxu0 %v5168
    %7633 = vmatpush.bf16.msra.mxu0 %v5152
    %7634 = vmatpush.bf16.msra.mxu0 %v5136
    %7635 = vmatmul.bf16.gmra.mxu0 %v1275
    %v7636 = vpop.f32.mrf.mxu0
    %v7637 = vadd.f32 %v7624, %v7636
    %v7638 = vpop.f32.mrf.mxu0
    %7639 = vdwg.mxu0
    %7640 = vmatpush.bf16.msra.mxu0 %v5376
    %7641 = vmatpush.bf16.msra.mxu0 %v5360
    %7642 = vmatpush.bf16.msra.mxu0 %v5344
    %7643 = vmatpush.bf16.msra.mxu0 %v5328
    %7644 = vmatpush.bf16.msra.mxu0 %v5312
    %7645 = vmatpush.bf16.msra.mxu0 %v5296
    %7646 = vmatpush.bf16.msra.mxu0 %v5280
    %7647 = vmatpush.bf16.msra.mxu0 %v5264
    %7648 = vmatmul.bf16.gmra.mxu0 %v1276
    %v7649 = vpop.f32.mrf.mxu0
    %v7650 = vadd.f32 %v7637, %v7649
    %v7651 = vpop.f32.mrf.mxu0
    %7652 = vdwg.mxu0
    %7653 = vmatpush.bf16.msra.mxu0 %v4481
    %7654 = vmatpush.bf16.msra.mxu0 %v4465
    %7655 = vmatpush.bf16.msra.mxu0 %v4449
    %7656 = vmatpush.bf16.msra.mxu0 %v4433
    %7657 = vmatpush.bf16.msra.mxu0 %v4417
    %7658 = vmatpush.bf16.msra.mxu0 %v4401
    %7659 = vmatpush.bf16.msra.mxu0 %v4385
    %7660 = vmatpush.bf16.msra.mxu0 %v4369
    %7661 = vmatmul.bf16.gmra.mxu0 %v1269
    %v7662 = vpop.f32.mrf.mxu0
    %v7663 = vadd.f32 %v1237, %v7662
    %v7664 = vpop.f32.mrf.mxu0
    %7665 = vdwg.mxu0
    %7666 = vmatpush.bf16.msra.mxu0 %v4609
    %7667 = vmatpush.bf16.msra.mxu0 %v4593
    %7668 = vmatpush.bf16.msra.mxu0 %v4577
    %7669 = vmatpush.bf16.msra.mxu0 %v4561
    %7670 = vmatpush.bf16.msra.mxu0 %v4545
    %7671 = vmatpush.bf16.msra.mxu0 %v4529
    %7672 = vmatpush.bf16.msra.mxu0 %v4513
    %7673 = vmatpush.bf16.msra.mxu0 %v4497
    %7674 = vmatmul.bf16.gmra.mxu0 %v1270
    %v7675 = vpop.f32.mrf.mxu0
    %v7676 = vadd.f32 %v7663, %v7675
    %v7677 = vpop.f32.mrf.mxu0
    %7678 = vdwg.mxu0
    %7679 = vmatpush.bf16.msra.mxu0 %v4737
    %7680 = vmatpush.bf16.msra.mxu0 %v4721
    %7681 = vmatpush.bf16.msra.mxu0 %v4705
    %7682 = vmatpush.bf16.msra.mxu0 %v4689
    %7683 = vmatpush.bf16.msra.mxu0 %v4673
    %7684 = vmatpush.bf16.msra.mxu0 %v4657
    %7685 = vmatpush.bf16.msra.mxu0 %v4641
    %7686 = vmatpush.bf16.msra.mxu0 %v4625
    %7687 = vmatmul.bf16.gmra.mxu0 %v1271
    %v7688 = vpop.f32.mrf.mxu0
    %v7689 = vadd.f32 %v7676, %v7688
    %v7690 = vpop.f32.mrf.mxu0
    %7691 = vdwg.mxu0
    %7692 = vmatpush.bf16.msra.mxu0 %v4865
    %7693 = vmatpush.bf16.msra.mxu0 %v4849
    %7694 = vmatpush.bf16.msra.mxu0 %v4833
    %7695 = vmatpush.bf16.msra.mxu0 %v4817
    %7696 = vmatpush.bf16.msra.mxu0 %v4801
    %7697 = vmatpush.bf16.msra.mxu0 %v4785
    %7698 = vmatpush.bf16.msra.mxu0 %v4769
    %7699 = vmatpush.bf16.msra.mxu0 %v4753
    %7700 = vmatmul.bf16.gmra.mxu0 %v1272
    %v7701 = vpop.f32.mrf.mxu0
    %v7702 = vadd.f32 %v7689, %v7701
    %v7703 = vpop.f32.mrf.mxu0
    %7704 = vdwg.mxu0
    %7705 = vmatpush.bf16.msra.mxu0 %v4993
    %7706 = vmatpush.bf16.msra.mxu0 %v4977
    %7707 = vmatpush.bf16.msra.mxu0 %v4961
    %7708 = vmatpush.bf16.msra.mxu0 %v4945
    %7709 = vmatpush.bf16.msra.mxu0 %v4929
    %7710 = vmatpush.bf16.msra.mxu0 %v4913
    %7711 = vmatpush.bf16.msra.mxu0 %v4897
    %7712 = vmatpush.bf16.msra.mxu0 %v4881
    %7713 = vmatmul.bf16.gmra.mxu0 %v1273
    %v7714 = vpop.f32.mrf.mxu0
    %v7715 = vadd.f32 %v7702, %v7714
    %v7716 = vpop.f32.mrf.mxu0
    %7717 = vdwg.mxu0
    %7718 = vmatpush.bf16.msra.mxu0 %v5121
    %7719 = vmatpush.bf16.msra.mxu0 %v5105
    %7720 = vmatpush.bf16.msra.mxu0 %v5089
    %7721 = vmatpush.bf16.msra.mxu0 %v5073
    %7722 = vmatpush.bf16.msra.mxu0 %v5057
    %7723 = vmatpush.bf16.msra.mxu0 %v5041
    %7724 = vmatpush.bf16.msra.mxu0 %v5025
    %7725 = vmatpush.bf16.msra.mxu0 %v5009
    %7726 = vmatmul.bf16.gmra.mxu0 %v1274
    %v7727 = vpop.f32.mrf.mxu0
    %v7728 = vadd.f32 %v7715, %v7727
    %v7729 = vpop.f32.mrf.mxu0
    %7730 = vdwg.mxu0
    %7731 = vmatpush.bf16.msra.mxu0 %v5249
    %7732 = vmatpush.bf16.msra.mxu0 %v5233
    %7733 = vmatpush.bf16.msra.mxu0 %v5217
    %7734 = vmatpush.bf16.msra.mxu0 %v5201
    %7735 = vmatpush.bf16.msra.mxu0 %v5185
    %7736 = vmatpush.bf16.msra.mxu0 %v5169
    %7737 = vmatpush.bf16.msra.mxu0 %v5153
    %7738 = vmatpush.bf16.msra.mxu0 %v5137
    %7739 = vmatmul.bf16.gmra.mxu0 %v1275
    %v7740 = vpop.f32.mrf.mxu0
    %v7741 = vadd.f32 %v7728, %v7740
    %v7742 = vpop.f32.mrf.mxu0
    %7743 = vdwg.mxu0
    %7744 = vmatpush.bf16.msra.mxu0 %v5377
    %7745 = vmatpush.bf16.msra.mxu0 %v5361
    %7746 = vmatpush.bf16.msra.mxu0 %v5345
    %7747 = vmatpush.bf16.msra.mxu0 %v5329
    %7748 = vmatpush.bf16.msra.mxu0 %v5313
    %7749 = vmatpush.bf16.msra.mxu0 %v5297
    %7750 = vmatpush.bf16.msra.mxu0 %v5281
    %7751 = vmatpush.bf16.msra.mxu0 %v5265
    %7752 = vmatmul.bf16.gmra.mxu0 %v1276
    %v7753 = vpop.f32.mrf.mxu0
    %v7754 = vadd.f32 %v7741, %v7753
    %v7755 = vpop.f32.mrf.mxu0
    %7756 = vdwg.mxu0
    %7757 = vmatpush.bf16.msra.mxu0 %v4482
    %7758 = vmatpush.bf16.msra.mxu0 %v4466
    %7759 = vmatpush.bf16.msra.mxu0 %v4450
    %7760 = vmatpush.bf16.msra.mxu0 %v4434
    %7761 = vmatpush.bf16.msra.mxu0 %v4418
    %7762 = vmatpush.bf16.msra.mxu0 %v4402
    %7763 = vmatpush.bf16.msra.mxu0 %v4386
    %7764 = vmatpush.bf16.msra.mxu0 %v4370
    %7765 = vmatmul.bf16.gmra.mxu0 %v1269
    %v7766 = vpop.f32.mrf.mxu0
    %v7767 = vadd.f32 %v1238, %v7766
    %v7768 = vpop.f32.mrf.mxu0
    %7769 = vdwg.mxu0
    %7770 = vmatpush.bf16.msra.mxu0 %v4610
    %7771 = vmatpush.bf16.msra.mxu0 %v4594
    %7772 = vmatpush.bf16.msra.mxu0 %v4578
    %7773 = vmatpush.bf16.msra.mxu0 %v4562
    %7774 = vmatpush.bf16.msra.mxu0 %v4546
    %7775 = vmatpush.bf16.msra.mxu0 %v4530
    %7776 = vmatpush.bf16.msra.mxu0 %v4514
    %7777 = vmatpush.bf16.msra.mxu0 %v4498
    %7778 = vmatmul.bf16.gmra.mxu0 %v1270
    %v7779 = vpop.f32.mrf.mxu0
    %v7780 = vadd.f32 %v7767, %v7779
    %v7781 = vpop.f32.mrf.mxu0
    %7782 = vdwg.mxu0
    %7783 = vmatpush.bf16.msra.mxu0 %v4738
    %7784 = vmatpush.bf16.msra.mxu0 %v4722
    %7785 = vmatpush.bf16.msra.mxu0 %v4706
    %7786 = vmatpush.bf16.msra.mxu0 %v4690
    %7787 = vmatpush.bf16.msra.mxu0 %v4674
    %7788 = vmatpush.bf16.msra.mxu0 %v4658
    %7789 = vmatpush.bf16.msra.mxu0 %v4642
    %7790 = vmatpush.bf16.msra.mxu0 %v4626
    %7791 = vmatmul.bf16.gmra.mxu0 %v1271
    %v7792 = vpop.f32.mrf.mxu0
    %v7793 = vadd.f32 %v7780, %v7792
    %v7794 = vpop.f32.mrf.mxu0
    %7795 = vdwg.mxu0
    %7796 = vmatpush.bf16.msra.mxu0 %v4866
    %7797 = vmatpush.bf16.msra.mxu0 %v4850
    %7798 = vmatpush.bf16.msra.mxu0 %v4834
    %7799 = vmatpush.bf16.msra.mxu0 %v4818
    %7800 = vmatpush.bf16.msra.mxu0 %v4802
    %7801 = vmatpush.bf16.msra.mxu0 %v4786
    %7802 = vmatpush.bf16.msra.mxu0 %v4770
    %7803 = vmatpush.bf16.msra.mxu0 %v4754
    %7804 = vmatmul.bf16.gmra.mxu0 %v1272
    %v7805 = vpop.f32.mrf.mxu0
    %v7806 = vadd.f32 %v7793, %v7805
    %v7807 = vpop.f32.mrf.mxu0
    %7808 = vdwg.mxu0
    %7809 = vmatpush.bf16.msra.mxu0 %v4994
    %7810 = vmatpush.bf16.msra.mxu0 %v4978
    %7811 = vmatpush.bf16.msra.mxu0 %v4962
    %7812 = vmatpush.bf16.msra.mxu0 %v4946
    %7813 = vmatpush.bf16.msra.mxu0 %v4930
    %7814 = vmatpush.bf16.msra.mxu0 %v4914
    %7815 = vmatpush.bf16.msra.mxu0 %v4898
    %7816 = vmatpush.bf16.msra.mxu0 %v4882
    %7817 = vmatmul.bf16.gmra.mxu0 %v1273
    %v7818 = vpop.f32.mrf.mxu0
    %v7819 = vadd.f32 %v7806, %v7818
    %v7820 = vpop.f32.mrf.mxu0
    %7821 = vdwg.mxu0
    %7822 = vmatpush.bf16.msra.mxu0 %v5122
    %7823 = vmatpush.bf16.msra.mxu0 %v5106
    %7824 = vmatpush.bf16.msra.mxu0 %v5090
    %7825 = vmatpush.bf16.msra.mxu0 %v5074
    %7826 = vmatpush.bf16.msra.mxu0 %v5058
    %7827 = vmatpush.bf16.msra.mxu0 %v5042
    %7828 = vmatpush.bf16.msra.mxu0 %v5026
    %7829 = vmatpush.bf16.msra.mxu0 %v5010
    %7830 = vmatmul.bf16.gmra.mxu0 %v1274
    %v7831 = vpop.f32.mrf.mxu0
    %v7832 = vadd.f32 %v7819, %v7831
    %v7833 = vpop.f32.mrf.mxu0
    %7834 = vdwg.mxu0
    %7835 = vmatpush.bf16.msra.mxu0 %v5250
    %7836 = vmatpush.bf16.msra.mxu0 %v5234
    %7837 = vmatpush.bf16.msra.mxu0 %v5218
    %7838 = vmatpush.bf16.msra.mxu0 %v5202
    %7839 = vmatpush.bf16.msra.mxu0 %v5186
    %7840 = vmatpush.bf16.msra.mxu0 %v5170
    %7841 = vmatpush.bf16.msra.mxu0 %v5154
    %7842 = vmatpush.bf16.msra.mxu0 %v5138
    %7843 = vmatmul.bf16.gmra.mxu0 %v1275
    %v7844 = vpop.f32.mrf.mxu0
    %v7845 = vadd.f32 %v7832, %v7844
    %v7846 = vpop.f32.mrf.mxu0
    %7847 = vdwg.mxu0
    %7848 = vmatpush.bf16.msra.mxu0 %v5378
    %7849 = vmatpush.bf16.msra.mxu0 %v5362
    %7850 = vmatpush.bf16.msra.mxu0 %v5346
    %7851 = vmatpush.bf16.msra.mxu0 %v5330
    %7852 = vmatpush.bf16.msra.mxu0 %v5314
    %7853 = vmatpush.bf16.msra.mxu0 %v5298
    %7854 = vmatpush.bf16.msra.mxu0 %v5282
    %7855 = vmatpush.bf16.msra.mxu0 %v5266
    %7856 = vmatmul.bf16.gmra.mxu0 %v1276
    %v7857 = vpop.f32.mrf.mxu0
    %v7858 = vadd.f32 %v7845, %v7857
    %v7859 = vpop.f32.mrf.mxu0
    %7860 = vdwg.mxu0
    %7861 = vmatpush.bf16.msra.mxu0 %v4483
    %7862 = vmatpush.bf16.msra.mxu0 %v4467
    %7863 = vmatpush.bf16.msra.mxu0 %v4451
    %7864 = vmatpush.bf16.msra.mxu0 %v4435
    %7865 = vmatpush.bf16.msra.mxu0 %v4419
    %7866 = vmatpush.bf16.msra.mxu0 %v4403
    %7867 = vmatpush.bf16.msra.mxu0 %v4387
    %7868 = vmatpush.bf16.msra.mxu0 %v4371
    %7869 = vmatmul.bf16.gmra.mxu0 %v1269
    %v7870 = vpop.f32.mrf.mxu0
    %v7871 = vadd.f32 %v1239, %v7870
    %v7872 = vpop.f32.mrf.mxu0
    %7873 = vdwg.mxu0
    %7874 = vmatpush.bf16.msra.mxu0 %v4611
    %7875 = vmatpush.bf16.msra.mxu0 %v4595
    %7876 = vmatpush.bf16.msra.mxu0 %v4579
    %7877 = vmatpush.bf16.msra.mxu0 %v4563
    %7878 = vmatpush.bf16.msra.mxu0 %v4547
    %7879 = vmatpush.bf16.msra.mxu0 %v4531
    %7880 = vmatpush.bf16.msra.mxu0 %v4515
    %7881 = vmatpush.bf16.msra.mxu0 %v4499
    %7882 = vmatmul.bf16.gmra.mxu0 %v1270
    %v7883 = vpop.f32.mrf.mxu0
    %v7884 = vadd.f32 %v7871, %v7883
    %v7885 = vpop.f32.mrf.mxu0
    %7886 = vdwg.mxu0
    %7887 = vmatpush.bf16.msra.mxu0 %v4739
    %7888 = vmatpush.bf16.msra.mxu0 %v4723
    %7889 = vmatpush.bf16.msra.mxu0 %v4707
    %7890 = vmatpush.bf16.msra.mxu0 %v4691
    %7891 = vmatpush.bf16.msra.mxu0 %v4675
    %7892 = vmatpush.bf16.msra.mxu0 %v4659
    %7893 = vmatpush.bf16.msra.mxu0 %v4643
    %7894 = vmatpush.bf16.msra.mxu0 %v4627
    %7895 = vmatmul.bf16.gmra.mxu0 %v1271
    %v7896 = vpop.f32.mrf.mxu0
    %v7897 = vadd.f32 %v7884, %v7896
    %v7898 = vpop.f32.mrf.mxu0
    %7899 = vdwg.mxu0
    %7900 = vmatpush.bf16.msra.mxu0 %v4867
    %7901 = vmatpush.bf16.msra.mxu0 %v4851
    %7902 = vmatpush.bf16.msra.mxu0 %v4835
    %7903 = vmatpush.bf16.msra.mxu0 %v4819
    %7904 = vmatpush.bf16.msra.mxu0 %v4803
    %7905 = vmatpush.bf16.msra.mxu0 %v4787
    %7906 = vmatpush.bf16.msra.mxu0 %v4771
    %7907 = vmatpush.bf16.msra.mxu0 %v4755
    %7908 = vmatmul.bf16.gmra.mxu0 %v1272
    %v7909 = vpop.f32.mrf.mxu0
    %v7910 = vadd.f32 %v7897, %v7909
    %v7911 = vpop.f32.mrf.mxu0
    %7912 = vdwg.mxu0
    %7913 = vmatpush.bf16.msra.mxu0 %v4995
    %7914 = vmatpush.bf16.msra.mxu0 %v4979
    %7915 = vmatpush.bf16.msra.mxu0 %v4963
    %7916 = vmatpush.bf16.msra.mxu0 %v4947
    %7917 = vmatpush.bf16.msra.mxu0 %v4931
    %7918 = vmatpush.bf16.msra.mxu0 %v4915
    %7919 = vmatpush.bf16.msra.mxu0 %v4899
    %7920 = vmatpush.bf16.msra.mxu0 %v4883
    %7921 = vmatmul.bf16.gmra.mxu0 %v1273
    %v7922 = vpop.f32.mrf.mxu0
    %v7923 = vadd.f32 %v7910, %v7922
    %v7924 = vpop.f32.mrf.mxu0
    %7925 = vdwg.mxu0
    %7926 = vmatpush.bf16.msra.mxu0 %v5123
    %7927 = vmatpush.bf16.msra.mxu0 %v5107
    %7928 = vmatpush.bf16.msra.mxu0 %v5091
    %7929 = vmatpush.bf16.msra.mxu0 %v5075
    %7930 = vmatpush.bf16.msra.mxu0 %v5059
    %7931 = vmatpush.bf16.msra.mxu0 %v5043
    %7932 = vmatpush.bf16.msra.mxu0 %v5027
    %7933 = vmatpush.bf16.msra.mxu0 %v5011
    %7934 = vmatmul.bf16.gmra.mxu0 %v1274
    %v7935 = vpop.f32.mrf.mxu0
    %v7936 = vadd.f32 %v7923, %v7935
    %v7937 = vpop.f32.mrf.mxu0
    %7938 = vdwg.mxu0
    %7939 = vmatpush.bf16.msra.mxu0 %v5251
    %7940 = vmatpush.bf16.msra.mxu0 %v5235
    %7941 = vmatpush.bf16.msra.mxu0 %v5219
    %7942 = vmatpush.bf16.msra.mxu0 %v5203
    %7943 = vmatpush.bf16.msra.mxu0 %v5187
    %7944 = vmatpush.bf16.msra.mxu0 %v5171
    %7945 = vmatpush.bf16.msra.mxu0 %v5155
    %7946 = vmatpush.bf16.msra.mxu0 %v5139
    %7947 = vmatmul.bf16.gmra.mxu0 %v1275
    %v7948 = vpop.f32.mrf.mxu0
    %v7949 = vadd.f32 %v7936, %v7948
    %v7950 = vpop.f32.mrf.mxu0
    %7951 = vdwg.mxu0
    %7952 = vmatpush.bf16.msra.mxu0 %v5379
    %7953 = vmatpush.bf16.msra.mxu0 %v5363
    %7954 = vmatpush.bf16.msra.mxu0 %v5347
    %7955 = vmatpush.bf16.msra.mxu0 %v5331
    %7956 = vmatpush.bf16.msra.mxu0 %v5315
    %7957 = vmatpush.bf16.msra.mxu0 %v5299
    %7958 = vmatpush.bf16.msra.mxu0 %v5283
    %7959 = vmatpush.bf16.msra.mxu0 %v5267
    %7960 = vmatmul.bf16.gmra.mxu0 %v1276
    %v7961 = vpop.f32.mrf.mxu0
    %v7962 = vadd.f32 %v7949, %v7961
    %v7963 = vpop.f32.mrf.mxu0
    %7964 = vdwg.mxu0
    %7965 = vmatpush.bf16.msra.mxu0 %v4484
    %7966 = vmatpush.bf16.msra.mxu0 %v4468
    %7967 = vmatpush.bf16.msra.mxu0 %v4452
    %7968 = vmatpush.bf16.msra.mxu0 %v4436
    %7969 = vmatpush.bf16.msra.mxu0 %v4420
    %7970 = vmatpush.bf16.msra.mxu0 %v4404
    %7971 = vmatpush.bf16.msra.mxu0 %v4388
    %7972 = vmatpush.bf16.msra.mxu0 %v4372
    %7973 = vmatmul.bf16.gmra.mxu0 %v1269
    %v7974 = vpop.f32.mrf.mxu0
    %v7975 = vadd.f32 %v1240, %v7974
    %v7976 = vpop.f32.mrf.mxu0
    %7977 = vdwg.mxu0
    %7978 = vmatpush.bf16.msra.mxu0 %v4612
    %7979 = vmatpush.bf16.msra.mxu0 %v4596
    %7980 = vmatpush.bf16.msra.mxu0 %v4580
    %7981 = vmatpush.bf16.msra.mxu0 %v4564
    %7982 = vmatpush.bf16.msra.mxu0 %v4548
    %7983 = vmatpush.bf16.msra.mxu0 %v4532
    %7984 = vmatpush.bf16.msra.mxu0 %v4516
    %7985 = vmatpush.bf16.msra.mxu0 %v4500
    %7986 = vmatmul.bf16.gmra.mxu0 %v1270
    %v7987 = vpop.f32.mrf.mxu0
    %v7988 = vadd.f32 %v7975, %v7987
    %v7989 = vpop.f32.mrf.mxu0
    %7990 = vdwg.mxu0
    %7991 = vmatpush.bf16.msra.mxu0 %v4740
    %7992 = vmatpush.bf16.msra.mxu0 %v4724
    %7993 = vmatpush.bf16.msra.mxu0 %v4708
    %7994 = vmatpush.bf16.msra.mxu0 %v4692
    %7995 = vmatpush.bf16.msra.mxu0 %v4676
    %7996 = vmatpush.bf16.msra.mxu0 %v4660
    %7997 = vmatpush.bf16.msra.mxu0 %v4644
    %7998 = vmatpush.bf16.msra.mxu0 %v4628
    %7999 = vmatmul.bf16.gmra.mxu0 %v1271
    %v8000 = vpop.f32.mrf.mxu0
    %v8001 = vadd.f32 %v7988, %v8000
    %v8002 = vpop.f32.mrf.mxu0
    %8003 = vdwg.mxu0
    %8004 = vmatpush.bf16.msra.mxu0 %v4868
    %8005 = vmatpush.bf16.msra.mxu0 %v4852
    %8006 = vmatpush.bf16.msra.mxu0 %v4836
    %8007 = vmatpush.bf16.msra.mxu0 %v4820
    %8008 = vmatpush.bf16.msra.mxu0 %v4804
    %8009 = vmatpush.bf16.msra.mxu0 %v4788
    %8010 = vmatpush.bf16.msra.mxu0 %v4772
    %8011 = vmatpush.bf16.msra.mxu0 %v4756
    %8012 = vmatmul.bf16.gmra.mxu0 %v1272
    %v8013 = vpop.f32.mrf.mxu0
    %v8014 = vadd.f32 %v8001, %v8013
    %v8015 = vpop.f32.mrf.mxu0
    %8016 = vdwg.mxu0
    %8017 = vmatpush.bf16.msra.mxu0 %v4996
    %8018 = vmatpush.bf16.msra.mxu0 %v4980
    %8019 = vmatpush.bf16.msra.mxu0 %v4964
    %8020 = vmatpush.bf16.msra.mxu0 %v4948
    %8021 = vmatpush.bf16.msra.mxu0 %v4932
    %8022 = vmatpush.bf16.msra.mxu0 %v4916
    %8023 = vmatpush.bf16.msra.mxu0 %v4900
    %8024 = vmatpush.bf16.msra.mxu0 %v4884
    %8025 = vmatmul.bf16.gmra.mxu0 %v1273
    %v8026 = vpop.f32.mrf.mxu0
    %v8027 = vadd.f32 %v8014, %v8026
    %v8028 = vpop.f32.mrf.mxu0
    %8029 = vdwg.mxu0
    %8030 = vmatpush.bf16.msra.mxu0 %v5124
    %8031 = vmatpush.bf16.msra.mxu0 %v5108
    %8032 = vmatpush.bf16.msra.mxu0 %v5092
    %8033 = vmatpush.bf16.msra.mxu0 %v5076
    %8034 = vmatpush.bf16.msra.mxu0 %v5060
    %8035 = vmatpush.bf16.msra.mxu0 %v5044
    %8036 = vmatpush.bf16.msra.mxu0 %v5028
    %8037 = vmatpush.bf16.msra.mxu0 %v5012
    %8038 = vmatmul.bf16.gmra.mxu0 %v1274
    %v8039 = vpop.f32.mrf.mxu0
    %v8040 = vadd.f32 %v8027, %v8039
    %v8041 = vpop.f32.mrf.mxu0
    %8042 = vdwg.mxu0
    %8043 = vmatpush.bf16.msra.mxu0 %v5252
    %8044 = vmatpush.bf16.msra.mxu0 %v5236
    %8045 = vmatpush.bf16.msra.mxu0 %v5220
    %8046 = vmatpush.bf16.msra.mxu0 %v5204
    %8047 = vmatpush.bf16.msra.mxu0 %v5188
    %8048 = vmatpush.bf16.msra.mxu0 %v5172
    %8049 = vmatpush.bf16.msra.mxu0 %v5156
    %8050 = vmatpush.bf16.msra.mxu0 %v5140
    %8051 = vmatmul.bf16.gmra.mxu0 %v1275
    %v8052 = vpop.f32.mrf.mxu0
    %v8053 = vadd.f32 %v8040, %v8052
    %v8054 = vpop.f32.mrf.mxu0
    %8055 = vdwg.mxu0
    %8056 = vmatpush.bf16.msra.mxu0 %v5380
    %8057 = vmatpush.bf16.msra.mxu0 %v5364
    %8058 = vmatpush.bf16.msra.mxu0 %v5348
    %8059 = vmatpush.bf16.msra.mxu0 %v5332
    %8060 = vmatpush.bf16.msra.mxu0 %v5316
    %8061 = vmatpush.bf16.msra.mxu0 %v5300
    %8062 = vmatpush.bf16.msra.mxu0 %v5284
    %8063 = vmatpush.bf16.msra.mxu0 %v5268
    %8064 = vmatmul.bf16.gmra.mxu0 %v1276
    %v8065 = vpop.f32.mrf.mxu0
    %v8066 = vadd.f32 %v8053, %v8065
    %v8067 = vpop.f32.mrf.mxu0
    %8068 = vdwg.mxu0
    %v8069 = vmax.f32 %v6506, 0.0
    %v8070 = vmax.f32 %v6610, 0.0
    %v8071 = vmax.f32 %v6714, 0.0
    %v8072 = vmax.f32 %v6818, 0.0
    %v8073 = vmax.f32 %v6922, 0.0
    %v8074 = vmax.f32 %v7026, 0.0
    %v8075 = vmax.f32 %v7130, 0.0
    %v8076 = vmax.f32 %v7234, 0.0
    %v8077 = vmax.f32 %v7338, 0.0
    %v8078 = vmax.f32 %v7442, 0.0
    %v8079 = vmax.f32 %v7546, 0.0
    %v8080 = vmax.f32 %v7650, 0.0
    %v8081 = vmax.f32 %v7754, 0.0
    %v8082 = vmax.f32 %v7858, 0.0
    %v8083 = vmax.f32 %v7962, 0.0
    %v8084 = vmax.f32 %v8066, 0.0
    %v8085 = vmax.f32 %v8069, %v8077
    %v8086 = vmax.f32 %v8070, %v8078
    %v8087 = vmax.f32 %v8071, %v8079
    %v8088 = vmax.f32 %v8072, %v8080
    %v8089 = vmax.f32 %v8073, %v8081
    %v8090 = vmax.f32 %v8074, %v8082
    %v8091 = vmax.f32 %v8075, %v8083
    %v8092 = vmax.f32 %v8076, %v8084
    %v8093 = vmax.f32 %v8085, %v8089
    %v8094 = vmax.f32 %v8086, %v8090
    %v8095 = vmax.f32 %v8087, %v8091
    %v8096 = vmax.f32 %v8088, %v8092
    %v8097 = vpack.c.bf16 %v8093, %v8093
    %v8098 = vpack.c.bf16 %v8094, %v8094
    %v8099 = vpack.c.bf16 %v8095, %v8095
    %v8100 = vpack.c.bf16 %v8096, %v8096
    %v8101 = vld [vmem:[#allocation7] sm:$0xff]
    %v8102 = vld [vmem:[#allocation7 + $0x8] sm:$0xff]
    %v8103 = vld [vmem:[#allocation7 + $0x10] sm:$0xff]
    %v8104 = vld [vmem:[#allocation7 + $0x18] sm:$0xff]
    %v8105 = vld [vmem:[#allocation7 + $0x20] sm:$0xff]
    %v8106 = vld [vmem:[#allocation7 + $0x28] sm:$0xff]
    %v8107 = vld [vmem:[#allocation7 + $0x30] sm:$0xff]
    %v8108 = vld [vmem:[#allocation7 + $0x38] sm:$0xff]
    %v8109 = vld [vmem:[#allocation7 + $0x40] sm:$0xff]
    %v8110 = vld [vmem:[#allocation7 + $0x48] sm:$0xff]
    %v8111 = vld [vmem:[#allocation7 + $0x50] sm:$0xff]
    %v8112 = vld [vmem:[#allocation7 + $0x58] sm:$0xff]
    %v8113 = vld [vmem:[#allocation7 + $0x60] sm:$0xff]
    %v8114 = vld [vmem:[#allocation7 + $0x68] sm:$0xff]
    %v8115 = vld [vmem:[#allocation7 + $0x70] sm:$0xff]
    %v8116 = vld [vmem:[#allocation7 + $0x78] sm:$0xff]
    %v8117 = vld [vmem:[#allocation7 + $0x80] sm:$0xff]
    %v8118 = vld [vmem:[#allocation7 + $0x88] sm:$0xff]
    %v8119 = vld [vmem:[#allocation7 + $0x90] sm:$0xff]
    %v8120 = vld [vmem:[#allocation7 + $0x98] sm:$0xff]
    %v8121 = vld [vmem:[#allocation7 + $0xa0] sm:$0xff]
    %v8122 = vld [vmem:[#allocation7 + $0xa8] sm:$0xff]
    %v8123 = vld [vmem:[#allocation7 + $0xb0] sm:$0xff]
    %v8124 = vld [vmem:[#allocation7 + $0xb8] sm:$0xff]
    %v8125 = vld [vmem:[#allocation7 + $0xc0] sm:$0xff]
    %v8126 = vld [vmem:[#allocation7 + $0xc8] sm:$0xff]
    %v8127 = vld [vmem:[#allocation7 + $0xd0] sm:$0xff]
    %v8128 = vld [vmem:[#allocation7 + $0xd8] sm:$0xff]
    %v8129 = vld [vmem:[#allocation7 + $0xe0] sm:$0xff]
    %v8130 = vld [vmem:[#allocation7 + $0xe8] sm:$0xff]
    %v8131 = vld [vmem:[#allocation7 + $0xf0] sm:$0xff]
    %v8132 = vld [vmem:[#allocation7 + $0xf8] sm:$0xff]
    %v8133 = vld [vmem:[#allocation7 + $0x100] sm:$0xff]
    %v8134 = vld [vmem:[#allocation7 + $0x108] sm:$0xff]
    %v8135 = vld [vmem:[#allocation7 + $0x110] sm:$0xff]
    %v8136 = vld [vmem:[#allocation7 + $0x118] sm:$0xff]
    %v8137 = vld [vmem:[#allocation7 + $0x120] sm:$0xff]
    %v8138 = vld [vmem:[#allocation7 + $0x128] sm:$0xff]
    %v8139 = vld [vmem:[#allocation7 + $0x130] sm:$0xff]
    %v8140 = vld [vmem:[#allocation7 + $0x138] sm:$0xff]
    %v8141 = vld [vmem:[#allocation7 + $0x140] sm:$0xff]
    %v8142 = vld [vmem:[#allocation7 + $0x148] sm:$0xff]
    %v8143 = vld [vmem:[#allocation7 + $0x150] sm:$0xff]
    %v8144 = vld [vmem:[#allocation7 + $0x158] sm:$0xff]
    %v8145 = vld [vmem:[#allocation7 + $0x160] sm:$0xff]
    %v8146 = vld [vmem:[#allocation7 + $0x168] sm:$0xff]
    %v8147 = vld [vmem:[#allocation7 + $0x170] sm:$0xff]
    %v8148 = vld [vmem:[#allocation7 + $0x178] sm:$0xff]
    %v8149 = vld [vmem:[#allocation7 + $0x180] sm:$0xff]
    %v8150 = vld [vmem:[#allocation7 + $0x188] sm:$0xff]
    %v8151 = vld [vmem:[#allocation7 + $0x190] sm:$0xff]
    %v8152 = vld [vmem:[#allocation7 + $0x198] sm:$0xff]
    %v8153 = vld [vmem:[#allocation7 + $0x1a0] sm:$0xff]
    %v8154 = vld [vmem:[#allocation7 + $0x1a8] sm:$0xff]
    %v8155 = vld [vmem:[#allocation7 + $0x1b0] sm:$0xff]
    %v8156 = vld [vmem:[#allocation7 + $0x1b8] sm:$0xff]
    %v8157 = vld [vmem:[#allocation7 + $0x1c0] sm:$0xff]
    %v8158 = vld [vmem:[#allocation7 + $0x1c8] sm:$0xff]
    %v8159 = vld [vmem:[#allocation7 + $0x1d0] sm:$0xff]
    %v8160 = vld [vmem:[#allocation7 + $0x1d8] sm:$0xff]
    %v8161 = vld [vmem:[#allocation7 + $0x1e0] sm:$0xff]
    %v8162 = vld [vmem:[#allocation7 + $0x1e8] sm:$0xff]
    %v8163 = vld [vmem:[#allocation7 + $0x1f0] sm:$0xff]
    %v8164 = vld [vmem:[#allocation7 + $0x1f8] sm:$0xff]
    %v8165 = vld [vmem:[#allocation7 + $0x200] sm:$0xff]
    %v8166 = vld [vmem:[#allocation7 + $0x208] sm:$0xff]
    %v8167 = vld [vmem:[#allocation7 + $0x210] sm:$0xff]
    %v8168 = vld [vmem:[#allocation7 + $0x218] sm:$0xff]
    %v8169 = vld [vmem:[#allocation7 + $0x220] sm:$0xff]
    %v8170 = vld [vmem:[#allocation7 + $0x228] sm:$0xff]
    %v8171 = vld [vmem:[#allocation7 + $0x230] sm:$0xff]
    %v8172 = vld [vmem:[#allocation7 + $0x238] sm:$0xff]
    %v8173 = vld [vmem:[#allocation7 + $0x240] sm:$0xff]
    %v8174 = vld [vmem:[#allocation7 + $0x248] sm:$0xff]
    %v8175 = vld [vmem:[#allocation7 + $0x250] sm:$0xff]
    %v8176 = vld [vmem:[#allocation7 + $0x258] sm:$0xff]
    %v8177 = vld [vmem:[#allocation7 + $0x260] sm:$0xff]
    %v8178 = vld [vmem:[#allocation7 + $0x268] sm:$0xff]
    %v8179 = vld [vmem:[#allocation7 + $0x270] sm:$0xff]
    %v8180 = vld [vmem:[#allocation7 + $0x278] sm:$0xff]
    %v8181 = vld [vmem:[#allocation7 + $0x280] sm:$0xff]
    %v8182 = vld [vmem:[#allocation7 + $0x288] sm:$0xff]
    %v8183 = vld [vmem:[#allocation7 + $0x290] sm:$0xff]
    %v8184 = vld [vmem:[#allocation7 + $0x298] sm:$0xff]
    %v8185 = vld [vmem:[#allocation7 + $0x2a0] sm:$0xff]
    %v8186 = vld [vmem:[#allocation7 + $0x2a8] sm:$0xff]
    %v8187 = vld [vmem:[#allocation7 + $0x2b0] sm:$0xff]
    %v8188 = vld [vmem:[#allocation7 + $0x2b8] sm:$0xff]
    %v8189 = vld [vmem:[#allocation7 + $0x2c0] sm:$0xff]
    %v8190 = vld [vmem:[#allocation7 + $0x2c8] sm:$0xff]
    %v8191 = vld [vmem:[#allocation7 + $0x2d0] sm:$0xff]
    %v8192 = vld [vmem:[#allocation7 + $0x2d8] sm:$0xff]
    %v8193 = vld [vmem:[#allocation7 + $0x2e0] sm:$0xff]
    %v8194 = vld [vmem:[#allocation7 + $0x2e8] sm:$0xff]
    %v8195 = vld [vmem:[#allocation7 + $0x2f0] sm:$0xff]
    %v8196 = vld [vmem:[#allocation7 + $0x2f8] sm:$0xff]
    %v8197 = vld [vmem:[#allocation7 + $0x300] sm:$0xff]
    %v8198 = vld [vmem:[#allocation7 + $0x308] sm:$0xff]
    %v8199 = vld [vmem:[#allocation7 + $0x310] sm:$0xff]
    %v8200 = vld [vmem:[#allocation7 + $0x318] sm:$0xff]
    %v8201 = vld [vmem:[#allocation7 + $0x320] sm:$0xff]
    %v8202 = vld [vmem:[#allocation7 + $0x328] sm:$0xff]
    %v8203 = vld [vmem:[#allocation7 + $0x330] sm:$0xff]
    %v8204 = vld [vmem:[#allocation7 + $0x338] sm:$0xff]
    %v8205 = vld [vmem:[#allocation7 + $0x340] sm:$0xff]
    %v8206 = vld [vmem:[#allocation7 + $0x348] sm:$0xff]
    %v8207 = vld [vmem:[#allocation7 + $0x350] sm:$0xff]
    %v8208 = vld [vmem:[#allocation7 + $0x358] sm:$0xff]
    %v8209 = vld [vmem:[#allocation7 + $0x360] sm:$0xff]
    %v8210 = vld [vmem:[#allocation7 + $0x368] sm:$0xff]
    %v8211 = vld [vmem:[#allocation7 + $0x370] sm:$0xff]
    %v8212 = vld [vmem:[#allocation7 + $0x378] sm:$0xff]
    %v8213 = vld [vmem:[#allocation7 + $0x380] sm:$0xff]
    %v8214 = vld [vmem:[#allocation7 + $0x388] sm:$0xff]
    %v8215 = vld [vmem:[#allocation7 + $0x390] sm:$0xff]
    %v8216 = vld [vmem:[#allocation7 + $0x398] sm:$0xff]
    %v8217 = vld [vmem:[#allocation7 + $0x3a0] sm:$0xff]
    %v8218 = vld [vmem:[#allocation7 + $0x3a8] sm:$0xff]
    %v8219 = vld [vmem:[#allocation7 + $0x3b0] sm:$0xff]
    %v8220 = vld [vmem:[#allocation7 + $0x3b8] sm:$0xff]
    %v8221 = vld [vmem:[#allocation7 + $0x3c0] sm:$0xff]
    %v8222 = vld [vmem:[#allocation7 + $0x3c8] sm:$0xff]
    %v8223 = vld [vmem:[#allocation7 + $0x3d0] sm:$0xff]
    %v8224 = vld [vmem:[#allocation7 + $0x3d8] sm:$0xff]
    %v8225 = vld [vmem:[#allocation7 + $0x3e0] sm:$0xff]
    %v8226 = vld [vmem:[#allocation7 + $0x3e8] sm:$0xff]
    %v8227 = vld [vmem:[#allocation7 + $0x3f0] sm:$0xff]
    %v8228 = vld [vmem:[#allocation7 + $0x3f8] sm:$0xff]
    %v8229 = vld [vmem:[#allocation7 + $0x400] sm:$0xff]
    %v8230 = vld [vmem:[#allocation7 + $0x408] sm:$0xff]
    %v8231 = vld [vmem:[#allocation7 + $0x410] sm:$0xff]
    %v8232 = vld [vmem:[#allocation7 + $0x418] sm:$0xff]
    %v8233 = vld [vmem:[#allocation7 + $0x420] sm:$0xff]
    %v8234 = vld [vmem:[#allocation7 + $0x428] sm:$0xff]
    %v8235 = vld [vmem:[#allocation7 + $0x430] sm:$0xff]
    %v8236 = vld [vmem:[#allocation7 + $0x438] sm:$0xff]
    %v8237 = vld [vmem:[#allocation7 + $0x440] sm:$0xff]
    %v8238 = vld [vmem:[#allocation7 + $0x448] sm:$0xff]
    %v8239 = vld [vmem:[#allocation7 + $0x450] sm:$0xff]
    %v8240 = vld [vmem:[#allocation7 + $0x458] sm:$0xff]
    %v8241 = vld [vmem:[#allocation7 + $0x460] sm:$0xff]
    %v8242 = vld [vmem:[#allocation7 + $0x468] sm:$0xff]
    %v8243 = vld [vmem:[#allocation7 + $0x470] sm:$0xff]
    %v8244 = vld [vmem:[#allocation7 + $0x478] sm:$0xff]
    %v8245 = vld [vmem:[#allocation7 + $0x480] sm:$0xff]
    %v8246 = vld [vmem:[#allocation7 + $0x488] sm:$0xff]
    %v8247 = vld [vmem:[#allocation7 + $0x490] sm:$0xff]
    %v8248 = vld [vmem:[#allocation7 + $0x498] sm:$0xff]
    %v8249 = vld [vmem:[#allocation7 + $0x4a0] sm:$0xff]
    %v8250 = vld [vmem:[#allocation7 + $0x4a8] sm:$0xff]
    %v8251 = vld [vmem:[#allocation7 + $0x4b0] sm:$0xff]
    %v8252 = vld [vmem:[#allocation7 + $0x4b8] sm:$0xff]
    %v8253 = vld [vmem:[#allocation7 + $0x4c0] sm:$0xff]
    %v8254 = vld [vmem:[#allocation7 + $0x4c8] sm:$0xff]
    %v8255 = vld [vmem:[#allocation7 + $0x4d0] sm:$0xff]
    %v8256 = vld [vmem:[#allocation7 + $0x4d8] sm:$0xff]
    %v8257 = vld [vmem:[#allocation7 + $0x4e0] sm:$0xff]
    %v8258 = vld [vmem:[#allocation7 + $0x4e8] sm:$0xff]
    %v8259 = vld [vmem:[#allocation7 + $0x4f0] sm:$0xff]
    %v8260 = vld [vmem:[#allocation7 + $0x4f8] sm:$0xff]
    %v8261 = vld [vmem:[#allocation7 + $0x500] sm:$0xff]
    %v8262 = vld [vmem:[#allocation7 + $0x508] sm:$0xff]
    %v8263 = vld [vmem:[#allocation7 + $0x510] sm:$0xff]
    %v8264 = vld [vmem:[#allocation7 + $0x518] sm:$0xff]
    %v8265 = vld [vmem:[#allocation7 + $0x520] sm:$0xff]
    %v8266 = vld [vmem:[#allocation7 + $0x528] sm:$0xff]
    %v8267 = vld [vmem:[#allocation7 + $0x530] sm:$0xff]
    %v8268 = vld [vmem:[#allocation7 + $0x538] sm:$0xff]
    %v8269 = vld [vmem:[#allocation7 + $0x540] sm:$0xff]
    %v8270 = vld [vmem:[#allocation7 + $0x548] sm:$0xff]
    %v8271 = vld [vmem:[#allocation7 + $0x550] sm:$0xff]
    %v8272 = vld [vmem:[#allocation7 + $0x558] sm:$0xff]
    %v8273 = vld [vmem:[#allocation7 + $0x560] sm:$0xff]
    %v8274 = vld [vmem:[#allocation7 + $0x568] sm:$0xff]
    %v8275 = vld [vmem:[#allocation7 + $0x570] sm:$0xff]
    %v8276 = vld [vmem:[#allocation7 + $0x578] sm:$0xff]
    %v8277 = vld [vmem:[#allocation7 + $0x580] sm:$0xff]
    %v8278 = vld [vmem:[#allocation7 + $0x588] sm:$0xff]
    %v8279 = vld [vmem:[#allocation7 + $0x590] sm:$0xff]
    %v8280 = vld [vmem:[#allocation7 + $0x598] sm:$0xff]
    %v8281 = vld [vmem:[#allocation7 + $0x5a0] sm:$0xff]
    %v8282 = vld [vmem:[#allocation7 + $0x5a8] sm:$0xff]
    %v8283 = vld [vmem:[#allocation7 + $0x5b0] sm:$0xff]
    %v8284 = vld [vmem:[#allocation7 + $0x5b8] sm:$0xff]
    %v8285 = vld [vmem:[#allocation7 + $0x5c0] sm:$0xff]
    %v8286 = vld [vmem:[#allocation7 + $0x5c8] sm:$0xff]
    %v8287 = vld [vmem:[#allocation7 + $0x5d0] sm:$0xff]
    %v8288 = vld [vmem:[#allocation7 + $0x5d8] sm:$0xff]
    %v8289 = vld [vmem:[#allocation7 + $0x5e0] sm:$0xff]
    %v8290 = vld [vmem:[#allocation7 + $0x5e8] sm:$0xff]
    %v8291 = vld [vmem:[#allocation7 + $0x5f0] sm:$0xff]
    %v8292 = vld [vmem:[#allocation7 + $0x5f8] sm:$0xff]
    %v8293 = vld [vmem:[#allocation7 + $0x600] sm:$0xff]
    %v8294 = vld [vmem:[#allocation7 + $0x608] sm:$0xff]
    %v8295 = vld [vmem:[#allocation7 + $0x610] sm:$0xff]
    %v8296 = vld [vmem:[#allocation7 + $0x618] sm:$0xff]
    %v8297 = vld [vmem:[#allocation7 + $0x620] sm:$0xff]
    %v8298 = vld [vmem:[#allocation7 + $0x628] sm:$0xff]
    %v8299 = vld [vmem:[#allocation7 + $0x630] sm:$0xff]
    %v8300 = vld [vmem:[#allocation7 + $0x638] sm:$0xff]
    %v8301 = vld [vmem:[#allocation7 + $0x640] sm:$0xff]
    %v8302 = vld [vmem:[#allocation7 + $0x648] sm:$0xff]
    %v8303 = vld [vmem:[#allocation7 + $0x650] sm:$0xff]
    %v8304 = vld [vmem:[#allocation7 + $0x658] sm:$0xff]
    %v8305 = vld [vmem:[#allocation7 + $0x660] sm:$0xff]
    %v8306 = vld [vmem:[#allocation7 + $0x668] sm:$0xff]
    %v8307 = vld [vmem:[#allocation7 + $0x670] sm:$0xff]
    %v8308 = vld [vmem:[#allocation7 + $0x678] sm:$0xff]
    %v8309 = vld [vmem:[#allocation7 + $0x680] sm:$0xff]
    %v8310 = vld [vmem:[#allocation7 + $0x688] sm:$0xff]
    %v8311 = vld [vmem:[#allocation7 + $0x690] sm:$0xff]
    %v8312 = vld [vmem:[#allocation7 + $0x698] sm:$0xff]
    %v8313 = vld [vmem:[#allocation7 + $0x6a0] sm:$0xff]
    %v8314 = vld [vmem:[#allocation7 + $0x6a8] sm:$0xff]
    %v8315 = vld [vmem:[#allocation7 + $0x6b0] sm:$0xff]
    %v8316 = vld [vmem:[#allocation7 + $0x6b8] sm:$0xff]
    %v8317 = vld [vmem:[#allocation7 + $0x6c0] sm:$0xff]
    %v8318 = vld [vmem:[#allocation7 + $0x6c8] sm:$0xff]
    %v8319 = vld [vmem:[#allocation7 + $0x6d0] sm:$0xff]
    %v8320 = vld [vmem:[#allocation7 + $0x6d8] sm:$0xff]
    %v8321 = vld [vmem:[#allocation7 + $0x6e0] sm:$0xff]
    %v8322 = vld [vmem:[#allocation7 + $0x6e8] sm:$0xff]
    %v8323 = vld [vmem:[#allocation7 + $0x6f0] sm:$0xff]
    %v8324 = vld [vmem:[#allocation7 + $0x6f8] sm:$0xff]
    %v8325 = vld [vmem:[#allocation7 + $0x700] sm:$0xff]
    %v8326 = vld [vmem:[#allocation7 + $0x708] sm:$0xff]
    %v8327 = vld [vmem:[#allocation7 + $0x710] sm:$0xff]
    %v8328 = vld [vmem:[#allocation7 + $0x718] sm:$0xff]
    %v8329 = vld [vmem:[#allocation7 + $0x720] sm:$0xff]
    %v8330 = vld [vmem:[#allocation7 + $0x728] sm:$0xff]
    %v8331 = vld [vmem:[#allocation7 + $0x730] sm:$0xff]
    %v8332 = vld [vmem:[#allocation7 + $0x738] sm:$0xff]
    %v8333 = vld [vmem:[#allocation7 + $0x740] sm:$0xff]
    %v8334 = vld [vmem:[#allocation7 + $0x748] sm:$0xff]
    %v8335 = vld [vmem:[#allocation7 + $0x750] sm:$0xff]
    %v8336 = vld [vmem:[#allocation7 + $0x758] sm:$0xff]
    %v8337 = vld [vmem:[#allocation7 + $0x760] sm:$0xff]
    %v8338 = vld [vmem:[#allocation7 + $0x768] sm:$0xff]
    %v8339 = vld [vmem:[#allocation7 + $0x770] sm:$0xff]
    %v8340 = vld [vmem:[#allocation7 + $0x778] sm:$0xff]
    %v8341 = vld [vmem:[#allocation7 + $0x780] sm:$0xff]
    %v8342 = vld [vmem:[#allocation7 + $0x788] sm:$0xff]
    %v8343 = vld [vmem:[#allocation7 + $0x790] sm:$0xff]
    %v8344 = vld [vmem:[#allocation7 + $0x798] sm:$0xff]
    %v8345 = vld [vmem:[#allocation7 + $0x7a0] sm:$0xff]
    %v8346 = vld [vmem:[#allocation7 + $0x7a8] sm:$0xff]
    %v8347 = vld [vmem:[#allocation7 + $0x7b0] sm:$0xff]
    %v8348 = vld [vmem:[#allocation7 + $0x7b8] sm:$0xff]
    %v8349 = vld [vmem:[#allocation7 + $0x7c0] sm:$0xff]
    %v8350 = vld [vmem:[#allocation7 + $0x7c8] sm:$0xff]
    %v8351 = vld [vmem:[#allocation7 + $0x7d0] sm:$0xff]
    %v8352 = vld [vmem:[#allocation7 + $0x7d8] sm:$0xff]
    %v8353 = vld [vmem:[#allocation7 + $0x7e0] sm:$0xff]
    %v8354 = vld [vmem:[#allocation7 + $0x7e8] sm:$0xff]
    %v8355 = vld [vmem:[#allocation7 + $0x7f0] sm:$0xff]
    %v8356 = vld [vmem:[#allocation7 + $0x7f8] sm:$0xff]
    %v8357 = vld [vmem:[#allocation8] sm:$0xff]
    %v8359 = vperm.slane %v8357, 0
    %v8360 = vperm.slane %v8357, 1
    %v8361 = vperm.slane %v8357, 2
    %v8362 = vperm.slane %v8357, 3
    %v8363 = vperm.slane %v8357, 4
    %v8364 = vperm.slane %v8357, 5
    %v8365 = vperm.slane %v8357, 6
    %v8366 = vperm.slane %v8357, 7
    %v8631 = vunpack.c.l.b16 %v8101
    %v8632 = vunpack.c.h.b16 %v8101
    %v8633 = vunpack.c.l.b16 %v8102
    %v8634 = vunpack.c.h.b16 %v8102
    %v8635 = vunpack.c.l.b16 %v8103
    %v8636 = vunpack.c.h.b16 %v8103
    %v8637 = vunpack.c.l.b16 %v8104
    %v8638 = vunpack.c.h.b16 %v8104
    %v8639 = vunpack.c.l.b16 %v8105
    %v8640 = vunpack.c.h.b16 %v8105
    %v8641 = vunpack.c.l.b16 %v8106
    %v8642 = vunpack.c.h.b16 %v8106
    %v8643 = vunpack.c.l.b16 %v8107
    %v8644 = vunpack.c.h.b16 %v8107
    %v8645 = vunpack.c.l.b16 %v8108
    %v8646 = vunpack.c.h.b16 %v8108
    %v8647 = vunpack.c.l.b16 %v8109
    %v8648 = vunpack.c.h.b16 %v8109
    %v8649 = vunpack.c.l.b16 %v8110
    %v8650 = vunpack.c.h.b16 %v8110
    %v8651 = vunpack.c.l.b16 %v8111
    %v8652 = vunpack.c.h.b16 %v8111
    %v8653 = vunpack.c.l.b16 %v8112
    %v8654 = vunpack.c.h.b16 %v8112
    %v8655 = vunpack.c.l.b16 %v8113
    %v8656 = vunpack.c.h.b16 %v8113
    %v8657 = vunpack.c.l.b16 %v8114
    %v8658 = vunpack.c.h.b16 %v8114
    %v8659 = vunpack.c.l.b16 %v8115
    %v8660 = vunpack.c.h.b16 %v8115
    %v8661 = vunpack.c.l.b16 %v8116
    %v8662 = vunpack.c.h.b16 %v8116
    %v8663 = vunpack.c.l.b16 %v8117
    %v8664 = vunpack.c.h.b16 %v8117
    %v8665 = vunpack.c.l.b16 %v8118
    %v8666 = vunpack.c.h.b16 %v8118
    %v8667 = vunpack.c.l.b16 %v8119
    %v8668 = vunpack.c.h.b16 %v8119
    %v8669 = vunpack.c.l.b16 %v8120
    %v8670 = vunpack.c.h.b16 %v8120
    %v8671 = vunpack.c.l.b16 %v8121
    %v8672 = vunpack.c.h.b16 %v8121
    %v8673 = vunpack.c.l.b16 %v8122
    %v8674 = vunpack.c.h.b16 %v8122
    %v8675 = vunpack.c.l.b16 %v8123
    %v8676 = vunpack.c.h.b16 %v8123
    %v8677 = vunpack.c.l.b16 %v8124
    %v8678 = vunpack.c.h.b16 %v8124
    %v8679 = vunpack.c.l.b16 %v8125
    %v8680 = vunpack.c.h.b16 %v8125
    %v8681 = vunpack.c.l.b16 %v8126
    %v8682 = vunpack.c.h.b16 %v8126
    %v8683 = vunpack.c.l.b16 %v8127
    %v8684 = vunpack.c.h.b16 %v8127
    %v8685 = vunpack.c.l.b16 %v8128
    %v8686 = vunpack.c.h.b16 %v8128
    %v8687 = vunpack.c.l.b16 %v8129
    %v8688 = vunpack.c.h.b16 %v8129
    %v8689 = vunpack.c.l.b16 %v8130
    %v8690 = vunpack.c.h.b16 %v8130
    %v8691 = vunpack.c.l.b16 %v8131
    %v8692 = vunpack.c.h.b16 %v8131
    %v8693 = vunpack.c.l.b16 %v8132
    %v8694 = vunpack.c.h.b16 %v8132
    %v8695 = vunpack.c.l.b16 %v8133
    %v8696 = vunpack.c.h.b16 %v8133
    %v8697 = vunpack.c.l.b16 %v8134
    %v8698 = vunpack.c.h.b16 %v8134
    %v8699 = vunpack.c.l.b16 %v8135
    %v8700 = vunpack.c.h.b16 %v8135
    %v8701 = vunpack.c.l.b16 %v8136
    %v8702 = vunpack.c.h.b16 %v8136
    %v8703 = vunpack.c.l.b16 %v8137
    %v8704 = vunpack.c.h.b16 %v8137
    %v8705 = vunpack.c.l.b16 %v8138
    %v8706 = vunpack.c.h.b16 %v8138
    %v8707 = vunpack.c.l.b16 %v8139
    %v8708 = vunpack.c.h.b16 %v8139
    %v8709 = vunpack.c.l.b16 %v8140
    %v8710 = vunpack.c.h.b16 %v8140
    %v8711 = vunpack.c.l.b16 %v8141
    %v8712 = vunpack.c.h.b16 %v8141
    %v8713 = vunpack.c.l.b16 %v8142
    %v8714 = vunpack.c.h.b16 %v8142
    %v8715 = vunpack.c.l.b16 %v8143
    %v8716 = vunpack.c.h.b16 %v8143
    %v8717 = vunpack.c.l.b16 %v8144
    %v8718 = vunpack.c.h.b16 %v8144
    %v8719 = vunpack.c.l.b16 %v8145
    %v8720 = vunpack.c.h.b16 %v8145
    %v8721 = vunpack.c.l.b16 %v8146
    %v8722 = vunpack.c.h.b16 %v8146
    %v8723 = vunpack.c.l.b16 %v8147
    %v8724 = vunpack.c.h.b16 %v8147
    %v8725 = vunpack.c.l.b16 %v8148
    %v8726 = vunpack.c.h.b16 %v8148
    %v8727 = vunpack.c.l.b16 %v8149
    %v8728 = vunpack.c.h.b16 %v8149
    %v8729 = vunpack.c.l.b16 %v8150
    %v8730 = vunpack.c.h.b16 %v8150
    %v8731 = vunpack.c.l.b16 %v8151
    %v8732 = vunpack.c.h.b16 %v8151
    %v8733 = vunpack.c.l.b16 %v8152
    %v8734 = vunpack.c.h.b16 %v8152
    %v8735 = vunpack.c.l.b16 %v8153
    %v8736 = vunpack.c.h.b16 %v8153
    %v8737 = vunpack.c.l.b16 %v8154
    %v8738 = vunpack.c.h.b16 %v8154
    %v8739 = vunpack.c.l.b16 %v8155
    %v8740 = vunpack.c.h.b16 %v8155
    %v8741 = vunpack.c.l.b16 %v8156
    %v8742 = vunpack.c.h.b16 %v8156
    %v8743 = vunpack.c.l.b16 %v8157
    %v8744 = vunpack.c.h.b16 %v8157
    %v8745 = vunpack.c.l.b16 %v8158
    %v8746 = vunpack.c.h.b16 %v8158
    %v8747 = vunpack.c.l.b16 %v8159
    %v8748 = vunpack.c.h.b16 %v8159
    %v8749 = vunpack.c.l.b16 %v8160
    %v8750 = vunpack.c.h.b16 %v8160
    %v8751 = vunpack.c.l.b16 %v8161
    %v8752 = vunpack.c.h.b16 %v8161
    %v8753 = vunpack.c.l.b16 %v8162
    %v8754 = vunpack.c.h.b16 %v8162
    %v8755 = vunpack.c.l.b16 %v8163
    %v8756 = vunpack.c.h.b16 %v8163
    %v8757 = vunpack.c.l.b16 %v8164
    %v8758 = vunpack.c.h.b16 %v8164
    %v8759 = vunpack.c.l.b16 %v8165
    %v8760 = vunpack.c.h.b16 %v8165
    %v8761 = vunpack.c.l.b16 %v8166
    %v8762 = vunpack.c.h.b16 %v8166
    %v8763 = vunpack.c.l.b16 %v8167
    %v8764 = vunpack.c.h.b16 %v8167
    %v8765 = vunpack.c.l.b16 %v8168
    %v8766 = vunpack.c.h.b16 %v8168
    %v8767 = vunpack.c.l.b16 %v8169
    %v8768 = vunpack.c.h.b16 %v8169
    %v8769 = vunpack.c.l.b16 %v8170
    %v8770 = vunpack.c.h.b16 %v8170
    %v8771 = vunpack.c.l.b16 %v8171
    %v8772 = vunpack.c.h.b16 %v8171
    %v8773 = vunpack.c.l.b16 %v8172
    %v8774 = vunpack.c.h.b16 %v8172
    %v8775 = vunpack.c.l.b16 %v8173
    %v8776 = vunpack.c.h.b16 %v8173
    %v8777 = vunpack.c.l.b16 %v8174
    %v8778 = vunpack.c.h.b16 %v8174
    %v8779 = vunpack.c.l.b16 %v8175
    %v8780 = vunpack.c.h.b16 %v8175
    %v8781 = vunpack.c.l.b16 %v8176
    %v8782 = vunpack.c.h.b16 %v8176
    %v8783 = vunpack.c.l.b16 %v8177
    %v8784 = vunpack.c.h.b16 %v8177
    %v8785 = vunpack.c.l.b16 %v8178
    %v8786 = vunpack.c.h.b16 %v8178
    %v8787 = vunpack.c.l.b16 %v8179
    %v8788 = vunpack.c.h.b16 %v8179
    %v8789 = vunpack.c.l.b16 %v8180
    %v8790 = vunpack.c.h.b16 %v8180
    %v8791 = vunpack.c.l.b16 %v8181
    %v8792 = vunpack.c.h.b16 %v8181
    %v8793 = vunpack.c.l.b16 %v8182
    %v8794 = vunpack.c.h.b16 %v8182
    %v8795 = vunpack.c.l.b16 %v8183
    %v8796 = vunpack.c.h.b16 %v8183
    %v8797 = vunpack.c.l.b16 %v8184
    %v8798 = vunpack.c.h.b16 %v8184
    %v8799 = vunpack.c.l.b16 %v8185
    %v8800 = vunpack.c.h.b16 %v8185
    %v8801 = vunpack.c.l.b16 %v8186
    %v8802 = vunpack.c.h.b16 %v8186
    %v8803 = vunpack.c.l.b16 %v8187
    %v8804 = vunpack.c.h.b16 %v8187
    %v8805 = vunpack.c.l.b16 %v8188
    %v8806 = vunpack.c.h.b16 %v8188
    %v8807 = vunpack.c.l.b16 %v8189
    %v8808 = vunpack.c.h.b16 %v8189
    %v8809 = vunpack.c.l.b16 %v8190
    %v8810 = vunpack.c.h.b16 %v8190
    %v8811 = vunpack.c.l.b16 %v8191
    %v8812 = vunpack.c.h.b16 %v8191
    %v8813 = vunpack.c.l.b16 %v8192
    %v8814 = vunpack.c.h.b16 %v8192
    %v8815 = vunpack.c.l.b16 %v8193
    %v8816 = vunpack.c.h.b16 %v8193
    %v8817 = vunpack.c.l.b16 %v8194
    %v8818 = vunpack.c.h.b16 %v8194
    %v8819 = vunpack.c.l.b16 %v8195
    %v8820 = vunpack.c.h.b16 %v8195
    %v8821 = vunpack.c.l.b16 %v8196
    %v8822 = vunpack.c.h.b16 %v8196
    %v8823 = vunpack.c.l.b16 %v8197
    %v8824 = vunpack.c.h.b16 %v8197
    %v8825 = vunpack.c.l.b16 %v8198
    %v8826 = vunpack.c.h.b16 %v8198
    %v8827 = vunpack.c.l.b16 %v8199
    %v8828 = vunpack.c.h.b16 %v8199
    %v8829 = vunpack.c.l.b16 %v8200
    %v8830 = vunpack.c.h.b16 %v8200
    %v8831 = vunpack.c.l.b16 %v8201
    %v8832 = vunpack.c.h.b16 %v8201
    %v8833 = vunpack.c.l.b16 %v8202
    %v8834 = vunpack.c.h.b16 %v8202
    %v8835 = vunpack.c.l.b16 %v8203
    %v8836 = vunpack.c.h.b16 %v8203
    %v8837 = vunpack.c.l.b16 %v8204
    %v8838 = vunpack.c.h.b16 %v8204
    %v8839 = vunpack.c.l.b16 %v8205
    %v8840 = vunpack.c.h.b16 %v8205
    %v8841 = vunpack.c.l.b16 %v8206
    %v8842 = vunpack.c.h.b16 %v8206
    %v8843 = vunpack.c.l.b16 %v8207
    %v8844 = vunpack.c.h.b16 %v8207
    %v8845 = vunpack.c.l.b16 %v8208
    %v8846 = vunpack.c.h.b16 %v8208
    %v8847 = vunpack.c.l.b16 %v8209
    %v8848 = vunpack.c.h.b16 %v8209
    %v8849 = vunpack.c.l.b16 %v8210
    %v8850 = vunpack.c.h.b16 %v8210
    %v8851 = vunpack.c.l.b16 %v8211
    %v8852 = vunpack.c.h.b16 %v8211
    %v8853 = vunpack.c.l.b16 %v8212
    %v8854 = vunpack.c.h.b16 %v8212
    %v8855 = vunpack.c.l.b16 %v8213
    %v8856 = vunpack.c.h.b16 %v8213
    %v8857 = vunpack.c.l.b16 %v8214
    %v8858 = vunpack.c.h.b16 %v8214
    %v8859 = vunpack.c.l.b16 %v8215
    %v8860 = vunpack.c.h.b16 %v8215
    %v8861 = vunpack.c.l.b16 %v8216
    %v8862 = vunpack.c.h.b16 %v8216
    %v8863 = vunpack.c.l.b16 %v8217
    %v8864 = vunpack.c.h.b16 %v8217
    %v8865 = vunpack.c.l.b16 %v8218
    %v8866 = vunpack.c.h.b16 %v8218
    %v8867 = vunpack.c.l.b16 %v8219
    %v8868 = vunpack.c.h.b16 %v8219
    %v8869 = vunpack.c.l.b16 %v8220
    %v8870 = vunpack.c.h.b16 %v8220
    %v8871 = vunpack.c.l.b16 %v8221
    %v8872 = vunpack.c.h.b16 %v8221
    %v8873 = vunpack.c.l.b16 %v8222
    %v8874 = vunpack.c.h.b16 %v8222
    %v8875 = vunpack.c.l.b16 %v8223
    %v8876 = vunpack.c.h.b16 %v8223
    %v8877 = vunpack.c.l.b16 %v8224
    %v8878 = vunpack.c.h.b16 %v8224
    %v8879 = vunpack.c.l.b16 %v8225
    %v8880 = vunpack.c.h.b16 %v8225
    %v8881 = vunpack.c.l.b16 %v8226
    %v8882 = vunpack.c.h.b16 %v8226
    %v8883 = vunpack.c.l.b16 %v8227
    %v8884 = vunpack.c.h.b16 %v8227
    %v8885 = vunpack.c.l.b16 %v8228
    %v8886 = vunpack.c.h.b16 %v8228
    %v8887 = vunpack.c.l.b16 %v8229
    %v8888 = vunpack.c.h.b16 %v8229
    %v8889 = vunpack.c.l.b16 %v8230
    %v8890 = vunpack.c.h.b16 %v8230
    %v8891 = vunpack.c.l.b16 %v8231
    %v8892 = vunpack.c.h.b16 %v8231
    %v8893 = vunpack.c.l.b16 %v8232
    %v8894 = vunpack.c.h.b16 %v8232
    %v8895 = vunpack.c.l.b16 %v8233
    %v8896 = vunpack.c.h.b16 %v8233
    %v8897 = vunpack.c.l.b16 %v8234
    %v8898 = vunpack.c.h.b16 %v8234
    %v8899 = vunpack.c.l.b16 %v8235
    %v8900 = vunpack.c.h.b16 %v8235
    %v8901 = vunpack.c.l.b16 %v8236
    %v8902 = vunpack.c.h.b16 %v8236
    %v8903 = vunpack.c.l.b16 %v8237
    %v8904 = vunpack.c.h.b16 %v8237
    %v8905 = vunpack.c.l.b16 %v8238
    %v8906 = vunpack.c.h.b16 %v8238
    %v8907 = vunpack.c.l.b16 %v8239
    %v8908 = vunpack.c.h.b16 %v8239
    %v8909 = vunpack.c.l.b16 %v8240
    %v8910 = vunpack.c.h.b16 %v8240
    %v8911 = vunpack.c.l.b16 %v8241
    %v8912 = vunpack.c.h.b16 %v8241
    %v8913 = vunpack.c.l.b16 %v8242
    %v8914 = vunpack.c.h.b16 %v8242
    %v8915 = vunpack.c.l.b16 %v8243
    %v8916 = vunpack.c.h.b16 %v8243
    %v8917 = vunpack.c.l.b16 %v8244
    %v8918 = vunpack.c.h.b16 %v8244
    %v8919 = vunpack.c.l.b16 %v8245
    %v8920 = vunpack.c.h.b16 %v8245
    %v8921 = vunpack.c.l.b16 %v8246
    %v8922 = vunpack.c.h.b16 %v8246
    %v8923 = vunpack.c.l.b16 %v8247
    %v8924 = vunpack.c.h.b16 %v8247
    %v8925 = vunpack.c.l.b16 %v8248
    %v8926 = vunpack.c.h.b16 %v8248
    %v8927 = vunpack.c.l.b16 %v8249
    %v8928 = vunpack.c.h.b16 %v8249
    %v8929 = vunpack.c.l.b16 %v8250
    %v8930 = vunpack.c.h.b16 %v8250
    %v8931 = vunpack.c.l.b16 %v8251
    %v8932 = vunpack.c.h.b16 %v8251
    %v8933 = vunpack.c.l.b16 %v8252
    %v8934 = vunpack.c.h.b16 %v8252
    %v8935 = vunpack.c.l.b16 %v8253
    %v8936 = vunpack.c.h.b16 %v8253
    %v8937 = vunpack.c.l.b16 %v8254
    %v8938 = vunpack.c.h.b16 %v8254
    %v8939 = vunpack.c.l.b16 %v8255
    %v8940 = vunpack.c.h.b16 %v8255
    %v8941 = vunpack.c.l.b16 %v8256
    %v8942 = vunpack.c.h.b16 %v8256
    %v8943 = vunpack.c.l.b16 %v8257
    %v8944 = vunpack.c.h.b16 %v8257
    %v8945 = vunpack.c.l.b16 %v8258
    %v8946 = vunpack.c.h.b16 %v8258
    %v8947 = vunpack.c.l.b16 %v8259
    %v8948 = vunpack.c.h.b16 %v8259
    %v8949 = vunpack.c.l.b16 %v8260
    %v8950 = vunpack.c.h.b16 %v8260
    %v8951 = vunpack.c.l.b16 %v8261
    %v8952 = vunpack.c.h.b16 %v8261
    %v8953 = vunpack.c.l.b16 %v8262
    %v8954 = vunpack.c.h.b16 %v8262
    %v8955 = vunpack.c.l.b16 %v8263
    %v8956 = vunpack.c.h.b16 %v8263
    %v8957 = vunpack.c.l.b16 %v8264
    %v8958 = vunpack.c.h.b16 %v8264
    %v8959 = vunpack.c.l.b16 %v8265
    %v8960 = vunpack.c.h.b16 %v8265
    %v8961 = vunpack.c.l.b16 %v8266
    %v8962 = vunpack.c.h.b16 %v8266
    %v8963 = vunpack.c.l.b16 %v8267
    %v8964 = vunpack.c.h.b16 %v8267
    %v8965 = vunpack.c.l.b16 %v8268
    %v8966 = vunpack.c.h.b16 %v8268
    %v8967 = vunpack.c.l.b16 %v8269
    %v8968 = vunpack.c.h.b16 %v8269
    %v8969 = vunpack.c.l.b16 %v8270
    %v8970 = vunpack.c.h.b16 %v8270
    %v8971 = vunpack.c.l.b16 %v8271
    %v8972 = vunpack.c.h.b16 %v8271
    %v8973 = vunpack.c.l.b16 %v8272
    %v8974 = vunpack.c.h.b16 %v8272
    %v8975 = vunpack.c.l.b16 %v8273
    %v8976 = vunpack.c.h.b16 %v8273
    %v8977 = vunpack.c.l.b16 %v8274
    %v8978 = vunpack.c.h.b16 %v8274
    %v8979 = vunpack.c.l.b16 %v8275
    %v8980 = vunpack.c.h.b16 %v8275
    %v8981 = vunpack.c.l.b16 %v8276
    %v8982 = vunpack.c.h.b16 %v8276
    %v8983 = vunpack.c.l.b16 %v8277
    %v8984 = vunpack.c.h.b16 %v8277
    %v8985 = vunpack.c.l.b16 %v8278
    %v8986 = vunpack.c.h.b16 %v8278
    %v8987 = vunpack.c.l.b16 %v8279
    %v8988 = vunpack.c.h.b16 %v8279
    %v8989 = vunpack.c.l.b16 %v8280
    %v8990 = vunpack.c.h.b16 %v8280
    %v8991 = vunpack.c.l.b16 %v8281
    %v8992 = vunpack.c.h.b16 %v8281
    %v8993 = vunpack.c.l.b16 %v8282
    %v8994 = vunpack.c.h.b16 %v8282
    %v8995 = vunpack.c.l.b16 %v8283
    %v8996 = vunpack.c.h.b16 %v8283
    %v8997 = vunpack.c.l.b16 %v8284
    %v8998 = vunpack.c.h.b16 %v8284
    %v8999 = vunpack.c.l.b16 %v8285
    %v9000 = vunpack.c.h.b16 %v8285
    %v9001 = vunpack.c.l.b16 %v8286
    %v9002 = vunpack.c.h.b16 %v8286
    %v9003 = vunpack.c.l.b16 %v8287
    %v9004 = vunpack.c.h.b16 %v8287
    %v9005 = vunpack.c.l.b16 %v8288
    %v9006 = vunpack.c.h.b16 %v8288
    %v9007 = vunpack.c.l.b16 %v8289
    %v9008 = vunpack.c.h.b16 %v8289
    %v9009 = vunpack.c.l.b16 %v8290
    %v9010 = vunpack.c.h.b16 %v8290
    %v9011 = vunpack.c.l.b16 %v8291
    %v9012 = vunpack.c.h.b16 %v8291
    %v9013 = vunpack.c.l.b16 %v8292
    %v9014 = vunpack.c.h.b16 %v8292
    %v9015 = vunpack.c.l.b16 %v8293
    %v9016 = vunpack.c.h.b16 %v8293
    %v9017 = vunpack.c.l.b16 %v8294
    %v9018 = vunpack.c.h.b16 %v8294
    %v9019 = vunpack.c.l.b16 %v8295
    %v9020 = vunpack.c.h.b16 %v8295
    %v9021 = vunpack.c.l.b16 %v8296
    %v9022 = vunpack.c.h.b16 %v8296
    %v9023 = vunpack.c.l.b16 %v8297
    %v9024 = vunpack.c.h.b16 %v8297
    %v9025 = vunpack.c.l.b16 %v8298
    %v9026 = vunpack.c.h.b16 %v8298
    %v9027 = vunpack.c.l.b16 %v8299
    %v9028 = vunpack.c.h.b16 %v8299
    %v9029 = vunpack.c.l.b16 %v8300
    %v9030 = vunpack.c.h.b16 %v8300
    %v9031 = vunpack.c.l.b16 %v8301
    %v9032 = vunpack.c.h.b16 %v8301
    %v9033 = vunpack.c.l.b16 %v8302
    %v9034 = vunpack.c.h.b16 %v8302
    %v9035 = vunpack.c.l.b16 %v8303
    %v9036 = vunpack.c.h.b16 %v8303
    %v9037 = vunpack.c.l.b16 %v8304
    %v9038 = vunpack.c.h.b16 %v8304
    %v9039 = vunpack.c.l.b16 %v8305
    %v9040 = vunpack.c.h.b16 %v8305
    %v9041 = vunpack.c.l.b16 %v8306
    %v9042 = vunpack.c.h.b16 %v8306
    %v9043 = vunpack.c.l.b16 %v8307
    %v9044 = vunpack.c.h.b16 %v8307
    %v9045 = vunpack.c.l.b16 %v8308
    %v9046 = vunpack.c.h.b16 %v8308
    %v9047 = vunpack.c.l.b16 %v8309
    %v9048 = vunpack.c.h.b16 %v8309
    %v9049 = vunpack.c.l.b16 %v8310
    %v9050 = vunpack.c.h.b16 %v8310
    %v9051 = vunpack.c.l.b16 %v8311
    %v9052 = vunpack.c.h.b16 %v8311
    %v9053 = vunpack.c.l.b16 %v8312
    %v9054 = vunpack.c.h.b16 %v8312
    %v9055 = vunpack.c.l.b16 %v8313
    %v9056 = vunpack.c.h.b16 %v8313
    %v9057 = vunpack.c.l.b16 %v8314
    %v9058 = vunpack.c.h.b16 %v8314
    %v9059 = vunpack.c.l.b16 %v8315
    %v9060 = vunpack.c.h.b16 %v8315
    %v9061 = vunpack.c.l.b16 %v8316
    %v9062 = vunpack.c.h.b16 %v8316
    %v9063 = vunpack.c.l.b16 %v8317
    %v9064 = vunpack.c.h.b16 %v8317
    %v9065 = vunpack.c.l.b16 %v8318
    %v9066 = vunpack.c.h.b16 %v8318
    %v9067 = vunpack.c.l.b16 %v8319
    %v9068 = vunpack.c.h.b16 %v8319
    %v9069 = vunpack.c.l.b16 %v8320
    %v9070 = vunpack.c.h.b16 %v8320
    %v9071 = vunpack.c.l.b16 %v8321
    %v9072 = vunpack.c.h.b16 %v8321
    %v9073 = vunpack.c.l.b16 %v8322
    %v9074 = vunpack.c.h.b16 %v8322
    %v9075 = vunpack.c.l.b16 %v8323
    %v9076 = vunpack.c.h.b16 %v8323
    %v9077 = vunpack.c.l.b16 %v8324
    %v9078 = vunpack.c.h.b16 %v8324
    %v9079 = vunpack.c.l.b16 %v8325
    %v9080 = vunpack.c.h.b16 %v8325
    %v9081 = vunpack.c.l.b16 %v8326
    %v9082 = vunpack.c.h.b16 %v8326
    %v9083 = vunpack.c.l.b16 %v8327
    %v9084 = vunpack.c.h.b16 %v8327
    %v9085 = vunpack.c.l.b16 %v8328
    %v9086 = vunpack.c.h.b16 %v8328
    %v9087 = vunpack.c.l.b16 %v8329
    %v9088 = vunpack.c.h.b16 %v8329
    %v9089 = vunpack.c.l.b16 %v8330
    %v9090 = vunpack.c.h.b16 %v8330
    %v9091 = vunpack.c.l.b16 %v8331
    %v9092 = vunpack.c.h.b16 %v8331
    %v9093 = vunpack.c.l.b16 %v8332
    %v9094 = vunpack.c.h.b16 %v8332
    %v9095 = vunpack.c.l.b16 %v8333
    %v9096 = vunpack.c.h.b16 %v8333
    %v9097 = vunpack.c.l.b16 %v8334
    %v9098 = vunpack.c.h.b16 %v8334
    %v9099 = vunpack.c.l.b16 %v8335
    %v9100 = vunpack.c.h.b16 %v8335
    %v9101 = vunpack.c.l.b16 %v8336
    %v9102 = vunpack.c.h.b16 %v8336
    %v9103 = vunpack.c.l.b16 %v8337
    %v9104 = vunpack.c.h.b16 %v8337
    %v9105 = vunpack.c.l.b16 %v8338
    %v9106 = vunpack.c.h.b16 %v8338
    %v9107 = vunpack.c.l.b16 %v8339
    %v9108 = vunpack.c.h.b16 %v8339
    %v9109 = vunpack.c.l.b16 %v8340
    %v9110 = vunpack.c.h.b16 %v8340
    %v9111 = vunpack.c.l.b16 %v8341
    %v9112 = vunpack.c.h.b16 %v8341
    %v9113 = vunpack.c.l.b16 %v8342
    %v9114 = vunpack.c.h.b16 %v8342
    %v9115 = vunpack.c.l.b16 %v8343
    %v9116 = vunpack.c.h.b16 %v8343
    %v9117 = vunpack.c.l.b16 %v8344
    %v9118 = vunpack.c.h.b16 %v8344
    %v9119 = vunpack.c.l.b16 %v8345
    %v9120 = vunpack.c.h.b16 %v8345
    %v9121 = vunpack.c.l.b16 %v8346
    %v9122 = vunpack.c.h.b16 %v8346
    %v9123 = vunpack.c.l.b16 %v8347
    %v9124 = vunpack.c.h.b16 %v8347
    %v9125 = vunpack.c.l.b16 %v8348
    %v9126 = vunpack.c.h.b16 %v8348
    %v9127 = vunpack.c.l.b16 %v8349
    %v9128 = vunpack.c.h.b16 %v8349
    %v9129 = vunpack.c.l.b16 %v8350
    %v9130 = vunpack.c.h.b16 %v8350
    %v9131 = vunpack.c.l.b16 %v8351
    %v9132 = vunpack.c.h.b16 %v8351
    %v9133 = vunpack.c.l.b16 %v8352
    %v9134 = vunpack.c.h.b16 %v8352
    %v9135 = vunpack.c.l.b16 %v8353
    %v9136 = vunpack.c.h.b16 %v8353
    %v9137 = vunpack.c.l.b16 %v8354
    %v9138 = vunpack.c.h.b16 %v8354
    %v9139 = vunpack.c.l.b16 %v8355
    %v9140 = vunpack.c.h.b16 %v8355
    %v9141 = vunpack.c.l.b16 %v8356
    %v9142 = vunpack.c.h.b16 %v8356
    %v9143 = vpack.c.b16 %v8639, %v8631
    %v9144 = vpack.c.b16 %v8640, %v8632
    %v9145 = vpack.c.b16 %v8641, %v8633
    %v9146 = vpack.c.b16 %v8642, %v8634
    %v9147 = vpack.c.b16 %v8643, %v8635
    %v9148 = vpack.c.b16 %v8644, %v8636
    %v9149 = vpack.c.b16 %v8645, %v8637
    %v9150 = vpack.c.b16 %v8646, %v8638
    %v9151 = vpack.c.b16 %v8655, %v8647
    %v9152 = vpack.c.b16 %v8656, %v8648
    %v9153 = vpack.c.b16 %v8657, %v8649
    %v9154 = vpack.c.b16 %v8658, %v8650
    %v9155 = vpack.c.b16 %v8659, %v8651
    %v9156 = vpack.c.b16 %v8660, %v8652
    %v9157 = vpack.c.b16 %v8661, %v8653
    %v9158 = vpack.c.b16 %v8662, %v8654
    %v9159 = vpack.c.b16 %v8671, %v8663
    %v9160 = vpack.c.b16 %v8672, %v8664
    %v9161 = vpack.c.b16 %v8673, %v8665
    %v9162 = vpack.c.b16 %v8674, %v8666
    %v9163 = vpack.c.b16 %v8675, %v8667
    %v9164 = vpack.c.b16 %v8676, %v8668
    %v9165 = vpack.c.b16 %v8677, %v8669
    %v9166 = vpack.c.b16 %v8678, %v8670
    %v9167 = vpack.c.b16 %v8687, %v8679
    %v9168 = vpack.c.b16 %v8688, %v8680
    %v9169 = vpack.c.b16 %v8689, %v8681
    %v9170 = vpack.c.b16 %v8690, %v8682
    %v9171 = vpack.c.b16 %v8691, %v8683
    %v9172 = vpack.c.b16 %v8692, %v8684
    %v9173 = vpack.c.b16 %v8693, %v8685
    %v9174 = vpack.c.b16 %v8694, %v8686
    %v9175 = vpack.c.b16 %v8703, %v8695
    %v9176 = vpack.c.b16 %v8704, %v8696
    %v9177 = vpack.c.b16 %v8705, %v8697
    %v9178 = vpack.c.b16 %v8706, %v8698
    %v9179 = vpack.c.b16 %v8707, %v8699
    %v9180 = vpack.c.b16 %v8708, %v8700
    %v9181 = vpack.c.b16 %v8709, %v8701
    %v9182 = vpack.c.b16 %v8710, %v8702
    %v9183 = vpack.c.b16 %v8719, %v8711
    %v9184 = vpack.c.b16 %v8720, %v8712
    %v9185 = vpack.c.b16 %v8721, %v8713
    %v9186 = vpack.c.b16 %v8722, %v8714
    %v9187 = vpack.c.b16 %v8723, %v8715
    %v9188 = vpack.c.b16 %v8724, %v8716
    %v9189 = vpack.c.b16 %v8725, %v8717
    %v9190 = vpack.c.b16 %v8726, %v8718
    %v9191 = vpack.c.b16 %v8735, %v8727
    %v9192 = vpack.c.b16 %v8736, %v8728
    %v9193 = vpack.c.b16 %v8737, %v8729
    %v9194 = vpack.c.b16 %v8738, %v8730
    %v9195 = vpack.c.b16 %v8739, %v8731
    %v9196 = vpack.c.b16 %v8740, %v8732
    %v9197 = vpack.c.b16 %v8741, %v8733
    %v9198 = vpack.c.b16 %v8742, %v8734
    %v9199 = vpack.c.b16 %v8751, %v8743
    %v9200 = vpack.c.b16 %v8752, %v8744
    %v9201 = vpack.c.b16 %v8753, %v8745
    %v9202 = vpack.c.b16 %v8754, %v8746
    %v9203 = vpack.c.b16 %v8755, %v8747
    %v9204 = vpack.c.b16 %v8756, %v8748
    %v9205 = vpack.c.b16 %v8757, %v8749
    %v9206 = vpack.c.b16 %v8758, %v8750
    %v9207 = vpack.c.b16 %v8767, %v8759
    %v9208 = vpack.c.b16 %v8768, %v8760
    %v9209 = vpack.c.b16 %v8769, %v8761
    %v9210 = vpack.c.b16 %v8770, %v8762
    %v9211 = vpack.c.b16 %v8771, %v8763
    %v9212 = vpack.c.b16 %v8772, %v8764
    %v9213 = vpack.c.b16 %v8773, %v8765
    %v9214 = vpack.c.b16 %v8774, %v8766
    %v9215 = vpack.c.b16 %v8783, %v8775
    %v9216 = vpack.c.b16 %v8784, %v8776
    %v9217 = vpack.c.b16 %v8785, %v8777
    %v9218 = vpack.c.b16 %v8786, %v8778
    %v9219 = vpack.c.b16 %v8787, %v8779
    %v9220 = vpack.c.b16 %v8788, %v8780
    %v9221 = vpack.c.b16 %v8789, %v8781
    %v9222 = vpack.c.b16 %v8790, %v8782
    %v9223 = vpack.c.b16 %v8799, %v8791
    %v9224 = vpack.c.b16 %v8800, %v8792
    %v9225 = vpack.c.b16 %v8801, %v8793
    %v9226 = vpack.c.b16 %v8802, %v8794
    %v9227 = vpack.c.b16 %v8803, %v8795
    %v9228 = vpack.c.b16 %v8804, %v8796
    %v9229 = vpack.c.b16 %v8805, %v8797
    %v9230 = vpack.c.b16 %v8806, %v8798
    %v9231 = vpack.c.b16 %v8815, %v8807
    %v9232 = vpack.c.b16 %v8816, %v8808
    %v9233 = vpack.c.b16 %v8817, %v8809
    %v9234 = vpack.c.b16 %v8818, %v8810
    %v9235 = vpack.c.b16 %v8819, %v8811
    %v9236 = vpack.c.b16 %v8820, %v8812
    %v9237 = vpack.c.b16 %v8821, %v8813
    %v9238 = vpack.c.b16 %v8822, %v8814
    %v9239 = vpack.c.b16 %v8831, %v8823
    %v9240 = vpack.c.b16 %v8832, %v8824
    %v9241 = vpack.c.b16 %v8833, %v8825
    %v9242 = vpack.c.b16 %v8834, %v8826
    %v9243 = vpack.c.b16 %v8835, %v8827
    %v9244 = vpack.c.b16 %v8836, %v8828
    %v9245 = vpack.c.b16 %v8837, %v8829
    %v9246 = vpack.c.b16 %v8838, %v8830
    %v9247 = vpack.c.b16 %v8847, %v8839
    %v9248 = vpack.c.b16 %v8848, %v8840
    %v9249 = vpack.c.b16 %v8849, %v8841
    %v9250 = vpack.c.b16 %v8850, %v8842
    %v9251 = vpack.c.b16 %v8851, %v8843
    %v9252 = vpack.c.b16 %v8852, %v8844
    %v9253 = vpack.c.b16 %v8853, %v8845
    %v9254 = vpack.c.b16 %v8854, %v8846
    %v9255 = vpack.c.b16 %v8863, %v8855
    %v9256 = vpack.c.b16 %v8864, %v8856
    %v9257 = vpack.c.b16 %v8865, %v8857
    %v9258 = vpack.c.b16 %v8866, %v8858
    %v9259 = vpack.c.b16 %v8867, %v8859
    %v9260 = vpack.c.b16 %v8868, %v8860
    %v9261 = vpack.c.b16 %v8869, %v8861
    %v9262 = vpack.c.b16 %v8870, %v8862
    %v9263 = vpack.c.b16 %v8879, %v8871
    %v9264 = vpack.c.b16 %v8880, %v8872
    %v9265 = vpack.c.b16 %v8881, %v8873
    %v9266 = vpack.c.b16 %v8882, %v8874
    %v9267 = vpack.c.b16 %v8883, %v8875
    %v9268 = vpack.c.b16 %v8884, %v8876
    %v9269 = vpack.c.b16 %v8885, %v8877
    %v9270 = vpack.c.b16 %v8886, %v8878
    %v9271 = vpack.c.b16 %v8895, %v8887
    %v9272 = vpack.c.b16 %v8896, %v8888
    %v9273 = vpack.c.b16 %v8897, %v8889
    %v9274 = vpack.c.b16 %v8898, %v8890
    %v9275 = vpack.c.b16 %v8899, %v8891
    %v9276 = vpack.c.b16 %v8900, %v8892
    %v9277 = vpack.c.b16 %v8901, %v8893
    %v9278 = vpack.c.b16 %v8902, %v8894
    %v9279 = vpack.c.b16 %v8911, %v8903
    %v9280 = vpack.c.b16 %v8912, %v8904
    %v9281 = vpack.c.b16 %v8913, %v8905
    %v9282 = vpack.c.b16 %v8914, %v8906
    %v9283 = vpack.c.b16 %v8915, %v8907
    %v9284 = vpack.c.b16 %v8916, %v8908
    %v9285 = vpack.c.b16 %v8917, %v8909
    %v9286 = vpack.c.b16 %v8918, %v8910
    %v9287 = vpack.c.b16 %v8927, %v8919
    %v9288 = vpack.c.b16 %v8928, %v8920
    %v9289 = vpack.c.b16 %v8929, %v8921
    %v9290 = vpack.c.b16 %v8930, %v8922
    %v9291 = vpack.c.b16 %v8931, %v8923
    %v9292 = vpack.c.b16 %v8932, %v8924
    %v9293 = vpack.c.b16 %v8933, %v8925
    %v9294 = vpack.c.b16 %v8934, %v8926
    %v9295 = vpack.c.b16 %v8943, %v8935
    %v9296 = vpack.c.b16 %v8944, %v8936
    %v9297 = vpack.c.b16 %v8945, %v8937
    %v9298 = vpack.c.b16 %v8946, %v8938
    %v9299 = vpack.c.b16 %v8947, %v8939
    %v9300 = vpack.c.b16 %v8948, %v8940
    %v9301 = vpack.c.b16 %v8949, %v8941
    %v9302 = vpack.c.b16 %v8950, %v8942
    %v9303 = vpack.c.b16 %v8959, %v8951
    %v9304 = vpack.c.b16 %v8960, %v8952
    %v9305 = vpack.c.b16 %v8961, %v8953
    %v9306 = vpack.c.b16 %v8962, %v8954
    %v9307 = vpack.c.b16 %v8963, %v8955
    %v9308 = vpack.c.b16 %v8964, %v8956
    %v9309 = vpack.c.b16 %v8965, %v8957
    %v9310 = vpack.c.b16 %v8966, %v8958
    %v9311 = vpack.c.b16 %v8975, %v8967
    %v9312 = vpack.c.b16 %v8976, %v8968
    %v9313 = vpack.c.b16 %v8977, %v8969
    %v9314 = vpack.c.b16 %v8978, %v8970
    %v9315 = vpack.c.b16 %v8979, %v8971
    %v9316 = vpack.c.b16 %v8980, %v8972
    %v9317 = vpack.c.b16 %v8981, %v8973
    %v9318 = vpack.c.b16 %v8982, %v8974
    %v9319 = vpack.c.b16 %v8991, %v8983
    %v9320 = vpack.c.b16 %v8992, %v8984
    %v9321 = vpack.c.b16 %v8993, %v8985
    %v9322 = vpack.c.b16 %v8994, %v8986
    %v9323 = vpack.c.b16 %v8995, %v8987
    %v9324 = vpack.c.b16 %v8996, %v8988
    %v9325 = vpack.c.b16 %v8997, %v8989
    %v9326 = vpack.c.b16 %v8998, %v8990
    %v9327 = vpack.c.b16 %v9007, %v8999
    %v9328 = vpack.c.b16 %v9008, %v9000
    %v9329 = vpack.c.b16 %v9009, %v9001
    %v9330 = vpack.c.b16 %v9010, %v9002
    %v9331 = vpack.c.b16 %v9011, %v9003
    %v9332 = vpack.c.b16 %v9012, %v9004
    %v9333 = vpack.c.b16 %v9013, %v9005
    %v9334 = vpack.c.b16 %v9014, %v9006
    %v9335 = vpack.c.b16 %v9023, %v9015
    %v9336 = vpack.c.b16 %v9024, %v9016
    %v9337 = vpack.c.b16 %v9025, %v9017
    %v9338 = vpack.c.b16 %v9026, %v9018
    %v9339 = vpack.c.b16 %v9027, %v9019
    %v9340 = vpack.c.b16 %v9028, %v9020
    %v9341 = vpack.c.b16 %v9029, %v9021
    %v9342 = vpack.c.b16 %v9030, %v9022
    %v9343 = vpack.c.b16 %v9039, %v9031
    %v9344 = vpack.c.b16 %v9040, %v9032
    %v9345 = vpack.c.b16 %v9041, %v9033
    %v9346 = vpack.c.b16 %v9042, %v9034
    %v9347 = vpack.c.b16 %v9043, %v9035
    %v9348 = vpack.c.b16 %v9044, %v9036
    %v9349 = vpack.c.b16 %v9045, %v9037
    %v9350 = vpack.c.b16 %v9046, %v9038
    %v9351 = vpack.c.b16 %v9055, %v9047
    %v9352 = vpack.c.b16 %v9056, %v9048
    %v9353 = vpack.c.b16 %v9057, %v9049
    %v9354 = vpack.c.b16 %v9058, %v9050
    %v9355 = vpack.c.b16 %v9059, %v9051
    %v9356 = vpack.c.b16 %v9060, %v9052
    %v9357 = vpack.c.b16 %v9061, %v9053
    %v9358 = vpack.c.b16 %v9062, %v9054
    %v9359 = vpack.c.b16 %v9071, %v9063
    %v9360 = vpack.c.b16 %v9072, %v9064
    %v9361 = vpack.c.b16 %v9073, %v9065
    %v9362 = vpack.c.b16 %v9074, %v9066
    %v9363 = vpack.c.b16 %v9075, %v9067
    %v9364 = vpack.c.b16 %v9076, %v9068
    %v9365 = vpack.c.b16 %v9077, %v9069
    %v9366 = vpack.c.b16 %v9078, %v9070
    %v9367 = vpack.c.b16 %v9087, %v9079
    %v9368 = vpack.c.b16 %v9088, %v9080
    %v9369 = vpack.c.b16 %v9089, %v9081
    %v9370 = vpack.c.b16 %v9090, %v9082
    %v9371 = vpack.c.b16 %v9091, %v9083
    %v9372 = vpack.c.b16 %v9092, %v9084
    %v9373 = vpack.c.b16 %v9093, %v9085
    %v9374 = vpack.c.b16 %v9094, %v9086
    %v9375 = vpack.c.b16 %v9103, %v9095
    %v9376 = vpack.c.b16 %v9104, %v9096
    %v9377 = vpack.c.b16 %v9105, %v9097
    %v9378 = vpack.c.b16 %v9106, %v9098
    %v9379 = vpack.c.b16 %v9107, %v9099
    %v9380 = vpack.c.b16 %v9108, %v9100
    %v9381 = vpack.c.b16 %v9109, %v9101
    %v9382 = vpack.c.b16 %v9110, %v9102
    %v9383 = vpack.c.b16 %v9119, %v9111
    %v9384 = vpack.c.b16 %v9120, %v9112
    %v9385 = vpack.c.b16 %v9121, %v9113
    %v9386 = vpack.c.b16 %v9122, %v9114
    %v9387 = vpack.c.b16 %v9123, %v9115
    %v9388 = vpack.c.b16 %v9124, %v9116
    %v9389 = vpack.c.b16 %v9125, %v9117
    %v9390 = vpack.c.b16 %v9126, %v9118
    %v9391 = vpack.c.b16 %v9135, %v9127
    %v9392 = vpack.c.b16 %v9136, %v9128
    %v9393 = vpack.c.b16 %v9137, %v9129
    %v9394 = vpack.c.b16 %v9138, %v9130
    %v9395 = vpack.c.b16 %v9139, %v9131
    %v9396 = vpack.c.b16 %v9140, %v9132
    %v9397 = vpack.c.b16 %v9141, %v9133
    %v9398 = vpack.c.b16 %v9142, %v9134
    %9655 = vmatpush.bf16.msra.mxu0 %v9199
    %9656 = vmatpush.bf16.msra.mxu0 %v9191
    %9657 = vmatpush.bf16.msra.mxu0 %v9183
    %9658 = vmatpush.bf16.msra.mxu0 %v9175
    %9659 = vmatpush.bf16.msra.mxu0 %v9167
    %9660 = vmatpush.bf16.msra.mxu0 %v9159
    %9661 = vmatpush.bf16.msra.mxu0 %v9151
    %9662 = vmatpush.bf16.msra.mxu0 %v9143
    %9663 = vmatmul.bf16.gmra.mxu0 %v8097
    %v9664 = vpop.f32.mrf.mxu0
    %v9665 = vadd.f32 %v8359, %v9664
    %v9666 = vpop.f32.mrf.mxu0
    %9667 = vdwg.mxu0
    %9668 = vmatpush.bf16.msra.mxu0 %v9263
    %9669 = vmatpush.bf16.msra.mxu0 %v9255
    %9670 = vmatpush.bf16.msra.mxu0 %v9247
    %9671 = vmatpush.bf16.msra.mxu0 %v9239
    %9672 = vmatpush.bf16.msra.mxu0 %v9231
    %9673 = vmatpush.bf16.msra.mxu0 %v9223
    %9674 = vmatpush.bf16.msra.mxu0 %v9215
    %9675 = vmatpush.bf16.msra.mxu0 %v9207
    %9676 = vmatmul.bf16.gmra.mxu0 %v8098
    %v9677 = vpop.f32.mrf.mxu0
    %v9678 = vadd.f32 %v9665, %v9677
    %v9679 = vpop.f32.mrf.mxu0
    %9680 = vdwg.mxu0
    %9681 = vmatpush.bf16.msra.mxu0 %v9327
    %9682 = vmatpush.bf16.msra.mxu0 %v9319
    %9683 = vmatpush.bf16.msra.mxu0 %v9311
    %9684 = vmatpush.bf16.msra.mxu0 %v9303
    %9685 = vmatpush.bf16.msra.mxu0 %v9295
    %9686 = vmatpush.bf16.msra.mxu0 %v9287
    %9687 = vmatpush.bf16.msra.mxu0 %v9279
    %9688 = vmatpush.bf16.msra.mxu0 %v9271
    %9689 = vmatmul.bf16.gmra.mxu0 %v8099
    %v9690 = vpop.f32.mrf.mxu0
    %v9691 = vadd.f32 %v9678, %v9690
    %v9692 = vpop.f32.mrf.mxu0
    %9693 = vdwg.mxu0
    %9694 = vmatpush.bf16.msra.mxu0 %v9391
    %9695 = vmatpush.bf16.msra.mxu0 %v9383
    %9696 = vmatpush.bf16.msra.mxu0 %v9375
    %9697 = vmatpush.bf16.msra.mxu0 %v9367
    %9698 = vmatpush.bf16.msra.mxu0 %v9359
    %9699 = vmatpush.bf16.msra.mxu0 %v9351
    %9700 = vmatpush.bf16.msra.mxu0 %v9343
    %9701 = vmatpush.bf16.msra.mxu0 %v9335
    %9702 = vmatmul.bf16.gmra.mxu0 %v8100
    %v9703 = vpop.f32.mrf.mxu0
    %v9704 = vadd.f32 %v9691, %v9703
    %v9705 = vpop.f32.mrf.mxu0
    %9706 = vdwg.mxu0
    %9707 = vmatpush.bf16.msra.mxu0 %v9200
    %9708 = vmatpush.bf16.msra.mxu0 %v9192
    %9709 = vmatpush.bf16.msra.mxu0 %v9184
    %9710 = vmatpush.bf16.msra.mxu0 %v9176
    %9711 = vmatpush.bf16.msra.mxu0 %v9168
    %9712 = vmatpush.bf16.msra.mxu0 %v9160
    %9713 = vmatpush.bf16.msra.mxu0 %v9152
    %9714 = vmatpush.bf16.msra.mxu0 %v9144
    %9715 = vmatmul.bf16.gmra.mxu0 %v8097
    %v9716 = vpop.f32.mrf.mxu0
    %v9717 = vadd.f32 %v8360, %v9716
    %v9718 = vpop.f32.mrf.mxu0
    %9719 = vdwg.mxu0
    %9720 = vmatpush.bf16.msra.mxu0 %v9264
    %9721 = vmatpush.bf16.msra.mxu0 %v9256
    %9722 = vmatpush.bf16.msra.mxu0 %v9248
    %9723 = vmatpush.bf16.msra.mxu0 %v9240
    %9724 = vmatpush.bf16.msra.mxu0 %v9232
    %9725 = vmatpush.bf16.msra.mxu0 %v9224
    %9726 = vmatpush.bf16.msra.mxu0 %v9216
    %9727 = vmatpush.bf16.msra.mxu0 %v9208
    %9728 = vmatmul.bf16.gmra.mxu0 %v8098
    %v9729 = vpop.f32.mrf.mxu0
    %v9730 = vadd.f32 %v9717, %v9729
    %v9731 = vpop.f32.mrf.mxu0
    %9732 = vdwg.mxu0
    %9733 = vmatpush.bf16.msra.mxu0 %v9328
    %9734 = vmatpush.bf16.msra.mxu0 %v9320
    %9735 = vmatpush.bf16.msra.mxu0 %v9312
    %9736 = vmatpush.bf16.msra.mxu0 %v9304
    %9737 = vmatpush.bf16.msra.mxu0 %v9296
    %9738 = vmatpush.bf16.msra.mxu0 %v9288
    %9739 = vmatpush.bf16.msra.mxu0 %v9280
    %9740 = vmatpush.bf16.msra.mxu0 %v9272
    %9741 = vmatmul.bf16.gmra.mxu0 %v8099
    %v9742 = vpop.f32.mrf.mxu0
    %v9743 = vadd.f32 %v9730, %v9742
    %v9744 = vpop.f32.mrf.mxu0
    %9745 = vdwg.mxu0
    %9746 = vmatpush.bf16.msra.mxu0 %v9392
    %9747 = vmatpush.bf16.msra.mxu0 %v9384
    %9748 = vmatpush.bf16.msra.mxu0 %v9376
    %9749 = vmatpush.bf16.msra.mxu0 %v9368
    %9750 = vmatpush.bf16.msra.mxu0 %v9360
    %9751 = vmatpush.bf16.msra.mxu0 %v9352
    %9752 = vmatpush.bf16.msra.mxu0 %v9344
    %9753 = vmatpush.bf16.msra.mxu0 %v9336
    %9754 = vmatmul.bf16.gmra.mxu0 %v8100
    %v9755 = vpop.f32.mrf.mxu0
    %v9756 = vadd.f32 %v9743, %v9755
    %v9757 = vpop.f32.mrf.mxu0
    %9758 = vdwg.mxu0
    %9759 = vmatpush.bf16.msra.mxu0 %v9201
    %9760 = vmatpush.bf16.msra.mxu0 %v9193
    %9761 = vmatpush.bf16.msra.mxu0 %v9185
    %9762 = vmatpush.bf16.msra.mxu0 %v9177
    %9763 = vmatpush.bf16.msra.mxu0 %v9169
    %9764 = vmatpush.bf16.msra.mxu0 %v9161
    %9765 = vmatpush.bf16.msra.mxu0 %v9153
    %9766 = vmatpush.bf16.msra.mxu0 %v9145
    %9767 = vmatmul.bf16.gmra.mxu0 %v8097
    %v9768 = vpop.f32.mrf.mxu0
    %v9769 = vadd.f32 %v8361, %v9768
    %v9770 = vpop.f32.mrf.mxu0
    %9771 = vdwg.mxu0
    %9772 = vmatpush.bf16.msra.mxu0 %v9265
    %9773 = vmatpush.bf16.msra.mxu0 %v9257
    %9774 = vmatpush.bf16.msra.mxu0 %v9249
    %9775 = vmatpush.bf16.msra.mxu0 %v9241
    %9776 = vmatpush.bf16.msra.mxu0 %v9233
    %9777 = vmatpush.bf16.msra.mxu0 %v9225
    %9778 = vmatpush.bf16.msra.mxu0 %v9217
    %9779 = vmatpush.bf16.msra.mxu0 %v9209
    %9780 = vmatmul.bf16.gmra.mxu0 %v8098
    %v9781 = vpop.f32.mrf.mxu0
    %v9782 = vadd.f32 %v9769, %v9781
    %v9783 = vpop.f32.mrf.mxu0
    %9784 = vdwg.mxu0
    %9785 = vmatpush.bf16.msra.mxu0 %v9329
    %9786 = vmatpush.bf16.msra.mxu0 %v9321
    %9787 = vmatpush.bf16.msra.mxu0 %v9313
    %9788 = vmatpush.bf16.msra.mxu0 %v9305
    %9789 = vmatpush.bf16.msra.mxu0 %v9297
    %9790 = vmatpush.bf16.msra.mxu0 %v9289
    %9791 = vmatpush.bf16.msra.mxu0 %v9281
    %9792 = vmatpush.bf16.msra.mxu0 %v9273
    %9793 = vmatmul.bf16.gmra.mxu0 %v8099
    %v9794 = vpop.f32.mrf.mxu0
    %v9795 = vadd.f32 %v9782, %v9794
    %v9796 = vpop.f32.mrf.mxu0
    %9797 = vdwg.mxu0
    %9798 = vmatpush.bf16.msra.mxu0 %v9393
    %9799 = vmatpush.bf16.msra.mxu0 %v9385
    %9800 = vmatpush.bf16.msra.mxu0 %v9377
    %9801 = vmatpush.bf16.msra.mxu0 %v9369
    %9802 = vmatpush.bf16.msra.mxu0 %v9361
    %9803 = vmatpush.bf16.msra.mxu0 %v9353
    %9804 = vmatpush.bf16.msra.mxu0 %v9345
    %9805 = vmatpush.bf16.msra.mxu0 %v9337
    %9806 = vmatmul.bf16.gmra.mxu0 %v8100
    %v9807 = vpop.f32.mrf.mxu0
    %v9808 = vadd.f32 %v9795, %v9807
    %v9809 = vpop.f32.mrf.mxu0
    %9810 = vdwg.mxu0
    %9811 = vmatpush.bf16.msra.mxu0 %v9202
    %9812 = vmatpush.bf16.msra.mxu0 %v9194
    %9813 = vmatpush.bf16.msra.mxu0 %v9186
    %9814 = vmatpush.bf16.msra.mxu0 %v9178
    %9815 = vmatpush.bf16.msra.mxu0 %v9170
    %9816 = vmatpush.bf16.msra.mxu0 %v9162
    %9817 = vmatpush.bf16.msra.mxu0 %v9154
    %9818 = vmatpush.bf16.msra.mxu0 %v9146
    %9819 = vmatmul.bf16.gmra.mxu0 %v8097
    %v9820 = vpop.f32.mrf.mxu0
    %v9821 = vadd.f32 %v8362, %v9820
    %v9822 = vpop.f32.mrf.mxu0
    %9823 = vdwg.mxu0
    %9824 = vmatpush.bf16.msra.mxu0 %v9266
    %9825 = vmatpush.bf16.msra.mxu0 %v9258
    %9826 = vmatpush.bf16.msra.mxu0 %v9250
    %9827 = vmatpush.bf16.msra.mxu0 %v9242
    %9828 = vmatpush.bf16.msra.mxu0 %v9234
    %9829 = vmatpush.bf16.msra.mxu0 %v9226
    %9830 = vmatpush.bf16.msra.mxu0 %v9218
    %9831 = vmatpush.bf16.msra.mxu0 %v9210
    %9832 = vmatmul.bf16.gmra.mxu0 %v8098
    %v9833 = vpop.f32.mrf.mxu0
    %v9834 = vadd.f32 %v9821, %v9833
    %v9835 = vpop.f32.mrf.mxu0
    %9836 = vdwg.mxu0
    %9837 = vmatpush.bf16.msra.mxu0 %v9330
    %9838 = vmatpush.bf16.msra.mxu0 %v9322
    %9839 = vmatpush.bf16.msra.mxu0 %v9314
    %9840 = vmatpush.bf16.msra.mxu0 %v9306
    %9841 = vmatpush.bf16.msra.mxu0 %v9298
    %9842 = vmatpush.bf16.msra.mxu0 %v9290
    %9843 = vmatpush.bf16.msra.mxu0 %v9282
    %9844 = vmatpush.bf16.msra.mxu0 %v9274
    %9845 = vmatmul.bf16.gmra.mxu0 %v8099
    %v9846 = vpop.f32.mrf.mxu0
    %v9847 = vadd.f32 %v9834, %v9846
    %v9848 = vpop.f32.mrf.mxu0
    %9849 = vdwg.mxu0
    %9850 = vmatpush.bf16.msra.mxu0 %v9394
    %9851 = vmatpush.bf16.msra.mxu0 %v9386
    %9852 = vmatpush.bf16.msra.mxu0 %v9378
    %9853 = vmatpush.bf16.msra.mxu0 %v9370
    %9854 = vmatpush.bf16.msra.mxu0 %v9362
    %9855 = vmatpush.bf16.msra.mxu0 %v9354
    %9856 = vmatpush.bf16.msra.mxu0 %v9346
    %9857 = vmatpush.bf16.msra.mxu0 %v9338
    %9858 = vmatmul.bf16.gmra.mxu0 %v8100
    %v9859 = vpop.f32.mrf.mxu0
    %v9860 = vadd.f32 %v9847, %v9859
    %v9861 = vpop.f32.mrf.mxu0
    %9862 = vdwg.mxu0
    %9863 = vmatpush.bf16.msra.mxu0 %v9203
    %9864 = vmatpush.bf16.msra.mxu0 %v9195
    %9865 = vmatpush.bf16.msra.mxu0 %v9187
    %9866 = vmatpush.bf16.msra.mxu0 %v9179
    %9867 = vmatpush.bf16.msra.mxu0 %v9171
    %9868 = vmatpush.bf16.msra.mxu0 %v9163
    %9869 = vmatpush.bf16.msra.mxu0 %v9155
    %9870 = vmatpush.bf16.msra.mxu0 %v9147
    %9871 = vmatmul.bf16.gmra.mxu0 %v8097
    %v9872 = vpop.f32.mrf.mxu0
    %v9873 = vadd.f32 %v8363, %v9872
    %v9874 = vpop.f32.mrf.mxu0
    %9875 = vdwg.mxu0
    %9876 = vmatpush.bf16.msra.mxu0 %v9267
    %9877 = vmatpush.bf16.msra.mxu0 %v9259
    %9878 = vmatpush.bf16.msra.mxu0 %v9251
    %9879 = vmatpush.bf16.msra.mxu0 %v9243
    %9880 = vmatpush.bf16.msra.mxu0 %v9235
    %9881 = vmatpush.bf16.msra.mxu0 %v9227
    %9882 = vmatpush.bf16.msra.mxu0 %v9219
    %9883 = vmatpush.bf16.msra.mxu0 %v9211
    %9884 = vmatmul.bf16.gmra.mxu0 %v8098
    %v9885 = vpop.f32.mrf.mxu0
    %v9886 = vadd.f32 %v9873, %v9885
    %v9887 = vpop.f32.mrf.mxu0
    %9888 = vdwg.mxu0
    %9889 = vmatpush.bf16.msra.mxu0 %v9331
    %9890 = vmatpush.bf16.msra.mxu0 %v9323
    %9891 = vmatpush.bf16.msra.mxu0 %v9315
    %9892 = vmatpush.bf16.msra.mxu0 %v9307
    %9893 = vmatpush.bf16.msra.mxu0 %v9299
    %9894 = vmatpush.bf16.msra.mxu0 %v9291
    %9895 = vmatpush.bf16.msra.mxu0 %v9283
    %9896 = vmatpush.bf16.msra.mxu0 %v9275
    %9897 = vmatmul.bf16.gmra.mxu0 %v8099
    %v9898 = vpop.f32.mrf.mxu0
    %v9899 = vadd.f32 %v9886, %v9898
    %v9900 = vpop.f32.mrf.mxu0
    %9901 = vdwg.mxu0
    %9902 = vmatpush.bf16.msra.mxu0 %v9395
    %9903 = vmatpush.bf16.msra.mxu0 %v9387
    %9904 = vmatpush.bf16.msra.mxu0 %v9379
    %9905 = vmatpush.bf16.msra.mxu0 %v9371
    %9906 = vmatpush.bf16.msra.mxu0 %v9363
    %9907 = vmatpush.bf16.msra.mxu0 %v9355
    %9908 = vmatpush.bf16.msra.mxu0 %v9347
    %9909 = vmatpush.bf16.msra.mxu0 %v9339
    %9910 = vmatmul.bf16.gmra.mxu0 %v8100
    %v9911 = vpop.f32.mrf.mxu0
    %v9912 = vadd.f32 %v9899, %v9911
    %v9913 = vpop.f32.mrf.mxu0
    %9914 = vdwg.mxu0
    %9915 = vmatpush.bf16.msra.mxu0 %v9204
    %9916 = vmatpush.bf16.msra.mxu0 %v9196
    %9917 = vmatpush.bf16.msra.mxu0 %v9188
    %9918 = vmatpush.bf16.msra.mxu0 %v9180
    %9919 = vmatpush.bf16.msra.mxu0 %v9172
    %9920 = vmatpush.bf16.msra.mxu0 %v9164
    %9921 = vmatpush.bf16.msra.mxu0 %v9156
    %9922 = vmatpush.bf16.msra.mxu0 %v9148
    %9923 = vmatmul.bf16.gmra.mxu0 %v8097
    %v9924 = vpop.f32.mrf.mxu0
    %v9925 = vadd.f32 %v8364, %v9924
    %v9926 = vpop.f32.mrf.mxu0
    %9927 = vdwg.mxu0
    %9928 = vmatpush.bf16.msra.mxu0 %v9268
    %9929 = vmatpush.bf16.msra.mxu0 %v9260
    %9930 = vmatpush.bf16.msra.mxu0 %v9252
    %9931 = vmatpush.bf16.msra.mxu0 %v9244
    %9932 = vmatpush.bf16.msra.mxu0 %v9236
    %9933 = vmatpush.bf16.msra.mxu0 %v9228
    %9934 = vmatpush.bf16.msra.mxu0 %v9220
    %9935 = vmatpush.bf16.msra.mxu0 %v9212
    %9936 = vmatmul.bf16.gmra.mxu0 %v8098
    %v9937 = vpop.f32.mrf.mxu0
    %v9938 = vadd.f32 %v9925, %v9937
    %v9939 = vpop.f32.mrf.mxu0
    %9940 = vdwg.mxu0
    %9941 = vmatpush.bf16.msra.mxu0 %v9332
    %9942 = vmatpush.bf16.msra.mxu0 %v9324
    %9943 = vmatpush.bf16.msra.mxu0 %v9316
    %9944 = vmatpush.bf16.msra.mxu0 %v9308
    %9945 = vmatpush.bf16.msra.mxu0 %v9300
    %9946 = vmatpush.bf16.msra.mxu0 %v9292
    %9947 = vmatpush.bf16.msra.mxu0 %v9284
    %9948 = vmatpush.bf16.msra.mxu0 %v9276
    %9949 = vmatmul.bf16.gmra.mxu0 %v8099
    %v9950 = vpop.f32.mrf.mxu0
    %v9951 = vadd.f32 %v9938, %v9950
    %v9952 = vpop.f32.mrf.mxu0
    %9953 = vdwg.mxu0
    %9954 = vmatpush.bf16.msra.mxu0 %v9396
    %9955 = vmatpush.bf16.msra.mxu0 %v9388
    %9956 = vmatpush.bf16.msra.mxu0 %v9380
    %9957 = vmatpush.bf16.msra.mxu0 %v9372
    %9958 = vmatpush.bf16.msra.mxu0 %v9364
    %9959 = vmatpush.bf16.msra.mxu0 %v9356
    %9960 = vmatpush.bf16.msra.mxu0 %v9348
    %9961 = vmatpush.bf16.msra.mxu0 %v9340
    %9962 = vmatmul.bf16.gmra.mxu0 %v8100
    %v9963 = vpop.f32.mrf.mxu0
    %v9964 = vadd.f32 %v9951, %v9963
    %v9965 = vpop.f32.mrf.mxu0
    %9966 = vdwg.mxu0
    %9967 = vmatpush.bf16.msra.mxu0 %v9205
    %9968 = vmatpush.bf16.msra.mxu0 %v9197
    %9969 = vmatpush.bf16.msra.mxu0 %v9189
    %9970 = vmatpush.bf16.msra.mxu0 %v9181
    %9971 = vmatpush.bf16.msra.mxu0 %v9173
    %9972 = vmatpush.bf16.msra.mxu0 %v9165
    %9973 = vmatpush.bf16.msra.mxu0 %v9157
    %9974 = vmatpush.bf16.msra.mxu0 %v9149
    %9975 = vmatmul.bf16.gmra.mxu0 %v8097
    %v9976 = vpop.f32.mrf.mxu0
    %v9977 = vadd.f32 %v8365, %v9976
    %v9978 = vpop.f32.mrf.mxu0
    %9979 = vdwg.mxu0
    %9980 = vmatpush.bf16.msra.mxu0 %v9269
    %9981 = vmatpush.bf16.msra.mxu0 %v9261
    %9982 = vmatpush.bf16.msra.mxu0 %v9253
    %9983 = vmatpush.bf16.msra.mxu0 %v9245
    %9984 = vmatpush.bf16.msra.mxu0 %v9237
    %9985 = vmatpush.bf16.msra.mxu0 %v9229
    %9986 = vmatpush.bf16.msra.mxu0 %v9221
    %9987 = vmatpush.bf16.msra.mxu0 %v9213
    %9988 = vmatmul.bf16.gmra.mxu0 %v8098
    %v9989 = vpop.f32.mrf.mxu0
    %v9990 = vadd.f32 %v9977, %v9989
    %v9991 = vpop.f32.mrf.mxu0
    %9992 = vdwg.mxu0
    %9993 = vmatpush.bf16.msra.mxu0 %v9333
    %9994 = vmatpush.bf16.msra.mxu0 %v9325
    %9995 = vmatpush.bf16.msra.mxu0 %v9317
    %9996 = vmatpush.bf16.msra.mxu0 %v9309
    %9997 = vmatpush.bf16.msra.mxu0 %v9301
    %9998 = vmatpush.bf16.msra.mxu0 %v9293
    %9999 = vmatpush.bf16.msra.mxu0 %v9285
    %10000 = vmatpush.bf16.msra.mxu0 %v9277
    %10001 = vmatmul.bf16.gmra.mxu0 %v8099
    %v10002 = vpop.f32.mrf.mxu0
    %v10003 = vadd.f32 %v9990, %v10002
    %v10004 = vpop.f32.mrf.mxu0
    %10005 = vdwg.mxu0
    %10006 = vmatpush.bf16.msra.mxu0 %v9397
    %10007 = vmatpush.bf16.msra.mxu0 %v9389
    %10008 = vmatpush.bf16.msra.mxu0 %v9381
    %10009 = vmatpush.bf16.msra.mxu0 %v9373
    %10010 = vmatpush.bf16.msra.mxu0 %v9365
    %10011 = vmatpush.bf16.msra.mxu0 %v9357
    %10012 = vmatpush.bf16.msra.mxu0 %v9349
    %10013 = vmatpush.bf16.msra.mxu0 %v9341
    %10014 = vmatmul.bf16.gmra.mxu0 %v8100
    %v10015 = vpop.f32.mrf.mxu0
    %v10016 = vadd.f32 %v10003, %v10015
    %v10017 = vpop.f32.mrf.mxu0
    %10018 = vdwg.mxu0
    %10019 = vmatpush.bf16.msra.mxu0 %v9206
    %10020 = vmatpush.bf16.msra.mxu0 %v9198
    %10021 = vmatpush.bf16.msra.mxu0 %v9190
    %10022 = vmatpush.bf16.msra.mxu0 %v9182
    %10023 = vmatpush.bf16.msra.mxu0 %v9174
    %10024 = vmatpush.bf16.msra.mxu0 %v9166
    %10025 = vmatpush.bf16.msra.mxu0 %v9158
    %10026 = vmatpush.bf16.msra.mxu0 %v9150
    %10027 = vmatmul.bf16.gmra.mxu0 %v8097
    %v10028 = vpop.f32.mrf.mxu0
    %v10029 = vadd.f32 %v8366, %v10028
    %v10030 = vpop.f32.mrf.mxu0
    %10031 = vdwg.mxu0
    %10032 = vmatpush.bf16.msra.mxu0 %v9270
    %10033 = vmatpush.bf16.msra.mxu0 %v9262
    %10034 = vmatpush.bf16.msra.mxu0 %v9254
    %10035 = vmatpush.bf16.msra.mxu0 %v9246
    %10036 = vmatpush.bf16.msra.mxu0 %v9238
    %10037 = vmatpush.bf16.msra.mxu0 %v9230
    %10038 = vmatpush.bf16.msra.mxu0 %v9222
    %10039 = vmatpush.bf16.msra.mxu0 %v9214
    %10040 = vmatmul.bf16.gmra.mxu0 %v8098
    %v10041 = vpop.f32.mrf.mxu0
    %v10042 = vadd.f32 %v10029, %v10041
    %v10043 = vpop.f32.mrf.mxu0
    %10044 = vdwg.mxu0
    %10045 = vmatpush.bf16.msra.mxu0 %v9334
    %10046 = vmatpush.bf16.msra.mxu0 %v9326
    %10047 = vmatpush.bf16.msra.mxu0 %v9318
    %10048 = vmatpush.bf16.msra.mxu0 %v9310
    %10049 = vmatpush.bf16.msra.mxu0 %v9302
    %10050 = vmatpush.bf16.msra.mxu0 %v9294
    %10051 = vmatpush.bf16.msra.mxu0 %v9286
    %10052 = vmatpush.bf16.msra.mxu0 %v9278
    %10053 = vmatmul.bf16.gmra.mxu0 %v8099
    %v10054 = vpop.f32.mrf.mxu0
    %v10055 = vadd.f32 %v10042, %v10054
    %v10056 = vpop.f32.mrf.mxu0
    %10057 = vdwg.mxu0
    %10058 = vmatpush.bf16.msra.mxu0 %v9398
    %10059 = vmatpush.bf16.msra.mxu0 %v9390
    %10060 = vmatpush.bf16.msra.mxu0 %v9382
    %10061 = vmatpush.bf16.msra.mxu0 %v9374
    %10062 = vmatpush.bf16.msra.mxu0 %v9366
    %10063 = vmatpush.bf16.msra.mxu0 %v9358
    %10064 = vmatpush.bf16.msra.mxu0 %v9350
    %10065 = vmatpush.bf16.msra.mxu0 %v9342
    %10066 = vmatmul.bf16.gmra.mxu0 %v8100
    %v10067 = vpop.f32.mrf.mxu0
    %v10068 = vadd.f32 %v10055, %v10067
    %v10069 = vpop.f32.mrf.mxu0
    %10070 = vdwg.mxu0
    %v10071 = vmax.f32 %v9704, 0.0
    %v10072 = vmax.f32 %v9756, 0.0
    %v10073 = vmax.f32 %v9808, 0.0
    %v10074 = vmax.f32 %v9860, 0.0
    %v10075 = vmax.f32 %v9912, 0.0
    %v10076 = vmax.f32 %v9964, 0.0
    %v10077 = vmax.f32 %v10016, 0.0
    %v10078 = vmax.f32 %v10068, 0.0
    %v10079 = vmax.f32 %v10071, %v10075
    %v10080 = vmax.f32 %v10072, %v10076
    %v10081 = vmax.f32 %v10073, %v10077
    %v10082 = vmax.f32 %v10074, %v10078
    %v10083 = vmax.f32 %v10079, %v10081
    %v10084 = vmax.f32 %v10080, %v10082
    %v10085 = vld [vmem:[%s1] sm:$0xff]
    %v10086 = vpack.c.bf16 %v10085, %v10085
    %v10087 = vld [vmem:[#allocation10] sm:$0x7]
    %v10088 = vld [vmem:[#allocation11] sm:$0x1]
    %v10090 = vperm.slane %v10088, 0
    %vm10092 = vcmask 39936
    %v10094 = vsel %vm10092, %v10086, 0
    %vm10096 = vcmask 1041408
    %vm10097 = vcmask 1042432
    %v10098 = vsel %vm10096, 4294967295, 65535
    %v10099 = vsel %vm10097, %v10098, 0
    %v10101 = vand.u32 %v10087, %v10099
    %10103 = vmatpush.bf16.msra.mxu0 0
    %10104 = vmatpush.bf16.msra.mxu0 0
    %10105 = vmatpush.bf16.msra.mxu0 0
    %10106 = vmatpush.bf16.msra.mxu0 0
    %10107 = vmatpush.bf16.msra.mxu0 0
    %10108 = vmatpush.bf16.msra.mxu0 0
    %10109 = vmatpush.bf16.msra.mxu0 0
    %10110 = vmatpush.bf16.msra.mxu0 %v10101
    %10111 = vmatmul.bf16.gmra.mxu0 %v10094
    %v10112 = vpop.f32.mrf.mxu0
    %v10113 = vadd.f32 %v10090, %v10112
    %v10114 = vpop.f32.mrf.mxu0
    %10115 = vdwg.mxu0
    %v10116 = vmax.f32 %v10113, 0.0
    %v10117 = vpack.c.bf16 %v10116, %v10116
    %v10118 = vld [vmem:[%s8] sm:$0xf]
    %v10119 = vld [vmem:[%s8 + $0x4] sm:$0xf]
    %v10120 = vld [vmem:[#allocation13] sm:$0x1]
    %v10122 = vperm.slane %v10120, 0
    %v10126 = vunpack.c.l.b16 %v10118
    %v10127 = vunpack.c.l.b16 %v10119
    %v10128 = vpack.c.b16 %v10127, %v10126
    %vm10130 = vcmask 130048
    %v10132 = vsel %vm10130, %v10117, 0
    %10134 = vmatpush.bf16.msra.mxu0 0
    %10135 = vmatpush.bf16.msra.mxu0 0
    %10136 = vmatpush.bf16.msra.mxu0 0
    %10137 = vmatpush.bf16.msra.mxu0 0
    %10138 = vmatpush.bf16.msra.mxu0 0
    %10139 = vmatpush.bf16.msra.mxu0 0
    %10140 = vmatpush.bf16.msra.mxu0 0
    %10141 = vmatpush.bf16.msra.mxu0 %v10128
    %10142 = vmatmul.bf16.gmra.mxu0 %v10132
    %v10143 = vpop.f32.mrf.mxu0
    %v10144 = vadd.f32 %v10122, %v10143
    %v10145 = vpop.f32.mrf.mxu0
    %10146 = vdwg.mxu0
    %v10147 = vmax.f32 %v10144, 0.0
    %v10148 = vpack.c.bf16 %v10083, %v10083
    %v10149 = vpack.c.bf16 %v10084, %v10084
    %v10150 = vld [vmem:[%s10] sm:$0xf]
    %v10151 = vld [vmem:[%s10 + $0x4] sm:$0xf]
    %v10152 = vld [vmem:[%s10 + $0x8] sm:$0xf]
    %v10153 = vld [vmem:[%s10 + $0xc] sm:$0xf]
    %v10154 = vld [vmem:[%s10 + $0x10] sm:$0xf]
    %v10155 = vld [vmem:[%s10 + $0x14] sm:$0xf]
    %v10156 = vld [vmem:[%s10 + $0x18] sm:$0xf]
    %v10157 = vld [vmem:[%s10 + $0x1c] sm:$0xf]
    %v10158 = vld [vmem:[%s10 + $0x20] sm:$0xf]
    %v10159 = vld [vmem:[%s10 + $0x24] sm:$0xf]
    %v10160 = vld [vmem:[%s10 + $0x28] sm:$0xf]
    %v10161 = vld [vmem:[%s10 + $0x2c] sm:$0xf]
    %v10162 = vld [vmem:[%s10 + $0x30] sm:$0xf]
    %v10163 = vld [vmem:[%s10 + $0x34] sm:$0xf]
    %v10164 = vld [vmem:[%s10 + $0x38] sm:$0xf]
    %v10165 = vld [vmem:[%s10 + $0x3c] sm:$0xf]
    %v10166 = vld [vmem:[%s10 + $0x40] sm:$0xf]
    %v10167 = vld [vmem:[%s10 + $0x44] sm:$0xf]
    %v10168 = vld [vmem:[%s10 + $0x48] sm:$0xf]
    %v10169 = vld [vmem:[%s10 + $0x4c] sm:$0xf]
    %v10170 = vld [vmem:[%s10 + $0x50] sm:$0xf]
    %v10171 = vld [vmem:[%s10 + $0x54] sm:$0xf]
    %v10172 = vld [vmem:[%s10 + $0x58] sm:$0xf]
    %v10173 = vld [vmem:[%s10 + $0x5c] sm:$0xf]
    %v10174 = vld [vmem:[%s10 + $0x60] sm:$0xf]
    %v10175 = vld [vmem:[%s10 + $0x64] sm:$0xf]
    %v10176 = vld [vmem:[%s10 + $0x68] sm:$0xf]
    %v10177 = vld [vmem:[%s10 + $0x6c] sm:$0xf]
    %v10178 = vld [vmem:[%s10 + $0x70] sm:$0xf]
    %v10179 = vld [vmem:[%s10 + $0x74] sm:$0xf]
    %v10180 = vld [vmem:[%s10 + $0x78] sm:$0xf]
    %v10181 = vld [vmem:[%s10 + $0x7c] sm:$0xf]
    %v10182 = vpack.c.bf16 %v10147, %v10147
    %v10183 = vld [vmem:[#allocation14] sm:$0xf]
    %vm10184 = vcmask 64512
    %v10186 = vsel %vm10184, %v10182, 0
    %vm10188 = vcmask 1043456
    %v10190 = vsel %vm10188, %v10183, 0
    %10192 = vmatpush.bf16.msra.mxu0 0
    %10193 = vmatpush.bf16.msra.mxu0 0
    %10194 = vmatpush.bf16.msra.mxu0 0
    %10195 = vmatpush.bf16.msra.mxu0 0
    %10196 = vmatpush.bf16.msra.mxu0 0
    %10197 = vmatpush.bf16.msra.mxu0 0
    %10198 = vmatpush.bf16.msra.mxu0 0
    %10199 = vmatpush.bf16.msra.mxu0 %v10190
    %10200 = vmatmul.bf16.gmra.mxu0 %v10186
    %v10201 = vpop.f32.mrf.mxu0
    %v10202 = vadd.f32 0.0, %v10201
    %v10203 = vpop.f32.mrf.mxu0
    %10204 = vdwg.mxu0
    %v10237 = vunpack.c.l.b16 %v10150
    %v10238 = vunpack.c.l.b16 %v10151
    %v10239 = vunpack.c.l.b16 %v10152
    %v10240 = vunpack.c.l.b16 %v10153
    %v10241 = vunpack.c.l.b16 %v10154
    %v10242 = vunpack.c.l.b16 %v10155
    %v10243 = vunpack.c.l.b16 %v10156
    %v10244 = vunpack.c.l.b16 %v10157
    %v10245 = vunpack.c.l.b16 %v10158
    %v10246 = vunpack.c.l.b16 %v10159
    %v10247 = vunpack.c.l.b16 %v10160
    %v10248 = vunpack.c.l.b16 %v10161
    %v10249 = vunpack.c.l.b16 %v10162
    %v10250 = vunpack.c.l.b16 %v10163
    %v10251 = vunpack.c.l.b16 %v10164
    %v10252 = vunpack.c.l.b16 %v10165
    %v10253 = vunpack.c.l.b16 %v10166
    %v10254 = vunpack.c.l.b16 %v10167
    %v10255 = vunpack.c.l.b16 %v10168
    %v10256 = vunpack.c.l.b16 %v10169
    %v10257 = vunpack.c.l.b16 %v10170
    %v10258 = vunpack.c.l.b16 %v10171
    %v10259 = vunpack.c.l.b16 %v10172
    %v10260 = vunpack.c.l.b16 %v10173
    %v10261 = vunpack.c.l.b16 %v10174
    %v10262 = vunpack.c.l.b16 %v10175
    %v10263 = vunpack.c.l.b16 %v10176
    %v10264 = vunpack.c.l.b16 %v10177
    %v10265 = vunpack.c.l.b16 %v10178
    %v10266 = vunpack.c.l.b16 %v10179
    %v10267 = vunpack.c.l.b16 %v10180
    %v10268 = vunpack.c.l.b16 %v10181
    %v10269 = vpack.c.b16 %v10238, %v10237
    %v10270 = vpack.c.b16 %v10240, %v10239
    %v10271 = vpack.c.b16 %v10242, %v10241
    %v10272 = vpack.c.b16 %v10244, %v10243
    %v10273 = vpack.c.b16 %v10246, %v10245
    %v10274 = vpack.c.b16 %v10248, %v10247
    %v10275 = vpack.c.b16 %v10250, %v10249
    %v10276 = vpack.c.b16 %v10252, %v10251
    %v10277 = vpack.c.b16 %v10254, %v10253
    %v10278 = vpack.c.b16 %v10256, %v10255
    %v10279 = vpack.c.b16 %v10258, %v10257
    %v10280 = vpack.c.b16 %v10260, %v10259
    %v10281 = vpack.c.b16 %v10262, %v10261
    %v10282 = vpack.c.b16 %v10264, %v10263
    %v10283 = vpack.c.b16 %v10266, %v10265
    %v10284 = vpack.c.b16 %v10268, %v10267
    %10301 = vmatpush.bf16.msra.mxu0 %v10276
    %10302 = vmatpush.bf16.msra.mxu0 %v10275
    %10303 = vmatpush.bf16.msra.mxu0 %v10274
    %10304 = vmatpush.bf16.msra.mxu0 %v10273
    %10305 = vmatpush.bf16.msra.mxu0 %v10272
    %10306 = vmatpush.bf16.msra.mxu0 %v10271
    %10307 = vmatpush.bf16.msra.mxu0 %v10270
    %10308 = vmatpush.bf16.msra.mxu0 %v10269
    %10309 = vmatmul.bf16.gmra.mxu0 %v10148
    %v10310 = vpop.f32.mrf.mxu0
    %v10311 = vadd.f32 %v10202, %v10310
    %v10312 = vpop.f32.mrf.mxu0
    %10313 = vdwg.mxu0
    %10314 = vmatpush.bf16.msra.mxu0 %v10284
    %10315 = vmatpush.bf16.msra.mxu0 %v10283
    %10316 = vmatpush.bf16.msra.mxu0 %v10282
    %10317 = vmatpush.bf16.msra.mxu0 %v10281
    %10318 = vmatpush.bf16.msra.mxu0 %v10280
    %10319 = vmatpush.bf16.msra.mxu0 %v10279
    %10320 = vmatpush.bf16.msra.mxu0 %v10278
    %10321 = vmatpush.bf16.msra.mxu0 %v10277
    %10322 = vmatmul.bf16.gmra.mxu0 %v10149
    %v10323 = vpop.f32.mrf.mxu0
    %v10324 = vadd.f32 %v10311, %v10323
    %v10325 = vpop.f32.mrf.mxu0
    %10326 = vdwg.mxu0
    %v10327 = vld [vmem:[#allocation16] sm:$0x1]
    %v10329 = vperm.slane %v10327, 0
    %v10331 = vadd.f32 %v10324, %v10329
    %v10332 = vmax.f32 %v10331, 0.0
    %v10333 = vld [vmem:[#allocation17] sm:$0x1]
    %v10335 = vperm.slane %v10333, 0
    %v10337 = vmul.f32 %v10332, %v10335
    %vm10338 = vcmask 523264
    %v10339 = vsel %vm10338, %v10337, 0.0
    %10340 = vadd.xlane.f32.xlu0 %v10339
    %v10341 = vpop.xlane.xlu0 %10340
    %v10342 = vld [vmem:[#allocation2] sm:$0x1]
    %v10344 = vperm.slane %v10342, 0
    %v10346 = vadd.f32 %v10341, %v10344
    %vm10347 = vcmask 7168
    %10348 = vst.msk [vmem:[%s15] sm:$0xff] %vm10347, %v10346
    // Predicated region
    $region102: #{chess_puzzle_cnn_forward.1} parent=1 // pred_check
      _
    $region103: #{chess_puzzle_cnn_forward.1} parent=1 // pred_check_branch
      %10350 = sbr.rel (0) target = $region105
    $region104: #{chess_puzzle_cnn_forward.1} parent=1 // pred_region
      _
    $region105: #{chess_puzzle_cnn_forward.1} parent=1 // pred_fallthru
      _
    // Predicated region
    $region106: #{chess_puzzle_cnn_forward.1} parent=1 // pred_check
      _
    $region107: #{chess_puzzle_cnn_forward.1} parent=1 // pred_check_branch
      %10352 = sbr.rel (0) target = $region109
    $region108: #{chess_puzzle_cnn_forward.1} parent=1 // pred_region
      _
    $region109: #{chess_puzzle_cnn_forward.1} parent=1 // pred_fallthru
      _
    %10353 = vsyncpa [#allocation4], 1
    %10354 = vsyncpa [#allocation6], 1
    %10355 = vsyncpa [#allocation9], 1
    %10356 = vsyncpa [#allocation12], 1
    %10357 = vsyncpa [#allocation15], 1
    %10358 = vsyncpa [#allocation18], 1

</llo_original>
